<compile_context>
chip_gen: v7x
topology: tpu7x:2x2x1
jax: 0.10.0
libtpu: 0.0.40
codegen_flags: <defaults>
</compile_context>

<pallas_src>
import functools
import numpy as np
import jax
import jax.numpy as jnp
from jax import lax
from jax.experimental import pallas as pl
from jax.experimental.pallas import tpu as pltpu

# ---- model config (small, consistent with the module's constraints) ----
HIDDEN = 32          # hidden_dim (also the time dimension T, see layout note)
LAYERS = 2           # layer_dim
BATCH = 2
BERT_SEQ = 512       # fixed by at2_emb_layer = Linear(512, H)
BERT_DIM = 768       # fixed by at_emb_layer  = Linear(768, H)
VOCAB = 1000


def _num_programs(batch):
    """One program per TensorCore. v7x has 2 TCs -> 2 programs (if batch splits evenly);
    v5e/v6e are single-TC -> fold the whole batch into sublanes of a single program."""
    try:
        kind = jax.devices()[0].device_kind.lower()
    except Exception:
        kind = ""
    if ("v7" in kind or "7x" in kind) and batch >= 2 and batch % 2 == 0:
        return 2
    return 1


# ---------------------------------------------------------------------------
# Fused kernel: preproc + stacked LSTMCell recurrence, BP batch rows per program.
# Every 2-D operand is time-major: row index = t*BP + bp.
# ---------------------------------------------------------------------------
def fused_kernel(bp, at_ref, x_ref, w_vx_ref, w_at2v_ref, b_v_ref,
                 wx_ref, wh_ref, bl_ref, out_ref):
    # at_ref  : (T*BP, S)  bf16   masked bert-emb gather, pre-projected 768->H, transposed
    # x_ref   : (T*BP, H)  f32
    # w_vx    : (H, H) bf16, w_at2v: (S, H) bf16, b_v: (T*BP, H) f32 (all biases folded)
    # wx / wh : (L, H, 4H) bf16,  bl: (L, 1, 4H) f32 = bx + bh
    # out_ref : (T*BP, H)  f32    last-layer hidden per (timestep, batch-row)
    R, H = x_ref.shape
    T = R // bp
    L = wx_ref.shape[0]

    # ---- preproc: v = relu(x @ w_vx + at1m_T @ w_at2v + b_v_eff)  (at2 stage folded) ----
    x_bf = x_ref[...].astype(jnp.bfloat16)
    pre = (jnp.dot(x_bf, w_vx_ref[...], preferred_element_type=jnp.float32)
           + jnp.dot(at_ref[...], w_at2v_ref[...], preferred_element_type=jnp.float32))
    v = jnp.maximum(pre + b_v_ref[...], 0.0)                                # (T*BP, H) f32

    # ---- layer-0 x2h (+ both biases) for all timesteps: one matmul, kept in registers ----
    gx0 = (jnp.dot(v.astype(jnp.bfloat16), wx_ref[0],
                   preferred_element_type=jnp.float32) + bl_ref[0])         # (T*BP, 4H) f32

    # Recurrent weights loaded once, kept live across the unrolled loop (bf16, tiny).
    wh_l = [wh_ref[l] for l in range(L)]
    wx_l = [wx_ref[l] for l in range(1, L)]        # layer-0 x2h hoisted above
    bl_l = [bl_ref[l] for l in range(1, L)]

    def gate_update(gates, c_prev):
        # Full-width (4H = 128-lane) EUP launches, then static lane slices. All f32.
        sg = jax.nn.sigmoid(gates)
        tg = jnp.tanh(gates)
        i_g = sg[:, 0 * H:1 * H]
        f_g = sg[:, 1 * H:2 * H]
        g_g = tg[:, 2 * H:3 * H]
        o_g = sg[:, 3 * H:4 * H]
        c_new = c_prev * f_g + i_g * g_g
        return o_g * jnp.tanh(c_new), c_new

    hs = [jnp.zeros((bp, H), jnp.float32) for _ in range(L)]
    cs = [jnp.zeros((bp, H), jnp.float32) for _ in range(L)]

    # T is small and static: full unroll gives the scheduler cross-timestep visibility.
    for t in range(T):
        r0 = t * bp
        # layer 0: input gates precomputed; only the recurrent dot sits on the serial path.
        g = gx0[r0:r0 + bp, :] + jnp.dot(hs[0].astype(jnp.bfloat16), wh_l[0],
                                         preferred_element_type=jnp.float32)
        hs[0], cs[0] = gate_update(g, cs[0])
        x_in = hs[0]
        # layers 1..L-1: two small bf16 dots, pre-summed bias.
        for l in range(1, L):
            g = (jnp.dot(x_in.astype(jnp.bfloat16), wx_l[l - 1],
                         preferred_element_type=jnp.float32)
                 + jnp.dot(hs[l].astype(jnp.bfloat16), wh_l[l],
                           preferred_element_type=jnp.float32)
                 + bl_l[l - 1])
            hs[l], cs[l] = gate_update(g, cs[l])
            x_in = hs[l]
        out_ref[pl.ds(r0, bp), :] = x_in            # last-layer hidden, off the serial path


def fused_forward(at_g, x_g, b_v_rep, p, bp):
    G, R, S = at_g.shape            # R = T * BP
    H = x_g.shape[2]
    L = p['wx_bf16'].shape[0]
    kernel = functools.partial(fused_kernel, bp)
    return pl.pallas_call(
        kernel,
        out_shape=jax.ShapeDtypeStruct((G, R, H), jnp.float32),
        grid_spec=pltpu.PrefetchScalarGridSpec(
            num_scalar_prefetch=0,
            grid=(G,),
            in_specs=[
                pl.BlockSpec((None, R, S), lambda g: (g, 0, 0)),       # at1m (time-major, bf16)
                pl.BlockSpec((None, R, H), lambda g: (g, 0, 0)),       # x    (time-major)
                pl.BlockSpec((H, H), lambda g: (0, 0)),                # w_vx        (bf16)
                pl.BlockSpec((S, H), lambda g: (0, 0)),                # w_at2 @ w_va (bf16)
                pl.BlockSpec((R, H), lambda g: (0, 0)),                # folded bias (f32)
                pl.BlockSpec((L, H, 4 * H), lambda g: (0, 0, 0)),      # wx (bf16)
                pl.BlockSpec((L, H, 4 * H), lambda g: (0, 0, 0)),      # wh (bf16)
                pl.BlockSpec((L, 1, 4 * H), lambda g: (0, 0, 0)),      # bx + bh
            ],
            out_specs=pl.BlockSpec((None, R, H), lambda g: (g, 0, 0)),
        ),
        compiler_params=pltpu.CompilerParams(dimension_semantics=("parallel",)),
    )(at_g, x_g, p['w_vx_bf16'], p['w_at2v_bf16'], b_v_rep,
      p['wx_bf16'], p['wh_bf16'], p['b_lstm'])


# ---------------------------------------------------------------------------
# Full forward (glue in plain JAX: embedding gather + tiny layout transposes)
# ---------------------------------------------------------------------------
def lstm_model_forward(params, x, at_s, at_t, at_m):
    B, T, H = x.shape
    assert T == H, "module layout requires x.size(1) == hidden_dim"
    S = at_s.shape[1]
    G = _num_programs(B)
    BP = B // G

    # DistilBERT stand-in: masked deterministic embedding lookup; its 768->H projection is
    # folded into the table:  (emb[ids]*mask) @ W == mask * (emb @ W)[ids]   (bf16 table).
    at1m = params['emb_proj_bf16'][at_s] * at_m[..., None].astype(jnp.bfloat16)   # (B,S,H)

    # Lane-dense, time-major shards: row t*BP + bp of program g is batch b = g*BP + bp.
    at_g = jnp.transpose(at1m.reshape(G, BP, S, T), (0, 3, 1, 2)).reshape(G, T * BP, S)
    x_g = jnp.transpose(x.reshape(G, BP, T, H), (0, 2, 1, 3)).reshape(G, T * BP, H)
    b_v_rep = jnp.repeat(params['b_v_eff'], BP, axis=0)                           # (T*BP, H)

    out = fused_forward(at_g, x_g, b_v_rep, params, BP)                           # (G,T*BP,H)
    # rows (t, bp) -> (B, H, T)  == torch.stack(outs, dim=-1)   (8 KiB transpose)
    return jnp.transpose(out.reshape(G, T, BP, H), (0, 2, 3, 1)).reshape(B, H, T)


# ---------------------------------------------------------------------------
# Parameter initialization + one-time derived parameters
# ---------------------------------------------------------------------------
def init_params(key, hidden, layers, bert_dim=BERT_DIM, bert_seq=BERT_SEQ, vocab=VOCAB):
    ks = jax.random.split(key, 11)
    H, L = hidden, layers

    def u(k, shape, fan_in):
        s = 1.0 / np.sqrt(fan_in)
        return jax.random.uniform(k, shape, jnp.float32, -s, s)

    return {
        'bert_emb': 0.02 * jax.random.normal(ks[0], (vocab, bert_dim), jnp.float32),
        'w_at':  u(ks[1], (bert_dim, H), bert_dim),  'b_at':  u(ks[2], (1, H), bert_dim),
        'w_at2': u(ks[3], (bert_seq, H), bert_seq),  'b_at2': u(ks[4], (1, H), bert_seq),
        'w_v':   u(ks[5], (2 * H, H), 2 * H),        'b_v':   u(ks[6], (1, H), 2 * H),
        # LSTMCell.reset_parameters(): U(-1/sqrt(H), 1/sqrt(H)); layer-0 input_dim == H
        'wx': jnp.stack([u(jax.random.fold_in(ks[7], l), (H, 4 * H), H) for l in range(L)]),
        'wh': jnp.stack([u(jax.random.fold_in(ks[8], l), (H, 4 * H), H) for l in range(L)]),
        'bx': jnp.stack([u(jax.random.fold_in(ks[9], l), (1, 4 * H), H) for l in range(L)]),
        'bh': jnp.stack([u(jax.random.fold_in(ks[10], l), (1, 4 * H), H) for l in range(L)]),
    }


def prepare_params(params):
    """One-time derived parameters (hoisted out of every forward call). Exact algebra:
       at2 stage fold:  w_at2v = w_at2 @ w_v[H:2H]
                        b_v_eff = b_v + b_at2 @ w_v[H:2H] + outer(b_at, colsum(w_at2v))."""
    p = dict(params)
    H = params['w_at'].shape[1]
    w_vx = params['w_v'][:H]                        # (H, H)
    w_va = params['w_v'][H:]                        # (H, H)
    w_at2v = params['w_at2'] @ w_va                 # (S, H)  f32
    b_v_eff = (params['b_v'] + params['b_at2'] @ w_va
               + params['b_at'].reshape(H, 1) * jnp.sum(w_at2v, axis=0).reshape(1, H))
    p['emb_proj_bf16'] = (params['bert_emb'] @ params['w_at']).astype(jnp.bfloat16)
    p['w_vx_bf16'] = w_vx.astype(jnp.bfloat16)
    p['w_at2v_bf16'] = w_at2v.astype(jnp.bfloat16)
    p['b_v_eff'] = b_v_eff.astype(jnp.float32)      # (T, H) == (H, H)
    p['wx_bf16'] = params['wx'].astype(jnp.bfloat16)
    p['wh_bf16'] = params['wh'].astype(jnp.bfloat16)
    p['b_lstm'] = params['bx'] + params['bh']
    return p


# ---------------------------------------------------------------------------
# Pure-JAX reference for a correctness sanity check (independent f32 path)
# ---------------------------------------------------------------------------
def reference_forward(params, x, at_s, at_t, at_m):
    bert_hidden = params['bert_emb'][at_s] * at_m[..., None].astype(jnp.float32)
    at1 = bert_hidden @ params['w_at'] + params['b_at']                      # (B,512,H)
    at2 = jnp.einsum('bsh,sk->bhk', at1, params['w_at2']) + params['b_at2']  # (B,H,H)
    v = jax.nn.relu(jnp.concatenate([x, at2], axis=-1) @ params['w_v'] + params['b_v'])
    B, T, H = v.shape
    L = params['wx'].shape[0]
    h = [jnp.zeros((B, H), jnp.float32) for _ in range(L)]
    c = [jnp.zeros((B, H), jnp.float32) for _ in range(L)]
    outs = []
    for t in range(T):
        x_in = v[:, t, :]
        for l in range(L):
            gates = (x_in @ params['wx'][l] + params['bx'][l]
                     + h[l] @ params['wh'][l] + params['bh'][l])
            i_g, f_g, g_g, o_g = jnp.split(gates, 4, axis=1)
            i_g = jax.nn.sigmoid(i_g); f_g = jax.nn.sigmoid(f_g)
            g_g = jnp.tanh(g_g); o_g = jax.nn.sigmoid(o_g)
            c[l] = c[l] * f_g + i_g * g_g
            h[l] = o_g * jnp.tanh(c[l])
            x_in = h[l]
        outs.append(x_in)
    return jnp.stack(outs, axis=-1)                                          # (B, H, T)


if __name__ == "__main__":
    key = jax.random.PRNGKey(0)
    kp, kx, ks = jax.random.split(key, 3)
    params = prepare_params(init_params(kp, HIDDEN, LAYERS))

    # x.size(1) must equal HIDDEN (see layout note)
    x = jax.random.normal(kx, (BATCH, HIDDEN, HIDDEN), jnp.float32)
    at_s = jax.random.randint(ks, (BATCH, BERT_SEQ), 0, VOCAB, dtype=jnp.int32)
    at_t = jnp.zeros((BATCH, BERT_SEQ), jnp.int32)   # unused by forward (as in PyTorch)
    at_m = jnp.ones((BATCH, BERT_SEQ), jnp.int32)

    out = jax.jit(lstm_model_forward)(params, x, at_s, at_t, at_m)
    out = jax.block_until_ready(out)
    assert out.shape == (BATCH, HIDDEN, HIDDEN)      # (B, H, T)

    ref = reference_forward(params, x, at_s, at_t, at_m)
    np.testing.assert_allclose(np.asarray(out), np.asarray(ref), rtol=5e-2, atol=5e-2)

    print("KERNEL_OK")
</pallas_src>

<mosaic_0001>
module attributes {stable_mosaic.version = 11 : i64} {
  func.func @fused_kernel(%arg0: i32, %arg1: memref<1x64x512xbf16, #tpu.memory_space<vmem>>, %arg2: memref<1x64x32xf32, #tpu.memory_space<vmem>>, %arg3: memref<32x32xbf16, #tpu.memory_space<vmem>>, %arg4: memref<512x32xbf16, #tpu.memory_space<vmem>>, %arg5: memref<64x32xf32, #tpu.memory_space<vmem>>, %arg6: memref<2x32x128xbf16, #tpu.memory_space<vmem>>, %arg7: memref<2x32x128xbf16, #tpu.memory_space<vmem>>, %arg8: memref<2x1x128xf32, #tpu.memory_space<vmem>>, %arg9: memref<1x64x32xf32, #tpu.memory_space<vmem>>) attributes {dimension_semantics = [#tpu.dimension_semantics<parallel>], iteration_bounds = array<i64: 1>, scalar_prefetch = 0 : i64, scratch_operands = 0 : i64, tpu.core_type = #tpu.core_type<tc>, window_params = [{transform_indices = @transform_0, window_bounds = array<i64: 1, 64, 512>}, {transform_indices = @transform_1, window_bounds = array<i64: 1, 64, 32>}, {pipeline_mode = #tpu.pipeline_mode<synchronous>, transform_indices = @transform_2, window_bounds = array<i64: 32, 32>}, {pipeline_mode = #tpu.pipeline_mode<synchronous>, transform_indices = @transform_3, window_bounds = array<i64: 512, 32>}, {pipeline_mode = #tpu.pipeline_mode<synchronous>, transform_indices = @transform_4, window_bounds = array<i64: 64, 32>}, {pipeline_mode = #tpu.pipeline_mode<synchronous>, transform_indices = @transform_5, window_bounds = array<i64: 2, 32, 128>}, {pipeline_mode = #tpu.pipeline_mode<synchronous>, transform_indices = @transform_6, window_bounds = array<i64: 2, 32, 128>}, {pipeline_mode = #tpu.pipeline_mode<synchronous>, transform_indices = @transform_7, window_bounds = array<i64: 2, 1, 128>}, {transform_indices = @transform_8, window_bounds = array<i64: 1, 64, 32>}]} {
    %c0 = arith.constant 0 : index
    %c0_0 = arith.constant 0 : index
    %c0_1 = arith.constant 0 : index
    %0 = vector.load %arg2[%c0, %c0_0, %c0_1] : memref<1x64x32xf32, #tpu.memory_space<vmem>>, vector<1x64x32xf32>
    %1 = vector.shape_cast %0 : vector<1x64x32xf32> to vector<64x32xf32>
    %2 = arith.truncf %1 : vector<64x32xf32> to vector<64x32xbf16>
    %c0_2 = arith.constant 0 : index
    %c0_3 = arith.constant 0 : index
    %3 = vector.load %arg3[%c0_2, %c0_3] : memref<32x32xbf16, #tpu.memory_space<vmem>>, vector<32x32xbf16>
    %cst = arith.constant dense<0.000000e+00> : vector<64x32xf32>
    %4 = tpu.matmul %2, %3, %cst {dimension_numbers = #tpu.dot_dimension_numbers<[1], [0], [0], [1], [0, 0, 1, 1], [], []>} : vector<64x32xbf16>, vector<32x32xbf16>, vector<64x32xf32> -> vector<64x32xf32>
    %c0_4 = arith.constant 0 : index
    %c0_5 = arith.constant 0 : index
    %c0_6 = arith.constant 0 : index
    %5 = vector.load %arg1[%c0_4, %c0_5, %c0_6] : memref<1x64x512xbf16, #tpu.memory_space<vmem>>, vector<1x64x512xbf16>
    %6 = vector.shape_cast %5 : vector<1x64x512xbf16> to vector<64x512xbf16>
    %c0_7 = arith.constant 0 : index
    %c0_8 = arith.constant 0 : index
    %7 = vector.load %arg4[%c0_7, %c0_8] : memref<512x32xbf16, #tpu.memory_space<vmem>>, vector<512x32xbf16>
    %cst_9 = arith.constant dense<0.000000e+00> : vector<64x32xf32>
    %8 = tpu.matmul %6, %7, %cst_9 {dimension_numbers = #tpu.dot_dimension_numbers<[1], [0], [0], [1], [0, 0, 1, 1], [], []>} : vector<64x512xbf16>, vector<512x32xbf16>, vector<64x32xf32> -> vector<64x32xf32>
    %9 = arith.addf %4, %8 : vector<64x32xf32>
    %c0_10 = arith.constant 0 : index
    %c0_11 = arith.constant 0 : index
    %10 = vector.load %arg5[%c0_10, %c0_11] : memref<64x32xf32, #tpu.memory_space<vmem>>, vector<64x32xf32>
    %11 = arith.addf %9, %10 : vector<64x32xf32>
    %cst_12 = arith.constant 0.000000e+00 : f32
    %12 = vector.broadcast %cst_12 : f32 to vector<64x32xf32>
    %13 = arith.maximumf %11, %12 : vector<64x32xf32>
    %14 = arith.truncf %13 : vector<64x32xf32> to vector<64x32xbf16>
    %c0_13 = arith.constant 0 : index
    %c0_14 = arith.constant 0 : index
    %c0_15 = arith.constant 0 : index
    %15 = vector.load %arg6[%c0_13, %c0_14, %c0_15] : memref<2x32x128xbf16, #tpu.memory_space<vmem>>, vector<1x32x128xbf16>
    %16 = vector.shape_cast %15 : vector<1x32x128xbf16> to vector<32x128xbf16>
    %cst_16 = arith.constant dense<0.000000e+00> : vector<64x128xf32>
    %17 = tpu.matmul %14, %16, %cst_16 {dimension_numbers = #tpu.dot_dimension_numbers<[1], [0], [0], [1], [0, 0, 1, 1], [], []>} : vector<64x32xbf16>, vector<32x128xbf16>, vector<64x128xf32> -> vector<64x128xf32>
    %c0_17 = arith.constant 0 : index
    %c0_18 = arith.constant 0 : index
    %c0_19 = arith.constant 0 : index
    %18 = vector.load %arg8[%c0_17, %c0_18, %c0_19] : memref<2x1x128xf32, #tpu.memory_space<vmem>>, vector<1x1x128xf32>
    %19 = vector.shape_cast %18 : vector<1x1x128xf32> to vector<1x128xf32>
    %20 = vector.broadcast %19 : vector<1x128xf32> to vector<64x128xf32>
    %21 = arith.addf %17, %20 : vector<64x128xf32>
    %c0_20 = arith.constant 0 : index
    %c0_21 = arith.constant 0 : index
    %c0_22 = arith.constant 0 : index
    %22 = vector.load %arg7[%c0_20, %c0_21, %c0_22] : memref<2x32x128xbf16, #tpu.memory_space<vmem>>, vector<1x32x128xbf16>
    %23 = vector.shape_cast %22 : vector<1x32x128xbf16> to vector<32x128xbf16>
    %c1 = arith.constant 1 : index
    %c0_23 = arith.constant 0 : index
    %c0_24 = arith.constant 0 : index
    %24 = vector.load %arg7[%c1, %c0_23, %c0_24] : memref<2x32x128xbf16, #tpu.memory_space<vmem>>, vector<1x32x128xbf16>
    %25 = vector.shape_cast %24 : vector<1x32x128xbf16> to vector<32x128xbf16>
    %c1_25 = arith.constant 1 : index
    %c0_26 = arith.constant 0 : index
    %c0_27 = arith.constant 0 : index
    %26 = vector.load %arg6[%c1_25, %c0_26, %c0_27] : memref<2x32x128xbf16, #tpu.memory_space<vmem>>, vector<1x32x128xbf16>
    %27 = vector.shape_cast %26 : vector<1x32x128xbf16> to vector<32x128xbf16>
    %c1_28 = arith.constant 1 : index
    %c0_29 = arith.constant 0 : index
    %c0_30 = arith.constant 0 : index
    %28 = vector.load %arg8[%c1_28, %c0_29, %c0_30] : memref<2x1x128xf32, #tpu.memory_space<vmem>>, vector<1x1x128xf32>
    %29 = vector.shape_cast %28 : vector<1x1x128xf32> to vector<1x128xf32>
    %cst_31 = arith.constant 0.000000e+00 : f32
    %30 = vector.broadcast %cst_31 : f32 to vector<2x32xf32>
    %cst_32 = arith.constant 0.000000e+00 : f32
    %31 = vector.broadcast %cst_32 : f32 to vector<2x32xf32>
    %cst_33 = arith.constant 0.000000e+00 : f32
    %32 = vector.broadcast %cst_33 : f32 to vector<2x32xf32>
    %cst_34 = arith.constant 0.000000e+00 : f32
    %33 = vector.broadcast %cst_34 : f32 to vector<2x32xf32>
    %34 = vector.extract_strided_slice %21 {offsets = [0, 0], sizes = [2, 128], strides = [1, 1]} : vector<64x128xf32> to vector<2x128xf32>
    %35 = arith.truncf %30 : vector<2x32xf32> to vector<2x32xbf16>
    %cst_35 = arith.constant dense<0.000000e+00> : vector<2x128xf32>
    %36 = tpu.matmul %35, %23, %cst_35 {dimension_numbers = #tpu.dot_dimension_numbers<[1], [0], [0], [1], [0, 0, 1, 1], [], []>} : vector<2x32xbf16>, vector<32x128xbf16>, vector<2x128xf32> -> vector<2x128xf32>
    %37 = arith.addf %34, %36 : vector<2x128xf32>
    %38 = arith.negf %37 : vector<2x128xf32>
    %39 = math.exp %38 : vector<2x128xf32>
    %cst_36 = arith.constant 1.000000e+00 : f32
    %40 = vector.broadcast %cst_36 : f32 to vector<2x128xf32>
    %41 = arith.addf %40, %39 : vector<2x128xf32>
    %42 = arith.divf %40, %41 : vector<2x128xf32>
    %43 = math.tanh %37 : vector<2x128xf32>
    %44 = vector.extract_strided_slice %42 {offsets = [0, 0], sizes = [2, 32], strides = [1, 1]} : vector<2x128xf32> to vector<2x32xf32>
    %45 = vector.extract_strided_slice %42 {offsets = [0, 32], sizes = [2, 32], strides = [1, 1]} : vector<2x128xf32> to vector<2x32xf32>
    %46 = vector.extract_strided_slice %43 {offsets = [0, 64], sizes = [2, 32], strides = [1, 1]} : vector<2x128xf32> to vector<2x32xf32>
    %47 = vector.extract_strided_slice %42 {offsets = [0, 96], sizes = [2, 32], strides = [1, 1]} : vector<2x128xf32> to vector<2x32xf32>
    %48 = arith.mulf %32, %45 : vector<2x32xf32>
    %49 = arith.mulf %44, %46 : vector<2x32xf32>
    %50 = arith.addf %48, %49 : vector<2x32xf32>
    %51 = math.tanh %50 : vector<2x32xf32>
    %52 = arith.mulf %47, %51 : vector<2x32xf32>
    %53 = arith.truncf %52 : vector<2x32xf32> to vector<2x32xbf16>
    %cst_37 = arith.constant dense<0.000000e+00> : vector<2x128xf32>
    %54 = tpu.matmul %53, %27, %cst_37 {dimension_numbers = #tpu.dot_dimension_numbers<[1], [0], [0], [1], [0, 0, 1, 1], [], []>} : vector<2x32xbf16>, vector<32x128xbf16>, vector<2x128xf32> -> vector<2x128xf32>
    %55 = arith.truncf %31 : vector<2x32xf32> to vector<2x32xbf16>
    %cst_38 = arith.constant dense<0.000000e+00> : vector<2x128xf32>
    %56 = tpu.matmul %55, %25, %cst_38 {dimension_numbers = #tpu.dot_dimension_numbers<[1], [0], [0], [1], [0, 0, 1, 1], [], []>} : vector<2x32xbf16>, vector<32x128xbf16>, vector<2x128xf32> -> vector<2x128xf32>
    %57 = arith.addf %54, %56 : vector<2x128xf32>
    %58 = vector.broadcast %29 : vector<1x128xf32> to vector<2x128xf32>
    %59 = arith.addf %57, %58 : vector<2x128xf32>
    %60 = arith.negf %59 : vector<2x128xf32>
    %61 = math.exp %60 : vector<2x128xf32>
    %cst_39 = arith.constant 1.000000e+00 : f32
    %62 = vector.broadcast %cst_39 : f32 to vector<2x128xf32>
    %63 = arith.addf %62, %61 : vector<2x128xf32>
    %64 = arith.divf %62, %63 : vector<2x128xf32>
    %65 = math.tanh %59 : vector<2x128xf32>
    %66 = vector.extract_strided_slice %64 {offsets = [0, 0], sizes = [2, 32], strides = [1, 1]} : vector<2x128xf32> to vector<2x32xf32>
    %67 = vector.extract_strided_slice %64 {offsets = [0, 32], sizes = [2, 32], strides = [1, 1]} : vector<2x128xf32> to vector<2x32xf32>
    %68 = vector.extract_strided_slice %65 {offsets = [0, 64], sizes = [2, 32], strides = [1, 1]} : vector<2x128xf32> to vector<2x32xf32>
    %69 = vector.extract_strided_slice %64 {offsets = [0, 96], sizes = [2, 32], strides = [1, 1]} : vector<2x128xf32> to vector<2x32xf32>
    %70 = arith.mulf %33, %67 : vector<2x32xf32>
    %71 = arith.mulf %66, %68 : vector<2x32xf32>
    %72 = arith.addf %70, %71 : vector<2x32xf32>
    %73 = math.tanh %72 : vector<2x32xf32>
    %74 = arith.mulf %69, %73 : vector<2x32xf32>
    %c0_40 = arith.constant 0 : index
    %c0_41 = arith.constant 0 : index
    %c0_42 = arith.constant 0 : index
    %75 = vector.load %arg9[%c0_40, %c0_41, %c0_42] : memref<1x64x32xf32, #tpu.memory_space<vmem>>, vector<1x2x32xf32>
    %76 = vector.shape_cast %75 : vector<1x2x32xf32> to vector<2x32xf32>
    %77 = vector.shape_cast %74 : vector<2x32xf32> to vector<1x2x32xf32>
    tpu.vector_store %arg9[%c0_40, %c0_41, %c0_42], %77 {strides = array<i32>} : memref<1x64x32xf32, #tpu.memory_space<vmem>>, vector<1x2x32xf32>,
    %78 = vector.extract_strided_slice %21 {offsets = [2, 0], sizes = [2, 128], strides = [1, 1]} : vector<64x128xf32> to vector<2x128xf32>
    %79 = arith.truncf %52 : vector<2x32xf32> to vector<2x32xbf16>
    %cst_43 = arith.constant dense<0.000000e+00> : vector<2x128xf32>
    %80 = tpu.matmul %79, %23, %cst_43 {dimension_numbers = #tpu.dot_dimension_numbers<[1], [0], [0], [1], [0, 0, 1, 1], [], []>} : vector<2x32xbf16>, vector<32x128xbf16>, vector<2x128xf32> -> vector<2x128xf32>
    %81 = arith.addf %78, %80 : vector<2x128xf32>
    %82 = arith.negf %81 : vector<2x128xf32>
    %83 = math.exp %82 : vector<2x128xf32>
    %cst_44 = arith.constant 1.000000e+00 : f32
    %84 = vector.broadcast %cst_44 : f32 to vector<2x128xf32>
    %85 = arith.addf %84, %83 : vector<2x128xf32>
    %86 = arith.divf %84, %85 : vector<2x128xf32>
    %87 = math.tanh %81 : vector<2x128xf32>
    %88 = vector.extract_strided_slice %86 {offsets = [0, 0], sizes = [2, 32], strides = [1, 1]} : vector<2x128xf32> to vector<2x32xf32>
    %89 = vector.extract_strided_slice %86 {offsets = [0, 32], sizes = [2, 32], strides = [1, 1]} : vector<2x128xf32> to vector<2x32xf32>
    %90 = vector.extract_strided_slice %87 {offsets = [0, 64], sizes = [2, 32], strides = [1, 1]} : vector<2x128xf32> to vector<2x32xf32>
    %91 = vector.extract_strided_slice %86 {offsets = [0, 96], sizes = [2, 32], strides = [1, 1]} : vector<2x128xf32> to vector<2x32xf32>
    %92 = arith.mulf %50, %89 : vector<2x32xf32>
    %93 = arith.mulf %88, %90 : vector<2x32xf32>
    %94 = arith.addf %92, %93 : vector<2x32xf32>
    %95 = math.tanh %94 : vector<2x32xf32>
    %96 = arith.mulf %91, %95 : vector<2x32xf32>
    %97 = arith.truncf %96 : vector<2x32xf32> to vector<2x32xbf16>
    %cst_45 = arith.constant dense<0.000000e+00> : vector<2x128xf32>
    %98 = tpu.matmul %97, %27, %cst_45 {dimension_numbers = #tpu.dot_dimension_numbers<[1], [0], [0], [1], [0, 0, 1, 1], [], []>} : vector<2x32xbf16>, vector<32x128xbf16>, vector<2x128xf32> -> vector<2x128xf32>
    %99 = arith.truncf %74 : vector<2x32xf32> to vector<2x32xbf16>
    %cst_46 = arith.constant dense<0.000000e+00> : vector<2x128xf32>
    %100 = tpu.matmul %99, %25, %cst_46 {dimension_numbers = #tpu.dot_dimension_numbers<[1], [0], [0], [1], [0, 0, 1, 1], [], []>} : vector<2x32xbf16>, vector<32x128xbf16>, vector<2x128xf32> -> vector<2x128xf32>
    %101 = arith.addf %98, %100 : vector<2x128xf32>
    %102 = vector.broadcast %29 : vector<1x128xf32> to vector<2x128xf32>
    %103 = arith.addf %101, %102 : vector<2x128xf32>
    %104 = arith.negf %103 : vector<2x128xf32>
    %105 = math.exp %104 : vector<2x128xf32>
    %cst_47 = arith.constant 1.000000e+00 : f32
    %106 = vector.broadcast %cst_47 : f32 to vector<2x128xf32>
    %107 = arith.addf %106, %105 : vector<2x128xf32>
    %108 = arith.divf %106, %107 : vector<2x128xf32>
    %109 = math.tanh %103 : vector<2x128xf32>
    %110 = vector.extract_strided_slice %108 {offsets = [0, 0], sizes = [2, 32], strides = [1, 1]} : vector<2x128xf32> to vector<2x32xf32>
    %111 = vector.extract_strided_slice %108 {offsets = [0, 32], sizes = [2, 32], strides = [1, 1]} : vector<2x128xf32> to vector<2x32xf32>
    %112 = vector.extract_strided_slice %109 {offsets = [0, 64], sizes = [2, 32], strides = [1, 1]} : vector<2x128xf32> to vector<2x32xf32>
    %113 = vector.extract_strided_slice %108 {offsets = [0, 96], sizes = [2, 32], strides = [1, 1]} : vector<2x128xf32> to vector<2x32xf32>
    %114 = arith.mulf %72, %111 : vector<2x32xf32>
    %115 = arith.mulf %110, %112 : vector<2x32xf32>
    %116 = arith.addf %114, %115 : vector<2x32xf32>
    %117 = math.tanh %116 : vector<2x32xf32>
    %118 = arith.mulf %113, %117 : vector<2x32xf32>
    %c0_48 = arith.constant 0 : index
    %c2 = arith.constant 2 : index
    %c0_49 = arith.constant 0 : index
    %119 = vector.load %arg9[%c0_48, %c2, %c0_49] : memref<1x64x32xf32, #tpu.memory_space<vmem>>, vector<1x2x32xf32>
    %120 = vector.shape_cast %119 : vector<1x2x32xf32> to vector<2x32xf32>
    %121 = vector.shape_cast %118 : vector<2x32xf32> to vector<1x2x32xf32>
    tpu.vector_store %arg9[%c0_48, %c2, %c0_49], %121 {strides = array<i32>} : memref<1x64x32xf32, #tpu.memory_space<vmem>>, vector<1x2x32xf32>,
    %122 = vector.extract_strided_slice %21 {offsets = [4, 0], sizes = [2, 128], strides = [1, 1]} : vector<64x128xf32> to vector<2x128xf32>
    %123 = arith.truncf %96 : vector<2x32xf32> to vector<2x32xbf16>
    %cst_50 = arith.constant dense<0.000000e+00> : vector<2x128xf32>
    %124 = tpu.matmul %123, %23, %cst_50 {dimension_numbers = #tpu.dot_dimension_numbers<[1], [0], [0], [1], [0, 0, 1, 1], [], []>} : vector<2x32xbf16>, vector<32x128xbf16>, vector<2x128xf32> -> vector<2x128xf32>
    %125 = arith.addf %122, %124 : vector<2x128xf32>
    %126 = arith.negf %125 : vector<2x128xf32>
    %127 = math.exp %126 : vector<2x128xf32>
    %cst_51 = arith.constant 1.000000e+00 : f32
    %128 = vector.broadcast %cst_51 : f32 to vector<2x128xf32>
    %129 = arith.addf %128, %127 : vector<2x128xf32>
    %130 = arith.divf %128, %129 : vector<2x128xf32>
    %131 = math.tanh %125 : vector<2x128xf32>
    %132 = vector.extract_strided_slice %130 {offsets = [0, 0], sizes = [2, 32], strides = [1, 1]} : vector<2x128xf32> to vector<2x32xf32>
    %133 = vector.extract_strided_slice %130 {offsets = [0, 32], sizes = [2, 32], strides = [1, 1]} : vector<2x128xf32> to vector<2x32xf32>
    %134 = vector.extract_strided_slice %131 {offsets = [0, 64], sizes = [2, 32], strides = [1, 1]} : vector<2x128xf32> to vector<2x32xf32>
    %135 = vector.extract_strided_slice %130 {offsets = [0, 96], sizes = [2, 32], strides = [1, 1]} : vector<2x128xf32> to vector<2x32xf32>
    %136 = arith.mulf %94, %133 : vector<2x32xf32>
    %137 = arith.mulf %132, %134 : vector<2x32xf32>
    %138 = arith.addf %136, %137 : vector<2x32xf32>
    %139 = math.tanh %138 : vector<2x32xf32>
    %140 = arith.mulf %135, %139 : vector<2x32xf32>
    %141 = arith.truncf %140 : vector<2x32xf32> to vector<2x32xbf16>
    %cst_52 = arith.constant dense<0.000000e+00> : vector<2x128xf32>
    %142 = tpu.matmul %141, %27, %cst_52 {dimension_numbers = #tpu.dot_dimension_numbers<[1], [0], [0], [1], [0, 0, 1, 1], [], []>} : vector<2x32xbf16>, vector<32x128xbf16>, vector<2x128xf32> -> vector<2x128xf32>
    %143 = arith.truncf %118 : vector<2x32xf32> to vector<2x32xbf16>
    %cst_53 = arith.constant dense<0.000000e+00> : vector<2x128xf32>
    %144 = tpu.matmul %143, %25, %cst_53 {dimension_numbers = #tpu.dot_dimension_numbers<[1], [0], [0], [1], [0, 0, 1, 1], [], []>} : vector<2x32xbf16>, vector<32x128xbf16>, vector<2x128xf32> -> vector<2x128xf32>
    %145 = arith.addf %142, %144 : vector<2x128xf32>
    %146 = vector.broadcast %29 : vector<1x128xf32> to vector<2x128xf32>
    %147 = arith.addf %145, %146 : vector<2x128xf32>
    %148 = arith.negf %147 : vector<2x128xf32>
    %149 = math.exp %148 : vector<2x128xf32>
    %cst_54 = arith.constant 1.000000e+00 : f32
    %150 = vector.broadcast %cst_54 : f32 to vector<2x128xf32>
    %151 = arith.addf %150, %149 : vector<2x128xf32>
    %152 = arith.divf %150, %151 : vector<2x128xf32>
    %153 = math.tanh %147 : vector<2x128xf32>
    %154 = vector.extract_strided_slice %152 {offsets = [0, 0], sizes = [2, 32], strides = [1, 1]} : vector<2x128xf32> to vector<2x32xf32>
    %155 = vector.extract_strided_slice %152 {offsets = [0, 32], sizes = [2, 32], strides = [1, 1]} : vector<2x128xf32> to vector<2x32xf32>
    %156 = vector.extract_strided_slice %153 {offsets = [0, 64], sizes = [2, 32], strides = [1, 1]} : vector<2x128xf32> to vector<2x32xf32>
    %157 = vector.extract_strided_slice %152 {offsets = [0, 96], sizes = [2, 32], strides = [1, 1]} : vector<2x128xf32> to vector<2x32xf32>
    %158 = arith.mulf %116, %155 : vector<2x32xf32>
    %159 = arith.mulf %154, %156 : vector<2x32xf32>
    %160 = arith.addf %158, %159 : vector<2x32xf32>
    %161 = math.tanh %160 : vector<2x32xf32>
    %162 = arith.mulf %157, %161 : vector<2x32xf32>
    %c0_55 = arith.constant 0 : index
    %c4 = arith.constant 4 : index
    %c0_56 = arith.constant 0 : index
    %163 = vector.load %arg9[%c0_55, %c4, %c0_56] : memref<1x64x32xf32, #tpu.memory_space<vmem>>, vector<1x2x32xf32>
    %164 = vector.shape_cast %163 : vector<1x2x32xf32> to vector<2x32xf32>
    %165 = vector.shape_cast %162 : vector<2x32xf32> to vector<1x2x32xf32>
    tpu.vector_store %arg9[%c0_55, %c4, %c0_56], %165 {strides = array<i32>} : memref<1x64x32xf32, #tpu.memory_space<vmem>>, vector<1x2x32xf32>,
    %166 = vector.extract_strided_slice %21 {offsets = [6, 0], sizes = [2, 128], strides = [1, 1]} : vector<64x128xf32> to vector<2x128xf32>
    %167 = arith.truncf %140 : vector<2x32xf32> to vector<2x32xbf16>
    %cst_57 = arith.constant dense<0.000000e+00> : vector<2x128xf32>
    %168 = tpu.matmul %167, %23, %cst_57 {dimension_numbers = #tpu.dot_dimension_numbers<[1], [0], [0], [1], [0, 0, 1, 1], [], []>} : vector<2x32xbf16>, vector<32x128xbf16>, vector<2x128xf32> -> vector<2x128xf32>
    %169 = arith.addf %166, %168 : vector<2x128xf32>
    %170 = arith.negf %169 : vector<2x128xf32>
    %171 = math.exp %170 : vector<2x128xf32>
    %cst_58 = arith.constant 1.000000e+00 : f32
    %172 = vector.broadcast %cst_58 : f32 to vector<2x128xf32>
    %173 = arith.addf %172, %171 : vector<2x128xf32>
    %174 = arith.divf %172, %173 : vector<2x128xf32>
    %175 = math.tanh %169 : vector<2x128xf32>
    %176 = vector.extract_strided_slice %174 {offsets = [0, 0], sizes = [2, 32], strides = [1, 1]} : vector<2x128xf32> to vector<2x32xf32>
    %177 = vector.extract_strided_slice %174 {offsets = [0, 32], sizes = [2, 32], strides = [1, 1]} : vector<2x128xf32> to vector<2x32xf32>
    %178 = vector.extract_strided_slice %175 {offsets = [0, 64], sizes = [2, 32], strides = [1, 1]} : vector<2x128xf32> to vector<2x32xf32>
    %179 = vector.extract_strided_slice %174 {offsets = [0, 96], sizes = [2, 32], strides = [1, 1]} : vector<2x128xf32> to vector<2x32xf32>
    %180 = arith.mulf %138, %177 : vector<2x32xf32>
    %181 = arith.mulf %176, %178 : vector<2x32xf32>
    %182 = arith.addf %180, %181 : vector<2x32xf32>
    %183 = math.tanh %182 : vector<2x32xf32>
    %184 = arith.mulf %179, %183 : vector<2x32xf32>
    %185 = arith.truncf %184 : vector<2x32xf32> to vector<2x32xbf16>
    %cst_59 = arith.constant dense<0.000000e+00> : vector<2x128xf32>
    %186 = tpu.matmul %185, %27, %cst_59 {dimension_numbers = #tpu.dot_dimension_numbers<[1], [0], [0], [1], [0, 0, 1, 1], [], []>} : vector<2x32xbf16>, vector<32x128xbf16>, vector<2x128xf32> -> vector<2x128xf32>
    %187 = arith.truncf %162 : vector<2x32xf32> to vector<2x32xbf16>
    %cst_60 = arith.constant dense<0.000000e+00> : vector<2x128xf32>
    %188 = tpu.matmul %187, %25, %cst_60 {dimension_numbers = #tpu.dot_dimension_numbers<[1], [0], [0], [1], [0, 0, 1, 1], [], []>} : vector<2x32xbf16>, vector<32x128xbf16>, vector<2x128xf32> -> vector<2x128xf32>
    %189 = arith.addf %186, %188 : vector<2x128xf32>
    %190 = vector.broadcast %29 : vector<1x128xf32> to vector<2x128xf32>
    %191 = arith.addf %189, %190 : vector<2x128xf32>
    %192 = arith.negf %191 : vector<2x128xf32>
    %193 = math.exp %192 : vector<2x128xf32>
    %cst_61 = arith.constant 1.000000e+00 : f32
    %194 = vector.broadcast %cst_61 : f32 to vector<2x128xf32>
    %195 = arith.addf %194, %193 : vector<2x128xf32>
    %196 = arith.divf %194, %195 : vector<2x128xf32>
    %197 = math.tanh %191 : vector<2x128xf32>
    %198 = vector.extract_strided_slice %196 {offsets = [0, 0], sizes = [2, 32], strides = [1, 1]} : vector<2x128xf32> to vector<2x32xf32>
    %199 = vector.extract_strided_slice %196 {offsets = [0, 32], sizes = [2, 32], strides = [1, 1]} : vector<2x128xf32> to vector<2x32xf32>
    %200 = vector.extract_strided_slice %197 {offsets = [0, 64], sizes = [2, 32], strides = [1, 1]} : vector<2x128xf32> to vector<2x32xf32>
    %201 = vector.extract_strided_slice %196 {offsets = [0, 96], sizes = [2, 32], strides = [1, 1]} : vector<2x128xf32> to vector<2x32xf32>
    %202 = arith.mulf %160, %199 : vector<2x32xf32>
    %203 = arith.mulf %198, %200 : vector<2x32xf32>
    %204 = arith.addf %202, %203 : vector<2x32xf32>
    %205 = math.tanh %204 : vector<2x32xf32>
    %206 = arith.mulf %201, %205 : vector<2x32xf32>
    %c0_62 = arith.constant 0 : index
    %c6 = arith.constant 6 : index
    %c0_63 = arith.constant 0 : index
    %207 = vector.load %arg9[%c0_62, %c6, %c0_63] : memref<1x64x32xf32, #tpu.memory_space<vmem>>, vector<1x2x32xf32>
    %208 = vector.shape_cast %207 : vector<1x2x32xf32> to vector<2x32xf32>
    %209 = vector.shape_cast %206 : vector<2x32xf32> to vector<1x2x32xf32>
    tpu.vector_store %arg9[%c0_62, %c6, %c0_63], %209 {strides = array<i32>} : memref<1x64x32xf32, #tpu.memory_space<vmem>>, vector<1x2x32xf32>,
    %210 = vector.extract_strided_slice %21 {offsets = [8, 0], sizes = [2, 128], strides = [1, 1]} : vector<64x128xf32> to vector<2x128xf32>
    %211 = arith.truncf %184 : vector<2x32xf32> to vector<2x32xbf16>
    %cst_64 = arith.constant dense<0.000000e+00> : vector<2x128xf32>
    %212 = tpu.matmul %211, %23, %cst_64 {dimension_numbers = #tpu.dot_dimension_numbers<[1], [0], [0], [1], [0, 0, 1, 1], [], []>} : vector<2x32xbf16>, vector<32x128xbf16>, vector<2x128xf32> -> vector<2x128xf32>
    %213 = arith.addf %210, %212 : vector<2x128xf32>
    %214 = arith.negf %213 : vector<2x128xf32>
    %215 = math.exp %214 : vector<2x128xf32>
    %cst_65 = arith.constant 1.000000e+00 : f32
    %216 = vector.broadcast %cst_65 : f32 to vector<2x128xf32>
    %217 = arith.addf %216, %215 : vector<2x128xf32>
    %218 = arith.divf %216, %217 : vector<2x128xf32>
    %219 = math.tanh %213 : vector<2x128xf32>
    %220 = vector.extract_strided_slice %218 {offsets = [0, 0], sizes = [2, 32], strides = [1, 1]} : vector<2x128xf32> to vector<2x32xf32>
    %221 = vector.extract_strided_slice %218 {offsets = [0, 32], sizes = [2, 32], strides = [1, 1]} : vector<2x128xf32> to vector<2x32xf32>
    %222 = vector.extract_strided_slice %219 {offsets = [0, 64], sizes = [2, 32], strides = [1, 1]} : vector<2x128xf32> to vector<2x32xf32>
    %223 = vector.extract_strided_slice %218 {offsets = [0, 96], sizes = [2, 32], strides = [1, 1]} : vector<2x128xf32> to vector<2x32xf32>
    %224 = arith.mulf %182, %221 : vector<2x32xf32>
    %225 = arith.mulf %220, %222 : vector<2x32xf32>
    %226 = arith.addf %224, %225 : vector<2x32xf32>
    %227 = math.tanh %226 : vector<2x32xf32>
    %228 = arith.mulf %223, %227 : vector<2x32xf32>
    %229 = arith.truncf %228 : vector<2x32xf32> to vector<2x32xbf16>
    %cst_66 = arith.constant dense<0.000000e+00> : vector<2x128xf32>
    %230 = tpu.matmul %229, %27, %cst_66 {dimension_numbers = #tpu.dot_dimension_numbers<[1], [0], [0], [1], [0, 0, 1, 1], [], []>} : vector<2x32xbf16>, vector<32x128xbf16>, vector<2x128xf32> -> vector<2x128xf32>
    %231 = arith.truncf %206 : vector<2x32xf32> to vector<2x32xbf16>
    %cst_67 = arith.constant dense<0.000000e+00> : vector<2x128xf32>
    %232 = tpu.matmul %231, %25, %cst_67 {dimension_numbers = #tpu.dot_dimension_numbers<[1], [0], [0], [1], [0, 0, 1, 1], [], []>} : vector<2x32xbf16>, vector<32x128xbf16>, vector<2x128xf32> -> vector<2x128xf32>
    %233 = arith.addf %230, %232 : vector<2x128xf32>
    %234 = vector.broadcast %29 : vector<1x128xf32> to vector<2x128xf32>
    %235 = arith.addf %233, %234 : vector<2x128xf32>
    %236 = arith.negf %235 : vector<2x128xf32>
    %237 = math.exp %236 : vector<2x128xf32>
    %cst_68 = arith.constant 1.000000e+00 : f32
    %238 = vector.broadcast %cst_68 : f32 to vector<2x128xf32>
    %239 = arith.addf %238, %237 : vector<2x128xf32>
    %240 = arith.divf %238, %239 : vector<2x128xf32>
    %241 = math.tanh %235 : vector<2x128xf32>
    %242 = vector.extract_strided_slice %240 {offsets = [0, 0], sizes = [2, 32], strides = [1, 1]} : vector<2x128xf32> to vector<2x32xf32>
    %243 = vector.extract_strided_slice %240 {offsets = [0, 32], sizes = [2, 32], strides = [1, 1]} : vector<2x128xf32> to vector<2x32xf32>
    %244 = vector.extract_strided_slice %241 {offsets = [0, 64], sizes = [2, 32], strides = [1, 1]} : vector<2x128xf32> to vector<2x32xf32>
    %245 = vector.extract_strided_slice %240 {offsets = [0, 96], sizes = [2, 32], strides = [1, 1]} : vector<2x128xf32> to vector<2x32xf32>
    %246 = arith.mulf %204, %243 : vector<2x32xf32>
    %247 = arith.mulf %242, %244 : vector<2x32xf32>
    %248 = arith.addf %246, %247 : vector<2x32xf32>
    %249 = math.tanh %248 : vector<2x32xf32>
    %250 = arith.mulf %245, %249 : vector<2x32xf32>
    %c0_69 = arith.constant 0 : index
    %c8 = arith.constant 8 : index
    %c0_70 = arith.constant 0 : index
    %251 = vector.load %arg9[%c0_69, %c8, %c0_70] : memref<1x64x32xf32, #tpu.memory_space<vmem>>, vector<1x2x32xf32>
    %252 = vector.shape_cast %251 : vector<1x2x32xf32> to vector<2x32xf32>
    %253 = vector.shape_cast %250 : vector<2x32xf32> to vector<1x2x32xf32>
    tpu.vector_store %arg9[%c0_69, %c8, %c0_70], %253 {strides = array<i32>} : memref<1x64x32xf32, #tpu.memory_space<vmem>>, vector<1x2x32xf32>,
    %254 = vector.extract_strided_slice %21 {offsets = [10, 0], sizes = [2, 128], strides = [1, 1]} : vector<64x128xf32> to vector<2x128xf32>
    %255 = arith.truncf %228 : vector<2x32xf32> to vector<2x32xbf16>
    %cst_71 = arith.constant dense<0.000000e+00> : vector<2x128xf32>
    %256 = tpu.matmul %255, %23, %cst_71 {dimension_numbers = #tpu.dot_dimension_numbers<[1], [0], [0], [1], [0, 0, 1, 1], [], []>} : vector<2x32xbf16>, vector<32x128xbf16>, vector<2x128xf32> -> vector<2x128xf32>
    %257 = arith.addf %254, %256 : vector<2x128xf32>
    %258 = arith.negf %257 : vector<2x128xf32>
    %259 = math.exp %258 : vector<2x128xf32>
    %cst_72 = arith.constant 1.000000e+00 : f32
    %260 = vector.broadcast %cst_72 : f32 to vector<2x128xf32>
    %261 = arith.addf %260, %259 : vector<2x128xf32>
    %262 = arith.divf %260, %261 : vector<2x128xf32>
    %263 = math.tanh %257 : vector<2x128xf32>
    %264 = vector.extract_strided_slice %262 {offsets = [0, 0], sizes = [2, 32], strides = [1, 1]} : vector<2x128xf32> to vector<2x32xf32>
    %265 = vector.extract_strided_slice %262 {offsets = [0, 32], sizes = [2, 32], strides = [1, 1]} : vector<2x128xf32> to vector<2x32xf32>
    %266 = vector.extract_strided_slice %263 {offsets = [0, 64], sizes = [2, 32], strides = [1, 1]} : vector<2x128xf32> to vector<2x32xf32>
    %267 = vector.extract_strided_slice %262 {offsets = [0, 96], sizes = [2, 32], strides = [1, 1]} : vector<2x128xf32> to vector<2x32xf32>
    %268 = arith.mulf %226, %265 : vector<2x32xf32>
    %269 = arith.mulf %264, %266 : vector<2x32xf32>
    %270 = arith.addf %268, %269 : vector<2x32xf32>
    %271 = math.tanh %270 : vector<2x32xf32>
    %272 = arith.mulf %267, %271 : vector<2x32xf32>
    %273 = arith.truncf %272 : vector<2x32xf32> to vector<2x32xbf16>
    %cst_73 = arith.constant dense<0.000000e+00> : vector<2x128xf32>
    %274 = tpu.matmul %273, %27, %cst_73 {dimension_numbers = #tpu.dot_dimension_numbers<[1], [0], [0], [1], [0, 0, 1, 1], [], []>} : vector<2x32xbf16>, vector<32x128xbf16>, vector<2x128xf32> -> vector<2x128xf32>
    %275 = arith.truncf %250 : vector<2x32xf32> to vector<2x32xbf16>
    %cst_74 = arith.constant dense<0.000000e+00> : vector<2x128xf32>
    %276 = tpu.matmul %275, %25, %cst_74 {dimension_numbers = #tpu.dot_dimension_numbers<[1], [0], [0], [1], [0, 0, 1, 1], [], []>} : vector<2x32xbf16>, vector<32x128xbf16>, vector<2x128xf32> -> vector<2x128xf32>
    %277 = arith.addf %274, %276 : vector<2x128xf32>
    %278 = vector.broadcast %29 : vector<1x128xf32> to vector<2x128xf32>
    %279 = arith.addf %277, %278 : vector<2x128xf32>
    %280 = arith.negf %279 : vector<2x128xf32>
    %281 = math.exp %280 : vector<2x128xf32>
    %cst_75 = arith.constant 1.000000e+00 : f32
    %282 = vector.broadcast %cst_75 : f32 to vector<2x128xf32>
    %283 = arith.addf %282, %281 : vector<2x128xf32>
    %284 = arith.divf %282, %283 : vector<2x128xf32>
    %285 = math.tanh %279 : vector<2x128xf32>
    %286 = vector.extract_strided_slice %284 {offsets = [0, 0], sizes = [2, 32], strides = [1, 1]} : vector<2x128xf32> to vector<2x32xf32>
    %287 = vector.extract_strided_slice %284 {offsets = [0, 32], sizes = [2, 32], strides = [1, 1]} : vector<2x128xf32> to vector<2x32xf32>
    %288 = vector.extract_strided_slice %285 {offsets = [0, 64], sizes = [2, 32], strides = [1, 1]} : vector<2x128xf32> to vector<2x32xf32>
    %289 = vector.extract_strided_slice %284 {offsets = [0, 96], sizes = [2, 32], strides = [1, 1]} : vector<2x128xf32> to vector<2x32xf32>
    %290 = arith.mulf %248, %287 : vector<2x32xf32>
    %291 = arith.mulf %286, %288 : vector<2x32xf32>
    %292 = arith.addf %290, %291 : vector<2x32xf32>
    %293 = math.tanh %292 : vector<2x32xf32>
    %294 = arith.mulf %289, %293 : vector<2x32xf32>
    %c0_76 = arith.constant 0 : index
    %c10 = arith.constant 10 : index
    %c0_77 = arith.constant 0 : index
    %295 = vector.load %arg9[%c0_76, %c10, %c0_77] : memref<1x64x32xf32, #tpu.memory_space<vmem>>, vector<1x2x32xf32>
    %296 = vector.shape_cast %295 : vector<1x2x32xf32> to vector<2x32xf32>
    %297 = vector.shape_cast %294 : vector<2x32xf32> to vector<1x2x32xf32>
    tpu.vector_store %arg9[%c0_76, %c10, %c0_77], %297 {strides = array<i32>} : memref<1x64x32xf32, #tpu.memory_space<vmem>>, vector<1x2x32xf32>,
    %298 = vector.extract_strided_slice %21 {offsets = [12, 0], sizes = [2, 128], strides = [1, 1]} : vector<64x128xf32> to vector<2x128xf32>
    %299 = arith.truncf %272 : vector<2x32xf32> to vector<2x32xbf16>
    %cst_78 = arith.constant dense<0.000000e+00> : vector<2x128xf32>
    %300 = tpu.matmul %299, %23, %cst_78 {dimension_numbers = #tpu.dot_dimension_numbers<[1], [0], [0], [1], [0, 0, 1, 1], [], []>} : vector<2x32xbf16>, vector<32x128xbf16>, vector<2x128xf32> -> vector<2x128xf32>
    %301 = arith.addf %298, %300 : vector<2x128xf32>
    %302 = arith.negf %301 : vector<2x128xf32>
    %303 = math.exp %302 : vector<2x128xf32>
    %cst_79 = arith.constant 1.000000e+00 : f32
    %304 = vector.broadcast %cst_79 : f32 to vector<2x128xf32>
    %305 = arith.addf %304, %303 : vector<2x128xf32>
    %306 = arith.divf %304, %305 : vector<2x128xf32>
    %307 = math.tanh %301 : vector<2x128xf32>
    %308 = vector.extract_strided_slice %306 {offsets = [0, 0], sizes = [2, 32], strides = [1, 1]} : vector<2x128xf32> to vector<2x32xf32>
    %309 = vector.extract_strided_slice %306 {offsets = [0, 32], sizes = [2, 32], strides = [1, 1]} : vector<2x128xf32> to vector<2x32xf32>
    %310 = vector.extract_strided_slice %307 {offsets = [0, 64], sizes = [2, 32], strides = [1, 1]} : vector<2x128xf32> to vector<2x32xf32>
    %311 = vector.extract_strided_slice %306 {offsets = [0, 96], sizes = [2, 32], strides = [1, 1]} : vector<2x128xf32> to vector<2x32xf32>
    %312 = arith.mulf %270, %309 : vector<2x32xf32>
    %313 = arith.mulf %308, %310 : vector<2x32xf32>
    %314 = arith.addf %312, %313 : vector<2x32xf32>
    %315 = math.tanh %314 : vector<2x32xf32>
    %316 = arith.mulf %311, %315 : vector<2x32xf32>
    %317 = arith.truncf %316 : vector<2x32xf32> to vector<2x32xbf16>
    %cst_80 = arith.constant dense<0.000000e+00> : vector<2x128xf32>
    %318 = tpu.matmul %317, %27, %cst_80 {dimension_numbers = #tpu.dot_dimension_numbers<[1], [0], [0], [1], [0, 0, 1, 1], [], []>} : vector<2x32xbf16>, vector<32x128xbf16>, vector<2x128xf32> -> vector<2x128xf32>
    %319 = arith.truncf %294 : vector<2x32xf32> to vector<2x32xbf16>
    %cst_81 = arith.constant dense<0.000000e+00> : vector<2x128xf32>
    %320 = tpu.matmul %319, %25, %cst_81 {dimension_numbers = #tpu.dot_dimension_numbers<[1], [0], [0], [1], [0, 0, 1, 1], [], []>} : vector<2x32xbf16>, vector<32x128xbf16>, vector<2x128xf32> -> vector<2x128xf32>
    %321 = arith.addf %318, %320 : vector<2x128xf32>
    %322 = vector.broadcast %29 : vector<1x128xf32> to vector<2x128xf32>
    %323 = arith.addf %321, %322 : vector<2x128xf32>
    %324 = arith.negf %323 : vector<2x128xf32>
    %325 = math.exp %324 : vector<2x128xf32>
    %cst_82 = arith.constant 1.000000e+00 : f32
    %326 = vector.broadcast %cst_82 : f32 to vector<2x128xf32>
    %327 = arith.addf %326, %325 : vector<2x128xf32>
    %328 = arith.divf %326, %327 : vector<2x128xf32>
    %329 = math.tanh %323 : vector<2x128xf32>
    %330 = vector.extract_strided_slice %328 {offsets = [0, 0], sizes = [2, 32], strides = [1, 1]} : vector<2x128xf32> to vector<2x32xf32>
    %331 = vector.extract_strided_slice %328 {offsets = [0, 32], sizes = [2, 32], strides = [1, 1]} : vector<2x128xf32> to vector<2x32xf32>
    %332 = vector.extract_strided_slice %329 {offsets = [0, 64], sizes = [2, 32], strides = [1, 1]} : vector<2x128xf32> to vector<2x32xf32>
    %333 = vector.extract_strided_slice %328 {offsets = [0, 96], sizes = [2, 32], strides = [1, 1]} : vector<2x128xf32> to vector<2x32xf32>
    %334 = arith.mulf %292, %331 : vector<2x32xf32>
    %335 = arith.mulf %330, %332 : vector<2x32xf32>
    %336 = arith.addf %334, %335 : vector<2x32xf32>
    %337 = math.tanh %336 : vector<2x32xf32>
    %338 = arith.mulf %333, %337 : vector<2x32xf32>
    %c0_83 = arith.constant 0 : index
    %c12 = arith.constant 12 : index
    %c0_84 = arith.constant 0 : index
    %339 = vector.load %arg9[%c0_83, %c12, %c0_84] : memref<1x64x32xf32, #tpu.memory_space<vmem>>, vector<1x2x32xf32>
    %340 = vector.shape_cast %339 : vector<1x2x32xf32> to vector<2x32xf32>
    %341 = vector.shape_cast %338 : vector<2x32xf32> to vector<1x2x32xf32>
    tpu.vector_store %arg9[%c0_83, %c12, %c0_84], %341 {strides = array<i32>} : memref<1x64x32xf32, #tpu.memory_space<vmem>>, vector<1x2x32xf32>,
    %342 = vector.extract_strided_slice %21 {offsets = [14, 0], sizes = [2, 128], strides = [1, 1]} : vector<64x128xf32> to vector<2x128xf32>
    %343 = arith.truncf %316 : vector<2x32xf32> to vector<2x32xbf16>
    %cst_85 = arith.constant dense<0.000000e+00> : vector<2x128xf32>
    %344 = tpu.matmul %343, %23, %cst_85 {dimension_numbers = #tpu.dot_dimension_numbers<[1], [0], [0], [1], [0, 0, 1, 1], [], []>} : vector<2x32xbf16>, vector<32x128xbf16>, vector<2x128xf32> -> vector<2x128xf32>
    %345 = arith.addf %342, %344 : vector<2x128xf32>
    %346 = arith.negf %345 : vector<2x128xf32>
    %347 = math.exp %346 : vector<2x128xf32>
    %cst_86 = arith.constant 1.000000e+00 : f32
    %348 = vector.broadcast %cst_86 : f32 to vector<2x128xf32>
    %349 = arith.addf %348, %347 : vector<2x128xf32>
    %350 = arith.divf %348, %349 : vector<2x128xf32>
    %351 = math.tanh %345 : vector<2x128xf32>
    %352 = vector.extract_strided_slice %350 {offsets = [0, 0], sizes = [2, 32], strides = [1, 1]} : vector<2x128xf32> to vector<2x32xf32>
    %353 = vector.extract_strided_slice %350 {offsets = [0, 32], sizes = [2, 32], strides = [1, 1]} : vector<2x128xf32> to vector<2x32xf32>
    %354 = vector.extract_strided_slice %351 {offsets = [0, 64], sizes = [2, 32], strides = [1, 1]} : vector<2x128xf32> to vector<2x32xf32>
    %355 = vector.extract_strided_slice %350 {offsets = [0, 96], sizes = [2, 32], strides = [1, 1]} : vector<2x128xf32> to vector<2x32xf32>
    %356 = arith.mulf %314, %353 : vector<2x32xf32>
    %357 = arith.mulf %352, %354 : vector<2x32xf32>
    %358 = arith.addf %356, %357 : vector<2x32xf32>
    %359 = math.tanh %358 : vector<2x32xf32>
    %360 = arith.mulf %355, %359 : vector<2x32xf32>
    %361 = arith.truncf %360 : vector<2x32xf32> to vector<2x32xbf16>
    %cst_87 = arith.constant dense<0.000000e+00> : vector<2x128xf32>
    %362 = tpu.matmul %361, %27, %cst_87 {dimension_numbers = #tpu.dot_dimension_numbers<[1], [0], [0], [1], [0, 0, 1, 1], [], []>} : vector<2x32xbf16>, vector<32x128xbf16>, vector<2x128xf32> -> vector<2x128xf32>
    %363 = arith.truncf %338 : vector<2x32xf32> to vector<2x32xbf16>
    %cst_88 = arith.constant dense<0.000000e+00> : vector<2x128xf32>
    %364 = tpu.matmul %363, %25, %cst_88 {dimension_numbers = #tpu.dot_dimension_numbers<[1], [0], [0], [1], [0, 0, 1, 1], [], []>} : vector<2x32xbf16>, vector<32x128xbf16>, vector<2x128xf32> -> vector<2x128xf32>
    %365 = arith.addf %362, %364 : vector<2x128xf32>
    %366 = vector.broadcast %29 : vector<1x128xf32> to vector<2x128xf32>
    %367 = arith.addf %365, %366 : vector<2x128xf32>
    %368 = arith.negf %367 : vector<2x128xf32>
    %369 = math.exp %368 : vector<2x128xf32>
    %cst_89 = arith.constant 1.000000e+00 : f32
    %370 = vector.broadcast %cst_89 : f32 to vector<2x128xf32>
    %371 = arith.addf %370, %369 : vector<2x128xf32>
    %372 = arith.divf %370, %371 : vector<2x128xf32>
    %373 = math.tanh %367 : vector<2x128xf32>
    %374 = vector.extract_strided_slice %372 {offsets = [0, 0], sizes = [2, 32], strides = [1, 1]} : vector<2x128xf32> to vector<2x32xf32>
    %375 = vector.extract_strided_slice %372 {offsets = [0, 32], sizes = [2, 32], strides = [1, 1]} : vector<2x128xf32> to vector<2x32xf32>
    %376 = vector.extract_strided_slice %373 {offsets = [0, 64], sizes = [2, 32], strides = [1, 1]} : vector<2x128xf32> to vector<2x32xf32>
    %377 = vector.extract_strided_slice %372 {offsets = [0, 96], sizes = [2, 32], strides = [1, 1]} : vector<2x128xf32> to vector<2x32xf32>
    %378 = arith.mulf %336, %375 : vector<2x32xf32>
    %379 = arith.mulf %374, %376 : vector<2x32xf32>
    %380 = arith.addf %378, %379 : vector<2x32xf32>
    %381 = math.tanh %380 : vector<2x32xf32>
    %382 = arith.mulf %377, %381 : vector<2x32xf32>
    %c0_90 = arith.constant 0 : index
    %c14 = arith.constant 14 : index
    %c0_91 = arith.constant 0 : index
    %383 = vector.load %arg9[%c0_90, %c14, %c0_91] : memref<1x64x32xf32, #tpu.memory_space<vmem>>, vector<1x2x32xf32>
    %384 = vector.shape_cast %383 : vector<1x2x32xf32> to vector<2x32xf32>
    %385 = vector.shape_cast %382 : vector<2x32xf32> to vector<1x2x32xf32>
    tpu.vector_store %arg9[%c0_90, %c14, %c0_91], %385 {strides = array<i32>} : memref<1x64x32xf32, #tpu.memory_space<vmem>>, vector<1x2x32xf32>,
    %386 = vector.extract_strided_slice %21 {offsets = [16, 0], sizes = [2, 128], strides = [1, 1]} : vector<64x128xf32> to vector<2x128xf32>
    %387 = arith.truncf %360 : vector<2x32xf32> to vector<2x32xbf16>
    %cst_92 = arith.constant dense<0.000000e+00> : vector<2x128xf32>
    %388 = tpu.matmul %387, %23, %cst_92 {dimension_numbers = #tpu.dot_dimension_numbers<[1], [0], [0], [1], [0, 0, 1, 1], [], []>} : vector<2x32xbf16>, vector<32x128xbf16>, vector<2x128xf32> -> vector<2x128xf32>
    %389 = arith.addf %386, %388 : vector<2x128xf32>
    %390 = arith.negf %389 : vector<2x128xf32>
    %391 = math.exp %390 : vector<2x128xf32>
    %cst_93 = arith.constant 1.000000e+00 : f32
    %392 = vector.broadcast %cst_93 : f32 to vector<2x128xf32>
    %393 = arith.addf %392, %391 : vector<2x128xf32>
    %394 = arith.divf %392, %393 : vector<2x128xf32>
    %395 = math.tanh %389 : vector<2x128xf32>
    %396 = vector.extract_strided_slice %394 {offsets = [0, 0], sizes = [2, 32], strides = [1, 1]} : vector<2x128xf32> to vector<2x32xf32>
    %397 = vector.extract_strided_slice %394 {offsets = [0, 32], sizes = [2, 32], strides = [1, 1]} : vector<2x128xf32> to vector<2x32xf32>
    %398 = vector.extract_strided_slice %395 {offsets = [0, 64], sizes = [2, 32], strides = [1, 1]} : vector<2x128xf32> to vector<2x32xf32>
    %399 = vector.extract_strided_slice %394 {offsets = [0, 96], sizes = [2, 32], strides = [1, 1]} : vector<2x128xf32> to vector<2x32xf32>
    %400 = arith.mulf %358, %397 : vector<2x32xf32>
    %401 = arith.mulf %396, %398 : vector<2x32xf32>
    %402 = arith.addf %400, %401 : vector<2x32xf32>
    %403 = math.tanh %402 : vector<2x32xf32>
    %404 = arith.mulf %399, %403 : vector<2x32xf32>
    %405 = arith.truncf %404 : vector<2x32xf32> to vector<2x32xbf16>
    %cst_94 = arith.constant dense<0.000000e+00> : vector<2x128xf32>
    %406 = tpu.matmul %405, %27, %cst_94 {dimension_numbers = #tpu.dot_dimension_numbers<[1], [0], [0], [1], [0, 0, 1, 1], [], []>} : vector<2x32xbf16>, vector<32x128xbf16>, vector<2x128xf32> -> vector<2x128xf32>
    %407 = arith.truncf %382 : vector<2x32xf32> to vector<2x32xbf16>
    %cst_95 = arith.constant dense<0.000000e+00> : vector<2x128xf32>
    %408 = tpu.matmul %407, %25, %cst_95 {dimension_numbers = #tpu.dot_dimension_numbers<[1], [0], [0], [1], [0, 0, 1, 1], [], []>} : vector<2x32xbf16>, vector<32x128xbf16>, vector<2x128xf32> -> vector<2x128xf32>
    %409 = arith.addf %406, %408 : vector<2x128xf32>
    %410 = vector.broadcast %29 : vector<1x128xf32> to vector<2x128xf32>
    %411 = arith.addf %409, %410 : vector<2x128xf32>
    %412 = arith.negf %411 : vector<2x128xf32>
    %413 = math.exp %412 : vector<2x128xf32>
    %cst_96 = arith.constant 1.000000e+00 : f32
    %414 = vector.broadcast %cst_96 : f32 to vector<2x128xf32>
    %415 = arith.addf %414, %413 : vector<2x128xf32>
    %416 = arith.divf %414, %415 : vector<2x128xf32>
    %417 = math.tanh %411 : vector<2x128xf32>
    %418 = vector.extract_strided_slice %416 {offsets = [0, 0], sizes = [2, 32], strides = [1, 1]} : vector<2x128xf32> to vector<2x32xf32>
    %419 = vector.extract_strided_slice %416 {offsets = [0, 32], sizes = [2, 32], strides = [1, 1]} : vector<2x128xf32> to vector<2x32xf32>
    %420 = vector.extract_strided_slice %417 {offsets = [0, 64], sizes = [2, 32], strides = [1, 1]} : vector<2x128xf32> to vector<2x32xf32>
    %421 = vector.extract_strided_slice %416 {offsets = [0, 96], sizes = [2, 32], strides = [1, 1]} : vector<2x128xf32> to vector<2x32xf32>
    %422 = arith.mulf %380, %419 : vector<2x32xf32>
    %423 = arith.mulf %418, %420 : vector<2x32xf32>
    %424 = arith.addf %422, %423 : vector<2x32xf32>
    %425 = math.tanh %424 : vector<2x32xf32>
    %426 = arith.mulf %421, %425 : vector<2x32xf32>
    %c0_97 = arith.constant 0 : index
    %c16 = arith.constant 16 : index
    %c0_98 = arith.constant 0 : index
    %427 = vector.load %arg9[%c0_97, %c16, %c0_98] : memref<1x64x32xf32, #tpu.memory_space<vmem>>, vector<1x2x32xf32>
    %428 = vector.shape_cast %427 : vector<1x2x32xf32> to vector<2x32xf32>
    %429 = vector.shape_cast %426 : vector<2x32xf32> to vector<1x2x32xf32>
    tpu.vector_store %arg9[%c0_97, %c16, %c0_98], %429 {strides = array<i32>} : memref<1x64x32xf32, #tpu.memory_space<vmem>>, vector<1x2x32xf32>,
    %430 = vector.extract_strided_slice %21 {offsets = [18, 0], sizes = [2, 128], strides = [1, 1]} : vector<64x128xf32> to vector<2x128xf32>
    %431 = arith.truncf %404 : vector<2x32xf32> to vector<2x32xbf16>
    %cst_99 = arith.constant dense<0.000000e+00> : vector<2x128xf32>
    %432 = tpu.matmul %431, %23, %cst_99 {dimension_numbers = #tpu.dot_dimension_numbers<[1], [0], [0], [1], [0, 0, 1, 1], [], []>} : vector<2x32xbf16>, vector<32x128xbf16>, vector<2x128xf32> -> vector<2x128xf32>
    %433 = arith.addf %430, %432 : vector<2x128xf32>
    %434 = arith.negf %433 : vector<2x128xf32>
    %435 = math.exp %434 : vector<2x128xf32>
    %cst_100 = arith.constant 1.000000e+00 : f32
    %436 = vector.broadcast %cst_100 : f32 to vector<2x128xf32>
    %437 = arith.addf %436, %435 : vector<2x128xf32>
    %438 = arith.divf %436, %437 : vector<2x128xf32>
    %439 = math.tanh %433 : vector<2x128xf32>
    %440 = vector.extract_strided_slice %438 {offsets = [0, 0], sizes = [2, 32], strides = [1, 1]} : vector<2x128xf32> to vector<2x32xf32>
    %441 = vector.extract_strided_slice %438 {offsets = [0, 32], sizes = [2, 32], strides = [1, 1]} : vector<2x128xf32> to vector<2x32xf32>
    %442 = vector.extract_strided_slice %439 {offsets = [0, 64], sizes = [2, 32], strides = [1, 1]} : vector<2x128xf32> to vector<2x32xf32>
    %443 = vector.extract_strided_slice %438 {offsets = [0, 96], sizes = [2, 32], strides = [1, 1]} : vector<2x128xf32> to vector<2x32xf32>
    %444 = arith.mulf %402, %441 : vector<2x32xf32>
    %445 = arith.mulf %440, %442 : vector<2x32xf32>
    %446 = arith.addf %444, %445 : vector<2x32xf32>
    %447 = math.tanh %446 : vector<2x32xf32>
    %448 = arith.mulf %443, %447 : vector<2x32xf32>
    %449 = arith.truncf %448 : vector<2x32xf32> to vector<2x32xbf16>
    %cst_101 = arith.constant dense<0.000000e+00> : vector<2x128xf32>
    %450 = tpu.matmul %449, %27, %cst_101 {dimension_numbers = #tpu.dot_dimension_numbers<[1], [0], [0], [1], [0, 0, 1, 1], [], []>} : vector<2x32xbf16>, vector<32x128xbf16>, vector<2x128xf32> -> vector<2x128xf32>
    %451 = arith.truncf %426 : vector<2x32xf32> to vector<2x32xbf16>
    %cst_102 = arith.constant dense<0.000000e+00> : vector<2x128xf32>
    %452 = tpu.matmul %451, %25, %cst_102 {dimension_numbers = #tpu.dot_dimension_numbers<[1], [0], [0], [1], [0, 0, 1, 1], [], []>} : vector<2x32xbf16>, vector<32x128xbf16>, vector<2x128xf32> -> vector<2x128xf32>
    %453 = arith.addf %450, %452 : vector<2x128xf32>
    %454 = vector.broadcast %29 : vector<1x128xf32> to vector<2x128xf32>
    %455 = arith.addf %453, %454 : vector<2x128xf32>
    %456 = arith.negf %455 : vector<2x128xf32>
    %457 = math.exp %456 : vector<2x128xf32>
    %cst_103 = arith.constant 1.000000e+00 : f32
    %458 = vector.broadcast %cst_103 : f32 to vector<2x128xf32>
    %459 = arith.addf %458, %457 : vector<2x128xf32>
    %460 = arith.divf %458, %459 : vector<2x128xf32>
    %461 = math.tanh %455 : vector<2x128xf32>
    %462 = vector.extract_strided_slice %460 {offsets = [0, 0], sizes = [2, 32], strides = [1, 1]} : vector<2x128xf32> to vector<2x32xf32>
    %463 = vector.extract_strided_slice %460 {offsets = [0, 32], sizes = [2, 32], strides = [1, 1]} : vector<2x128xf32> to vector<2x32xf32>
    %464 = vector.extract_strided_slice %461 {offsets = [0, 64], sizes = [2, 32], strides = [1, 1]} : vector<2x128xf32> to vector<2x32xf32>
    %465 = vector.extract_strided_slice %460 {offsets = [0, 96], sizes = [2, 32], strides = [1, 1]} : vector<2x128xf32> to vector<2x32xf32>
    %466 = arith.mulf %424, %463 : vector<2x32xf32>
    %467 = arith.mulf %462, %464 : vector<2x32xf32>
    %468 = arith.addf %466, %467 : vector<2x32xf32>
    %469 = math.tanh %468 : vector<2x32xf32>
    %470 = arith.mulf %465, %469 : vector<2x32xf32>
    %c0_104 = arith.constant 0 : index
    %c18 = arith.constant 18 : index
    %c0_105 = arith.constant 0 : index
    %471 = vector.load %arg9[%c0_104, %c18, %c0_105] : memref<1x64x32xf32, #tpu.memory_space<vmem>>, vector<1x2x32xf32>
    %472 = vector.shape_cast %471 : vector<1x2x32xf32> to vector<2x32xf32>
    %473 = vector.shape_cast %470 : vector<2x32xf32> to vector<1x2x32xf32>
    tpu.vector_store %arg9[%c0_104, %c18, %c0_105], %473 {strides = array<i32>} : memref<1x64x32xf32, #tpu.memory_space<vmem>>, vector<1x2x32xf32>,
    %474 = vector.extract_strided_slice %21 {offsets = [20, 0], sizes = [2, 128], strides = [1, 1]} : vector<64x128xf32> to vector<2x128xf32>
    %475 = arith.truncf %448 : vector<2x32xf32> to vector<2x32xbf16>
    %cst_106 = arith.constant dense<0.000000e+00> : vector<2x128xf32>
    %476 = tpu.matmul %475, %23, %cst_106 {dimension_numbers = #tpu.dot_dimension_numbers<[1], [0], [0], [1], [0, 0, 1, 1], [], []>} : vector<2x32xbf16>, vector<32x128xbf16>, vector<2x128xf32> -> vector<2x128xf32>
    %477 = arith.addf %474, %476 : vector<2x128xf32>
    %478 = arith.negf %477 : vector<2x128xf32>
    %479 = math.exp %478 : vector<2x128xf32>
    %cst_107 = arith.constant 1.000000e+00 : f32
    %480 = vector.broadcast %cst_107 : f32 to vector<2x128xf32>
    %481 = arith.addf %480, %479 : vector<2x128xf32>
    %482 = arith.divf %480, %481 : vector<2x128xf32>
    %483 = math.tanh %477 : vector<2x128xf32>
    %484 = vector.extract_strided_slice %482 {offsets = [0, 0], sizes = [2, 32], strides = [1, 1]} : vector<2x128xf32> to vector<2x32xf32>
    %485 = vector.extract_strided_slice %482 {offsets = [0, 32], sizes = [2, 32], strides = [1, 1]} : vector<2x128xf32> to vector<2x32xf32>
    %486 = vector.extract_strided_slice %483 {offsets = [0, 64], sizes = [2, 32], strides = [1, 1]} : vector<2x128xf32> to vector<2x32xf32>
    %487 = vector.extract_strided_slice %482 {offsets = [0, 96], sizes = [2, 32], strides = [1, 1]} : vector<2x128xf32> to vector<2x32xf32>
    %488 = arith.mulf %446, %485 : vector<2x32xf32>
    %489 = arith.mulf %484, %486 : vector<2x32xf32>
    %490 = arith.addf %488, %489 : vector<2x32xf32>
    %491 = math.tanh %490 : vector<2x32xf32>
    %492 = arith.mulf %487, %491 : vector<2x32xf32>
    %493 = arith.truncf %492 : vector<2x32xf32> to vector<2x32xbf16>
    %cst_108 = arith.constant dense<0.000000e+00> : vector<2x128xf32>
    %494 = tpu.matmul %493, %27, %cst_108 {dimension_numbers = #tpu.dot_dimension_numbers<[1], [0], [0], [1], [0, 0, 1, 1], [], []>} : vector<2x32xbf16>, vector<32x128xbf16>, vector<2x128xf32> -> vector<2x128xf32>
    %495 = arith.truncf %470 : vector<2x32xf32> to vector<2x32xbf16>
    %cst_109 = arith.constant dense<0.000000e+00> : vector<2x128xf32>
    %496 = tpu.matmul %495, %25, %cst_109 {dimension_numbers = #tpu.dot_dimension_numbers<[1], [0], [0], [1], [0, 0, 1, 1], [], []>} : vector<2x32xbf16>, vector<32x128xbf16>, vector<2x128xf32> -> vector<2x128xf32>
    %497 = arith.addf %494, %496 : vector<2x128xf32>
    %498 = vector.broadcast %29 : vector<1x128xf32> to vector<2x128xf32>
    %499 = arith.addf %497, %498 : vector<2x128xf32>
    %500 = arith.negf %499 : vector<2x128xf32>
    %501 = math.exp %500 : vector<2x128xf32>
    %cst_110 = arith.constant 1.000000e+00 : f32
    %502 = vector.broadcast %cst_110 : f32 to vector<2x128xf32>
    %503 = arith.addf %502, %501 : vector<2x128xf32>
    %504 = arith.divf %502, %503 : vector<2x128xf32>
    %505 = math.tanh %499 : vector<2x128xf32>
    %506 = vector.extract_strided_slice %504 {offsets = [0, 0], sizes = [2, 32], strides = [1, 1]} : vector<2x128xf32> to vector<2x32xf32>
    %507 = vector.extract_strided_slice %504 {offsets = [0, 32], sizes = [2, 32], strides = [1, 1]} : vector<2x128xf32> to vector<2x32xf32>
    %508 = vector.extract_strided_slice %505 {offsets = [0, 64], sizes = [2, 32], strides = [1, 1]} : vector<2x128xf32> to vector<2x32xf32>
    %509 = vector.extract_strided_slice %504 {offsets = [0, 96], sizes = [2, 32], strides = [1, 1]} : vector<2x128xf32> to vector<2x32xf32>
    %510 = arith.mulf %468, %507 : vector<2x32xf32>
    %511 = arith.mulf %506, %508 : vector<2x32xf32>
    %512 = arith.addf %510, %511 : vector<2x32xf32>
    %513 = math.tanh %512 : vector<2x32xf32>
    %514 = arith.mulf %509, %513 : vector<2x32xf32>
    %c0_111 = arith.constant 0 : index
    %c20 = arith.constant 20 : index
    %c0_112 = arith.constant 0 : index
    %515 = vector.load %arg9[%c0_111, %c20, %c0_112] : memref<1x64x32xf32, #tpu.memory_space<vmem>>, vector<1x2x32xf32>
    %516 = vector.shape_cast %515 : vector<1x2x32xf32> to vector<2x32xf32>
    %517 = vector.shape_cast %514 : vector<2x32xf32> to vector<1x2x32xf32>
    tpu.vector_store %arg9[%c0_111, %c20, %c0_112], %517 {strides = array<i32>} : memref<1x64x32xf32, #tpu.memory_space<vmem>>, vector<1x2x32xf32>,
    %518 = vector.extract_strided_slice %21 {offsets = [22, 0], sizes = [2, 128], strides = [1, 1]} : vector<64x128xf32> to vector<2x128xf32>
    %519 = arith.truncf %492 : vector<2x32xf32> to vector<2x32xbf16>
    %cst_113 = arith.constant dense<0.000000e+00> : vector<2x128xf32>
    %520 = tpu.matmul %519, %23, %cst_113 {dimension_numbers = #tpu.dot_dimension_numbers<[1], [0], [0], [1], [0, 0, 1, 1], [], []>} : vector<2x32xbf16>, vector<32x128xbf16>, vector<2x128xf32> -> vector<2x128xf32>
    %521 = arith.addf %518, %520 : vector<2x128xf32>
    %522 = arith.negf %521 : vector<2x128xf32>
    %523 = math.exp %522 : vector<2x128xf32>
    %cst_114 = arith.constant 1.000000e+00 : f32
    %524 = vector.broadcast %cst_114 : f32 to vector<2x128xf32>
    %525 = arith.addf %524, %523 : vector<2x128xf32>
    %526 = arith.divf %524, %525 : vector<2x128xf32>
    %527 = math.tanh %521 : vector<2x128xf32>
    %528 = vector.extract_strided_slice %526 {offsets = [0, 0], sizes = [2, 32], strides = [1, 1]} : vector<2x128xf32> to vector<2x32xf32>
    %529 = vector.extract_strided_slice %526 {offsets = [0, 32], sizes = [2, 32], strides = [1, 1]} : vector<2x128xf32> to vector<2x32xf32>
    %530 = vector.extract_strided_slice %527 {offsets = [0, 64], sizes = [2, 32], strides = [1, 1]} : vector<2x128xf32> to vector<2x32xf32>
    %531 = vector.extract_strided_slice %526 {offsets = [0, 96], sizes = [2, 32], strides = [1, 1]} : vector<2x128xf32> to vector<2x32xf32>
    %532 = arith.mulf %490, %529 : vector<2x32xf32>
    %533 = arith.mulf %528, %530 : vector<2x32xf32>
    %534 = arith.addf %532, %533 : vector<2x32xf32>
    %535 = math.tanh %534 : vector<2x32xf32>
    %536 = arith.mulf %531, %535 : vector<2x32xf32>
    %537 = arith.truncf %536 : vector<2x32xf32> to vector<2x32xbf16>
    %cst_115 = arith.constant dense<0.000000e+00> : vector<2x128xf32>
    %538 = tpu.matmul %537, %27, %cst_115 {dimension_numbers = #tpu.dot_dimension_numbers<[1], [0], [0], [1], [0, 0, 1, 1], [], []>} : vector<2x32xbf16>, vector<32x128xbf16>, vector<2x128xf32> -> vector<2x128xf32>
    %539 = arith.truncf %514 : vector<2x32xf32> to vector<2x32xbf16>
    %cst_116 = arith.constant dense<0.000000e+00> : vector<2x128xf32>
    %540 = tpu.matmul %539, %25, %cst_116 {dimension_numbers = #tpu.dot_dimension_numbers<[1], [0], [0], [1], [0, 0, 1, 1], [], []>} : vector<2x32xbf16>, vector<32x128xbf16>, vector<2x128xf32> -> vector<2x128xf32>
    %541 = arith.addf %538, %540 : vector<2x128xf32>
    %542 = vector.broadcast %29 : vector<1x128xf32> to vector<2x128xf32>
    %543 = arith.addf %541, %542 : vector<2x128xf32>
    %544 = arith.negf %543 : vector<2x128xf32>
    %545 = math.exp %544 : vector<2x128xf32>
    %cst_117 = arith.constant 1.000000e+00 : f32
    %546 = vector.broadcast %cst_117 : f32 to vector<2x128xf32>
    %547 = arith.addf %546, %545 : vector<2x128xf32>
    %548 = arith.divf %546, %547 : vector<2x128xf32>
    %549 = math.tanh %543 : vector<2x128xf32>
    %550 = vector.extract_strided_slice %548 {offsets = [0, 0], sizes = [2, 32], strides = [1, 1]} : vector<2x128xf32> to vector<2x32xf32>
    %551 = vector.extract_strided_slice %548 {offsets = [0, 32], sizes = [2, 32], strides = [1, 1]} : vector<2x128xf32> to vector<2x32xf32>
    %552 = vector.extract_strided_slice %549 {offsets = [0, 64], sizes = [2, 32], strides = [1, 1]} : vector<2x128xf32> to vector<2x32xf32>
    %553 = vector.extract_strided_slice %548 {offsets = [0, 96], sizes = [2, 32], strides = [1, 1]} : vector<2x128xf32> to vector<2x32xf32>
    %554 = arith.mulf %512, %551 : vector<2x32xf32>
    %555 = arith.mulf %550, %552 : vector<2x32xf32>
    %556 = arith.addf %554, %555 : vector<2x32xf32>
    %557 = math.tanh %556 : vector<2x32xf32>
    %558 = arith.mulf %553, %557 : vector<2x32xf32>
    %c0_118 = arith.constant 0 : index
    %c22 = arith.constant 22 : index
    %c0_119 = arith.constant 0 : index
    %559 = vector.load %arg9[%c0_118, %c22, %c0_119] : memref<1x64x32xf32, #tpu.memory_space<vmem>>, vector<1x2x32xf32>
    %560 = vector.shape_cast %559 : vector<1x2x32xf32> to vector<2x32xf32>
    %561 = vector.shape_cast %558 : vector<2x32xf32> to vector<1x2x32xf32>
    tpu.vector_store %arg9[%c0_118, %c22, %c0_119], %561 {strides = array<i32>} : memref<1x64x32xf32, #tpu.memory_space<vmem>>, vector<1x2x32xf32>,
    %562 = vector.extract_strided_slice %21 {offsets = [24, 0], sizes = [2, 128], strides = [1, 1]} : vector<64x128xf32> to vector<2x128xf32>
    %563 = arith.truncf %536 : vector<2x32xf32> to vector<2x32xbf16>
    %cst_120 = arith.constant dense<0.000000e+00> : vector<2x128xf32>
    %564 = tpu.matmul %563, %23, %cst_120 {dimension_numbers = #tpu.dot_dimension_numbers<[1], [0], [0], [1], [0, 0, 1, 1], [], []>} : vector<2x32xbf16>, vector<32x128xbf16>, vector<2x128xf32> -> vector<2x128xf32>
    %565 = arith.addf %562, %564 : vector<2x128xf32>
    %566 = arith.negf %565 : vector<2x128xf32>
    %567 = math.exp %566 : vector<2x128xf32>
    %cst_121 = arith.constant 1.000000e+00 : f32
    %568 = vector.broadcast %cst_121 : f32 to vector<2x128xf32>
    %569 = arith.addf %568, %567 : vector<2x128xf32>
    %570 = arith.divf %568, %569 : vector<2x128xf32>
    %571 = math.tanh %565 : vector<2x128xf32>
    %572 = vector.extract_strided_slice %570 {offsets = [0, 0], sizes = [2, 32], strides = [1, 1]} : vector<2x128xf32> to vector<2x32xf32>
    %573 = vector.extract_strided_slice %570 {offsets = [0, 32], sizes = [2, 32], strides = [1, 1]} : vector<2x128xf32> to vector<2x32xf32>
    %574 = vector.extract_strided_slice %571 {offsets = [0, 64], sizes = [2, 32], strides = [1, 1]} : vector<2x128xf32> to vector<2x32xf32>
    %575 = vector.extract_strided_slice %570 {offsets = [0, 96], sizes = [2, 32], strides = [1, 1]} : vector<2x128xf32> to vector<2x32xf32>
    %576 = arith.mulf %534, %573 : vector<2x32xf32>
    %577 = arith.mulf %572, %574 : vector<2x32xf32>
    %578 = arith.addf %576, %577 : vector<2x32xf32>
    %579 = math.tanh %578 : vector<2x32xf32>
    %580 = arith.mulf %575, %579 : vector<2x32xf32>
    %581 = arith.truncf %580 : vector<2x32xf32> to vector<2x32xbf16>
    %cst_122 = arith.constant dense<0.000000e+00> : vector<2x128xf32>
    %582 = tpu.matmul %581, %27, %cst_122 {dimension_numbers = #tpu.dot_dimension_numbers<[1], [0], [0], [1], [0, 0, 1, 1], [], []>} : vector<2x32xbf16>, vector<32x128xbf16>, vector<2x128xf32> -> vector<2x128xf32>
    %583 = arith.truncf %558 : vector<2x32xf32> to vector<2x32xbf16>
    %cst_123 = arith.constant dense<0.000000e+00> : vector<2x128xf32>
    %584 = tpu.matmul %583, %25, %cst_123 {dimension_numbers = #tpu.dot_dimension_numbers<[1], [0], [0], [1], [0, 0, 1, 1], [], []>} : vector<2x32xbf16>, vector<32x128xbf16>, vector<2x128xf32> -> vector<2x128xf32>
    %585 = arith.addf %582, %584 : vector<2x128xf32>
    %586 = vector.broadcast %29 : vector<1x128xf32> to vector<2x128xf32>
    %587 = arith.addf %585, %586 : vector<2x128xf32>
    %588 = arith.negf %587 : vector<2x128xf32>
    %589 = math.exp %588 : vector<2x128xf32>
    %cst_124 = arith.constant 1.000000e+00 : f32
    %590 = vector.broadcast %cst_124 : f32 to vector<2x128xf32>
    %591 = arith.addf %590, %589 : vector<2x128xf32>
    %592 = arith.divf %590, %591 : vector<2x128xf32>
    %593 = math.tanh %587 : vector<2x128xf32>
    %594 = vector.extract_strided_slice %592 {offsets = [0, 0], sizes = [2, 32], strides = [1, 1]} : vector<2x128xf32> to vector<2x32xf32>
    %595 = vector.extract_strided_slice %592 {offsets = [0, 32], sizes = [2, 32], strides = [1, 1]} : vector<2x128xf32> to vector<2x32xf32>
    %596 = vector.extract_strided_slice %593 {offsets = [0, 64], sizes = [2, 32], strides = [1, 1]} : vector<2x128xf32> to vector<2x32xf32>
    %597 = vector.extract_strided_slice %592 {offsets = [0, 96], sizes = [2, 32], strides = [1, 1]} : vector<2x128xf32> to vector<2x32xf32>
    %598 = arith.mulf %556, %595 : vector<2x32xf32>
    %599 = arith.mulf %594, %596 : vector<2x32xf32>
    %600 = arith.addf %598, %599 : vector<2x32xf32>
    %601 = math.tanh %600 : vector<2x32xf32>
    %602 = arith.mulf %597, %601 : vector<2x32xf32>
    %c0_125 = arith.constant 0 : index
    %c24 = arith.constant 24 : index
    %c0_126 = arith.constant 0 : index
    %603 = vector.load %arg9[%c0_125, %c24, %c0_126] : memref<1x64x32xf32, #tpu.memory_space<vmem>>, vector<1x2x32xf32>
    %604 = vector.shape_cast %603 : vector<1x2x32xf32> to vector<2x32xf32>
    %605 = vector.shape_cast %602 : vector<2x32xf32> to vector<1x2x32xf32>
    tpu.vector_store %arg9[%c0_125, %c24, %c0_126], %605 {strides = array<i32>} : memref<1x64x32xf32, #tpu.memory_space<vmem>>, vector<1x2x32xf32>,
    %606 = vector.extract_strided_slice %21 {offsets = [26, 0], sizes = [2, 128], strides = [1, 1]} : vector<64x128xf32> to vector<2x128xf32>
    %607 = arith.truncf %580 : vector<2x32xf32> to vector<2x32xbf16>
    %cst_127 = arith.constant dense<0.000000e+00> : vector<2x128xf32>
    %608 = tpu.matmul %607, %23, %cst_127 {dimension_numbers = #tpu.dot_dimension_numbers<[1], [0], [0], [1], [0, 0, 1, 1], [], []>} : vector<2x32xbf16>, vector<32x128xbf16>, vector<2x128xf32> -> vector<2x128xf32>
    %609 = arith.addf %606, %608 : vector<2x128xf32>
    %610 = arith.negf %609 : vector<2x128xf32>
    %611 = math.exp %610 : vector<2x128xf32>
    %cst_128 = arith.constant 1.000000e+00 : f32
    %612 = vector.broadcast %cst_128 : f32 to vector<2x128xf32>
    %613 = arith.addf %612, %611 : vector<2x128xf32>
    %614 = arith.divf %612, %613 : vector<2x128xf32>
    %615 = math.tanh %609 : vector<2x128xf32>
    %616 = vector.extract_strided_slice %614 {offsets = [0, 0], sizes = [2, 32], strides = [1, 1]} : vector<2x128xf32> to vector<2x32xf32>
    %617 = vector.extract_strided_slice %614 {offsets = [0, 32], sizes = [2, 32], strides = [1, 1]} : vector<2x128xf32> to vector<2x32xf32>
    %618 = vector.extract_strided_slice %615 {offsets = [0, 64], sizes = [2, 32], strides = [1, 1]} : vector<2x128xf32> to vector<2x32xf32>
    %619 = vector.extract_strided_slice %614 {offsets = [0, 96], sizes = [2, 32], strides = [1, 1]} : vector<2x128xf32> to vector<2x32xf32>
    %620 = arith.mulf %578, %617 : vector<2x32xf32>
    %621 = arith.mulf %616, %618 : vector<2x32xf32>
    %622 = arith.addf %620, %621 : vector<2x32xf32>
    %623 = math.tanh %622 : vector<2x32xf32>
    %624 = arith.mulf %619, %623 : vector<2x32xf32>
    %625 = arith.truncf %624 : vector<2x32xf32> to vector<2x32xbf16>
    %cst_129 = arith.constant dense<0.000000e+00> : vector<2x128xf32>
    %626 = tpu.matmul %625, %27, %cst_129 {dimension_numbers = #tpu.dot_dimension_numbers<[1], [0], [0], [1], [0, 0, 1, 1], [], []>} : vector<2x32xbf16>, vector<32x128xbf16>, vector<2x128xf32> -> vector<2x128xf32>
    %627 = arith.truncf %602 : vector<2x32xf32> to vector<2x32xbf16>
    %cst_130 = arith.constant dense<0.000000e+00> : vector<2x128xf32>
    %628 = tpu.matmul %627, %25, %cst_130 {dimension_numbers = #tpu.dot_dimension_numbers<[1], [0], [0], [1], [0, 0, 1, 1], [], []>} : vector<2x32xbf16>, vector<32x128xbf16>, vector<2x128xf32> -> vector<2x128xf32>
    %629 = arith.addf %626, %628 : vector<2x128xf32>
    %630 = vector.broadcast %29 : vector<1x128xf32> to vector<2x128xf32>
    %631 = arith.addf %629, %630 : vector<2x128xf32>
    %632 = arith.negf %631 : vector<2x128xf32>
    %633 = math.exp %632 : vector<2x128xf32>
    %cst_131 = arith.constant 1.000000e+00 : f32
    %634 = vector.broadcast %cst_131 : f32 to vector<2x128xf32>
    %635 = arith.addf %634, %633 : vector<2x128xf32>
    %636 = arith.divf %634, %635 : vector<2x128xf32>
    %637 = math.tanh %631 : vector<2x128xf32>
    %638 = vector.extract_strided_slice %636 {offsets = [0, 0], sizes = [2, 32], strides = [1, 1]} : vector<2x128xf32> to vector<2x32xf32>
    %639 = vector.extract_strided_slice %636 {offsets = [0, 32], sizes = [2, 32], strides = [1, 1]} : vector<2x128xf32> to vector<2x32xf32>
    %640 = vector.extract_strided_slice %637 {offsets = [0, 64], sizes = [2, 32], strides = [1, 1]} : vector<2x128xf32> to vector<2x32xf32>
    %641 = vector.extract_strided_slice %636 {offsets = [0, 96], sizes = [2, 32], strides = [1, 1]} : vector<2x128xf32> to vector<2x32xf32>
    %642 = arith.mulf %600, %639 : vector<2x32xf32>
    %643 = arith.mulf %638, %640 : vector<2x32xf32>
    %644 = arith.addf %642, %643 : vector<2x32xf32>
    %645 = math.tanh %644 : vector<2x32xf32>
    %646 = arith.mulf %641, %645 : vector<2x32xf32>
    %c0_132 = arith.constant 0 : index
    %c26 = arith.constant 26 : index
    %c0_133 = arith.constant 0 : index
    %647 = vector.load %arg9[%c0_132, %c26, %c0_133] : memref<1x64x32xf32, #tpu.memory_space<vmem>>, vector<1x2x32xf32>
    %648 = vector.shape_cast %647 : vector<1x2x32xf32> to vector<2x32xf32>
    %649 = vector.shape_cast %646 : vector<2x32xf32> to vector<1x2x32xf32>
    tpu.vector_store %arg9[%c0_132, %c26, %c0_133], %649 {strides = array<i32>} : memref<1x64x32xf32, #tpu.memory_space<vmem>>, vector<1x2x32xf32>,
    %650 = vector.extract_strided_slice %21 {offsets = [28, 0], sizes = [2, 128], strides = [1, 1]} : vector<64x128xf32> to vector<2x128xf32>
    %651 = arith.truncf %624 : vector<2x32xf32> to vector<2x32xbf16>
    %cst_134 = arith.constant dense<0.000000e+00> : vector<2x128xf32>
    %652 = tpu.matmul %651, %23, %cst_134 {dimension_numbers = #tpu.dot_dimension_numbers<[1], [0], [0], [1], [0, 0, 1, 1], [], []>} : vector<2x32xbf16>, vector<32x128xbf16>, vector<2x128xf32> -> vector<2x128xf32>
    %653 = arith.addf %650, %652 : vector<2x128xf32>
    %654 = arith.negf %653 : vector<2x128xf32>
    %655 = math.exp %654 : vector<2x128xf32>
    %cst_135 = arith.constant 1.000000e+00 : f32
    %656 = vector.broadcast %cst_135 : f32 to vector<2x128xf32>
    %657 = arith.addf %656, %655 : vector<2x128xf32>
    %658 = arith.divf %656, %657 : vector<2x128xf32>
    %659 = math.tanh %653 : vector<2x128xf32>
    %660 = vector.extract_strided_slice %658 {offsets = [0, 0], sizes = [2, 32], strides = [1, 1]} : vector<2x128xf32> to vector<2x32xf32>
    %661 = vector.extract_strided_slice %658 {offsets = [0, 32], sizes = [2, 32], strides = [1, 1]} : vector<2x128xf32> to vector<2x32xf32>
    %662 = vector.extract_strided_slice %659 {offsets = [0, 64], sizes = [2, 32], strides = [1, 1]} : vector<2x128xf32> to vector<2x32xf32>
    %663 = vector.extract_strided_slice %658 {offsets = [0, 96], sizes = [2, 32], strides = [1, 1]} : vector<2x128xf32> to vector<2x32xf32>
    %664 = arith.mulf %622, %661 : vector<2x32xf32>
    %665 = arith.mulf %660, %662 : vector<2x32xf32>
    %666 = arith.addf %664, %665 : vector<2x32xf32>
    %667 = math.tanh %666 : vector<2x32xf32>
    %668 = arith.mulf %663, %667 : vector<2x32xf32>
    %669 = arith.truncf %668 : vector<2x32xf32> to vector<2x32xbf16>
    %cst_136 = arith.constant dense<0.000000e+00> : vector<2x128xf32>
    %670 = tpu.matmul %669, %27, %cst_136 {dimension_numbers = #tpu.dot_dimension_numbers<[1], [0], [0], [1], [0, 0, 1, 1], [], []>} : vector<2x32xbf16>, vector<32x128xbf16>, vector<2x128xf32> -> vector<2x128xf32>
    %671 = arith.truncf %646 : vector<2x32xf32> to vector<2x32xbf16>
    %cst_137 = arith.constant dense<0.000000e+00> : vector<2x128xf32>
    %672 = tpu.matmul %671, %25, %cst_137 {dimension_numbers = #tpu.dot_dimension_numbers<[1], [0], [0], [1], [0, 0, 1, 1], [], []>} : vector<2x32xbf16>, vector<32x128xbf16>, vector<2x128xf32> -> vector<2x128xf32>
    %673 = arith.addf %670, %672 : vector<2x128xf32>
    %674 = vector.broadcast %29 : vector<1x128xf32> to vector<2x128xf32>
    %675 = arith.addf %673, %674 : vector<2x128xf32>
    %676 = arith.negf %675 : vector<2x128xf32>
    %677 = math.exp %676 : vector<2x128xf32>
    %cst_138 = arith.constant 1.000000e+00 : f32
    %678 = vector.broadcast %cst_138 : f32 to vector<2x128xf32>
    %679 = arith.addf %678, %677 : vector<2x128xf32>
    %680 = arith.divf %678, %679 : vector<2x128xf32>
    %681 = math.tanh %675 : vector<2x128xf32>
    %682 = vector.extract_strided_slice %680 {offsets = [0, 0], sizes = [2, 32], strides = [1, 1]} : vector<2x128xf32> to vector<2x32xf32>
    %683 = vector.extract_strided_slice %680 {offsets = [0, 32], sizes = [2, 32], strides = [1, 1]} : vector<2x128xf32> to vector<2x32xf32>
    %684 = vector.extract_strided_slice %681 {offsets = [0, 64], sizes = [2, 32], strides = [1, 1]} : vector<2x128xf32> to vector<2x32xf32>
    %685 = vector.extract_strided_slice %680 {offsets = [0, 96], sizes = [2, 32], strides = [1, 1]} : vector<2x128xf32> to vector<2x32xf32>
    %686 = arith.mulf %644, %683 : vector<2x32xf32>
    %687 = arith.mulf %682, %684 : vector<2x32xf32>
    %688 = arith.addf %686, %687 : vector<2x32xf32>
    %689 = math.tanh %688 : vector<2x32xf32>
    %690 = arith.mulf %685, %689 : vector<2x32xf32>
    %c0_139 = arith.constant 0 : index
    %c28 = arith.constant 28 : index
    %c0_140 = arith.constant 0 : index
    %691 = vector.load %arg9[%c0_139, %c28, %c0_140] : memref<1x64x32xf32, #tpu.memory_space<vmem>>, vector<1x2x32xf32>
    %692 = vector.shape_cast %691 : vector<1x2x32xf32> to vector<2x32xf32>
    %693 = vector.shape_cast %690 : vector<2x32xf32> to vector<1x2x32xf32>
    tpu.vector_store %arg9[%c0_139, %c28, %c0_140], %693 {strides = array<i32>} : memref<1x64x32xf32, #tpu.memory_space<vmem>>, vector<1x2x32xf32>,
    %694 = vector.extract_strided_slice %21 {offsets = [30, 0], sizes = [2, 128], strides = [1, 1]} : vector<64x128xf32> to vector<2x128xf32>
    %695 = arith.truncf %668 : vector<2x32xf32> to vector<2x32xbf16>
    %cst_141 = arith.constant dense<0.000000e+00> : vector<2x128xf32>
    %696 = tpu.matmul %695, %23, %cst_141 {dimension_numbers = #tpu.dot_dimension_numbers<[1], [0], [0], [1], [0, 0, 1, 1], [], []>} : vector<2x32xbf16>, vector<32x128xbf16>, vector<2x128xf32> -> vector<2x128xf32>
    %697 = arith.addf %694, %696 : vector<2x128xf32>
    %698 = arith.negf %697 : vector<2x128xf32>
    %699 = math.exp %698 : vector<2x128xf32>
    %cst_142 = arith.constant 1.000000e+00 : f32
    %700 = vector.broadcast %cst_142 : f32 to vector<2x128xf32>
    %701 = arith.addf %700, %699 : vector<2x128xf32>
    %702 = arith.divf %700, %701 : vector<2x128xf32>
    %703 = math.tanh %697 : vector<2x128xf32>
    %704 = vector.extract_strided_slice %702 {offsets = [0, 0], sizes = [2, 32], strides = [1, 1]} : vector<2x128xf32> to vector<2x32xf32>
    %705 = vector.extract_strided_slice %702 {offsets = [0, 32], sizes = [2, 32], strides = [1, 1]} : vector<2x128xf32> to vector<2x32xf32>
    %706 = vector.extract_strided_slice %703 {offsets = [0, 64], sizes = [2, 32], strides = [1, 1]} : vector<2x128xf32> to vector<2x32xf32>
    %707 = vector.extract_strided_slice %702 {offsets = [0, 96], sizes = [2, 32], strides = [1, 1]} : vector<2x128xf32> to vector<2x32xf32>
    %708 = arith.mulf %666, %705 : vector<2x32xf32>
    %709 = arith.mulf %704, %706 : vector<2x32xf32>
    %710 = arith.addf %708, %709 : vector<2x32xf32>
    %711 = math.tanh %710 : vector<2x32xf32>
    %712 = arith.mulf %707, %711 : vector<2x32xf32>
    %713 = arith.truncf %712 : vector<2x32xf32> to vector<2x32xbf16>
    %cst_143 = arith.constant dense<0.000000e+00> : vector<2x128xf32>
    %714 = tpu.matmul %713, %27, %cst_143 {dimension_numbers = #tpu.dot_dimension_numbers<[1], [0], [0], [1], [0, 0, 1, 1], [], []>} : vector<2x32xbf16>, vector<32x128xbf16>, vector<2x128xf32> -> vector<2x128xf32>
    %715 = arith.truncf %690 : vector<2x32xf32> to vector<2x32xbf16>
    %cst_144 = arith.constant dense<0.000000e+00> : vector<2x128xf32>
    %716 = tpu.matmul %715, %25, %cst_144 {dimension_numbers = #tpu.dot_dimension_numbers<[1], [0], [0], [1], [0, 0, 1, 1], [], []>} : vector<2x32xbf16>, vector<32x128xbf16>, vector<2x128xf32> -> vector<2x128xf32>
    %717 = arith.addf %714, %716 : vector<2x128xf32>
    %718 = vector.broadcast %29 : vector<1x128xf32> to vector<2x128xf32>
    %719 = arith.addf %717, %718 : vector<2x128xf32>
    %720 = arith.negf %719 : vector<2x128xf32>
    %721 = math.exp %720 : vector<2x128xf32>
    %cst_145 = arith.constant 1.000000e+00 : f32
    %722 = vector.broadcast %cst_145 : f32 to vector<2x128xf32>
    %723 = arith.addf %722, %721 : vector<2x128xf32>
    %724 = arith.divf %722, %723 : vector<2x128xf32>
    %725 = math.tanh %719 : vector<2x128xf32>
    %726 = vector.extract_strided_slice %724 {offsets = [0, 0], sizes = [2, 32], strides = [1, 1]} : vector<2x128xf32> to vector<2x32xf32>
    %727 = vector.extract_strided_slice %724 {offsets = [0, 32], sizes = [2, 32], strides = [1, 1]} : vector<2x128xf32> to vector<2x32xf32>
    %728 = vector.extract_strided_slice %725 {offsets = [0, 64], sizes = [2, 32], strides = [1, 1]} : vector<2x128xf32> to vector<2x32xf32>
    %729 = vector.extract_strided_slice %724 {offsets = [0, 96], sizes = [2, 32], strides = [1, 1]} : vector<2x128xf32> to vector<2x32xf32>
    %730 = arith.mulf %688, %727 : vector<2x32xf32>
    %731 = arith.mulf %726, %728 : vector<2x32xf32>
    %732 = arith.addf %730, %731 : vector<2x32xf32>
    %733 = math.tanh %732 : vector<2x32xf32>
    %734 = arith.mulf %729, %733 : vector<2x32xf32>
    %c0_146 = arith.constant 0 : index
    %c30 = arith.constant 30 : index
    %c0_147 = arith.constant 0 : index
    %735 = vector.load %arg9[%c0_146, %c30, %c0_147] : memref<1x64x32xf32, #tpu.memory_space<vmem>>, vector<1x2x32xf32>
    %736 = vector.shape_cast %735 : vector<1x2x32xf32> to vector<2x32xf32>
    %737 = vector.shape_cast %734 : vector<2x32xf32> to vector<1x2x32xf32>
    tpu.vector_store %arg9[%c0_146, %c30, %c0_147], %737 {strides = array<i32>} : memref<1x64x32xf32, #tpu.memory_space<vmem>>, vector<1x2x32xf32>,
    %738 = vector.extract_strided_slice %21 {offsets = [32, 0], sizes = [2, 128], strides = [1, 1]} : vector<64x128xf32> to vector<2x128xf32>
    %739 = arith.truncf %712 : vector<2x32xf32> to vector<2x32xbf16>
    %cst_148 = arith.constant dense<0.000000e+00> : vector<2x128xf32>
    %740 = tpu.matmul %739, %23, %cst_148 {dimension_numbers = #tpu.dot_dimension_numbers<[1], [0], [0], [1], [0, 0, 1, 1], [], []>} : vector<2x32xbf16>, vector<32x128xbf16>, vector<2x128xf32> -> vector<2x128xf32>
    %741 = arith.addf %738, %740 : vector<2x128xf32>
    %742 = arith.negf %741 : vector<2x128xf32>
    %743 = math.exp %742 : vector<2x128xf32>
    %cst_149 = arith.constant 1.000000e+00 : f32
    %744 = vector.broadcast %cst_149 : f32 to vector<2x128xf32>
    %745 = arith.addf %744, %743 : vector<2x128xf32>
    %746 = arith.divf %744, %745 : vector<2x128xf32>
    %747 = math.tanh %741 : vector<2x128xf32>
    %748 = vector.extract_strided_slice %746 {offsets = [0, 0], sizes = [2, 32], strides = [1, 1]} : vector<2x128xf32> to vector<2x32xf32>
    %749 = vector.extract_strided_slice %746 {offsets = [0, 32], sizes = [2, 32], strides = [1, 1]} : vector<2x128xf32> to vector<2x32xf32>
    %750 = vector.extract_strided_slice %747 {offsets = [0, 64], sizes = [2, 32], strides = [1, 1]} : vector<2x128xf32> to vector<2x32xf32>
    %751 = vector.extract_strided_slice %746 {offsets = [0, 96], sizes = [2, 32], strides = [1, 1]} : vector<2x128xf32> to vector<2x32xf32>
    %752 = arith.mulf %710, %749 : vector<2x32xf32>
    %753 = arith.mulf %748, %750 : vector<2x32xf32>
    %754 = arith.addf %752, %753 : vector<2x32xf32>
    %755 = math.tanh %754 : vector<2x32xf32>
    %756 = arith.mulf %751, %755 : vector<2x32xf32>
    %757 = arith.truncf %756 : vector<2x32xf32> to vector<2x32xbf16>
    %cst_150 = arith.constant dense<0.000000e+00> : vector<2x128xf32>
    %758 = tpu.matmul %757, %27, %cst_150 {dimension_numbers = #tpu.dot_dimension_numbers<[1], [0], [0], [1], [0, 0, 1, 1], [], []>} : vector<2x32xbf16>, vector<32x128xbf16>, vector<2x128xf32> -> vector<2x128xf32>
    %759 = arith.truncf %734 : vector<2x32xf32> to vector<2x32xbf16>
    %cst_151 = arith.constant dense<0.000000e+00> : vector<2x128xf32>
    %760 = tpu.matmul %759, %25, %cst_151 {dimension_numbers = #tpu.dot_dimension_numbers<[1], [0], [0], [1], [0, 0, 1, 1], [], []>} : vector<2x32xbf16>, vector<32x128xbf16>, vector<2x128xf32> -> vector<2x128xf32>
    %761 = arith.addf %758, %760 : vector<2x128xf32>
    %762 = vector.broadcast %29 : vector<1x128xf32> to vector<2x128xf32>
    %763 = arith.addf %761, %762 : vector<2x128xf32>
    %764 = arith.negf %763 : vector<2x128xf32>
    %765 = math.exp %764 : vector<2x128xf32>
    %cst_152 = arith.constant 1.000000e+00 : f32
    %766 = vector.broadcast %cst_152 : f32 to vector<2x128xf32>
    %767 = arith.addf %766, %765 : vector<2x128xf32>
    %768 = arith.divf %766, %767 : vector<2x128xf32>
    %769 = math.tanh %763 : vector<2x128xf32>
    %770 = vector.extract_strided_slice %768 {offsets = [0, 0], sizes = [2, 32], strides = [1, 1]} : vector<2x128xf32> to vector<2x32xf32>
    %771 = vector.extract_strided_slice %768 {offsets = [0, 32], sizes = [2, 32], strides = [1, 1]} : vector<2x128xf32> to vector<2x32xf32>
    %772 = vector.extract_strided_slice %769 {offsets = [0, 64], sizes = [2, 32], strides = [1, 1]} : vector<2x128xf32> to vector<2x32xf32>
    %773 = vector.extract_strided_slice %768 {offsets = [0, 96], sizes = [2, 32], strides = [1, 1]} : vector<2x128xf32> to vector<2x32xf32>
    %774 = arith.mulf %732, %771 : vector<2x32xf32>
    %775 = arith.mulf %770, %772 : vector<2x32xf32>
    %776 = arith.addf %774, %775 : vector<2x32xf32>
    %777 = math.tanh %776 : vector<2x32xf32>
    %778 = arith.mulf %773, %777 : vector<2x32xf32>
    %c0_153 = arith.constant 0 : index
    %c32 = arith.constant 32 : index
    %c0_154 = arith.constant 0 : index
    %779 = vector.load %arg9[%c0_153, %c32, %c0_154] : memref<1x64x32xf32, #tpu.memory_space<vmem>>, vector<1x2x32xf32>
    %780 = vector.shape_cast %779 : vector<1x2x32xf32> to vector<2x32xf32>
    %781 = vector.shape_cast %778 : vector<2x32xf32> to vector<1x2x32xf32>
    tpu.vector_store %arg9[%c0_153, %c32, %c0_154], %781 {strides = array<i32>} : memref<1x64x32xf32, #tpu.memory_space<vmem>>, vector<1x2x32xf32>,
    %782 = vector.extract_strided_slice %21 {offsets = [34, 0], sizes = [2, 128], strides = [1, 1]} : vector<64x128xf32> to vector<2x128xf32>
    %783 = arith.truncf %756 : vector<2x32xf32> to vector<2x32xbf16>
    %cst_155 = arith.constant dense<0.000000e+00> : vector<2x128xf32>
    %784 = tpu.matmul %783, %23, %cst_155 {dimension_numbers = #tpu.dot_dimension_numbers<[1], [0], [0], [1], [0, 0, 1, 1], [], []>} : vector<2x32xbf16>, vector<32x128xbf16>, vector<2x128xf32> -> vector<2x128xf32>
    %785 = arith.addf %782, %784 : vector<2x128xf32>
    %786 = arith.negf %785 : vector<2x128xf32>
    %787 = math.exp %786 : vector<2x128xf32>
    %cst_156 = arith.constant 1.000000e+00 : f32
    %788 = vector.broadcast %cst_156 : f32 to vector<2x128xf32>
    %789 = arith.addf %788, %787 : vector<2x128xf32>
    %790 = arith.divf %788, %789 : vector<2x128xf32>
    %791 = math.tanh %785 : vector<2x128xf32>
    %792 = vector.extract_strided_slice %790 {offsets = [0, 0], sizes = [2, 32], strides = [1, 1]} : vector<2x128xf32> to vector<2x32xf32>
    %793 = vector.extract_strided_slice %790 {offsets = [0, 32], sizes = [2, 32], strides = [1, 1]} : vector<2x128xf32> to vector<2x32xf32>
    %794 = vector.extract_strided_slice %791 {offsets = [0, 64], sizes = [2, 32], strides = [1, 1]} : vector<2x128xf32> to vector<2x32xf32>
    %795 = vector.extract_strided_slice %790 {offsets = [0, 96], sizes = [2, 32], strides = [1, 1]} : vector<2x128xf32> to vector<2x32xf32>
    %796 = arith.mulf %754, %793 : vector<2x32xf32>
    %797 = arith.mulf %792, %794 : vector<2x32xf32>
    %798 = arith.addf %796, %797 : vector<2x32xf32>
    %799 = math.tanh %798 : vector<2x32xf32>
    %800 = arith.mulf %795, %799 : vector<2x32xf32>
    %801 = arith.truncf %800 : vector<2x32xf32> to vector<2x32xbf16>
    %cst_157 = arith.constant dense<0.000000e+00> : vector<2x128xf32>
    %802 = tpu.matmul %801, %27, %cst_157 {dimension_numbers = #tpu.dot_dimension_numbers<[1], [0], [0], [1], [0, 0, 1, 1], [], []>} : vector<2x32xbf16>, vector<32x128xbf16>, vector<2x128xf32> -> vector<2x128xf32>
    %803 = arith.truncf %778 : vector<2x32xf32> to vector<2x32xbf16>
    %cst_158 = arith.constant dense<0.000000e+00> : vector<2x128xf32>
    %804 = tpu.matmul %803, %25, %cst_158 {dimension_numbers = #tpu.dot_dimension_numbers<[1], [0], [0], [1], [0, 0, 1, 1], [], []>} : vector<2x32xbf16>, vector<32x128xbf16>, vector<2x128xf32> -> vector<2x128xf32>
    %805 = arith.addf %802, %804 : vector<2x128xf32>
    %806 = vector.broadcast %29 : vector<1x128xf32> to vector<2x128xf32>
    %807 = arith.addf %805, %806 : vector<2x128xf32>
    %808 = arith.negf %807 : vector<2x128xf32>
    %809 = math.exp %808 : vector<2x128xf32>
    %cst_159 = arith.constant 1.000000e+00 : f32
    %810 = vector.broadcast %cst_159 : f32 to vector<2x128xf32>
    %811 = arith.addf %810, %809 : vector<2x128xf32>
    %812 = arith.divf %810, %811 : vector<2x128xf32>
    %813 = math.tanh %807 : vector<2x128xf32>
    %814 = vector.extract_strided_slice %812 {offsets = [0, 0], sizes = [2, 32], strides = [1, 1]} : vector<2x128xf32> to vector<2x32xf32>
    %815 = vector.extract_strided_slice %812 {offsets = [0, 32], sizes = [2, 32], strides = [1, 1]} : vector<2x128xf32> to vector<2x32xf32>
    %816 = vector.extract_strided_slice %813 {offsets = [0, 64], sizes = [2, 32], strides = [1, 1]} : vector<2x128xf32> to vector<2x32xf32>
    %817 = vector.extract_strided_slice %812 {offsets = [0, 96], sizes = [2, 32], strides = [1, 1]} : vector<2x128xf32> to vector<2x32xf32>
    %818 = arith.mulf %776, %815 : vector<2x32xf32>
    %819 = arith.mulf %814, %816 : vector<2x32xf32>
    %820 = arith.addf %818, %819 : vector<2x32xf32>
    %821 = math.tanh %820 : vector<2x32xf32>
    %822 = arith.mulf %817, %821 : vector<2x32xf32>
    %c0_160 = arith.constant 0 : index
    %c34 = arith.constant 34 : index
    %c0_161 = arith.constant 0 : index
    %823 = vector.load %arg9[%c0_160, %c34, %c0_161] : memref<1x64x32xf32, #tpu.memory_space<vmem>>, vector<1x2x32xf32>
    %824 = vector.shape_cast %823 : vector<1x2x32xf32> to vector<2x32xf32>
    %825 = vector.shape_cast %822 : vector<2x32xf32> to vector<1x2x32xf32>
    tpu.vector_store %arg9[%c0_160, %c34, %c0_161], %825 {strides = array<i32>} : memref<1x64x32xf32, #tpu.memory_space<vmem>>, vector<1x2x32xf32>,
    %826 = vector.extract_strided_slice %21 {offsets = [36, 0], sizes = [2, 128], strides = [1, 1]} : vector<64x128xf32> to vector<2x128xf32>
    %827 = arith.truncf %800 : vector<2x32xf32> to vector<2x32xbf16>
    %cst_162 = arith.constant dense<0.000000e+00> : vector<2x128xf32>
    %828 = tpu.matmul %827, %23, %cst_162 {dimension_numbers = #tpu.dot_dimension_numbers<[1], [0], [0], [1], [0, 0, 1, 1], [], []>} : vector<2x32xbf16>, vector<32x128xbf16>, vector<2x128xf32> -> vector<2x128xf32>
    %829 = arith.addf %826, %828 : vector<2x128xf32>
    %830 = arith.negf %829 : vector<2x128xf32>
    %831 = math.exp %830 : vector<2x128xf32>
    %cst_163 = arith.constant 1.000000e+00 : f32
    %832 = vector.broadcast %cst_163 : f32 to vector<2x128xf32>
    %833 = arith.addf %832, %831 : vector<2x128xf32>
    %834 = arith.divf %832, %833 : vector<2x128xf32>
    %835 = math.tanh %829 : vector<2x128xf32>
    %836 = vector.extract_strided_slice %834 {offsets = [0, 0], sizes = [2, 32], strides = [1, 1]} : vector<2x128xf32> to vector<2x32xf32>
    %837 = vector.extract_strided_slice %834 {offsets = [0, 32], sizes = [2, 32], strides = [1, 1]} : vector<2x128xf32> to vector<2x32xf32>
    %838 = vector.extract_strided_slice %835 {offsets = [0, 64], sizes = [2, 32], strides = [1, 1]} : vector<2x128xf32> to vector<2x32xf32>
    %839 = vector.extract_strided_slice %834 {offsets = [0, 96], sizes = [2, 32], strides = [1, 1]} : vector<2x128xf32> to vector<2x32xf32>
    %840 = arith.mulf %798, %837 : vector<2x32xf32>
    %841 = arith.mulf %836, %838 : vector<2x32xf32>
    %842 = arith.addf %840, %841 : vector<2x32xf32>
    %843 = math.tanh %842 : vector<2x32xf32>
    %844 = arith.mulf %839, %843 : vector<2x32xf32>
    %845 = arith.truncf %844 : vector<2x32xf32> to vector<2x32xbf16>
    %cst_164 = arith.constant dense<0.000000e+00> : vector<2x128xf32>
    %846 = tpu.matmul %845, %27, %cst_164 {dimension_numbers = #tpu.dot_dimension_numbers<[1], [0], [0], [1], [0, 0, 1, 1], [], []>} : vector<2x32xbf16>, vector<32x128xbf16>, vector<2x128xf32> -> vector<2x128xf32>
    %847 = arith.truncf %822 : vector<2x32xf32> to vector<2x32xbf16>
    %cst_165 = arith.constant dense<0.000000e+00> : vector<2x128xf32>
    %848 = tpu.matmul %847, %25, %cst_165 {dimension_numbers = #tpu.dot_dimension_numbers<[1], [0], [0], [1], [0, 0, 1, 1], [], []>} : vector<2x32xbf16>, vector<32x128xbf16>, vector<2x128xf32> -> vector<2x128xf32>
    %849 = arith.addf %846, %848 : vector<2x128xf32>
    %850 = vector.broadcast %29 : vector<1x128xf32> to vector<2x128xf32>
    %851 = arith.addf %849, %850 : vector<2x128xf32>
    %852 = arith.negf %851 : vector<2x128xf32>
    %853 = math.exp %852 : vector<2x128xf32>
    %cst_166 = arith.constant 1.000000e+00 : f32
    %854 = vector.broadcast %cst_166 : f32 to vector<2x128xf32>
    %855 = arith.addf %854, %853 : vector<2x128xf32>
    %856 = arith.divf %854, %855 : vector<2x128xf32>
    %857 = math.tanh %851 : vector<2x128xf32>
    %858 = vector.extract_strided_slice %856 {offsets = [0, 0], sizes = [2, 32], strides = [1, 1]} : vector<2x128xf32> to vector<2x32xf32>
    %859 = vector.extract_strided_slice %856 {offsets = [0, 32], sizes = [2, 32], strides = [1, 1]} : vector<2x128xf32> to vector<2x32xf32>
    %860 = vector.extract_strided_slice %857 {offsets = [0, 64], sizes = [2, 32], strides = [1, 1]} : vector<2x128xf32> to vector<2x32xf32>
    %861 = vector.extract_strided_slice %856 {offsets = [0, 96], sizes = [2, 32], strides = [1, 1]} : vector<2x128xf32> to vector<2x32xf32>
    %862 = arith.mulf %820, %859 : vector<2x32xf32>
    %863 = arith.mulf %858, %860 : vector<2x32xf32>
    %864 = arith.addf %862, %863 : vector<2x32xf32>
    %865 = math.tanh %864 : vector<2x32xf32>
    %866 = arith.mulf %861, %865 : vector<2x32xf32>
    %c0_167 = arith.constant 0 : index
    %c36 = arith.constant 36 : index
    %c0_168 = arith.constant 0 : index
    %867 = vector.load %arg9[%c0_167, %c36, %c0_168] : memref<1x64x32xf32, #tpu.memory_space<vmem>>, vector<1x2x32xf32>
    %868 = vector.shape_cast %867 : vector<1x2x32xf32> to vector<2x32xf32>
    %869 = vector.shape_cast %866 : vector<2x32xf32> to vector<1x2x32xf32>
    tpu.vector_store %arg9[%c0_167, %c36, %c0_168], %869 {strides = array<i32>} : memref<1x64x32xf32, #tpu.memory_space<vmem>>, vector<1x2x32xf32>,
    %870 = vector.extract_strided_slice %21 {offsets = [38, 0], sizes = [2, 128], strides = [1, 1]} : vector<64x128xf32> to vector<2x128xf32>
    %871 = arith.truncf %844 : vector<2x32xf32> to vector<2x32xbf16>
    %cst_169 = arith.constant dense<0.000000e+00> : vector<2x128xf32>
    %872 = tpu.matmul %871, %23, %cst_169 {dimension_numbers = #tpu.dot_dimension_numbers<[1], [0], [0], [1], [0, 0, 1, 1], [], []>} : vector<2x32xbf16>, vector<32x128xbf16>, vector<2x128xf32> -> vector<2x128xf32>
    %873 = arith.addf %870, %872 : vector<2x128xf32>
    %874 = arith.negf %873 : vector<2x128xf32>
    %875 = math.exp %874 : vector<2x128xf32>
    %cst_170 = arith.constant 1.000000e+00 : f32
    %876 = vector.broadcast %cst_170 : f32 to vector<2x128xf32>
    %877 = arith.addf %876, %875 : vector<2x128xf32>
    %878 = arith.divf %876, %877 : vector<2x128xf32>
    %879 = math.tanh %873 : vector<2x128xf32>
    %880 = vector.extract_strided_slice %878 {offsets = [0, 0], sizes = [2, 32], strides = [1, 1]} : vector<2x128xf32> to vector<2x32xf32>
    %881 = vector.extract_strided_slice %878 {offsets = [0, 32], sizes = [2, 32], strides = [1, 1]} : vector<2x128xf32> to vector<2x32xf32>
    %882 = vector.extract_strided_slice %879 {offsets = [0, 64], sizes = [2, 32], strides = [1, 1]} : vector<2x128xf32> to vector<2x32xf32>
    %883 = vector.extract_strided_slice %878 {offsets = [0, 96], sizes = [2, 32], strides = [1, 1]} : vector<2x128xf32> to vector<2x32xf32>
    %884 = arith.mulf %842, %881 : vector<2x32xf32>
    %885 = arith.mulf %880, %882 : vector<2x32xf32>
    %886 = arith.addf %884, %885 : vector<2x32xf32>
    %887 = math.tanh %886 : vector<2x32xf32>
    %888 = arith.mulf %883, %887 : vector<2x32xf32>
    %889 = arith.truncf %888 : vector<2x32xf32> to vector<2x32xbf16>
    %cst_171 = arith.constant dense<0.000000e+00> : vector<2x128xf32>
    %890 = tpu.matmul %889, %27, %cst_171 {dimension_numbers = #tpu.dot_dimension_numbers<[1], [0], [0], [1], [0, 0, 1, 1], [], []>} : vector<2x32xbf16>, vector<32x128xbf16>, vector<2x128xf32> -> vector<2x128xf32>
    %891 = arith.truncf %866 : vector<2x32xf32> to vector<2x32xbf16>
    %cst_172 = arith.constant dense<0.000000e+00> : vector<2x128xf32>
    %892 = tpu.matmul %891, %25, %cst_172 {dimension_numbers = #tpu.dot_dimension_numbers<[1], [0], [0], [1], [0, 0, 1, 1], [], []>} : vector<2x32xbf16>, vector<32x128xbf16>, vector<2x128xf32> -> vector<2x128xf32>
    %893 = arith.addf %890, %892 : vector<2x128xf32>
    %894 = vector.broadcast %29 : vector<1x128xf32> to vector<2x128xf32>
    %895 = arith.addf %893, %894 : vector<2x128xf32>
    %896 = arith.negf %895 : vector<2x128xf32>
    %897 = math.exp %896 : vector<2x128xf32>
    %cst_173 = arith.constant 1.000000e+00 : f32
    %898 = vector.broadcast %cst_173 : f32 to vector<2x128xf32>
    %899 = arith.addf %898, %897 : vector<2x128xf32>
    %900 = arith.divf %898, %899 : vector<2x128xf32>
    %901 = math.tanh %895 : vector<2x128xf32>
    %902 = vector.extract_strided_slice %900 {offsets = [0, 0], sizes = [2, 32], strides = [1, 1]} : vector<2x128xf32> to vector<2x32xf32>
    %903 = vector.extract_strided_slice %900 {offsets = [0, 32], sizes = [2, 32], strides = [1, 1]} : vector<2x128xf32> to vector<2x32xf32>
    %904 = vector.extract_strided_slice %901 {offsets = [0, 64], sizes = [2, 32], strides = [1, 1]} : vector<2x128xf32> to vector<2x32xf32>
    %905 = vector.extract_strided_slice %900 {offsets = [0, 96], sizes = [2, 32], strides = [1, 1]} : vector<2x128xf32> to vector<2x32xf32>
    %906 = arith.mulf %864, %903 : vector<2x32xf32>
    %907 = arith.mulf %902, %904 : vector<2x32xf32>
    %908 = arith.addf %906, %907 : vector<2x32xf32>
    %909 = math.tanh %908 : vector<2x32xf32>
    %910 = arith.mulf %905, %909 : vector<2x32xf32>
    %c0_174 = arith.constant 0 : index
    %c38 = arith.constant 38 : index
    %c0_175 = arith.constant 0 : index
    %911 = vector.load %arg9[%c0_174, %c38, %c0_175] : memref<1x64x32xf32, #tpu.memory_space<vmem>>, vector<1x2x32xf32>
    %912 = vector.shape_cast %911 : vector<1x2x32xf32> to vector<2x32xf32>
    %913 = vector.shape_cast %910 : vector<2x32xf32> to vector<1x2x32xf32>
    tpu.vector_store %arg9[%c0_174, %c38, %c0_175], %913 {strides = array<i32>} : memref<1x64x32xf32, #tpu.memory_space<vmem>>, vector<1x2x32xf32>,
    %914 = vector.extract_strided_slice %21 {offsets = [40, 0], sizes = [2, 128], strides = [1, 1]} : vector<64x128xf32> to vector<2x128xf32>
    %915 = arith.truncf %888 : vector<2x32xf32> to vector<2x32xbf16>
    %cst_176 = arith.constant dense<0.000000e+00> : vector<2x128xf32>
    %916 = tpu.matmul %915, %23, %cst_176 {dimension_numbers = #tpu.dot_dimension_numbers<[1], [0], [0], [1], [0, 0, 1, 1], [], []>} : vector<2x32xbf16>, vector<32x128xbf16>, vector<2x128xf32> -> vector<2x128xf32>
    %917 = arith.addf %914, %916 : vector<2x128xf32>
    %918 = arith.negf %917 : vector<2x128xf32>
    %919 = math.exp %918 : vector<2x128xf32>
    %cst_177 = arith.constant 1.000000e+00 : f32
    %920 = vector.broadcast %cst_177 : f32 to vector<2x128xf32>
    %921 = arith.addf %920, %919 : vector<2x128xf32>
    %922 = arith.divf %920, %921 : vector<2x128xf32>
    %923 = math.tanh %917 : vector<2x128xf32>
    %924 = vector.extract_strided_slice %922 {offsets = [0, 0], sizes = [2, 32], strides = [1, 1]} : vector<2x128xf32> to vector<2x32xf32>
    %925 = vector.extract_strided_slice %922 {offsets = [0, 32], sizes = [2, 32], strides = [1, 1]} : vector<2x128xf32> to vector<2x32xf32>
    %926 = vector.extract_strided_slice %923 {offsets = [0, 64], sizes = [2, 32], strides = [1, 1]} : vector<2x128xf32> to vector<2x32xf32>
    %927 = vector.extract_strided_slice %922 {offsets = [0, 96], sizes = [2, 32], strides = [1, 1]} : vector<2x128xf32> to vector<2x32xf32>
    %928 = arith.mulf %886, %925 : vector<2x32xf32>
    %929 = arith.mulf %924, %926 : vector<2x32xf32>
    %930 = arith.addf %928, %929 : vector<2x32xf32>
    %931 = math.tanh %930 : vector<2x32xf32>
    %932 = arith.mulf %927, %931 : vector<2x32xf32>
    %933 = arith.truncf %932 : vector<2x32xf32> to vector<2x32xbf16>
    %cst_178 = arith.constant dense<0.000000e+00> : vector<2x128xf32>
    %934 = tpu.matmul %933, %27, %cst_178 {dimension_numbers = #tpu.dot_dimension_numbers<[1], [0], [0], [1], [0, 0, 1, 1], [], []>} : vector<2x32xbf16>, vector<32x128xbf16>, vector<2x128xf32> -> vector<2x128xf32>
    %935 = arith.truncf %910 : vector<2x32xf32> to vector<2x32xbf16>
    %cst_179 = arith.constant dense<0.000000e+00> : vector<2x128xf32>
    %936 = tpu.matmul %935, %25, %cst_179 {dimension_numbers = #tpu.dot_dimension_numbers<[1], [0], [0], [1], [0, 0, 1, 1], [], []>} : vector<2x32xbf16>, vector<32x128xbf16>, vector<2x128xf32> -> vector<2x128xf32>
    %937 = arith.addf %934, %936 : vector<2x128xf32>
    %938 = vector.broadcast %29 : vector<1x128xf32> to vector<2x128xf32>
    %939 = arith.addf %937, %938 : vector<2x128xf32>
    %940 = arith.negf %939 : vector<2x128xf32>
    %941 = math.exp %940 : vector<2x128xf32>
    %cst_180 = arith.constant 1.000000e+00 : f32
    %942 = vector.broadcast %cst_180 : f32 to vector<2x128xf32>
    %943 = arith.addf %942, %941 : vector<2x128xf32>
    %944 = arith.divf %942, %943 : vector<2x128xf32>
    %945 = math.tanh %939 : vector<2x128xf32>
    %946 = vector.extract_strided_slice %944 {offsets = [0, 0], sizes = [2, 32], strides = [1, 1]} : vector<2x128xf32> to vector<2x32xf32>
    %947 = vector.extract_strided_slice %944 {offsets = [0, 32], sizes = [2, 32], strides = [1, 1]} : vector<2x128xf32> to vector<2x32xf32>
    %948 = vector.extract_strided_slice %945 {offsets = [0, 64], sizes = [2, 32], strides = [1, 1]} : vector<2x128xf32> to vector<2x32xf32>
    %949 = vector.extract_strided_slice %944 {offsets = [0, 96], sizes = [2, 32], strides = [1, 1]} : vector<2x128xf32> to vector<2x32xf32>
    %950 = arith.mulf %908, %947 : vector<2x32xf32>
    %951 = arith.mulf %946, %948 : vector<2x32xf32>
    %952 = arith.addf %950, %951 : vector<2x32xf32>
    %953 = math.tanh %952 : vector<2x32xf32>
    %954 = arith.mulf %949, %953 : vector<2x32xf32>
    %c0_181 = arith.constant 0 : index
    %c40 = arith.constant 40 : index
    %c0_182 = arith.constant 0 : index
    %955 = vector.load %arg9[%c0_181, %c40, %c0_182] : memref<1x64x32xf32, #tpu.memory_space<vmem>>, vector<1x2x32xf32>
    %956 = vector.shape_cast %955 : vector<1x2x32xf32> to vector<2x32xf32>
    %957 = vector.shape_cast %954 : vector<2x32xf32> to vector<1x2x32xf32>
    tpu.vector_store %arg9[%c0_181, %c40, %c0_182], %957 {strides = array<i32>} : memref<1x64x32xf32, #tpu.memory_space<vmem>>, vector<1x2x32xf32>,
    %958 = vector.extract_strided_slice %21 {offsets = [42, 0], sizes = [2, 128], strides = [1, 1]} : vector<64x128xf32> to vector<2x128xf32>
    %959 = arith.truncf %932 : vector<2x32xf32> to vector<2x32xbf16>
    %cst_183 = arith.constant dense<0.000000e+00> : vector<2x128xf32>
    %960 = tpu.matmul %959, %23, %cst_183 {dimension_numbers = #tpu.dot_dimension_numbers<[1], [0], [0], [1], [0, 0, 1, 1], [], []>} : vector<2x32xbf16>, vector<32x128xbf16>, vector<2x128xf32> -> vector<2x128xf32>
    %961 = arith.addf %958, %960 : vector<2x128xf32>
    %962 = arith.negf %961 : vector<2x128xf32>
    %963 = math.exp %962 : vector<2x128xf32>
    %cst_184 = arith.constant 1.000000e+00 : f32
    %964 = vector.broadcast %cst_184 : f32 to vector<2x128xf32>
    %965 = arith.addf %964, %963 : vector<2x128xf32>
    %966 = arith.divf %964, %965 : vector<2x128xf32>
    %967 = math.tanh %961 : vector<2x128xf32>
    %968 = vector.extract_strided_slice %966 {offsets = [0, 0], sizes = [2, 32], strides = [1, 1]} : vector<2x128xf32> to vector<2x32xf32>
    %969 = vector.extract_strided_slice %966 {offsets = [0, 32], sizes = [2, 32], strides = [1, 1]} : vector<2x128xf32> to vector<2x32xf32>
    %970 = vector.extract_strided_slice %967 {offsets = [0, 64], sizes = [2, 32], strides = [1, 1]} : vector<2x128xf32> to vector<2x32xf32>
    %971 = vector.extract_strided_slice %966 {offsets = [0, 96], sizes = [2, 32], strides = [1, 1]} : vector<2x128xf32> to vector<2x32xf32>
    %972 = arith.mulf %930, %969 : vector<2x32xf32>
    %973 = arith.mulf %968, %970 : vector<2x32xf32>
    %974 = arith.addf %972, %973 : vector<2x32xf32>
    %975 = math.tanh %974 : vector<2x32xf32>
    %976 = arith.mulf %971, %975 : vector<2x32xf32>
    %977 = arith.truncf %976 : vector<2x32xf32> to vector<2x32xbf16>
    %cst_185 = arith.constant dense<0.000000e+00> : vector<2x128xf32>
    %978 = tpu.matmul %977, %27, %cst_185 {dimension_numbers = #tpu.dot_dimension_numbers<[1], [0], [0], [1], [0, 0, 1, 1], [], []>} : vector<2x32xbf16>, vector<32x128xbf16>, vector<2x128xf32> -> vector<2x128xf32>
    %979 = arith.truncf %954 : vector<2x32xf32> to vector<2x32xbf16>
    %cst_186 = arith.constant dense<0.000000e+00> : vector<2x128xf32>
    %980 = tpu.matmul %979, %25, %cst_186 {dimension_numbers = #tpu.dot_dimension_numbers<[1], [0], [0], [1], [0, 0, 1, 1], [], []>} : vector<2x32xbf16>, vector<32x128xbf16>, vector<2x128xf32> -> vector<2x128xf32>
    %981 = arith.addf %978, %980 : vector<2x128xf32>
    %982 = vector.broadcast %29 : vector<1x128xf32> to vector<2x128xf32>
    %983 = arith.addf %981, %982 : vector<2x128xf32>
    %984 = arith.negf %983 : vector<2x128xf32>
    %985 = math.exp %984 : vector<2x128xf32>
    %cst_187 = arith.constant 1.000000e+00 : f32
    %986 = vector.broadcast %cst_187 : f32 to vector<2x128xf32>
    %987 = arith.addf %986, %985 : vector<2x128xf32>
    %988 = arith.divf %986, %987 : vector<2x128xf32>
    %989 = math.tanh %983 : vector<2x128xf32>
    %990 = vector.extract_strided_slice %988 {offsets = [0, 0], sizes = [2, 32], strides = [1, 1]} : vector<2x128xf32> to vector<2x32xf32>
    %991 = vector.extract_strided_slice %988 {offsets = [0, 32], sizes = [2, 32], strides = [1, 1]} : vector<2x128xf32> to vector<2x32xf32>
    %992 = vector.extract_strided_slice %989 {offsets = [0, 64], sizes = [2, 32], strides = [1, 1]} : vector<2x128xf32> to vector<2x32xf32>
    %993 = vector.extract_strided_slice %988 {offsets = [0, 96], sizes = [2, 32], strides = [1, 1]} : vector<2x128xf32> to vector<2x32xf32>
    %994 = arith.mulf %952, %991 : vector<2x32xf32>
    %995 = arith.mulf %990, %992 : vector<2x32xf32>
    %996 = arith.addf %994, %995 : vector<2x32xf32>
    %997 = math.tanh %996 : vector<2x32xf32>
    %998 = arith.mulf %993, %997 : vector<2x32xf32>
    %c0_188 = arith.constant 0 : index
    %c42 = arith.constant 42 : index
    %c0_189 = arith.constant 0 : index
    %999 = vector.load %arg9[%c0_188, %c42, %c0_189] : memref<1x64x32xf32, #tpu.memory_space<vmem>>, vector<1x2x32xf32>
    %1000 = vector.shape_cast %999 : vector<1x2x32xf32> to vector<2x32xf32>
    %1001 = vector.shape_cast %998 : vector<2x32xf32> to vector<1x2x32xf32>
    tpu.vector_store %arg9[%c0_188, %c42, %c0_189], %1001 {strides = array<i32>} : memref<1x64x32xf32, #tpu.memory_space<vmem>>, vector<1x2x32xf32>,
    %1002 = vector.extract_strided_slice %21 {offsets = [44, 0], sizes = [2, 128], strides = [1, 1]} : vector<64x128xf32> to vector<2x128xf32>
    %1003 = arith.truncf %976 : vector<2x32xf32> to vector<2x32xbf16>
    %cst_190 = arith.constant dense<0.000000e+00> : vector<2x128xf32>
    %1004 = tpu.matmul %1003, %23, %cst_190 {dimension_numbers = #tpu.dot_dimension_numbers<[1], [0], [0], [1], [0, 0, 1, 1], [], []>} : vector<2x32xbf16>, vector<32x128xbf16>, vector<2x128xf32> -> vector<2x128xf32>
    %1005 = arith.addf %1002, %1004 : vector<2x128xf32>
    %1006 = arith.negf %1005 : vector<2x128xf32>
    %1007 = math.exp %1006 : vector<2x128xf32>
    %cst_191 = arith.constant 1.000000e+00 : f32
    %1008 = vector.broadcast %cst_191 : f32 to vector<2x128xf32>
    %1009 = arith.addf %1008, %1007 : vector<2x128xf32>
    %1010 = arith.divf %1008, %1009 : vector<2x128xf32>
    %1011 = math.tanh %1005 : vector<2x128xf32>
    %1012 = vector.extract_strided_slice %1010 {offsets = [0, 0], sizes = [2, 32], strides = [1, 1]} : vector<2x128xf32> to vector<2x32xf32>
    %1013 = vector.extract_strided_slice %1010 {offsets = [0, 32], sizes = [2, 32], strides = [1, 1]} : vector<2x128xf32> to vector<2x32xf32>
    %1014 = vector.extract_strided_slice %1011 {offsets = [0, 64], sizes = [2, 32], strides = [1, 1]} : vector<2x128xf32> to vector<2x32xf32>
    %1015 = vector.extract_strided_slice %1010 {offsets = [0, 96], sizes = [2, 32], strides = [1, 1]} : vector<2x128xf32> to vector<2x32xf32>
    %1016 = arith.mulf %974, %1013 : vector<2x32xf32>
    %1017 = arith.mulf %1012, %1014 : vector<2x32xf32>
    %1018 = arith.addf %1016, %1017 : vector<2x32xf32>
    %1019 = math.tanh %1018 : vector<2x32xf32>
    %1020 = arith.mulf %1015, %1019 : vector<2x32xf32>
    %1021 = arith.truncf %1020 : vector<2x32xf32> to vector<2x32xbf16>
    %cst_192 = arith.constant dense<0.000000e+00> : vector<2x128xf32>
    %1022 = tpu.matmul %1021, %27, %cst_192 {dimension_numbers = #tpu.dot_dimension_numbers<[1], [0], [0], [1], [0, 0, 1, 1], [], []>} : vector<2x32xbf16>, vector<32x128xbf16>, vector<2x128xf32> -> vector<2x128xf32>
    %1023 = arith.truncf %998 : vector<2x32xf32> to vector<2x32xbf16>
    %cst_193 = arith.constant dense<0.000000e+00> : vector<2x128xf32>
    %1024 = tpu.matmul %1023, %25, %cst_193 {dimension_numbers = #tpu.dot_dimension_numbers<[1], [0], [0], [1], [0, 0, 1, 1], [], []>} : vector<2x32xbf16>, vector<32x128xbf16>, vector<2x128xf32> -> vector<2x128xf32>
    %1025 = arith.addf %1022, %1024 : vector<2x128xf32>
    %1026 = vector.broadcast %29 : vector<1x128xf32> to vector<2x128xf32>
    %1027 = arith.addf %1025, %1026 : vector<2x128xf32>
    %1028 = arith.negf %1027 : vector<2x128xf32>
    %1029 = math.exp %1028 : vector<2x128xf32>
    %cst_194 = arith.constant 1.000000e+00 : f32
    %1030 = vector.broadcast %cst_194 : f32 to vector<2x128xf32>
    %1031 = arith.addf %1030, %1029 : vector<2x128xf32>
    %1032 = arith.divf %1030, %1031 : vector<2x128xf32>
    %1033 = math.tanh %1027 : vector<2x128xf32>
    %1034 = vector.extract_strided_slice %1032 {offsets = [0, 0], sizes = [2, 32], strides = [1, 1]} : vector<2x128xf32> to vector<2x32xf32>
    %1035 = vector.extract_strided_slice %1032 {offsets = [0, 32], sizes = [2, 32], strides = [1, 1]} : vector<2x128xf32> to vector<2x32xf32>
    %1036 = vector.extract_strided_slice %1033 {offsets = [0, 64], sizes = [2, 32], strides = [1, 1]} : vector<2x128xf32> to vector<2x32xf32>
    %1037 = vector.extract_strided_slice %1032 {offsets = [0, 96], sizes = [2, 32], strides = [1, 1]} : vector<2x128xf32> to vector<2x32xf32>
    %1038 = arith.mulf %996, %1035 : vector<2x32xf32>
    %1039 = arith.mulf %1034, %1036 : vector<2x32xf32>
    %1040 = arith.addf %1038, %1039 : vector<2x32xf32>
    %1041 = math.tanh %1040 : vector<2x32xf32>
    %1042 = arith.mulf %1037, %1041 : vector<2x32xf32>
    %c0_195 = arith.constant 0 : index
    %c44 = arith.constant 44 : index
    %c0_196 = arith.constant 0 : index
    %1043 = vector.load %arg9[%c0_195, %c44, %c0_196] : memref<1x64x32xf32, #tpu.memory_space<vmem>>, vector<1x2x32xf32>
    %1044 = vector.shape_cast %1043 : vector<1x2x32xf32> to vector<2x32xf32>
    %1045 = vector.shape_cast %1042 : vector<2x32xf32> to vector<1x2x32xf32>
    tpu.vector_store %arg9[%c0_195, %c44, %c0_196], %1045 {strides = array<i32>} : memref<1x64x32xf32, #tpu.memory_space<vmem>>, vector<1x2x32xf32>,
    %1046 = vector.extract_strided_slice %21 {offsets = [46, 0], sizes = [2, 128], strides = [1, 1]} : vector<64x128xf32> to vector<2x128xf32>
    %1047 = arith.truncf %1020 : vector<2x32xf32> to vector<2x32xbf16>
    %cst_197 = arith.constant dense<0.000000e+00> : vector<2x128xf32>
    %1048 = tpu.matmul %1047, %23, %cst_197 {dimension_numbers = #tpu.dot_dimension_numbers<[1], [0], [0], [1], [0, 0, 1, 1], [], []>} : vector<2x32xbf16>, vector<32x128xbf16>, vector<2x128xf32> -> vector<2x128xf32>
    %1049 = arith.addf %1046, %1048 : vector<2x128xf32>
    %1050 = arith.negf %1049 : vector<2x128xf32>
    %1051 = math.exp %1050 : vector<2x128xf32>
    %cst_198 = arith.constant 1.000000e+00 : f32
    %1052 = vector.broadcast %cst_198 : f32 to vector<2x128xf32>
    %1053 = arith.addf %1052, %1051 : vector<2x128xf32>
    %1054 = arith.divf %1052, %1053 : vector<2x128xf32>
    %1055 = math.tanh %1049 : vector<2x128xf32>
    %1056 = vector.extract_strided_slice %1054 {offsets = [0, 0], sizes = [2, 32], strides = [1, 1]} : vector<2x128xf32> to vector<2x32xf32>
    %1057 = vector.extract_strided_slice %1054 {offsets = [0, 32], sizes = [2, 32], strides = [1, 1]} : vector<2x128xf32> to vector<2x32xf32>
    %1058 = vector.extract_strided_slice %1055 {offsets = [0, 64], sizes = [2, 32], strides = [1, 1]} : vector<2x128xf32> to vector<2x32xf32>
    %1059 = vector.extract_strided_slice %1054 {offsets = [0, 96], sizes = [2, 32], strides = [1, 1]} : vector<2x128xf32> to vector<2x32xf32>
    %1060 = arith.mulf %1018, %1057 : vector<2x32xf32>
    %1061 = arith.mulf %1056, %1058 : vector<2x32xf32>
    %1062 = arith.addf %1060, %1061 : vector<2x32xf32>
    %1063 = math.tanh %1062 : vector<2x32xf32>
    %1064 = arith.mulf %1059, %1063 : vector<2x32xf32>
    %1065 = arith.truncf %1064 : vector<2x32xf32> to vector<2x32xbf16>
    %cst_199 = arith.constant dense<0.000000e+00> : vector<2x128xf32>
    %1066 = tpu.matmul %1065, %27, %cst_199 {dimension_numbers = #tpu.dot_dimension_numbers<[1], [0], [0], [1], [0, 0, 1, 1], [], []>} : vector<2x32xbf16>, vector<32x128xbf16>, vector<2x128xf32> -> vector<2x128xf32>
    %1067 = arith.truncf %1042 : vector<2x32xf32> to vector<2x32xbf16>
    %cst_200 = arith.constant dense<0.000000e+00> : vector<2x128xf32>
    %1068 = tpu.matmul %1067, %25, %cst_200 {dimension_numbers = #tpu.dot_dimension_numbers<[1], [0], [0], [1], [0, 0, 1, 1], [], []>} : vector<2x32xbf16>, vector<32x128xbf16>, vector<2x128xf32> -> vector<2x128xf32>
    %1069 = arith.addf %1066, %1068 : vector<2x128xf32>
    %1070 = vector.broadcast %29 : vector<1x128xf32> to vector<2x128xf32>
    %1071 = arith.addf %1069, %1070 : vector<2x128xf32>
    %1072 = arith.negf %1071 : vector<2x128xf32>
    %1073 = math.exp %1072 : vector<2x128xf32>
    %cst_201 = arith.constant 1.000000e+00 : f32
    %1074 = vector.broadcast %cst_201 : f32 to vector<2x128xf32>
    %1075 = arith.addf %1074, %1073 : vector<2x128xf32>
    %1076 = arith.divf %1074, %1075 : vector<2x128xf32>
    %1077 = math.tanh %1071 : vector<2x128xf32>
    %1078 = vector.extract_strided_slice %1076 {offsets = [0, 0], sizes = [2, 32], strides = [1, 1]} : vector<2x128xf32> to vector<2x32xf32>
    %1079 = vector.extract_strided_slice %1076 {offsets = [0, 32], sizes = [2, 32], strides = [1, 1]} : vector<2x128xf32> to vector<2x32xf32>
    %1080 = vector.extract_strided_slice %1077 {offsets = [0, 64], sizes = [2, 32], strides = [1, 1]} : vector<2x128xf32> to vector<2x32xf32>
    %1081 = vector.extract_strided_slice %1076 {offsets = [0, 96], sizes = [2, 32], strides = [1, 1]} : vector<2x128xf32> to vector<2x32xf32>
    %1082 = arith.mulf %1040, %1079 : vector<2x32xf32>
    %1083 = arith.mulf %1078, %1080 : vector<2x32xf32>
    %1084 = arith.addf %1082, %1083 : vector<2x32xf32>
    %1085 = math.tanh %1084 : vector<2x32xf32>
    %1086 = arith.mulf %1081, %1085 : vector<2x32xf32>
    %c0_202 = arith.constant 0 : index
    %c46 = arith.constant 46 : index
    %c0_203 = arith.constant 0 : index
    %1087 = vector.load %arg9[%c0_202, %c46, %c0_203] : memref<1x64x32xf32, #tpu.memory_space<vmem>>, vector<1x2x32xf32>
    %1088 = vector.shape_cast %1087 : vector<1x2x32xf32> to vector<2x32xf32>
    %1089 = vector.shape_cast %1086 : vector<2x32xf32> to vector<1x2x32xf32>
    tpu.vector_store %arg9[%c0_202, %c46, %c0_203], %1089 {strides = array<i32>} : memref<1x64x32xf32, #tpu.memory_space<vmem>>, vector<1x2x32xf32>,
    %1090 = vector.extract_strided_slice %21 {offsets = [48, 0], sizes = [2, 128], strides = [1, 1]} : vector<64x128xf32> to vector<2x128xf32>
    %1091 = arith.truncf %1064 : vector<2x32xf32> to vector<2x32xbf16>
    %cst_204 = arith.constant dense<0.000000e+00> : vector<2x128xf32>
    %1092 = tpu.matmul %1091, %23, %cst_204 {dimension_numbers = #tpu.dot_dimension_numbers<[1], [0], [0], [1], [0, 0, 1, 1], [], []>} : vector<2x32xbf16>, vector<32x128xbf16>, vector<2x128xf32> -> vector<2x128xf32>
    %1093 = arith.addf %1090, %1092 : vector<2x128xf32>
    %1094 = arith.negf %1093 : vector<2x128xf32>
    %1095 = math.exp %1094 : vector<2x128xf32>
    %cst_205 = arith.constant 1.000000e+00 : f32
    %1096 = vector.broadcast %cst_205 : f32 to vector<2x128xf32>
    %1097 = arith.addf %1096, %1095 : vector<2x128xf32>
    %1098 = arith.divf %1096, %1097 : vector<2x128xf32>
    %1099 = math.tanh %1093 : vector<2x128xf32>
    %1100 = vector.extract_strided_slice %1098 {offsets = [0, 0], sizes = [2, 32], strides = [1, 1]} : vector<2x128xf32> to vector<2x32xf32>
    %1101 = vector.extract_strided_slice %1098 {offsets = [0, 32], sizes = [2, 32], strides = [1, 1]} : vector<2x128xf32> to vector<2x32xf32>
    %1102 = vector.extract_strided_slice %1099 {offsets = [0, 64], sizes = [2, 32], strides = [1, 1]} : vector<2x128xf32> to vector<2x32xf32>
    %1103 = vector.extract_strided_slice %1098 {offsets = [0, 96], sizes = [2, 32], strides = [1, 1]} : vector<2x128xf32> to vector<2x32xf32>
    %1104 = arith.mulf %1062, %1101 : vector<2x32xf32>
    %1105 = arith.mulf %1100, %1102 : vector<2x32xf32>
    %1106 = arith.addf %1104, %1105 : vector<2x32xf32>
    %1107 = math.tanh %1106 : vector<2x32xf32>
    %1108 = arith.mulf %1103, %1107 : vector<2x32xf32>
    %1109 = arith.truncf %1108 : vector<2x32xf32> to vector<2x32xbf16>
    %cst_206 = arith.constant dense<0.000000e+00> : vector<2x128xf32>
    %1110 = tpu.matmul %1109, %27, %cst_206 {dimension_numbers = #tpu.dot_dimension_numbers<[1], [0], [0], [1], [0, 0, 1, 1], [], []>} : vector<2x32xbf16>, vector<32x128xbf16>, vector<2x128xf32> -> vector<2x128xf32>
    %1111 = arith.truncf %1086 : vector<2x32xf32> to vector<2x32xbf16>
    %cst_207 = arith.constant dense<0.000000e+00> : vector<2x128xf32>
    %1112 = tpu.matmul %1111, %25, %cst_207 {dimension_numbers = #tpu.dot_dimension_numbers<[1], [0], [0], [1], [0, 0, 1, 1], [], []>} : vector<2x32xbf16>, vector<32x128xbf16>, vector<2x128xf32> -> vector<2x128xf32>
    %1113 = arith.addf %1110, %1112 : vector<2x128xf32>
    %1114 = vector.broadcast %29 : vector<1x128xf32> to vector<2x128xf32>
    %1115 = arith.addf %1113, %1114 : vector<2x128xf32>
    %1116 = arith.negf %1115 : vector<2x128xf32>
    %1117 = math.exp %1116 : vector<2x128xf32>
    %cst_208 = arith.constant 1.000000e+00 : f32
    %1118 = vector.broadcast %cst_208 : f32 to vector<2x128xf32>
    %1119 = arith.addf %1118, %1117 : vector<2x128xf32>
    %1120 = arith.divf %1118, %1119 : vector<2x128xf32>
    %1121 = math.tanh %1115 : vector<2x128xf32>
    %1122 = vector.extract_strided_slice %1120 {offsets = [0, 0], sizes = [2, 32], strides = [1, 1]} : vector<2x128xf32> to vector<2x32xf32>
    %1123 = vector.extract_strided_slice %1120 {offsets = [0, 32], sizes = [2, 32], strides = [1, 1]} : vector<2x128xf32> to vector<2x32xf32>
    %1124 = vector.extract_strided_slice %1121 {offsets = [0, 64], sizes = [2, 32], strides = [1, 1]} : vector<2x128xf32> to vector<2x32xf32>
    %1125 = vector.extract_strided_slice %1120 {offsets = [0, 96], sizes = [2, 32], strides = [1, 1]} : vector<2x128xf32> to vector<2x32xf32>
    %1126 = arith.mulf %1084, %1123 : vector<2x32xf32>
    %1127 = arith.mulf %1122, %1124 : vector<2x32xf32>
    %1128 = arith.addf %1126, %1127 : vector<2x32xf32>
    %1129 = math.tanh %1128 : vector<2x32xf32>
    %1130 = arith.mulf %1125, %1129 : vector<2x32xf32>
    %c0_209 = arith.constant 0 : index
    %c48 = arith.constant 48 : index
    %c0_210 = arith.constant 0 : index
    %1131 = vector.load %arg9[%c0_209, %c48, %c0_210] : memref<1x64x32xf32, #tpu.memory_space<vmem>>, vector<1x2x32xf32>
    %1132 = vector.shape_cast %1131 : vector<1x2x32xf32> to vector<2x32xf32>
    %1133 = vector.shape_cast %1130 : vector<2x32xf32> to vector<1x2x32xf32>
    tpu.vector_store %arg9[%c0_209, %c48, %c0_210], %1133 {strides = array<i32>} : memref<1x64x32xf32, #tpu.memory_space<vmem>>, vector<1x2x32xf32>,
    %1134 = vector.extract_strided_slice %21 {offsets = [50, 0], sizes = [2, 128], strides = [1, 1]} : vector<64x128xf32> to vector<2x128xf32>
    %1135 = arith.truncf %1108 : vector<2x32xf32> to vector<2x32xbf16>
    %cst_211 = arith.constant dense<0.000000e+00> : vector<2x128xf32>
    %1136 = tpu.matmul %1135, %23, %cst_211 {dimension_numbers = #tpu.dot_dimension_numbers<[1], [0], [0], [1], [0, 0, 1, 1], [], []>} : vector<2x32xbf16>, vector<32x128xbf16>, vector<2x128xf32> -> vector<2x128xf32>
    %1137 = arith.addf %1134, %1136 : vector<2x128xf32>
    %1138 = arith.negf %1137 : vector<2x128xf32>
    %1139 = math.exp %1138 : vector<2x128xf32>
    %cst_212 = arith.constant 1.000000e+00 : f32
    %1140 = vector.broadcast %cst_212 : f32 to vector<2x128xf32>
    %1141 = arith.addf %1140, %1139 : vector<2x128xf32>
    %1142 = arith.divf %1140, %1141 : vector<2x128xf32>
    %1143 = math.tanh %1137 : vector<2x128xf32>
    %1144 = vector.extract_strided_slice %1142 {offsets = [0, 0], sizes = [2, 32], strides = [1, 1]} : vector<2x128xf32> to vector<2x32xf32>
    %1145 = vector.extract_strided_slice %1142 {offsets = [0, 32], sizes = [2, 32], strides = [1, 1]} : vector<2x128xf32> to vector<2x32xf32>
    %1146 = vector.extract_strided_slice %1143 {offsets = [0, 64], sizes = [2, 32], strides = [1, 1]} : vector<2x128xf32> to vector<2x32xf32>
    %1147 = vector.extract_strided_slice %1142 {offsets = [0, 96], sizes = [2, 32], strides = [1, 1]} : vector<2x128xf32> to vector<2x32xf32>
    %1148 = arith.mulf %1106, %1145 : vector<2x32xf32>
    %1149 = arith.mulf %1144, %1146 : vector<2x32xf32>
    %1150 = arith.addf %1148, %1149 : vector<2x32xf32>
    %1151 = math.tanh %1150 : vector<2x32xf32>
    %1152 = arith.mulf %1147, %1151 : vector<2x32xf32>
    %1153 = arith.truncf %1152 : vector<2x32xf32> to vector<2x32xbf16>
    %cst_213 = arith.constant dense<0.000000e+00> : vector<2x128xf32>
    %1154 = tpu.matmul %1153, %27, %cst_213 {dimension_numbers = #tpu.dot_dimension_numbers<[1], [0], [0], [1], [0, 0, 1, 1], [], []>} : vector<2x32xbf16>, vector<32x128xbf16>, vector<2x128xf32> -> vector<2x128xf32>
    %1155 = arith.truncf %1130 : vector<2x32xf32> to vector<2x32xbf16>
    %cst_214 = arith.constant dense<0.000000e+00> : vector<2x128xf32>
    %1156 = tpu.matmul %1155, %25, %cst_214 {dimension_numbers = #tpu.dot_dimension_numbers<[1], [0], [0], [1], [0, 0, 1, 1], [], []>} : vector<2x32xbf16>, vector<32x128xbf16>, vector<2x128xf32> -> vector<2x128xf32>
    %1157 = arith.addf %1154, %1156 : vector<2x128xf32>
    %1158 = vector.broadcast %29 : vector<1x128xf32> to vector<2x128xf32>
    %1159 = arith.addf %1157, %1158 : vector<2x128xf32>
    %1160 = arith.negf %1159 : vector<2x128xf32>
    %1161 = math.exp %1160 : vector<2x128xf32>
    %cst_215 = arith.constant 1.000000e+00 : f32
    %1162 = vector.broadcast %cst_215 : f32 to vector<2x128xf32>
    %1163 = arith.addf %1162, %1161 : vector<2x128xf32>
    %1164 = arith.divf %1162, %1163 : vector<2x128xf32>
    %1165 = math.tanh %1159 : vector<2x128xf32>
    %1166 = vector.extract_strided_slice %1164 {offsets = [0, 0], sizes = [2, 32], strides = [1, 1]} : vector<2x128xf32> to vector<2x32xf32>
    %1167 = vector.extract_strided_slice %1164 {offsets = [0, 32], sizes = [2, 32], strides = [1, 1]} : vector<2x128xf32> to vector<2x32xf32>
    %1168 = vector.extract_strided_slice %1165 {offsets = [0, 64], sizes = [2, 32], strides = [1, 1]} : vector<2x128xf32> to vector<2x32xf32>
    %1169 = vector.extract_strided_slice %1164 {offsets = [0, 96], sizes = [2, 32], strides = [1, 1]} : vector<2x128xf32> to vector<2x32xf32>
    %1170 = arith.mulf %1128, %1167 : vector<2x32xf32>
    %1171 = arith.mulf %1166, %1168 : vector<2x32xf32>
    %1172 = arith.addf %1170, %1171 : vector<2x32xf32>
    %1173 = math.tanh %1172 : vector<2x32xf32>
    %1174 = arith.mulf %1169, %1173 : vector<2x32xf32>
    %c0_216 = arith.constant 0 : index
    %c50 = arith.constant 50 : index
    %c0_217 = arith.constant 0 : index
    %1175 = vector.load %arg9[%c0_216, %c50, %c0_217] : memref<1x64x32xf32, #tpu.memory_space<vmem>>, vector<1x2x32xf32>
    %1176 = vector.shape_cast %1175 : vector<1x2x32xf32> to vector<2x32xf32>
    %1177 = vector.shape_cast %1174 : vector<2x32xf32> to vector<1x2x32xf32>
    tpu.vector_store %arg9[%c0_216, %c50, %c0_217], %1177 {strides = array<i32>} : memref<1x64x32xf32, #tpu.memory_space<vmem>>, vector<1x2x32xf32>,
    %1178 = vector.extract_strided_slice %21 {offsets = [52, 0], sizes = [2, 128], strides = [1, 1]} : vector<64x128xf32> to vector<2x128xf32>
    %1179 = arith.truncf %1152 : vector<2x32xf32> to vector<2x32xbf16>
    %cst_218 = arith.constant dense<0.000000e+00> : vector<2x128xf32>
    %1180 = tpu.matmul %1179, %23, %cst_218 {dimension_numbers = #tpu.dot_dimension_numbers<[1], [0], [0], [1], [0, 0, 1, 1], [], []>} : vector<2x32xbf16>, vector<32x128xbf16>, vector<2x128xf32> -> vector<2x128xf32>
    %1181 = arith.addf %1178, %1180 : vector<2x128xf32>
    %1182 = arith.negf %1181 : vector<2x128xf32>
    %1183 = math.exp %1182 : vector<2x128xf32>
    %cst_219 = arith.constant 1.000000e+00 : f32
    %1184 = vector.broadcast %cst_219 : f32 to vector<2x128xf32>
    %1185 = arith.addf %1184, %1183 : vector<2x128xf32>
    %1186 = arith.divf %1184, %1185 : vector<2x128xf32>
    %1187 = math.tanh %1181 : vector<2x128xf32>
    %1188 = vector.extract_strided_slice %1186 {offsets = [0, 0], sizes = [2, 32], strides = [1, 1]} : vector<2x128xf32> to vector<2x32xf32>
    %1189 = vector.extract_strided_slice %1186 {offsets = [0, 32], sizes = [2, 32], strides = [1, 1]} : vector<2x128xf32> to vector<2x32xf32>
    %1190 = vector.extract_strided_slice %1187 {offsets = [0, 64], sizes = [2, 32], strides = [1, 1]} : vector<2x128xf32> to vector<2x32xf32>
    %1191 = vector.extract_strided_slice %1186 {offsets = [0, 96], sizes = [2, 32], strides = [1, 1]} : vector<2x128xf32> to vector<2x32xf32>
    %1192 = arith.mulf %1150, %1189 : vector<2x32xf32>
    %1193 = arith.mulf %1188, %1190 : vector<2x32xf32>
    %1194 = arith.addf %1192, %1193 : vector<2x32xf32>
    %1195 = math.tanh %1194 : vector<2x32xf32>
    %1196 = arith.mulf %1191, %1195 : vector<2x32xf32>
    %1197 = arith.truncf %1196 : vector<2x32xf32> to vector<2x32xbf16>
    %cst_220 = arith.constant dense<0.000000e+00> : vector<2x128xf32>
    %1198 = tpu.matmul %1197, %27, %cst_220 {dimension_numbers = #tpu.dot_dimension_numbers<[1], [0], [0], [1], [0, 0, 1, 1], [], []>} : vector<2x32xbf16>, vector<32x128xbf16>, vector<2x128xf32> -> vector<2x128xf32>
    %1199 = arith.truncf %1174 : vector<2x32xf32> to vector<2x32xbf16>
    %cst_221 = arith.constant dense<0.000000e+00> : vector<2x128xf32>
    %1200 = tpu.matmul %1199, %25, %cst_221 {dimension_numbers = #tpu.dot_dimension_numbers<[1], [0], [0], [1], [0, 0, 1, 1], [], []>} : vector<2x32xbf16>, vector<32x128xbf16>, vector<2x128xf32> -> vector<2x128xf32>
    %1201 = arith.addf %1198, %1200 : vector<2x128xf32>
    %1202 = vector.broadcast %29 : vector<1x128xf32> to vector<2x128xf32>
    %1203 = arith.addf %1201, %1202 : vector<2x128xf32>
    %1204 = arith.negf %1203 : vector<2x128xf32>
    %1205 = math.exp %1204 : vector<2x128xf32>
    %cst_222 = arith.constant 1.000000e+00 : f32
    %1206 = vector.broadcast %cst_222 : f32 to vector<2x128xf32>
    %1207 = arith.addf %1206, %1205 : vector<2x128xf32>
    %1208 = arith.divf %1206, %1207 : vector<2x128xf32>
    %1209 = math.tanh %1203 : vector<2x128xf32>
    %1210 = vector.extract_strided_slice %1208 {offsets = [0, 0], sizes = [2, 32], strides = [1, 1]} : vector<2x128xf32> to vector<2x32xf32>
    %1211 = vector.extract_strided_slice %1208 {offsets = [0, 32], sizes = [2, 32], strides = [1, 1]} : vector<2x128xf32> to vector<2x32xf32>
    %1212 = vector.extract_strided_slice %1209 {offsets = [0, 64], sizes = [2, 32], strides = [1, 1]} : vector<2x128xf32> to vector<2x32xf32>
    %1213 = vector.extract_strided_slice %1208 {offsets = [0, 96], sizes = [2, 32], strides = [1, 1]} : vector<2x128xf32> to vector<2x32xf32>
    %1214 = arith.mulf %1172, %1211 : vector<2x32xf32>
    %1215 = arith.mulf %1210, %1212 : vector<2x32xf32>
    %1216 = arith.addf %1214, %1215 : vector<2x32xf32>
    %1217 = math.tanh %1216 : vector<2x32xf32>
    %1218 = arith.mulf %1213, %1217 : vector<2x32xf32>
    %c0_223 = arith.constant 0 : index
    %c52 = arith.constant 52 : index
    %c0_224 = arith.constant 0 : index
    %1219 = vector.load %arg9[%c0_223, %c52, %c0_224] : memref<1x64x32xf32, #tpu.memory_space<vmem>>, vector<1x2x32xf32>
    %1220 = vector.shape_cast %1219 : vector<1x2x32xf32> to vector<2x32xf32>
    %1221 = vector.shape_cast %1218 : vector<2x32xf32> to vector<1x2x32xf32>
    tpu.vector_store %arg9[%c0_223, %c52, %c0_224], %1221 {strides = array<i32>} : memref<1x64x32xf32, #tpu.memory_space<vmem>>, vector<1x2x32xf32>,
    %1222 = vector.extract_strided_slice %21 {offsets = [54, 0], sizes = [2, 128], strides = [1, 1]} : vector<64x128xf32> to vector<2x128xf32>
    %1223 = arith.truncf %1196 : vector<2x32xf32> to vector<2x32xbf16>
    %cst_225 = arith.constant dense<0.000000e+00> : vector<2x128xf32>
    %1224 = tpu.matmul %1223, %23, %cst_225 {dimension_numbers = #tpu.dot_dimension_numbers<[1], [0], [0], [1], [0, 0, 1, 1], [], []>} : vector<2x32xbf16>, vector<32x128xbf16>, vector<2x128xf32> -> vector<2x128xf32>
    %1225 = arith.addf %1222, %1224 : vector<2x128xf32>
    %1226 = arith.negf %1225 : vector<2x128xf32>
    %1227 = math.exp %1226 : vector<2x128xf32>
    %cst_226 = arith.constant 1.000000e+00 : f32
    %1228 = vector.broadcast %cst_226 : f32 to vector<2x128xf32>
    %1229 = arith.addf %1228, %1227 : vector<2x128xf32>
    %1230 = arith.divf %1228, %1229 : vector<2x128xf32>
    %1231 = math.tanh %1225 : vector<2x128xf32>
    %1232 = vector.extract_strided_slice %1230 {offsets = [0, 0], sizes = [2, 32], strides = [1, 1]} : vector<2x128xf32> to vector<2x32xf32>
    %1233 = vector.extract_strided_slice %1230 {offsets = [0, 32], sizes = [2, 32], strides = [1, 1]} : vector<2x128xf32> to vector<2x32xf32>
    %1234 = vector.extract_strided_slice %1231 {offsets = [0, 64], sizes = [2, 32], strides = [1, 1]} : vector<2x128xf32> to vector<2x32xf32>
    %1235 = vector.extract_strided_slice %1230 {offsets = [0, 96], sizes = [2, 32], strides = [1, 1]} : vector<2x128xf32> to vector<2x32xf32>
    %1236 = arith.mulf %1194, %1233 : vector<2x32xf32>
    %1237 = arith.mulf %1232, %1234 : vector<2x32xf32>
    %1238 = arith.addf %1236, %1237 : vector<2x32xf32>
    %1239 = math.tanh %1238 : vector<2x32xf32>
    %1240 = arith.mulf %1235, %1239 : vector<2x32xf32>
    %1241 = arith.truncf %1240 : vector<2x32xf32> to vector<2x32xbf16>
    %cst_227 = arith.constant dense<0.000000e+00> : vector<2x128xf32>
    %1242 = tpu.matmul %1241, %27, %cst_227 {dimension_numbers = #tpu.dot_dimension_numbers<[1], [0], [0], [1], [0, 0, 1, 1], [], []>} : vector<2x32xbf16>, vector<32x128xbf16>, vector<2x128xf32> -> vector<2x128xf32>
    %1243 = arith.truncf %1218 : vector<2x32xf32> to vector<2x32xbf16>
    %cst_228 = arith.constant dense<0.000000e+00> : vector<2x128xf32>
    %1244 = tpu.matmul %1243, %25, %cst_228 {dimension_numbers = #tpu.dot_dimension_numbers<[1], [0], [0], [1], [0, 0, 1, 1], [], []>} : vector<2x32xbf16>, vector<32x128xbf16>, vector<2x128xf32> -> vector<2x128xf32>
    %1245 = arith.addf %1242, %1244 : vector<2x128xf32>
    %1246 = vector.broadcast %29 : vector<1x128xf32> to vector<2x128xf32>
    %1247 = arith.addf %1245, %1246 : vector<2x128xf32>
    %1248 = arith.negf %1247 : vector<2x128xf32>
    %1249 = math.exp %1248 : vector<2x128xf32>
    %cst_229 = arith.constant 1.000000e+00 : f32
    %1250 = vector.broadcast %cst_229 : f32 to vector<2x128xf32>
    %1251 = arith.addf %1250, %1249 : vector<2x128xf32>
    %1252 = arith.divf %1250, %1251 : vector<2x128xf32>
    %1253 = math.tanh %1247 : vector<2x128xf32>
    %1254 = vector.extract_strided_slice %1252 {offsets = [0, 0], sizes = [2, 32], strides = [1, 1]} : vector<2x128xf32> to vector<2x32xf32>
    %1255 = vector.extract_strided_slice %1252 {offsets = [0, 32], sizes = [2, 32], strides = [1, 1]} : vector<2x128xf32> to vector<2x32xf32>
    %1256 = vector.extract_strided_slice %1253 {offsets = [0, 64], sizes = [2, 32], strides = [1, 1]} : vector<2x128xf32> to vector<2x32xf32>
    %1257 = vector.extract_strided_slice %1252 {offsets = [0, 96], sizes = [2, 32], strides = [1, 1]} : vector<2x128xf32> to vector<2x32xf32>
    %1258 = arith.mulf %1216, %1255 : vector<2x32xf32>
    %1259 = arith.mulf %1254, %1256 : vector<2x32xf32>
    %1260 = arith.addf %1258, %1259 : vector<2x32xf32>
    %1261 = math.tanh %1260 : vector<2x32xf32>
    %1262 = arith.mulf %1257, %1261 : vector<2x32xf32>
    %c0_230 = arith.constant 0 : index
    %c54 = arith.constant 54 : index
    %c0_231 = arith.constant 0 : index
    %1263 = vector.load %arg9[%c0_230, %c54, %c0_231] : memref<1x64x32xf32, #tpu.memory_space<vmem>>, vector<1x2x32xf32>
    %1264 = vector.shape_cast %1263 : vector<1x2x32xf32> to vector<2x32xf32>
    %1265 = vector.shape_cast %1262 : vector<2x32xf32> to vector<1x2x32xf32>
    tpu.vector_store %arg9[%c0_230, %c54, %c0_231], %1265 {strides = array<i32>} : memref<1x64x32xf32, #tpu.memory_space<vmem>>, vector<1x2x32xf32>,
    %1266 = vector.extract_strided_slice %21 {offsets = [56, 0], sizes = [2, 128], strides = [1, 1]} : vector<64x128xf32> to vector<2x128xf32>
    %1267 = arith.truncf %1240 : vector<2x32xf32> to vector<2x32xbf16>
    %cst_232 = arith.constant dense<0.000000e+00> : vector<2x128xf32>
    %1268 = tpu.matmul %1267, %23, %cst_232 {dimension_numbers = #tpu.dot_dimension_numbers<[1], [0], [0], [1], [0, 0, 1, 1], [], []>} : vector<2x32xbf16>, vector<32x128xbf16>, vector<2x128xf32> -> vector<2x128xf32>
    %1269 = arith.addf %1266, %1268 : vector<2x128xf32>
    %1270 = arith.negf %1269 : vector<2x128xf32>
    %1271 = math.exp %1270 : vector<2x128xf32>
    %cst_233 = arith.constant 1.000000e+00 : f32
    %1272 = vector.broadcast %cst_233 : f32 to vector<2x128xf32>
    %1273 = arith.addf %1272, %1271 : vector<2x128xf32>
    %1274 = arith.divf %1272, %1273 : vector<2x128xf32>
    %1275 = math.tanh %1269 : vector<2x128xf32>
    %1276 = vector.extract_strided_slice %1274 {offsets = [0, 0], sizes = [2, 32], strides = [1, 1]} : vector<2x128xf32> to vector<2x32xf32>
    %1277 = vector.extract_strided_slice %1274 {offsets = [0, 32], sizes = [2, 32], strides = [1, 1]} : vector<2x128xf32> to vector<2x32xf32>
    %1278 = vector.extract_strided_slice %1275 {offsets = [0, 64], sizes = [2, 32], strides = [1, 1]} : vector<2x128xf32> to vector<2x32xf32>
    %1279 = vector.extract_strided_slice %1274 {offsets = [0, 96], sizes = [2, 32], strides = [1, 1]} : vector<2x128xf32> to vector<2x32xf32>
    %1280 = arith.mulf %1238, %1277 : vector<2x32xf32>
    %1281 = arith.mulf %1276, %1278 : vector<2x32xf32>
    %1282 = arith.addf %1280, %1281 : vector<2x32xf32>
    %1283 = math.tanh %1282 : vector<2x32xf32>
    %1284 = arith.mulf %1279, %1283 : vector<2x32xf32>
    %1285 = arith.truncf %1284 : vector<2x32xf32> to vector<2x32xbf16>
    %cst_234 = arith.constant dense<0.000000e+00> : vector<2x128xf32>
    %1286 = tpu.matmul %1285, %27, %cst_234 {dimension_numbers = #tpu.dot_dimension_numbers<[1], [0], [0], [1], [0, 0, 1, 1], [], []>} : vector<2x32xbf16>, vector<32x128xbf16>, vector<2x128xf32> -> vector<2x128xf32>
    %1287 = arith.truncf %1262 : vector<2x32xf32> to vector<2x32xbf16>
    %cst_235 = arith.constant dense<0.000000e+00> : vector<2x128xf32>
    %1288 = tpu.matmul %1287, %25, %cst_235 {dimension_numbers = #tpu.dot_dimension_numbers<[1], [0], [0], [1], [0, 0, 1, 1], [], []>} : vector<2x32xbf16>, vector<32x128xbf16>, vector<2x128xf32> -> vector<2x128xf32>
    %1289 = arith.addf %1286, %1288 : vector<2x128xf32>
    %1290 = vector.broadcast %29 : vector<1x128xf32> to vector<2x128xf32>
    %1291 = arith.addf %1289, %1290 : vector<2x128xf32>
    %1292 = arith.negf %1291 : vector<2x128xf32>
    %1293 = math.exp %1292 : vector<2x128xf32>
    %cst_236 = arith.constant 1.000000e+00 : f32
    %1294 = vector.broadcast %cst_236 : f32 to vector<2x128xf32>
    %1295 = arith.addf %1294, %1293 : vector<2x128xf32>
    %1296 = arith.divf %1294, %1295 : vector<2x128xf32>
    %1297 = math.tanh %1291 : vector<2x128xf32>
    %1298 = vector.extract_strided_slice %1296 {offsets = [0, 0], sizes = [2, 32], strides = [1, 1]} : vector<2x128xf32> to vector<2x32xf32>
    %1299 = vector.extract_strided_slice %1296 {offsets = [0, 32], sizes = [2, 32], strides = [1, 1]} : vector<2x128xf32> to vector<2x32xf32>
    %1300 = vector.extract_strided_slice %1297 {offsets = [0, 64], sizes = [2, 32], strides = [1, 1]} : vector<2x128xf32> to vector<2x32xf32>
    %1301 = vector.extract_strided_slice %1296 {offsets = [0, 96], sizes = [2, 32], strides = [1, 1]} : vector<2x128xf32> to vector<2x32xf32>
    %1302 = arith.mulf %1260, %1299 : vector<2x32xf32>
    %1303 = arith.mulf %1298, %1300 : vector<2x32xf32>
    %1304 = arith.addf %1302, %1303 : vector<2x32xf32>
    %1305 = math.tanh %1304 : vector<2x32xf32>
    %1306 = arith.mulf %1301, %1305 : vector<2x32xf32>
    %c0_237 = arith.constant 0 : index
    %c56 = arith.constant 56 : index
    %c0_238 = arith.constant 0 : index
    %1307 = vector.load %arg9[%c0_237, %c56, %c0_238] : memref<1x64x32xf32, #tpu.memory_space<vmem>>, vector<1x2x32xf32>
    %1308 = vector.shape_cast %1307 : vector<1x2x32xf32> to vector<2x32xf32>
    %1309 = vector.shape_cast %1306 : vector<2x32xf32> to vector<1x2x32xf32>
    tpu.vector_store %arg9[%c0_237, %c56, %c0_238], %1309 {strides = array<i32>} : memref<1x64x32xf32, #tpu.memory_space<vmem>>, vector<1x2x32xf32>,
    %1310 = vector.extract_strided_slice %21 {offsets = [58, 0], sizes = [2, 128], strides = [1, 1]} : vector<64x128xf32> to vector<2x128xf32>
    %1311 = arith.truncf %1284 : vector<2x32xf32> to vector<2x32xbf16>
    %cst_239 = arith.constant dense<0.000000e+00> : vector<2x128xf32>
    %1312 = tpu.matmul %1311, %23, %cst_239 {dimension_numbers = #tpu.dot_dimension_numbers<[1], [0], [0], [1], [0, 0, 1, 1], [], []>} : vector<2x32xbf16>, vector<32x128xbf16>, vector<2x128xf32> -> vector<2x128xf32>
    %1313 = arith.addf %1310, %1312 : vector<2x128xf32>
    %1314 = arith.negf %1313 : vector<2x128xf32>
    %1315 = math.exp %1314 : vector<2x128xf32>
    %cst_240 = arith.constant 1.000000e+00 : f32
    %1316 = vector.broadcast %cst_240 : f32 to vector<2x128xf32>
    %1317 = arith.addf %1316, %1315 : vector<2x128xf32>
    %1318 = arith.divf %1316, %1317 : vector<2x128xf32>
    %1319 = math.tanh %1313 : vector<2x128xf32>
    %1320 = vector.extract_strided_slice %1318 {offsets = [0, 0], sizes = [2, 32], strides = [1, 1]} : vector<2x128xf32> to vector<2x32xf32>
    %1321 = vector.extract_strided_slice %1318 {offsets = [0, 32], sizes = [2, 32], strides = [1, 1]} : vector<2x128xf32> to vector<2x32xf32>
    %1322 = vector.extract_strided_slice %1319 {offsets = [0, 64], sizes = [2, 32], strides = [1, 1]} : vector<2x128xf32> to vector<2x32xf32>
    %1323 = vector.extract_strided_slice %1318 {offsets = [0, 96], sizes = [2, 32], strides = [1, 1]} : vector<2x128xf32> to vector<2x32xf32>
    %1324 = arith.mulf %1282, %1321 : vector<2x32xf32>
    %1325 = arith.mulf %1320, %1322 : vector<2x32xf32>
    %1326 = arith.addf %1324, %1325 : vector<2x32xf32>
    %1327 = math.tanh %1326 : vector<2x32xf32>
    %1328 = arith.mulf %1323, %1327 : vector<2x32xf32>
    %1329 = arith.truncf %1328 : vector<2x32xf32> to vector<2x32xbf16>
    %cst_241 = arith.constant dense<0.000000e+00> : vector<2x128xf32>
    %1330 = tpu.matmul %1329, %27, %cst_241 {dimension_numbers = #tpu.dot_dimension_numbers<[1], [0], [0], [1], [0, 0, 1, 1], [], []>} : vector<2x32xbf16>, vector<32x128xbf16>, vector<2x128xf32> -> vector<2x128xf32>
    %1331 = arith.truncf %1306 : vector<2x32xf32> to vector<2x32xbf16>
    %cst_242 = arith.constant dense<0.000000e+00> : vector<2x128xf32>
    %1332 = tpu.matmul %1331, %25, %cst_242 {dimension_numbers = #tpu.dot_dimension_numbers<[1], [0], [0], [1], [0, 0, 1, 1], [], []>} : vector<2x32xbf16>, vector<32x128xbf16>, vector<2x128xf32> -> vector<2x128xf32>
    %1333 = arith.addf %1330, %1332 : vector<2x128xf32>
    %1334 = vector.broadcast %29 : vector<1x128xf32> to vector<2x128xf32>
    %1335 = arith.addf %1333, %1334 : vector<2x128xf32>
    %1336 = arith.negf %1335 : vector<2x128xf32>
    %1337 = math.exp %1336 : vector<2x128xf32>
    %cst_243 = arith.constant 1.000000e+00 : f32
    %1338 = vector.broadcast %cst_243 : f32 to vector<2x128xf32>
    %1339 = arith.addf %1338, %1337 : vector<2x128xf32>
    %1340 = arith.divf %1338, %1339 : vector<2x128xf32>
    %1341 = math.tanh %1335 : vector<2x128xf32>
    %1342 = vector.extract_strided_slice %1340 {offsets = [0, 0], sizes = [2, 32], strides = [1, 1]} : vector<2x128xf32> to vector<2x32xf32>
    %1343 = vector.extract_strided_slice %1340 {offsets = [0, 32], sizes = [2, 32], strides = [1, 1]} : vector<2x128xf32> to vector<2x32xf32>
    %1344 = vector.extract_strided_slice %1341 {offsets = [0, 64], sizes = [2, 32], strides = [1, 1]} : vector<2x128xf32> to vector<2x32xf32>
    %1345 = vector.extract_strided_slice %1340 {offsets = [0, 96], sizes = [2, 32], strides = [1, 1]} : vector<2x128xf32> to vector<2x32xf32>
    %1346 = arith.mulf %1304, %1343 : vector<2x32xf32>
    %1347 = arith.mulf %1342, %1344 : vector<2x32xf32>
    %1348 = arith.addf %1346, %1347 : vector<2x32xf32>
    %1349 = math.tanh %1348 : vector<2x32xf32>
    %1350 = arith.mulf %1345, %1349 : vector<2x32xf32>
    %c0_244 = arith.constant 0 : index
    %c58 = arith.constant 58 : index
    %c0_245 = arith.constant 0 : index
    %1351 = vector.load %arg9[%c0_244, %c58, %c0_245] : memref<1x64x32xf32, #tpu.memory_space<vmem>>, vector<1x2x32xf32>
    %1352 = vector.shape_cast %1351 : vector<1x2x32xf32> to vector<2x32xf32>
    %1353 = vector.shape_cast %1350 : vector<2x32xf32> to vector<1x2x32xf32>
    tpu.vector_store %arg9[%c0_244, %c58, %c0_245], %1353 {strides = array<i32>} : memref<1x64x32xf32, #tpu.memory_space<vmem>>, vector<1x2x32xf32>,
    %1354 = vector.extract_strided_slice %21 {offsets = [60, 0], sizes = [2, 128], strides = [1, 1]} : vector<64x128xf32> to vector<2x128xf32>
    %1355 = arith.truncf %1328 : vector<2x32xf32> to vector<2x32xbf16>
    %cst_246 = arith.constant dense<0.000000e+00> : vector<2x128xf32>
    %1356 = tpu.matmul %1355, %23, %cst_246 {dimension_numbers = #tpu.dot_dimension_numbers<[1], [0], [0], [1], [0, 0, 1, 1], [], []>} : vector<2x32xbf16>, vector<32x128xbf16>, vector<2x128xf32> -> vector<2x128xf32>
    %1357 = arith.addf %1354, %1356 : vector<2x128xf32>
    %1358 = arith.negf %1357 : vector<2x128xf32>
    %1359 = math.exp %1358 : vector<2x128xf32>
    %cst_247 = arith.constant 1.000000e+00 : f32
    %1360 = vector.broadcast %cst_247 : f32 to vector<2x128xf32>
    %1361 = arith.addf %1360, %1359 : vector<2x128xf32>
    %1362 = arith.divf %1360, %1361 : vector<2x128xf32>
    %1363 = math.tanh %1357 : vector<2x128xf32>
    %1364 = vector.extract_strided_slice %1362 {offsets = [0, 0], sizes = [2, 32], strides = [1, 1]} : vector<2x128xf32> to vector<2x32xf32>
    %1365 = vector.extract_strided_slice %1362 {offsets = [0, 32], sizes = [2, 32], strides = [1, 1]} : vector<2x128xf32> to vector<2x32xf32>
    %1366 = vector.extract_strided_slice %1363 {offsets = [0, 64], sizes = [2, 32], strides = [1, 1]} : vector<2x128xf32> to vector<2x32xf32>
    %1367 = vector.extract_strided_slice %1362 {offsets = [0, 96], sizes = [2, 32], strides = [1, 1]} : vector<2x128xf32> to vector<2x32xf32>
    %1368 = arith.mulf %1326, %1365 : vector<2x32xf32>
    %1369 = arith.mulf %1364, %1366 : vector<2x32xf32>
    %1370 = arith.addf %1368, %1369 : vector<2x32xf32>
    %1371 = math.tanh %1370 : vector<2x32xf32>
    %1372 = arith.mulf %1367, %1371 : vector<2x32xf32>
    %1373 = arith.truncf %1372 : vector<2x32xf32> to vector<2x32xbf16>
    %cst_248 = arith.constant dense<0.000000e+00> : vector<2x128xf32>
    %1374 = tpu.matmul %1373, %27, %cst_248 {dimension_numbers = #tpu.dot_dimension_numbers<[1], [0], [0], [1], [0, 0, 1, 1], [], []>} : vector<2x32xbf16>, vector<32x128xbf16>, vector<2x128xf32> -> vector<2x128xf32>
    %1375 = arith.truncf %1350 : vector<2x32xf32> to vector<2x32xbf16>
    %cst_249 = arith.constant dense<0.000000e+00> : vector<2x128xf32>
    %1376 = tpu.matmul %1375, %25, %cst_249 {dimension_numbers = #tpu.dot_dimension_numbers<[1], [0], [0], [1], [0, 0, 1, 1], [], []>} : vector<2x32xbf16>, vector<32x128xbf16>, vector<2x128xf32> -> vector<2x128xf32>
    %1377 = arith.addf %1374, %1376 : vector<2x128xf32>
    %1378 = vector.broadcast %29 : vector<1x128xf32> to vector<2x128xf32>
    %1379 = arith.addf %1377, %1378 : vector<2x128xf32>
    %1380 = arith.negf %1379 : vector<2x128xf32>
    %1381 = math.exp %1380 : vector<2x128xf32>
    %cst_250 = arith.constant 1.000000e+00 : f32
    %1382 = vector.broadcast %cst_250 : f32 to vector<2x128xf32>
    %1383 = arith.addf %1382, %1381 : vector<2x128xf32>
    %1384 = arith.divf %1382, %1383 : vector<2x128xf32>
    %1385 = math.tanh %1379 : vector<2x128xf32>
    %1386 = vector.extract_strided_slice %1384 {offsets = [0, 0], sizes = [2, 32], strides = [1, 1]} : vector<2x128xf32> to vector<2x32xf32>
    %1387 = vector.extract_strided_slice %1384 {offsets = [0, 32], sizes = [2, 32], strides = [1, 1]} : vector<2x128xf32> to vector<2x32xf32>
    %1388 = vector.extract_strided_slice %1385 {offsets = [0, 64], sizes = [2, 32], strides = [1, 1]} : vector<2x128xf32> to vector<2x32xf32>
    %1389 = vector.extract_strided_slice %1384 {offsets = [0, 96], sizes = [2, 32], strides = [1, 1]} : vector<2x128xf32> to vector<2x32xf32>
    %1390 = arith.mulf %1348, %1387 : vector<2x32xf32>
    %1391 = arith.mulf %1386, %1388 : vector<2x32xf32>
    %1392 = arith.addf %1390, %1391 : vector<2x32xf32>
    %1393 = math.tanh %1392 : vector<2x32xf32>
    %1394 = arith.mulf %1389, %1393 : vector<2x32xf32>
    %c0_251 = arith.constant 0 : index
    %c60 = arith.constant 60 : index
    %c0_252 = arith.constant 0 : index
    %1395 = vector.load %arg9[%c0_251, %c60, %c0_252] : memref<1x64x32xf32, #tpu.memory_space<vmem>>, vector<1x2x32xf32>
    %1396 = vector.shape_cast %1395 : vector<1x2x32xf32> to vector<2x32xf32>
    %1397 = vector.shape_cast %1394 : vector<2x32xf32> to vector<1x2x32xf32>
    tpu.vector_store %arg9[%c0_251, %c60, %c0_252], %1397 {strides = array<i32>} : memref<1x64x32xf32, #tpu.memory_space<vmem>>, vector<1x2x32xf32>,
    %1398 = vector.extract_strided_slice %21 {offsets = [62, 0], sizes = [2, 128], strides = [1, 1]} : vector<64x128xf32> to vector<2x128xf32>
    %1399 = arith.truncf %1372 : vector<2x32xf32> to vector<2x32xbf16>
    %cst_253 = arith.constant dense<0.000000e+00> : vector<2x128xf32>
    %1400 = tpu.matmul %1399, %23, %cst_253 {dimension_numbers = #tpu.dot_dimension_numbers<[1], [0], [0], [1], [0, 0, 1, 1], [], []>} : vector<2x32xbf16>, vector<32x128xbf16>, vector<2x128xf32> -> vector<2x128xf32>
    %1401 = arith.addf %1398, %1400 : vector<2x128xf32>
    %1402 = arith.negf %1401 : vector<2x128xf32>
    %1403 = math.exp %1402 : vector<2x128xf32>
    %cst_254 = arith.constant 1.000000e+00 : f32
    %1404 = vector.broadcast %cst_254 : f32 to vector<2x128xf32>
    %1405 = arith.addf %1404, %1403 : vector<2x128xf32>
    %1406 = arith.divf %1404, %1405 : vector<2x128xf32>
    %1407 = math.tanh %1401 : vector<2x128xf32>
    %1408 = vector.extract_strided_slice %1406 {offsets = [0, 0], sizes = [2, 32], strides = [1, 1]} : vector<2x128xf32> to vector<2x32xf32>
    %1409 = vector.extract_strided_slice %1406 {offsets = [0, 32], sizes = [2, 32], strides = [1, 1]} : vector<2x128xf32> to vector<2x32xf32>
    %1410 = vector.extract_strided_slice %1407 {offsets = [0, 64], sizes = [2, 32], strides = [1, 1]} : vector<2x128xf32> to vector<2x32xf32>
    %1411 = vector.extract_strided_slice %1406 {offsets = [0, 96], sizes = [2, 32], strides = [1, 1]} : vector<2x128xf32> to vector<2x32xf32>
    %1412 = arith.mulf %1370, %1409 : vector<2x32xf32>
    %1413 = arith.mulf %1408, %1410 : vector<2x32xf32>
    %1414 = arith.addf %1412, %1413 : vector<2x32xf32>
    %1415 = math.tanh %1414 : vector<2x32xf32>
    %1416 = arith.mulf %1411, %1415 : vector<2x32xf32>
    %1417 = arith.truncf %1416 : vector<2x32xf32> to vector<2x32xbf16>
    %cst_255 = arith.constant dense<0.000000e+00> : vector<2x128xf32>
    %1418 = tpu.matmul %1417, %27, %cst_255 {dimension_numbers = #tpu.dot_dimension_numbers<[1], [0], [0], [1], [0, 0, 1, 1], [], []>} : vector<2x32xbf16>, vector<32x128xbf16>, vector<2x128xf32> -> vector<2x128xf32>
    %1419 = arith.truncf %1394 : vector<2x32xf32> to vector<2x32xbf16>
    %cst_256 = arith.constant dense<0.000000e+00> : vector<2x128xf32>
    %1420 = tpu.matmul %1419, %25, %cst_256 {dimension_numbers = #tpu.dot_dimension_numbers<[1], [0], [0], [1], [0, 0, 1, 1], [], []>} : vector<2x32xbf16>, vector<32x128xbf16>, vector<2x128xf32> -> vector<2x128xf32>
    %1421 = arith.addf %1418, %1420 : vector<2x128xf32>
    %1422 = vector.broadcast %29 : vector<1x128xf32> to vector<2x128xf32>
    %1423 = arith.addf %1421, %1422 : vector<2x128xf32>
    %1424 = arith.negf %1423 : vector<2x128xf32>
    %1425 = math.exp %1424 : vector<2x128xf32>
    %cst_257 = arith.constant 1.000000e+00 : f32
    %1426 = vector.broadcast %cst_257 : f32 to vector<2x128xf32>
    %1427 = arith.addf %1426, %1425 : vector<2x128xf32>
    %1428 = arith.divf %1426, %1427 : vector<2x128xf32>
    %1429 = math.tanh %1423 : vector<2x128xf32>
    %1430 = vector.extract_strided_slice %1428 {offsets = [0, 0], sizes = [2, 32], strides = [1, 1]} : vector<2x128xf32> to vector<2x32xf32>
    %1431 = vector.extract_strided_slice %1428 {offsets = [0, 32], sizes = [2, 32], strides = [1, 1]} : vector<2x128xf32> to vector<2x32xf32>
    %1432 = vector.extract_strided_slice %1429 {offsets = [0, 64], sizes = [2, 32], strides = [1, 1]} : vector<2x128xf32> to vector<2x32xf32>
    %1433 = vector.extract_strided_slice %1428 {offsets = [0, 96], sizes = [2, 32], strides = [1, 1]} : vector<2x128xf32> to vector<2x32xf32>
    %1434 = arith.mulf %1392, %1431 : vector<2x32xf32>
    %1435 = arith.mulf %1430, %1432 : vector<2x32xf32>
    %1436 = arith.addf %1434, %1435 : vector<2x32xf32>
    %1437 = math.tanh %1436 : vector<2x32xf32>
    %1438 = arith.mulf %1433, %1437 : vector<2x32xf32>
    %c0_258 = arith.constant 0 : index
    %c62 = arith.constant 62 : index
    %c0_259 = arith.constant 0 : index
    %1439 = vector.load %arg9[%c0_258, %c62, %c0_259] : memref<1x64x32xf32, #tpu.memory_space<vmem>>, vector<1x2x32xf32>
    %1440 = vector.shape_cast %1439 : vector<1x2x32xf32> to vector<2x32xf32>
    %1441 = vector.shape_cast %1438 : vector<2x32xf32> to vector<1x2x32xf32>
    tpu.vector_store %arg9[%c0_258, %c62, %c0_259], %1441 {strides = array<i32>} : memref<1x64x32xf32, #tpu.memory_space<vmem>>, vector<1x2x32xf32>,
    return
  }
  func.func @transform_0(%arg0: i32) -> (i32, i32, i32) {
    %c0_i32 = arith.constant 0 : i32
    %c0_i32_0 = arith.constant 0 : i32
    %c0_i32_1 = arith.constant 0 : i32
    return %arg0, %c0_i32, %c0_i32_0 : i32, i32, i32
  }
  func.func @transform_1(%arg0: i32) -> (i32, i32, i32) {
    %c0_i32 = arith.constant 0 : i32
    %c0_i32_0 = arith.constant 0 : i32
    %c0_i32_1 = arith.constant 0 : i32
    return %arg0, %c0_i32, %c0_i32_0 : i32, i32, i32
  }
  func.func @transform_2(%arg0: i32) -> (i32, i32) {
    %c0_i32 = arith.constant 0 : i32
    %c0_i32_0 = arith.constant 0 : i32
    %c0_i32_1 = arith.constant 0 : i32
    return %c0_i32, %c0_i32_0 : i32, i32
  }
  func.func @transform_3(%arg0: i32) -> (i32, i32) {
    %c0_i32 = arith.constant 0 : i32
    %c0_i32_0 = arith.constant 0 : i32
    %c0_i32_1 = arith.constant 0 : i32
    return %c0_i32, %c0_i32_0 : i32, i32
  }
  func.func @transform_4(%arg0: i32) -> (i32, i32) {
    %c0_i32 = arith.constant 0 : i32
    %c0_i32_0 = arith.constant 0 : i32
    %c0_i32_1 = arith.constant 0 : i32
    return %c0_i32, %c0_i32_0 : i32, i32
  }
  func.func @transform_5(%arg0: i32) -> (i32, i32, i32) {
    %c0_i32 = arith.constant 0 : i32
    %c0_i32_0 = arith.constant 0 : i32
    %c0_i32_1 = arith.constant 0 : i32
    %c0_i32_2 = arith.constant 0 : i32
    return %c0_i32, %c0_i32_0, %c0_i32_1 : i32, i32, i32
  }
  func.func @transform_6(%arg0: i32) -> (i32, i32, i32) {
    %c0_i32 = arith.constant 0 : i32
    %c0_i32_0 = arith.constant 0 : i32
    %c0_i32_1 = arith.constant 0 : i32
    %c0_i32_2 = arith.constant 0 : i32
    return %c0_i32, %c0_i32_0, %c0_i32_1 : i32, i32, i32
  }
  func.func @transform_7(%arg0: i32) -> (i32, i32, i32) {
    %c0_i32 = arith.constant 0 : i32
    %c0_i32_0 = arith.constant 0 : i32
    %c0_i32_1 = arith.constant 0 : i32
    %c0_i32_2 = arith.constant 0 : i32
    return %c0_i32, %c0_i32_0, %c0_i32_1 : i32, i32, i32
  }
  func.func @transform_8(%arg0: i32) -> (i32, i32, i32) {
    %c0_i32 = arith.constant 0 : i32
    %c0_i32_0 = arith.constant 0 : i32
    %c0_i32_1 = arith.constant 0 : i32
    return %arg0, %c0_i32, %c0_i32_0 : i32, i32, i32
  }
}

</mosaic_0001>

<llo_original>
// kernel: lstm_model_forward.1
$region0: #{lstm_model_forward.1}
  #allocation0 [shape = 'u32[]', space=smem, size = 0x4, offset = 0x4, fixed_abs, tag = 'smem constant byte address 0x4 - core index']
  #allocation1 [shape = 'u32[144,128]{1,0:T(1,128)}', space=vmem, size = 0x12000, scoped, tag = 'internal scratch']
  %s0 = inlined_call_operand.vmem [shape: bf16[1,64,512], index: 0, kind: input, shape index: {}]
  %s1 = inlined_call_operand.vmem [shape: f32[1,64,32], index: 1, kind: input, shape index: {}]
  %s2 = inlined_call_operand.vmem [shape: bf16[32,32], index: 2, kind: input, shape index: {}]
  %s3 = inlined_call_operand.vmem [shape: bf16[512,32], index: 3, kind: input, shape index: {}]
  %s4 = inlined_call_operand.vmem [shape: f32[64,32], index: 4, kind: input, shape index: {}]
  %s5 = inlined_call_operand.vmem [shape: bf16[2,32,128], index: 5, kind: input, shape index: {}]
  %s6 = inlined_call_operand.vmem [shape: bf16[2,32,128], index: 6, kind: input, shape index: {}]
  %s7 = inlined_call_operand.vmem [shape: f32[2,1,128], index: 7, kind: input, shape index: {}]
  %s8 = inlined_call_operand.vmem [shape: f32[1,64,32], index: 8, kind: output, shape index: {}]
  %s9 = sld [smem:[#allocation0]]
  $region42: #{lstm_model_forward.1} parent=0
    _
  %s11 = ssub.s32 1, %s9
  %s12 = scalar_select 0, %s11, %s9
  // Predicated region
  $region2: #{lstm_model_forward.1} parent=0 // pred_check
    _
  $region3: #{lstm_model_forward.1} parent=0 // pred_check_branch
    %14 = sbr.rel (0) target = $region5
  $region4: #{lstm_model_forward.1} parent=0 // pred_region
    _
  $region5: #{lstm_model_forward.1} parent=0 // pred_fallthru
    _
  // Predicated region
  $region6: #{lstm_model_forward.1} parent=0 // pred_check
    _
  $region7: #{lstm_model_forward.1} parent=0 // pred_check_branch
    %16 = sbr.rel (0) target = $region9
  $region8: #{lstm_model_forward.1} parent=0 // pred_region
    _
  $region9: #{lstm_model_forward.1} parent=0 // pred_fallthru
    _
  // Predicated region
  $region10: #{lstm_model_forward.1} parent=0 // pred_check
    _
  $region11: #{lstm_model_forward.1} parent=0 // pred_check_branch
    %18 = sbr.rel (0) target = $region13
  $region12: #{lstm_model_forward.1} parent=0 // pred_region
    _
  $region13: #{lstm_model_forward.1} parent=0 // pred_fallthru
    _
  // Predicated region
  $region14: #{lstm_model_forward.1} parent=0 // pred_check
    _
  $region15: #{lstm_model_forward.1} parent=0 // pred_check_branch
    %20 = sbr.rel (0) target = $region17
  $region16: #{lstm_model_forward.1} parent=0 // pred_region
    _
  $region17: #{lstm_model_forward.1} parent=0 // pred_fallthru
    _
  // Predicated region
  $region18: #{lstm_model_forward.1} parent=0 // pred_check
    _
  $region19: #{lstm_model_forward.1} parent=0 // pred_check_branch
    %22 = sbr.rel (0) target = $region21
  $region20: #{lstm_model_forward.1} parent=0 // pred_region
    _
  $region21: #{lstm_model_forward.1} parent=0 // pred_fallthru
    _
  // Predicated region
  $region22: #{lstm_model_forward.1} parent=0 // pred_check
    _
  $region23: #{lstm_model_forward.1} parent=0 // pred_check_branch
    %24 = sbr.rel (0) target = $region25
  $region24: #{lstm_model_forward.1} parent=0 // pred_region
    _
  $region25: #{lstm_model_forward.1} parent=0 // pred_fallthru
    _
  // Predicated region
  $region26: #{lstm_model_forward.1} parent=0 // pred_check
    _
  $region27: #{lstm_model_forward.1} parent=0 // pred_check_branch
    %26 = sbr.rel (0) target = $region29
  $region28: #{lstm_model_forward.1} parent=0 // pred_region
    _
  $region29: #{lstm_model_forward.1} parent=0 // pred_fallthru
    _
  // Predicated region
  $region30: #{lstm_model_forward.1} parent=0 // pred_check
    _
  $region31: #{lstm_model_forward.1} parent=0 // pred_check_branch
    %28 = sbr.rel (0) target = $region33
  $region32: #{lstm_model_forward.1} parent=0 // pred_region
    _
  $region33: #{lstm_model_forward.1} parent=0 // pred_fallthru
    _
  %v30 = vld [vmem:[%s1] sm:$0xff]
  %v31 = vld [vmem:[%s1 + $0x8] sm:$0xff]
  %v32 = vld [vmem:[%s1 + $0x10] sm:$0xff]
  %v33 = vld [vmem:[%s1 + $0x18] sm:$0xff]
  %v34 = vld [vmem:[%s1 + $0x20] sm:$0xff]
  %v35 = vld [vmem:[%s1 + $0x28] sm:$0xff]
  %v36 = vld [vmem:[%s1 + $0x30] sm:$0xff]
  %v37 = vld [vmem:[%s1 + $0x38] sm:$0xff]
  %v38 = vpack.c.bf16 %v31, %v30
  %v39 = vpack.c.bf16 %v33, %v32
  %v40 = vpack.c.bf16 %v35, %v34
  %v41 = vpack.c.bf16 %v37, %v36
  %v42 = vld [vmem:[%s2] sm:$0xf]
  %v43 = vld [vmem:[%s2 + $0x4] sm:$0xf]
  %v44 = vld [vmem:[%s2 + $0x8] sm:$0xf]
  %v45 = vld [vmem:[%s2 + $0xc] sm:$0xf]
  %v46 = vld [vmem:[%s0] sm:$0xff]
  %v47 = vld [vmem:[%s0 + $0x8] sm:$0xff]
  %v48 = vld [vmem:[%s0 + $0x10] sm:$0xff]
  %v49 = vld [vmem:[%s0 + $0x18] sm:$0xff]
  %v50 = vld [vmem:[%s0 + $0x20] sm:$0xff]
  %v51 = vld [vmem:[%s0 + $0x28] sm:$0xff]
  %v52 = vld [vmem:[%s0 + $0x30] sm:$0xff]
  %v53 = vld [vmem:[%s0 + $0x38] sm:$0xff]
  %v54 = vld [vmem:[%s0 + $0x40] sm:$0xff]
  %v55 = vld [vmem:[%s0 + $0x48] sm:$0xff]
  %v56 = vld [vmem:[%s0 + $0x50] sm:$0xff]
  %v57 = vld [vmem:[%s0 + $0x58] sm:$0xff]
  %v58 = vld [vmem:[%s0 + $0x60] sm:$0xff]
  %v59 = vld [vmem:[%s0 + $0x68] sm:$0xff]
  %v60 = vld [vmem:[%s0 + $0x70] sm:$0xff]
  %v61 = vld [vmem:[%s0 + $0x78] sm:$0xff]
  %v62 = vld [vmem:[%s3] sm:$0xf]
  %v63 = vld [vmem:[%s3 + $0x4] sm:$0xf]
  %v64 = vld [vmem:[%s3 + $0x8] sm:$0xf]
  %v65 = vld [vmem:[%s3 + $0xc] sm:$0xf]
  %v66 = vld [vmem:[%s3 + $0x10] sm:$0xf]
  %v67 = vld [vmem:[%s3 + $0x14] sm:$0xf]
  %v68 = vld [vmem:[%s3 + $0x18] sm:$0xf]
  %v69 = vld [vmem:[%s3 + $0x1c] sm:$0xf]
  %v70 = vld [vmem:[%s3 + $0x20] sm:$0xf]
  %v71 = vld [vmem:[%s3 + $0x24] sm:$0xf]
  %v72 = vld [vmem:[%s3 + $0x28] sm:$0xf]
  %v73 = vld [vmem:[%s3 + $0x2c] sm:$0xf]
  %v74 = vld [vmem:[%s3 + $0x30] sm:$0xf]
  %v75 = vld [vmem:[%s3 + $0x34] sm:$0xf]
  %v76 = vld [vmem:[%s3 + $0x38] sm:$0xf]
  %v77 = vld [vmem:[%s3 + $0x3c] sm:$0xf]
  %v78 = vld [vmem:[%s3 + $0x40] sm:$0xf]
  %v79 = vld [vmem:[%s3 + $0x44] sm:$0xf]
  %v80 = vld [vmem:[%s3 + $0x48] sm:$0xf]
  %v81 = vld [vmem:[%s3 + $0x4c] sm:$0xf]
  %v82 = vld [vmem:[%s3 + $0x50] sm:$0xf]
  %v83 = vld [vmem:[%s3 + $0x54] sm:$0xf]
  %v84 = vld [vmem:[%s3 + $0x58] sm:$0xf]
  %v85 = vld [vmem:[%s3 + $0x5c] sm:$0xf]
  %v86 = vld [vmem:[%s3 + $0x60] sm:$0xf]
  %v87 = vld [vmem:[%s3 + $0x64] sm:$0xf]
  %v88 = vld [vmem:[%s3 + $0x68] sm:$0xf]
  %v89 = vld [vmem:[%s3 + $0x6c] sm:$0xf]
  %v90 = vld [vmem:[%s3 + $0x70] sm:$0xf]
  %v91 = vld [vmem:[%s3 + $0x74] sm:$0xf]
  %v92 = vld [vmem:[%s3 + $0x78] sm:$0xf]
  %v93 = vld [vmem:[%s3 + $0x7c] sm:$0xf]
  %v94 = vld [vmem:[%s3 + $0x80] sm:$0xf]
  %v95 = vld [vmem:[%s3 + $0x84] sm:$0xf]
  %v96 = vld [vmem:[%s3 + $0x88] sm:$0xf]
  %v97 = vld [vmem:[%s3 + $0x8c] sm:$0xf]
  %v98 = vld [vmem:[%s3 + $0x90] sm:$0xf]
  %v99 = vld [vmem:[%s3 + $0x94] sm:$0xf]
  %v100 = vld [vmem:[%s3 + $0x98] sm:$0xf]
  %v101 = vld [vmem:[%s3 + $0x9c] sm:$0xf]
  %v102 = vld [vmem:[%s3 + $0xa0] sm:$0xf]
  %v103 = vld [vmem:[%s3 + $0xa4] sm:$0xf]
  %v104 = vld [vmem:[%s3 + $0xa8] sm:$0xf]
  %v105 = vld [vmem:[%s3 + $0xac] sm:$0xf]
  %v106 = vld [vmem:[%s3 + $0xb0] sm:$0xf]
  %v107 = vld [vmem:[%s3 + $0xb4] sm:$0xf]
  %v108 = vld [vmem:[%s3 + $0xb8] sm:$0xf]
  %v109 = vld [vmem:[%s3 + $0xbc] sm:$0xf]
  %v110 = vld [vmem:[%s3 + $0xc0] sm:$0xf]
  %v111 = vld [vmem:[%s3 + $0xc4] sm:$0xf]
  %v112 = vld [vmem:[%s3 + $0xc8] sm:$0xf]
  %v113 = vld [vmem:[%s3 + $0xcc] sm:$0xf]
  %v114 = vld [vmem:[%s3 + $0xd0] sm:$0xf]
  %v115 = vld [vmem:[%s3 + $0xd4] sm:$0xf]
  %v116 = vld [vmem:[%s3 + $0xd8] sm:$0xf]
  %v117 = vld [vmem:[%s3 + $0xdc] sm:$0xf]
  %v118 = vld [vmem:[%s3 + $0xe0] sm:$0xf]
  %v119 = vld [vmem:[%s3 + $0xe4] sm:$0xf]
  %v120 = vld [vmem:[%s3 + $0xe8] sm:$0xf]
  %v121 = vld [vmem:[%s3 + $0xec] sm:$0xf]
  %v122 = vld [vmem:[%s3 + $0xf0] sm:$0xf]
  %v123 = vld [vmem:[%s3 + $0xf4] sm:$0xf]
  %v124 = vld [vmem:[%s3 + $0xf8] sm:$0xf]
  %v125 = vld [vmem:[%s3 + $0xfc] sm:$0xf]
  %v142 = vunpack.c.l.b16 %v46
  %v143 = vunpack.c.h.b16 %v46
  %v144 = vunpack.c.l.b16 %v47
  %v145 = vunpack.c.h.b16 %v47
  %v146 = vunpack.c.l.b16 %v48
  %v147 = vunpack.c.h.b16 %v48
  %v148 = vunpack.c.l.b16 %v49
  %v149 = vunpack.c.h.b16 %v49
  %v150 = vunpack.c.l.b16 %v50
  %v151 = vunpack.c.h.b16 %v50
  %v152 = vunpack.c.l.b16 %v51
  %v153 = vunpack.c.h.b16 %v51
  %v154 = vunpack.c.l.b16 %v52
  %v155 = vunpack.c.h.b16 %v52
  %v156 = vunpack.c.l.b16 %v53
  %v157 = vunpack.c.h.b16 %v53
  %v158 = vunpack.c.l.b16 %v54
  %v159 = vunpack.c.h.b16 %v54
  %v160 = vunpack.c.l.b16 %v55
  %v161 = vunpack.c.h.b16 %v55
  %v162 = vunpack.c.l.b16 %v56
  %v163 = vunpack.c.h.b16 %v56
  %v164 = vunpack.c.l.b16 %v57
  %v165 = vunpack.c.h.b16 %v57
  %v166 = vunpack.c.l.b16 %v58
  %v167 = vunpack.c.h.b16 %v58
  %v168 = vunpack.c.l.b16 %v59
  %v169 = vunpack.c.h.b16 %v59
  %v170 = vunpack.c.l.b16 %v60
  %v171 = vunpack.c.h.b16 %v60
  %v172 = vunpack.c.l.b16 %v61
  %v173 = vunpack.c.h.b16 %v61
  %v174 = vpack.c.b16 %v146, %v142
  %v175 = vpack.c.b16 %v147, %v143
  %v176 = vpack.c.b16 %v148, %v144
  %v177 = vpack.c.b16 %v149, %v145
  %v178 = vpack.c.b16 %v154, %v150
  %v179 = vpack.c.b16 %v155, %v151
  %v180 = vpack.c.b16 %v156, %v152
  %v181 = vpack.c.b16 %v157, %v153
  %v182 = vpack.c.b16 %v162, %v158
  %v183 = vpack.c.b16 %v163, %v159
  %v184 = vpack.c.b16 %v164, %v160
  %v185 = vpack.c.b16 %v165, %v161
  %v186 = vpack.c.b16 %v170, %v166
  %v187 = vpack.c.b16 %v171, %v167
  %v188 = vpack.c.b16 %v172, %v168
  %v189 = vpack.c.b16 %v173, %v169
  %v270 = vunpack.c.l.b16 %v62
  %v271 = vunpack.c.l.b16 %v63
  %v272 = vunpack.c.l.b16 %v64
  %v273 = vunpack.c.l.b16 %v65
  %v274 = vunpack.c.l.b16 %v66
  %v275 = vunpack.c.l.b16 %v67
  %v276 = vunpack.c.l.b16 %v68
  %v277 = vunpack.c.l.b16 %v69
  %v278 = vunpack.c.l.b16 %v70
  %v279 = vunpack.c.l.b16 %v71
  %v280 = vunpack.c.l.b16 %v72
  %v281 = vunpack.c.l.b16 %v73
  %v282 = vunpack.c.l.b16 %v74
  %v283 = vunpack.c.l.b16 %v75
  %v284 = vunpack.c.l.b16 %v76
  %v285 = vunpack.c.l.b16 %v77
  %v286 = vunpack.c.l.b16 %v78
  %v287 = vunpack.c.l.b16 %v79
  %v288 = vunpack.c.l.b16 %v80
  %v289 = vunpack.c.l.b16 %v81
  %v290 = vunpack.c.l.b16 %v82
  %v291 = vunpack.c.l.b16 %v83
  %v292 = vunpack.c.l.b16 %v84
  %v293 = vunpack.c.l.b16 %v85
  %v294 = vunpack.c.l.b16 %v86
  %v295 = vunpack.c.l.b16 %v87
  %v296 = vunpack.c.l.b16 %v88
  %v297 = vunpack.c.l.b16 %v89
  %v298 = vunpack.c.l.b16 %v90
  %v299 = vunpack.c.l.b16 %v91
  %v300 = vunpack.c.l.b16 %v92
  %v301 = vunpack.c.l.b16 %v93
  %v302 = vunpack.c.l.b16 %v94
  %v303 = vunpack.c.l.b16 %v95
  %v304 = vunpack.c.l.b16 %v96
  %v305 = vunpack.c.l.b16 %v97
  %v306 = vunpack.c.l.b16 %v98
  %v307 = vunpack.c.l.b16 %v99
  %v308 = vunpack.c.l.b16 %v100
  %v309 = vunpack.c.l.b16 %v101
  %v310 = vunpack.c.l.b16 %v102
  %v311 = vunpack.c.l.b16 %v103
  %v312 = vunpack.c.l.b16 %v104
  %v313 = vunpack.c.l.b16 %v105
  %v314 = vunpack.c.l.b16 %v106
  %v315 = vunpack.c.l.b16 %v107
  %v316 = vunpack.c.l.b16 %v108
  %v317 = vunpack.c.l.b16 %v109
  %v318 = vunpack.c.l.b16 %v110
  %v319 = vunpack.c.l.b16 %v111
  %v320 = vunpack.c.l.b16 %v112
  %v321 = vunpack.c.l.b16 %v113
  %v322 = vunpack.c.l.b16 %v114
  %v323 = vunpack.c.l.b16 %v115
  %v324 = vunpack.c.l.b16 %v116
  %v325 = vunpack.c.l.b16 %v117
  %v326 = vunpack.c.l.b16 %v118
  %v327 = vunpack.c.l.b16 %v119
  %v328 = vunpack.c.l.b16 %v120
  %v329 = vunpack.c.l.b16 %v121
  %v330 = vunpack.c.l.b16 %v122
  %v331 = vunpack.c.l.b16 %v123
  %v332 = vunpack.c.l.b16 %v124
  %v333 = vunpack.c.l.b16 %v125
  %v334 = vpack.c.b16 %v271, %v270
  %v335 = vpack.c.b16 %v273, %v272
  %v336 = vpack.c.b16 %v275, %v274
  %v337 = vpack.c.b16 %v277, %v276
  %v338 = vpack.c.b16 %v279, %v278
  %v339 = vpack.c.b16 %v281, %v280
  %v340 = vpack.c.b16 %v283, %v282
  %v341 = vpack.c.b16 %v285, %v284
  %v342 = vpack.c.b16 %v287, %v286
  %v343 = vpack.c.b16 %v289, %v288
  %v344 = vpack.c.b16 %v291, %v290
  %v345 = vpack.c.b16 %v293, %v292
  %v346 = vpack.c.b16 %v295, %v294
  %v347 = vpack.c.b16 %v297, %v296
  %v348 = vpack.c.b16 %v299, %v298
  %v349 = vpack.c.b16 %v301, %v300
  %v350 = vpack.c.b16 %v303, %v302
  %v351 = vpack.c.b16 %v305, %v304
  %v352 = vpack.c.b16 %v307, %v306
  %v353 = vpack.c.b16 %v309, %v308
  %v354 = vpack.c.b16 %v311, %v310
  %v355 = vpack.c.b16 %v313, %v312
  %v356 = vpack.c.b16 %v315, %v314
  %v357 = vpack.c.b16 %v317, %v316
  %v358 = vpack.c.b16 %v319, %v318
  %v359 = vpack.c.b16 %v321, %v320
  %v360 = vpack.c.b16 %v323, %v322
  %v361 = vpack.c.b16 %v325, %v324
  %v362 = vpack.c.b16 %v327, %v326
  %v363 = vpack.c.b16 %v329, %v328
  %v364 = vpack.c.b16 %v331, %v330
  %v365 = vpack.c.b16 %v333, %v332
  %398 = vmatprep.subr.bf16.mxu0 0
  %399 = vmatpush1.bf16.msra.mxu0 %v334
  %400 = vmatprep.subr.bf16.mxu0 0
  %401 = vmatpush1.bf16.msra.mxu0 %v335
  %402 = vmatprep.subr.bf16.mxu0 0
  %403 = vmatpush1.bf16.msra.mxu0 %v336
  %404 = vmatprep.subr.bf16.mxu0 0
  %405 = vmatpush1.bf16.msra.mxu0 %v337
  %406 = vmatprep.subr.bf16.mxu0 0
  %407 = vmatpush1.bf16.msra.mxu0 %v338
  %408 = vmatprep.subr.bf16.mxu0 0
  %409 = vmatpush1.bf16.msra.mxu0 %v339
  %410 = vmatprep.subr.bf16.mxu0 0
  %411 = vmatpush1.bf16.msra.mxu0 %v340
  %412 = vmatprep.subr.bf16.mxu0 0
  %413 = vmatpush1.bf16.msra.mxu0 %v341
  %414 = vmatprep.subr.bf16.mxu0 0
  %415 = vmatpush1.bf16.msra.mxu0 %v342
  %416 = vmatprep.subr.bf16.mxu0 0
  %417 = vmatpush1.bf16.msra.mxu0 %v343
  %418 = vmatprep.subr.bf16.mxu0 0
  %419 = vmatpush1.bf16.msra.mxu0 %v344
  %420 = vmatprep.subr.bf16.mxu0 0
  %421 = vmatpush1.bf16.msra.mxu0 %v345
  %422 = vmatprep.subr.bf16.mxu0 0
  %423 = vmatpush1.bf16.msra.mxu0 %v346
  %424 = vmatprep.subr.bf16.mxu0 0
  %425 = vmatpush1.bf16.msra.mxu0 %v347
  %426 = vmatprep.subr.bf16.mxu0 0
  %427 = vmatpush1.bf16.msra.mxu0 %v348
  %428 = vmatprep.subr.bf16.mxu0 0
  %429 = vmatpush1.bf16.msra.mxu0 %v349
  %430 = vmatprep.mubr.bf16.mxu0 %v175
  %431 = vmatmul.mubr.bf16.gmra.mrb[0].mxu0 %v174
  %v432 = vpop.f32.mrb[0].mxu0
  %v433 = vadd.f32 0.0, %v432
  %v434 = vpop.f32.mrb[0].mxu0
  %v435 = vpop.f32.mrb[0].mxu0
  %v436 = vadd.f32 0.0, %v435
  %v437 = vpop.f32.mrb[0].mxu0
  %438 = vmatprep.mubr.bf16.mxu0 %v179
  %439 = vmatmul.mubr.bf16.gmra.mrb[0].mxu0 %v178
  %v440 = vpop.f32.mrb[0].mxu0
  %v441 = vadd.f32 0.0, %v440
  %v442 = vpop.f32.mrb[0].mxu0
  %v443 = vpop.f32.mrb[0].mxu0
  %v444 = vadd.f32 0.0, %v443
  %v445 = vpop.f32.mrb[0].mxu0
  %446 = vmatprep.mubr.bf16.mxu0 %v183
  %447 = vmatmul.mubr.bf16.gmra.mrb[0].mxu0 %v182
  %v448 = vpop.f32.mrb[0].mxu0
  %v449 = vadd.f32 0.0, %v448
  %v450 = vpop.f32.mrb[0].mxu0
  %v451 = vpop.f32.mrb[0].mxu0
  %v452 = vadd.f32 0.0, %v451
  %v453 = vpop.f32.mrb[0].mxu0
  %454 = vmatprep.mubr.bf16.mxu0 %v187
  %455 = vmatmul.mubr.bf16.gmra.mrb[0].mxu0 %v186
  %v456 = vpop.f32.mrb[0].mxu0
  %v457 = vadd.f32 0.0, %v456
  %v458 = vpop.f32.mrb[0].mxu0
  %v459 = vpop.f32.mrb[0].mxu0
  %v460 = vadd.f32 0.0, %v459
  %v461 = vpop.f32.mrb[0].mxu0
  %462 = vdwg.mxu0
  %463 = vmatprep.subr.bf16.mxu0 0
  %464 = vmatpush1.bf16.msra.mxu0 %v350
  %465 = vmatprep.subr.bf16.mxu0 0
  %466 = vmatpush1.bf16.msra.mxu0 %v351
  %467 = vmatprep.subr.bf16.mxu0 0
  %468 = vmatpush1.bf16.msra.mxu0 %v352
  %469 = vmatprep.subr.bf16.mxu0 0
  %470 = vmatpush1.bf16.msra.mxu0 %v353
  %471 = vmatprep.subr.bf16.mxu0 0
  %472 = vmatpush1.bf16.msra.mxu0 %v354
  %473 = vmatprep.subr.bf16.mxu0 0
  %474 = vmatpush1.bf16.msra.mxu0 %v355
  %475 = vmatprep.subr.bf16.mxu0 0
  %476 = vmatpush1.bf16.msra.mxu0 %v356
  %477 = vmatprep.subr.bf16.mxu0 0
  %478 = vmatpush1.bf16.msra.mxu0 %v357
  %479 = vmatprep.subr.bf16.mxu0 0
  %480 = vmatpush1.bf16.msra.mxu0 %v358
  %481 = vmatprep.subr.bf16.mxu0 0
  %482 = vmatpush1.bf16.msra.mxu0 %v359
  %483 = vmatprep.subr.bf16.mxu0 0
  %484 = vmatpush1.bf16.msra.mxu0 %v360
  %485 = vmatprep.subr.bf16.mxu0 0
  %486 = vmatpush1.bf16.msra.mxu0 %v361
  %487 = vmatprep.subr.bf16.mxu0 0
  %488 = vmatpush1.bf16.msra.mxu0 %v362
  %489 = vmatprep.subr.bf16.mxu0 0
  %490 = vmatpush1.bf16.msra.mxu0 %v363
  %491 = vmatprep.subr.bf16.mxu0 0
  %492 = vmatpush1.bf16.msra.mxu0 %v364
  %493 = vmatprep.subr.bf16.mxu0 0
  %494 = vmatpush1.bf16.msra.mxu0 %v365
  %495 = vmatprep.mubr.bf16.mxu0 %v177
  %496 = vmatmul.mubr.bf16.gmra.mrb[0].mxu0 %v176
  %v497 = vpop.f32.mrb[0].mxu0
  %v498 = vadd.f32 %v433, %v497
  %v499 = vpop.f32.mrb[0].mxu0
  %v500 = vpop.f32.mrb[0].mxu0
  %v501 = vadd.f32 %v436, %v500
  %v502 = vpop.f32.mrb[0].mxu0
  %503 = vmatprep.mubr.bf16.mxu0 %v181
  %504 = vmatmul.mubr.bf16.gmra.mrb[0].mxu0 %v180
  %v505 = vpop.f32.mrb[0].mxu0
  %v506 = vadd.f32 %v441, %v505
  %v507 = vpop.f32.mrb[0].mxu0
  %v508 = vpop.f32.mrb[0].mxu0
  %v509 = vadd.f32 %v444, %v508
  %v510 = vpop.f32.mrb[0].mxu0
  %511 = vmatprep.mubr.bf16.mxu0 %v185
  %512 = vmatmul.mubr.bf16.gmra.mrb[0].mxu0 %v184
  %v513 = vpop.f32.mrb[0].mxu0
  %v514 = vadd.f32 %v449, %v513
  %v515 = vpop.f32.mrb[0].mxu0
  %v516 = vpop.f32.mrb[0].mxu0
  %v517 = vadd.f32 %v452, %v516
  %v518 = vpop.f32.mrb[0].mxu0
  %519 = vmatprep.mubr.bf16.mxu0 %v189
  %520 = vmatmul.mubr.bf16.gmra.mrb[0].mxu0 %v188
  %v521 = vpop.f32.mrb[0].mxu0
  %v522 = vadd.f32 %v457, %v521
  %v523 = vpop.f32.mrb[0].mxu0
  %v524 = vpop.f32.mrb[0].mxu0
  %v525 = vadd.f32 %v460, %v524
  %v526 = vpop.f32.mrb[0].mxu0
  %527 = vdwg.mxu0
  %v532 = vunpack.c.l.b16 %v42
  %v533 = vunpack.c.l.b16 %v43
  %v534 = vunpack.c.l.b16 %v44
  %v535 = vunpack.c.l.b16 %v45
  %v536 = vpack.c.b16 %v533, %v532
  %v537 = vpack.c.b16 %v535, %v534
  %vm540 = vcmask 261120
  %v542 = vsel %vm540, %v38, 0
  %v545 = vsel %vm540, %v39, 0
  %v548 = vsel %vm540, %v40, 0
  %v551 = vsel %vm540, %v41, 0
  %553 = vmatprep.subr.bf16.mxu0 0
  %554 = vmatpush1.bf16.msra.mxu0 %v536
  %555 = vmatprep.subr.bf16.mxu0 0
  %556 = vmatpush1.bf16.msra.mxu0 %v537
  %557 = vmatprep.subr.bf16.mxu0 0
  %558 = vmatpush1.bf16.msra.mxu0 0
  %559 = vmatprep.subr.bf16.mxu0 0
  %560 = vmatpush1.bf16.msra.mxu0 0
  %561 = vmatprep.subr.bf16.mxu0 0
  %562 = vmatpush1.bf16.msra.mxu0 0
  %563 = vmatprep.subr.bf16.mxu0 0
  %564 = vmatpush1.bf16.msra.mxu0 0
  %565 = vmatprep.subr.bf16.mxu0 0
  %566 = vmatpush1.bf16.msra.mxu0 0
  %567 = vmatprep.subr.bf16.mxu0 0
  %568 = vmatpush1.bf16.msra.mxu0 0
  %569 = vmatprep.subr.bf16.mxu0 0
  %570 = vmatpush1.bf16.msra.mxu0 0
  %571 = vmatprep.subr.bf16.mxu0 0
  %572 = vmatpush1.bf16.msra.mxu0 0
  %573 = vmatprep.subr.bf16.mxu0 0
  %574 = vmatpush1.bf16.msra.mxu0 0
  %575 = vmatprep.subr.bf16.mxu0 0
  %576 = vmatpush1.bf16.msra.mxu0 0
  %577 = vmatprep.subr.bf16.mxu0 0
  %578 = vmatpush1.bf16.msra.mxu0 0
  %579 = vmatprep.subr.bf16.mxu0 0
  %580 = vmatpush1.bf16.msra.mxu0 0
  %581 = vmatprep.subr.bf16.mxu0 0
  %582 = vmatpush1.bf16.msra.mxu0 0
  %583 = vmatprep.subr.bf16.mxu0 0
  %584 = vmatpush1.bf16.msra.mxu0 0
  %585 = vmatprep.mubr.bf16.mxu0 0
  %586 = vmatmul.mubr.bf16.gmra.mrb[0].mxu0 %v542
  %v587 = vpop.f32.mrb[0].mxu0
  %v588 = vadd.f32 %v498, %v587
  %v589 = vpop.f32.mrb[0].mxu0
  %v590 = vpop.f32.mrb[0].mxu0
  %v591 = vadd.f32 %v501, %v590
  %v592 = vpop.f32.mrb[0].mxu0
  %593 = vmatprep.mubr.bf16.mxu0 0
  %594 = vmatmul.mubr.bf16.gmra.mrb[0].mxu0 %v545
  %v595 = vpop.f32.mrb[0].mxu0
  %v596 = vadd.f32 %v506, %v595
  %v597 = vpop.f32.mrb[0].mxu0
  %v598 = vpop.f32.mrb[0].mxu0
  %v599 = vadd.f32 %v509, %v598
  %v600 = vpop.f32.mrb[0].mxu0
  %601 = vmatprep.mubr.bf16.mxu0 0
  %602 = vmatmul.mubr.bf16.gmra.mrb[0].mxu0 %v548
  %v603 = vpop.f32.mrb[0].mxu0
  %v604 = vadd.f32 %v514, %v603
  %v605 = vpop.f32.mrb[0].mxu0
  %v606 = vpop.f32.mrb[0].mxu0
  %v607 = vadd.f32 %v517, %v606
  %v608 = vpop.f32.mrb[0].mxu0
  %609 = vmatprep.mubr.bf16.mxu0 0
  %610 = vmatmul.mubr.bf16.gmra.mrb[0].mxu0 %v551
  %v611 = vpop.f32.mrb[0].mxu0
  %v612 = vadd.f32 %v522, %v611
  %v613 = vpop.f32.mrb[0].mxu0
  %v614 = vpop.f32.mrb[0].mxu0
  %v615 = vadd.f32 %v525, %v614
  %v616 = vpop.f32.mrb[0].mxu0
  %617 = vdwg.mxu0
  %v618 = vld [vmem:[%s4] sm:$0xff]
  %v619 = vld [vmem:[%s4 + $0x8] sm:$0xff]
  %v620 = vld [vmem:[%s4 + $0x10] sm:$0xff]
  %v621 = vld [vmem:[%s4 + $0x18] sm:$0xff]
  %v622 = vld [vmem:[%s4 + $0x20] sm:$0xff]
  %v623 = vld [vmem:[%s4 + $0x28] sm:$0xff]
  %v624 = vld [vmem:[%s4 + $0x30] sm:$0xff]
  %v625 = vld [vmem:[%s4 + $0x38] sm:$0xff]
  %v626 = vadd.f32 %v588, %v618
  %v627 = vadd.f32 %v591, %v619
  %v628 = vadd.f32 %v596, %v620
  %v629 = vadd.f32 %v599, %v621
  %v630 = vadd.f32 %v604, %v622
  %v631 = vadd.f32 %v607, %v623
  %v632 = vadd.f32 %v612, %v624
  %v633 = vadd.f32 %v615, %v625
  %v634 = vmax.f32 %v626, 0.0
  %v635 = vmax.f32 %v627, 0.0
  %v636 = vmax.f32 %v628, 0.0
  %v637 = vmax.f32 %v629, 0.0
  %v638 = vmax.f32 %v630, 0.0
  %v639 = vmax.f32 %v631, 0.0
  %v640 = vmax.f32 %v632, 0.0
  %v641 = vmax.f32 %v633, 0.0
  %v642 = vpack.c.bf16 %v635, %v634
  %v643 = vpack.c.bf16 %v637, %v636
  %v644 = vpack.c.bf16 %v639, %v638
  %v645 = vpack.c.bf16 %v641, %v640
  %v646 = vld [vmem:[%s5] sm:$0xf]
  %v647 = vld [vmem:[%s5 + $0x4] sm:$0xf]
  %v648 = vld [vmem:[%s5 + $0x8] sm:$0xf]
  %v649 = vld [vmem:[%s5 + $0xc] sm:$0xf]
  %v650 = vld [vmem:[%s7] sm:$0x1]
  %v652 = vlaneseq
  %v653 = vshrl.u32 %v652, 7
  %v654 = vsub.s32 0, %v653
  %v655 = vrot.slane %v650, %v654
  %v661 = vunpack.c.l.b16 %v646
  %v662 = vunpack.c.l.b16 %v647
  %v663 = vunpack.c.l.b16 %v648
  %v664 = vunpack.c.l.b16 %v649
  %v665 = vpack.c.b16 %v662, %v661
  %v666 = vpack.c.b16 %v664, %v663
  %v670 = vsel %vm540, %v642, 0
  %v673 = vsel %vm540, %v643, 0
  %v676 = vsel %vm540, %v644, 0
  %v679 = vsel %vm540, %v645, 0
  %681 = vmatprep.subr.bf16.mxu0 0
  %682 = vmatpush1.bf16.msra.mxu0 %v665
  %683 = vmatprep.subr.bf16.mxu0 0
  %684 = vmatpush1.bf16.msra.mxu0 %v666
  %685 = vmatprep.subr.bf16.mxu0 0
  %686 = vmatpush1.bf16.msra.mxu0 0
  %687 = vmatprep.subr.bf16.mxu0 0
  %688 = vmatpush1.bf16.msra.mxu0 0
  %689 = vmatprep.subr.bf16.mxu0 0
  %690 = vmatpush1.bf16.msra.mxu0 0
  %691 = vmatprep.subr.bf16.mxu0 0
  %692 = vmatpush1.bf16.msra.mxu0 0
  %693 = vmatprep.subr.bf16.mxu0 0
  %694 = vmatpush1.bf16.msra.mxu0 0
  %695 = vmatprep.subr.bf16.mxu0 0
  %696 = vmatpush1.bf16.msra.mxu0 0
  %697 = vmatprep.subr.bf16.mxu0 0
  %698 = vmatpush1.bf16.msra.mxu0 0
  %699 = vmatprep.subr.bf16.mxu0 0
  %700 = vmatpush1.bf16.msra.mxu0 0
  %701 = vmatprep.subr.bf16.mxu0 0
  %702 = vmatpush1.bf16.msra.mxu0 0
  %703 = vmatprep.subr.bf16.mxu0 0
  %704 = vmatpush1.bf16.msra.mxu0 0
  %705 = vmatprep.subr.bf16.mxu0 0
  %706 = vmatpush1.bf16.msra.mxu0 0
  %707 = vmatprep.subr.bf16.mxu0 0
  %708 = vmatpush1.bf16.msra.mxu0 0
  %709 = vmatprep.subr.bf16.mxu0 0
  %710 = vmatpush1.bf16.msra.mxu0 0
  %711 = vmatprep.subr.bf16.mxu0 0
  %712 = vmatpush1.bf16.msra.mxu0 0
  %713 = vmatprep.mubr.bf16.mxu0 0
  %714 = vmatmul.mubr.bf16.gmra.mrb[0].mxu0 %v670
  %v715 = vpop.f32.mrb[0].mxu0
  %v716 = vadd.f32 %v655, %v715
  %v717 = vpop.f32.mrb[0].mxu0
  %v718 = vpop.f32.mrb[0].mxu0
  %v719 = vadd.f32 %v655, %v718
  %v720 = vpop.f32.mrb[0].mxu0
  %721 = vmatprep.mubr.bf16.mxu0 0
  %722 = vmatmul.mubr.bf16.gmra.mrb[0].mxu0 %v673
  %v723 = vpop.f32.mrb[0].mxu0
  %v724 = vadd.f32 %v655, %v723
  %v725 = vpop.f32.mrb[0].mxu0
  %v726 = vpop.f32.mrb[0].mxu0
  %v727 = vadd.f32 %v655, %v726
  %v728 = vpop.f32.mrb[0].mxu0
  %729 = vmatprep.mubr.bf16.mxu0 0
  %730 = vmatmul.mubr.bf16.gmra.mrb[0].mxu0 %v676
  %v731 = vpop.f32.mrb[0].mxu0
  %v732 = vadd.f32 %v655, %v731
  %v733 = vpop.f32.mrb[0].mxu0
  %v734 = vpop.f32.mrb[0].mxu0
  %v735 = vadd.f32 %v655, %v734
  %v736 = vpop.f32.mrb[0].mxu0
  %737 = vmatprep.mubr.bf16.mxu0 0
  %738 = vmatmul.mubr.bf16.gmra.mrb[0].mxu0 %v679
  %v739 = vpop.f32.mrb[0].mxu0
  %v740 = vadd.f32 %v655, %v739
  %v741 = vpop.f32.mrb[0].mxu0
  %v742 = vpop.f32.mrb[0].mxu0
  %v743 = vadd.f32 %v655, %v742
  %v744 = vpop.f32.mrb[0].mxu0
  %745 = vdwg.mxu0
  %v746 = vld [vmem:[%s6] sm:$0xf]
  %v747 = vld [vmem:[%s6 + $0x4] sm:$0xf]
  %v748 = vld [vmem:[%s6 + $0x8] sm:$0xf]
  %v749 = vld [vmem:[%s6 + $0xc] sm:$0xf]
  %s750 = scalar_lea.vmem %s6, 16
  %v751 = vld [vmem:[%s750] sm:$0xf]
  %v752 = vld [vmem:[%s750 + $0x4] sm:$0xf]
  %v753 = vld [vmem:[%s750 + $0x8] sm:$0xf]
  %v754 = vld [vmem:[%s750 + $0xc] sm:$0xf]
  %s755 = scalar_lea.vmem %s5, 16
  %v756 = vld [vmem:[%s755] sm:$0xf]
  %v757 = vld [vmem:[%s755 + $0x4] sm:$0xf]
  %v758 = vld [vmem:[%s755 + $0x8] sm:$0xf]
  %v759 = vld [vmem:[%s755 + $0xc] sm:$0xf]
  %s760 = scalar_lea.vmem %s7, 1
  %v761 = vld [vmem:[%s760] sm:$0x1]
  %v766 = vunpack.c.l.b16 %v746
  %v767 = vunpack.c.l.b16 %v747
  %v768 = vunpack.c.l.b16 %v748
  %v769 = vunpack.c.l.b16 %v749
  %v770 = vpack.c.b16 %v767, %v766
  %v771 = vpack.c.b16 %v769, %v768
  %v775 = vsel %vm540, 0, 0
  %777 = vmatprep.subr.bf16.mxu0 0
  %778 = vmatpush1.bf16.msra.mxu0 %v770
  %779 = vmatprep.subr.bf16.mxu0 0
  %780 = vmatpush1.bf16.msra.mxu0 %v771
  %781 = vmatprep.subr.bf16.mxu0 0
  %782 = vmatpush1.bf16.msra.mxu0 0
  %783 = vmatprep.subr.bf16.mxu0 0
  %784 = vmatpush1.bf16.msra.mxu0 0
  %785 = vmatprep.subr.bf16.mxu0 0
  %786 = vmatpush1.bf16.msra.mxu0 0
  %787 = vmatprep.subr.bf16.mxu0 0
  %788 = vmatpush1.bf16.msra.mxu0 0
  %789 = vmatprep.subr.bf16.mxu0 0
  %790 = vmatpush1.bf16.msra.mxu0 0
  %791 = vmatprep.subr.bf16.mxu0 0
  %792 = vmatpush1.bf16.msra.mxu0 0
  %793 = vmatprep.subr.bf16.mxu0 0
  %794 = vmatpush1.bf16.msra.mxu0 0
  %795 = vmatprep.subr.bf16.mxu0 0
  %796 = vmatpush1.bf16.msra.mxu0 0
  %797 = vmatprep.subr.bf16.mxu0 0
  %798 = vmatpush1.bf16.msra.mxu0 0
  %799 = vmatprep.subr.bf16.mxu0 0
  %800 = vmatpush1.bf16.msra.mxu0 0
  %801 = vmatprep.subr.bf16.mxu0 0
  %802 = vmatpush1.bf16.msra.mxu0 0
  %803 = vmatprep.subr.bf16.mxu0 0
  %804 = vmatpush1.bf16.msra.mxu0 0
  %805 = vmatprep.subr.bf16.mxu0 0
  %806 = vmatpush1.bf16.msra.mxu0 0
  %807 = vmatprep.subr.bf16.mxu0 0
  %808 = vmatpush1.bf16.msra.mxu0 0
  %809 = vmatprep.mubr.bf16.mxu0 0
  %810 = vmatmul.mubr.bf16.gmra.mrb[0].mxu0 %v775
  %v811 = vpop.f32.mrb[0].mxu0
  %v812 = vadd.f32 0.0, %v811
  %v813 = vpop.f32.mrb[0].mxu0
  %v814 = vpop.f32.mrb[0].mxu0
  %v815 = vpop.f32.mrb[0].mxu0
  %816 = vdwg.mxu0
  %v817 = vadd.f32 %v716, %v812
  %v818 = vxor.u32 %v817, 2147483648
  %v819 = vmul.f32 %v818, 1.442695
  %v820 = vpow.pop %v819
  %v821 = vadd.f32 %v820, 1.0
  %v822 = vrcp.pop %v821
  %v823 = vmul.f32 1.0, %v822
  %v824 = vtanh.pop %v817
  %v825 = vmul.f32 %v823, 0.0
  %827 = vrot.lane.b32.xlu0 %v824, 64
  %v828 = vpop.permute.xlu0 %827
  %v830 = vmul.f32 %v823, %v828
  %832 = vrot.lane.b32.xlu0 %v830, 32
  %v833 = vpop.permute.xlu0 %832
  %v835 = vadd.f32 %v825, %v833
  %v836 = vtanh.pop %v835
  %838 = vrot.lane.b32.xlu0 %v836, 64
  %v839 = vpop.permute.xlu0 %838
  %v841 = vmul.f32 %v823, %v839
  %v842 = vpack.c.bf16 %v841, %v841
  %v847 = vunpack.c.l.b16 %v751
  %v848 = vunpack.c.l.b16 %v752
  %v849 = vunpack.c.l.b16 %v753
  %v850 = vunpack.c.l.b16 %v754
  %v851 = vpack.c.b16 %v848, %v847
  %v852 = vpack.c.b16 %v850, %v849
  %855 = vmatprep.subr.bf16.mxu0 0
  %856 = vmatpush1.bf16.msra.mxu0 %v851
  %857 = vmatprep.subr.bf16.mxu0 0
  %858 = vmatpush1.bf16.msra.mxu0 %v852
  %859 = vmatprep.subr.bf16.mxu0 0
  %860 = vmatpush1.bf16.msra.mxu0 0
  %861 = vmatprep.subr.bf16.mxu0 0
  %862 = vmatpush1.bf16.msra.mxu0 0
  %863 = vmatprep.subr.bf16.mxu0 0
  %864 = vmatpush1.bf16.msra.mxu0 0
  %865 = vmatprep.subr.bf16.mxu0 0
  %866 = vmatpush1.bf16.msra.mxu0 0
  %867 = vmatprep.subr.bf16.mxu0 0
  %868 = vmatpush1.bf16.msra.mxu0 0
  %869 = vmatprep.subr.bf16.mxu0 0
  %870 = vmatpush1.bf16.msra.mxu0 0
  %871 = vmatprep.subr.bf16.mxu0 0
  %872 = vmatpush1.bf16.msra.mxu0 0
  %873 = vmatprep.subr.bf16.mxu0 0
  %874 = vmatpush1.bf16.msra.mxu0 0
  %875 = vmatprep.subr.bf16.mxu0 0
  %876 = vmatpush1.bf16.msra.mxu0 0
  %877 = vmatprep.subr.bf16.mxu0 0
  %878 = vmatpush1.bf16.msra.mxu0 0
  %879 = vmatprep.subr.bf16.mxu0 0
  %880 = vmatpush1.bf16.msra.mxu0 0
  %881 = vmatprep.subr.bf16.mxu0 0
  %882 = vmatpush1.bf16.msra.mxu0 0
  %883 = vmatprep.subr.bf16.mxu0 0
  %884 = vmatpush1.bf16.msra.mxu0 0
  %885 = vmatprep.subr.bf16.mxu0 0
  %886 = vmatpush1.bf16.msra.mxu0 0
  %887 = vmatprep.mubr.bf16.mxu0 0
  %888 = vmatmul.mubr.bf16.gmra.mrb[0].mxu0 %v775
  %v889 = vpop.f32.mrb[0].mxu0
  %v890 = vadd.f32 0.0, %v889
  %v891 = vpop.f32.mrb[0].mxu0
  %v892 = vpop.f32.mrb[0].mxu0
  %v893 = vpop.f32.mrb[0].mxu0
  %894 = vdwg.mxu0
  %896 = vrot.lane.b32.xlu0 %v842, 32
  %v897 = vpop.permute.xlu0 %896
  %v902 = vunpack.c.l.b16 %v756
  %v903 = vunpack.c.l.b16 %v757
  %v904 = vunpack.c.l.b16 %v758
  %v905 = vunpack.c.l.b16 %v759
  %v906 = vpack.c.b16 %v903, %v902
  %v907 = vpack.c.b16 %v905, %v904
  %v911 = vsel %vm540, %v897, 0
  %913 = vmatprep.subr.bf16.mxu0 0
  %914 = vmatpush1.bf16.msra.mxu0 %v906
  %915 = vmatprep.subr.bf16.mxu0 0
  %916 = vmatpush1.bf16.msra.mxu0 %v907
  %917 = vmatprep.subr.bf16.mxu0 0
  %918 = vmatpush1.bf16.msra.mxu0 0
  %919 = vmatprep.subr.bf16.mxu0 0
  %920 = vmatpush1.bf16.msra.mxu0 0
  %921 = vmatprep.subr.bf16.mxu0 0
  %922 = vmatpush1.bf16.msra.mxu0 0
  %923 = vmatprep.subr.bf16.mxu0 0
  %924 = vmatpush1.bf16.msra.mxu0 0
  %925 = vmatprep.subr.bf16.mxu0 0
  %926 = vmatpush1.bf16.msra.mxu0 0
  %927 = vmatprep.subr.bf16.mxu0 0
  %928 = vmatpush1.bf16.msra.mxu0 0
  %929 = vmatprep.subr.bf16.mxu0 0
  %930 = vmatpush1.bf16.msra.mxu0 0
  %931 = vmatprep.subr.bf16.mxu0 0
  %932 = vmatpush1.bf16.msra.mxu0 0
  %933 = vmatprep.subr.bf16.mxu0 0
  %934 = vmatpush1.bf16.msra.mxu0 0
  %935 = vmatprep.subr.bf16.mxu0 0
  %936 = vmatpush1.bf16.msra.mxu0 0
  %937 = vmatprep.subr.bf16.mxu0 0
  %938 = vmatpush1.bf16.msra.mxu0 0
  %939 = vmatprep.subr.bf16.mxu0 0
  %940 = vmatpush1.bf16.msra.mxu0 0
  %941 = vmatprep.subr.bf16.mxu0 0
  %942 = vmatpush1.bf16.msra.mxu0 0
  %943 = vmatprep.subr.bf16.mxu0 0
  %944 = vmatpush1.bf16.msra.mxu0 0
  %945 = vmatprep.mubr.bf16.mxu0 0
  %946 = vmatmul.mubr.bf16.gmra.mrb[0].mxu0 %v911
  %v947 = vpop.f32.mrb[0].mxu0
  %v948 = vadd.f32 %v890, %v947
  %v949 = vpop.f32.mrb[0].mxu0
  %v950 = vpop.f32.mrb[0].mxu0
  %v951 = vpop.f32.mrb[0].mxu0
  %952 = vdwg.mxu0
  %v954 = vlaneseq
  %v955 = vshrl.u32 %v954, 7
  %v956 = vsub.s32 0, %v955
  %v957 = vrot.slane %v761, %v956
  %v959 = vadd.f32 %v948, %v957
  %v960 = vxor.u32 %v959, 2147483648
  %v961 = vmul.f32 %v960, 1.442695
  %v962 = vpow.pop %v961
  %v963 = vadd.f32 %v962, 1.0
  %v964 = vrcp.pop %v963
  %v965 = vmul.f32 1.0, %v964
  %v966 = vtanh.pop %v959
  %v967 = vmul.f32 %v965, 0.0
  %969 = vrot.lane.b32.xlu0 %v966, 64
  %v970 = vpop.permute.xlu0 %969
  %v972 = vmul.f32 %v965, %v970
  %974 = vrot.lane.b32.xlu0 %v972, 32
  %v975 = vpop.permute.xlu0 %974
  %v977 = vadd.f32 %v967, %v975
  %v978 = vtanh.pop %v977
  %980 = vrot.lane.b32.xlu0 %v978, 64
  %v981 = vpop.permute.xlu0 %980
  %v983 = vmul.f32 %v965, %v981
  %985 = vrot.lane.b32.xlu0 %v983, 32
  %v986 = vpop.permute.xlu0 %985
  %vm988 = vcmask 254976
  %989 = vst.msk [vmem:[%s8] sm:$0x3] %vm988, %v986
  %990 = vmatprep.subr.bf16.mxu0 0
  %991 = vmatpush1.bf16.msra.mxu0 %v770
  %992 = vmatprep.subr.bf16.mxu0 0
  %993 = vmatpush1.bf16.msra.mxu0 %v771
  %994 = vmatprep.subr.bf16.mxu0 0
  %995 = vmatpush1.bf16.msra.mxu0 0
  %996 = vmatprep.subr.bf16.mxu0 0
  %997 = vmatpush1.bf16.msra.mxu0 0
  %998 = vmatprep.subr.bf16.mxu0 0
  %999 = vmatpush1.bf16.msra.mxu0 0
  %1000 = vmatprep.subr.bf16.mxu0 0
  %1001 = vmatpush1.bf16.msra.mxu0 0
  %1002 = vmatprep.subr.bf16.mxu0 0
  %1003 = vmatpush1.bf16.msra.mxu0 0
  %1004 = vmatprep.subr.bf16.mxu0 0
  %1005 = vmatpush1.bf16.msra.mxu0 0
  %1006 = vmatprep.subr.bf16.mxu0 0
  %1007 = vmatpush1.bf16.msra.mxu0 0
  %1008 = vmatprep.subr.bf16.mxu0 0
  %1009 = vmatpush1.bf16.msra.mxu0 0
  %1010 = vmatprep.subr.bf16.mxu0 0
  %1011 = vmatpush1.bf16.msra.mxu0 0
  %1012 = vmatprep.subr.bf16.mxu0 0
  %1013 = vmatpush1.bf16.msra.mxu0 0
  %1014 = vmatprep.subr.bf16.mxu0 0
  %1015 = vmatpush1.bf16.msra.mxu0 0
  %1016 = vmatprep.subr.bf16.mxu0 0
  %1017 = vmatpush1.bf16.msra.mxu0 0
  %1018 = vmatprep.subr.bf16.mxu0 0
  %1019 = vmatpush1.bf16.msra.mxu0 0
  %1020 = vmatprep.subr.bf16.mxu0 0
  %1021 = vmatpush1.bf16.msra.mxu0 0
  %1022 = vmatprep.mubr.bf16.mxu0 0
  %1023 = vmatmul.mubr.bf16.gmra.mrb[0].mxu0 %v911
  %v1024 = vpop.f32.mrb[0].mxu0
  %v1025 = vadd.f32 0.0, %v1024
  %v1026 = vpop.f32.mrb[0].mxu0
  %v1027 = vpop.f32.mrb[0].mxu0
  %v1028 = vpop.f32.mrb[0].mxu0
  %1029 = vdwg.mxu0
  %v1031 = vrot.slane %v1025, 6
  %v1033 = vadd.f32 %v716, %v1031
  %v1034 = vxor.u32 %v1033, 2147483648
  %v1035 = vmul.f32 %v1034, 1.442695
  %v1036 = vpow.pop %v1035
  %v1037 = vadd.f32 %v1036, 1.0
  %v1038 = vrcp.pop %v1037
  %v1039 = vmul.f32 1.0, %v1038
  %v1040 = vtanh.pop %v1033
  %v1042 = vrot.slane %v1039, 2
  %v1044 = vmul.f32 %v835, %v1042
  %1046 = vrot.lane.b32.xlu0 %v1040, 64
  %v1047 = vpop.permute.xlu0 %1046
  %v1049 = vmul.f32 %v1039, %v1047
  %v1051 = vrot.slane %v1049, 2
  %1052 = vrot.lane.b32.xlu0 %v1051, 32
  %v1053 = vpop.permute.xlu0 %1052
  %v1055 = vadd.f32 %v1044, %v1053
  %v1056 = vtanh.pop %v1055
  %v1058 = vrot.slane %v1056, 6
  %1059 = vrot.lane.b32.xlu0 %v1058, 64
  %v1060 = vpop.permute.xlu0 %1059
  %v1062 = vmul.f32 %v1039, %v1060
  %v1063 = vpack.c.bf16 %v1062, %v1062
  %v1064 = vpack.c.bf16 %v983, %v983
  %1066 = vrot.lane.b32.xlu0 %v1064, 32
  %v1067 = vpop.permute.xlu0 %1066
  %v1069 = vsel %vm540, %v1067, 0
  %1071 = vmatprep.subr.bf16.mxu0 0
  %1072 = vmatpush1.bf16.msra.mxu0 %v851
  %1073 = vmatprep.subr.bf16.mxu0 0
  %1074 = vmatpush1.bf16.msra.mxu0 %v852
  %1075 = vmatprep.subr.bf16.mxu0 0
  %1076 = vmatpush1.bf16.msra.mxu0 0
  %1077 = vmatprep.subr.bf16.mxu0 0
  %1078 = vmatpush1.bf16.msra.mxu0 0
  %1079 = vmatprep.subr.bf16.mxu0 0
  %1080 = vmatpush1.bf16.msra.mxu0 0
  %1081 = vmatprep.subr.bf16.mxu0 0
  %1082 = vmatpush1.bf16.msra.mxu0 0
  %1083 = vmatprep.subr.bf16.mxu0 0
  %1084 = vmatpush1.bf16.msra.mxu0 0
  %1085 = vmatprep.subr.bf16.mxu0 0
  %1086 = vmatpush1.bf16.msra.mxu0 0
  %1087 = vmatprep.subr.bf16.mxu0 0
  %1088 = vmatpush1.bf16.msra.mxu0 0
  %1089 = vmatprep.subr.bf16.mxu0 0
  %1090 = vmatpush1.bf16.msra.mxu0 0
  %1091 = vmatprep.subr.bf16.mxu0 0
  %1092 = vmatpush1.bf16.msra.mxu0 0
  %1093 = vmatprep.subr.bf16.mxu0 0
  %1094 = vmatpush1.bf16.msra.mxu0 0
  %1095 = vmatprep.subr.bf16.mxu0 0
  %1096 = vmatpush1.bf16.msra.mxu0 0
  %1097 = vmatprep.subr.bf16.mxu0 0
  %1098 = vmatpush1.bf16.msra.mxu0 0
  %1099 = vmatprep.subr.bf16.mxu0 0
  %1100 = vmatpush1.bf16.msra.mxu0 0
  %1101 = vmatprep.subr.bf16.mxu0 0
  %1102 = vmatpush1.bf16.msra.mxu0 0
  %1103 = vmatprep.mubr.bf16.mxu0 0
  %1104 = vmatmul.mubr.bf16.gmra.mrb[0].mxu0 %v1069
  %v1105 = vpop.f32.mrb[0].mxu0
  %v1106 = vadd.f32 0.0, %v1105
  %v1107 = vpop.f32.mrb[0].mxu0
  %v1108 = vpop.f32.mrb[0].mxu0
  %v1109 = vpop.f32.mrb[0].mxu0
  %1110 = vdwg.mxu0
  %v1112 = vrot.slane %v1063, 1
  %1113 = vrot.lane.b32.xlu0 %v1112, 32
  %v1114 = vpop.permute.xlu0 %1113
  %v1116 = vsel %vm540, %v1114, 0
  %1118 = vmatprep.subr.bf16.mxu0 0
  %1119 = vmatpush1.bf16.msra.mxu0 %v906
  %1120 = vmatprep.subr.bf16.mxu0 0
  %1121 = vmatpush1.bf16.msra.mxu0 %v907
  %1122 = vmatprep.subr.bf16.mxu0 0
  %1123 = vmatpush1.bf16.msra.mxu0 0
  %1124 = vmatprep.subr.bf16.mxu0 0
  %1125 = vmatpush1.bf16.msra.mxu0 0
  %1126 = vmatprep.subr.bf16.mxu0 0
  %1127 = vmatpush1.bf16.msra.mxu0 0
  %1128 = vmatprep.subr.bf16.mxu0 0
  %1129 = vmatpush1.bf16.msra.mxu0 0
  %1130 = vmatprep.subr.bf16.mxu0 0
  %1131 = vmatpush1.bf16.msra.mxu0 0
  %1132 = vmatprep.subr.bf16.mxu0 0
  %1133 = vmatpush1.bf16.msra.mxu0 0
  %1134 = vmatprep.subr.bf16.mxu0 0
  %1135 = vmatpush1.bf16.msra.mxu0 0
  %1136 = vmatprep.subr.bf16.mxu0 0
  %1137 = vmatpush1.bf16.msra.mxu0 0
  %1138 = vmatprep.subr.bf16.mxu0 0
  %1139 = vmatpush1.bf16.msra.mxu0 0
  %1140 = vmatprep.subr.bf16.mxu0 0
  %1141 = vmatpush1.bf16.msra.mxu0 0
  %1142 = vmatprep.subr.bf16.mxu0 0
  %1143 = vmatpush1.bf16.msra.mxu0 0
  %1144 = vmatprep.subr.bf16.mxu0 0
  %1145 = vmatpush1.bf16.msra.mxu0 0
  %1146 = vmatprep.subr.bf16.mxu0 0
  %1147 = vmatpush1.bf16.msra.mxu0 0
  %1148 = vmatprep.subr.bf16.mxu0 0
  %1149 = vmatpush1.bf16.msra.mxu0 0
  %1150 = vmatprep.mubr.bf16.mxu0 0
  %1151 = vmatmul.mubr.bf16.gmra.mrb[0].mxu0 %v1116
  %v1152 = vpop.f32.mrb[0].mxu0
  %v1153 = vadd.f32 %v1106, %v1152
  %v1154 = vpop.f32.mrb[0].mxu0
  %v1155 = vpop.f32.mrb[0].mxu0
  %v1156 = vpop.f32.mrb[0].mxu0
  %1157 = vdwg.mxu0
  %v1158 = vadd.f32 %v1153, %v957
  %v1159 = vxor.u32 %v1158, 2147483648
  %v1160 = vmul.f32 %v1159, 1.442695
  %v1161 = vpow.pop %v1160
  %v1162 = vadd.f32 %v1161, 1.0
  %v1163 = vrcp.pop %v1162
  %v1164 = vmul.f32 1.0, %v1163
  %v1165 = vtanh.pop %v1158
  %v1166 = vmul.f32 %v977, %v1164
  %1168 = vrot.lane.b32.xlu0 %v1165, 64
  %v1169 = vpop.permute.xlu0 %1168
  %v1171 = vmul.f32 %v1164, %v1169
  %1173 = vrot.lane.b32.xlu0 %v1171, 32
  %v1174 = vpop.permute.xlu0 %1173
  %v1176 = vadd.f32 %v1166, %v1174
  %v1177 = vtanh.pop %v1176
  %1179 = vrot.lane.b32.xlu0 %v1177, 64
  %v1180 = vpop.permute.xlu0 %1179
  %v1182 = vmul.f32 %v1164, %v1180
  %1184 = vrot.lane.b32.xlu0 %v1182, 32
  %v1185 = vpop.permute.xlu0 %1184
  %1187 = vst.msk [vmem:[%s8 + $0x2] sm:$0x3] %vm988, %v1185
  %1188 = vmatprep.subr.bf16.mxu0 0
  %1189 = vmatpush1.bf16.msra.mxu0 %v770
  %1190 = vmatprep.subr.bf16.mxu0 0
  %1191 = vmatpush1.bf16.msra.mxu0 %v771
  %1192 = vmatprep.subr.bf16.mxu0 0
  %1193 = vmatpush1.bf16.msra.mxu0 0
  %1194 = vmatprep.subr.bf16.mxu0 0
  %1195 = vmatpush1.bf16.msra.mxu0 0
  %1196 = vmatprep.subr.bf16.mxu0 0
  %1197 = vmatpush1.bf16.msra.mxu0 0
  %1198 = vmatprep.subr.bf16.mxu0 0
  %1199 = vmatpush1.bf16.msra.mxu0 0
  %1200 = vmatprep.subr.bf16.mxu0 0
  %1201 = vmatpush1.bf16.msra.mxu0 0
  %1202 = vmatprep.subr.bf16.mxu0 0
  %1203 = vmatpush1.bf16.msra.mxu0 0
  %1204 = vmatprep.subr.bf16.mxu0 0
  %1205 = vmatpush1.bf16.msra.mxu0 0
  %1206 = vmatprep.subr.bf16.mxu0 0
  %1207 = vmatpush1.bf16.msra.mxu0 0
  %1208 = vmatprep.subr.bf16.mxu0 0
  %1209 = vmatpush1.bf16.msra.mxu0 0
  %1210 = vmatprep.subr.bf16.mxu0 0
  %1211 = vmatpush1.bf16.msra.mxu0 0
  %1212 = vmatprep.subr.bf16.mxu0 0
  %1213 = vmatpush1.bf16.msra.mxu0 0
  %1214 = vmatprep.subr.bf16.mxu0 0
  %1215 = vmatpush1.bf16.msra.mxu0 0
  %1216 = vmatprep.subr.bf16.mxu0 0
  %1217 = vmatpush1.bf16.msra.mxu0 0
  %1218 = vmatprep.subr.bf16.mxu0 0
  %1219 = vmatpush1.bf16.msra.mxu0 0
  %1220 = vmatprep.mubr.bf16.mxu0 0
  %1221 = vmatmul.mubr.bf16.gmra.mrb[0].mxu0 %v1116
  %v1222 = vpop.f32.mrb[0].mxu0
  %v1223 = vadd.f32 0.0, %v1222
  %v1224 = vpop.f32.mrb[0].mxu0
  %v1225 = vpop.f32.mrb[0].mxu0
  %v1226 = vpop.f32.mrb[0].mxu0
  %1227 = vdwg.mxu0
  %v1229 = vrot.slane %v1223, 4
  %v1231 = vadd.f32 %v716, %v1229
  %v1232 = vxor.u32 %v1231, 2147483648
  %v1233 = vmul.f32 %v1232, 1.442695
  %v1234 = vpow.pop %v1233
  %v1235 = vadd.f32 %v1234, 1.0
  %v1236 = vrcp.pop %v1235
  %v1237 = vmul.f32 1.0, %v1236
  %v1238 = vtanh.pop %v1231
  %v1240 = vrot.slane %v1237, 4
  %v1242 = vmul.f32 %v1055, %v1240
  %1244 = vrot.lane.b32.xlu0 %v1238, 64
  %v1245 = vpop.permute.xlu0 %1244
  %v1247 = vmul.f32 %v1237, %v1245
  %v1249 = vrot.slane %v1247, 4
  %1250 = vrot.lane.b32.xlu0 %v1249, 32
  %v1251 = vpop.permute.xlu0 %1250
  %v1253 = vadd.f32 %v1242, %v1251
  %v1254 = vtanh.pop %v1253
  %v1256 = vrot.slane %v1254, 4
  %1257 = vrot.lane.b32.xlu0 %v1256, 64
  %v1258 = vpop.permute.xlu0 %1257
  %v1260 = vmul.f32 %v1237, %v1258
  %v1261 = vpack.c.bf16 %v1260, %v1260
  %v1262 = vpack.c.bf16 %v1182, %v1182
  %1264 = vrot.lane.b32.xlu0 %v1262, 32
  %v1265 = vpop.permute.xlu0 %1264
  %v1267 = vsel %vm540, %v1265, 0
  %1269 = vmatprep.subr.bf16.mxu0 0
  %1270 = vmatpush1.bf16.msra.mxu0 %v851
  %1271 = vmatprep.subr.bf16.mxu0 0
  %1272 = vmatpush1.bf16.msra.mxu0 %v852
  %1273 = vmatprep.subr.bf16.mxu0 0
  %1274 = vmatpush1.bf16.msra.mxu0 0
  %1275 = vmatprep.subr.bf16.mxu0 0
  %1276 = vmatpush1.bf16.msra.mxu0 0
  %1277 = vmatprep.subr.bf16.mxu0 0
  %1278 = vmatpush1.bf16.msra.mxu0 0
  %1279 = vmatprep.subr.bf16.mxu0 0
  %1280 = vmatpush1.bf16.msra.mxu0 0
  %1281 = vmatprep.subr.bf16.mxu0 0
  %1282 = vmatpush1.bf16.msra.mxu0 0
  %1283 = vmatprep.subr.bf16.mxu0 0
  %1284 = vmatpush1.bf16.msra.mxu0 0
  %1285 = vmatprep.subr.bf16.mxu0 0
  %1286 = vmatpush1.bf16.msra.mxu0 0
  %1287 = vmatprep.subr.bf16.mxu0 0
  %1288 = vmatpush1.bf16.msra.mxu0 0
  %1289 = vmatprep.subr.bf16.mxu0 0
  %1290 = vmatpush1.bf16.msra.mxu0 0
  %1291 = vmatprep.subr.bf16.mxu0 0
  %1292 = vmatpush1.bf16.msra.mxu0 0
  %1293 = vmatprep.subr.bf16.mxu0 0
  %1294 = vmatpush1.bf16.msra.mxu0 0
  %1295 = vmatprep.subr.bf16.mxu0 0
  %1296 = vmatpush1.bf16.msra.mxu0 0
  %1297 = vmatprep.subr.bf16.mxu0 0
  %1298 = vmatpush1.bf16.msra.mxu0 0
  %1299 = vmatprep.subr.bf16.mxu0 0
  %1300 = vmatpush1.bf16.msra.mxu0 0
  %1301 = vmatprep.mubr.bf16.mxu0 0
  %1302 = vmatmul.mubr.bf16.gmra.mrb[0].mxu0 %v1267
  %v1303 = vpop.f32.mrb[0].mxu0
  %v1304 = vadd.f32 0.0, %v1303
  %v1305 = vpop.f32.mrb[0].mxu0
  %v1306 = vpop.f32.mrb[0].mxu0
  %v1307 = vpop.f32.mrb[0].mxu0
  %1308 = vdwg.mxu0
  %v1310 = vrot.slane %v1261, 2
  %1311 = vrot.lane.b32.xlu0 %v1310, 32
  %v1312 = vpop.permute.xlu0 %1311
  %v1314 = vsel %vm540, %v1312, 0
  %1316 = vmatprep.subr.bf16.mxu0 0
  %1317 = vmatpush1.bf16.msra.mxu0 %v906
  %1318 = vmatprep.subr.bf16.mxu0 0
  %1319 = vmatpush1.bf16.msra.mxu0 %v907
  %1320 = vmatprep.subr.bf16.mxu0 0
  %1321 = vmatpush1.bf16.msra.mxu0 0
  %1322 = vmatprep.subr.bf16.mxu0 0
  %1323 = vmatpush1.bf16.msra.mxu0 0
  %1324 = vmatprep.subr.bf16.mxu0 0
  %1325 = vmatpush1.bf16.msra.mxu0 0
  %1326 = vmatprep.subr.bf16.mxu0 0
  %1327 = vmatpush1.bf16.msra.mxu0 0
  %1328 = vmatprep.subr.bf16.mxu0 0
  %1329 = vmatpush1.bf16.msra.mxu0 0
  %1330 = vmatprep.subr.bf16.mxu0 0
  %1331 = vmatpush1.bf16.msra.mxu0 0
  %1332 = vmatprep.subr.bf16.mxu0 0
  %1333 = vmatpush1.bf16.msra.mxu0 0
  %1334 = vmatprep.subr.bf16.mxu0 0
  %1335 = vmatpush1.bf16.msra.mxu0 0
  %1336 = vmatprep.subr.bf16.mxu0 0
  %1337 = vmatpush1.bf16.msra.mxu0 0
  %1338 = vmatprep.subr.bf16.mxu0 0
  %1339 = vmatpush1.bf16.msra.mxu0 0
  %1340 = vmatprep.subr.bf16.mxu0 0
  %1341 = vmatpush1.bf16.msra.mxu0 0
  %1342 = vmatprep.subr.bf16.mxu0 0
  %1343 = vmatpush1.bf16.msra.mxu0 0
  %1344 = vmatprep.subr.bf16.mxu0 0
  %1345 = vmatpush1.bf16.msra.mxu0 0
  %1346 = vmatprep.subr.bf16.mxu0 0
  %1347 = vmatpush1.bf16.msra.mxu0 0
  %1348 = vmatprep.mubr.bf16.mxu0 0
  %1349 = vmatmul.mubr.bf16.gmra.mrb[0].mxu0 %v1314
  %v1350 = vpop.f32.mrb[0].mxu0
  %v1351 = vadd.f32 %v1304, %v1350
  %v1352 = vpop.f32.mrb[0].mxu0
  %v1353 = vpop.f32.mrb[0].mxu0
  %v1354 = vpop.f32.mrb[0].mxu0
  %1355 = vdwg.mxu0
  %v1356 = vadd.f32 %v1351, %v957
  %v1357 = vxor.u32 %v1356, 2147483648
  %v1358 = vmul.f32 %v1357, 1.442695
  %v1359 = vpow.pop %v1358
  %v1360 = vadd.f32 %v1359, 1.0
  %v1361 = vrcp.pop %v1360
  %v1362 = vmul.f32 1.0, %v1361
  %v1363 = vtanh.pop %v1356
  %v1364 = vmul.f32 %v1176, %v1362
  %1366 = vrot.lane.b32.xlu0 %v1363, 64
  %v1367 = vpop.permute.xlu0 %1366
  %v1369 = vmul.f32 %v1362, %v1367
  %1371 = vrot.lane.b32.xlu0 %v1369, 32
  %v1372 = vpop.permute.xlu0 %1371
  %v1374 = vadd.f32 %v1364, %v1372
  %v1375 = vtanh.pop %v1374
  %1377 = vrot.lane.b32.xlu0 %v1375, 64
  %v1378 = vpop.permute.xlu0 %1377
  %v1380 = vmul.f32 %v1362, %v1378
  %1382 = vrot.lane.b32.xlu0 %v1380, 32
  %v1383 = vpop.permute.xlu0 %1382
  %1385 = vst.msk [vmem:[%s8 + $0x4] sm:$0x3] %vm988, %v1383
  %1386 = vmatprep.subr.bf16.mxu0 0
  %1387 = vmatpush1.bf16.msra.mxu0 %v770
  %1388 = vmatprep.subr.bf16.mxu0 0
  %1389 = vmatpush1.bf16.msra.mxu0 %v771
  %1390 = vmatprep.subr.bf16.mxu0 0
  %1391 = vmatpush1.bf16.msra.mxu0 0
  %1392 = vmatprep.subr.bf16.mxu0 0
  %1393 = vmatpush1.bf16.msra.mxu0 0
  %1394 = vmatprep.subr.bf16.mxu0 0
  %1395 = vmatpush1.bf16.msra.mxu0 0
  %1396 = vmatprep.subr.bf16.mxu0 0
  %1397 = vmatpush1.bf16.msra.mxu0 0
  %1398 = vmatprep.subr.bf16.mxu0 0
  %1399 = vmatpush1.bf16.msra.mxu0 0
  %1400 = vmatprep.subr.bf16.mxu0 0
  %1401 = vmatpush1.bf16.msra.mxu0 0
  %1402 = vmatprep.subr.bf16.mxu0 0
  %1403 = vmatpush1.bf16.msra.mxu0 0
  %1404 = vmatprep.subr.bf16.mxu0 0
  %1405 = vmatpush1.bf16.msra.mxu0 0
  %1406 = vmatprep.subr.bf16.mxu0 0
  %1407 = vmatpush1.bf16.msra.mxu0 0
  %1408 = vmatprep.subr.bf16.mxu0 0
  %1409 = vmatpush1.bf16.msra.mxu0 0
  %1410 = vmatprep.subr.bf16.mxu0 0
  %1411 = vmatpush1.bf16.msra.mxu0 0
  %1412 = vmatprep.subr.bf16.mxu0 0
  %1413 = vmatpush1.bf16.msra.mxu0 0
  %1414 = vmatprep.subr.bf16.mxu0 0
  %1415 = vmatpush1.bf16.msra.mxu0 0
  %1416 = vmatprep.subr.bf16.mxu0 0
  %1417 = vmatpush1.bf16.msra.mxu0 0
  %1418 = vmatprep.mubr.bf16.mxu0 0
  %1419 = vmatmul.mubr.bf16.gmra.mrb[0].mxu0 %v1314
  %v1420 = vpop.f32.mrb[0].mxu0
  %v1421 = vadd.f32 0.0, %v1420
  %v1422 = vpop.f32.mrb[0].mxu0
  %v1423 = vpop.f32.mrb[0].mxu0
  %v1424 = vpop.f32.mrb[0].mxu0
  %1425 = vdwg.mxu0
  %v1427 = vrot.slane %v1421, 2
  %v1429 = vadd.f32 %v716, %v1427
  %v1430 = vxor.u32 %v1429, 2147483648
  %v1431 = vmul.f32 %v1430, 1.442695
  %v1432 = vpow.pop %v1431
  %v1433 = vadd.f32 %v1432, 1.0
  %v1434 = vrcp.pop %v1433
  %v1435 = vmul.f32 1.0, %v1434
  %v1436 = vtanh.pop %v1429
  %v1438 = vrot.slane %v1435, 6
  %v1440 = vmul.f32 %v1253, %v1438
  %1442 = vrot.lane.b32.xlu0 %v1436, 64
  %v1443 = vpop.permute.xlu0 %1442
  %v1445 = vmul.f32 %v1435, %v1443
  %v1447 = vrot.slane %v1445, 6
  %1448 = vrot.lane.b32.xlu0 %v1447, 32
  %v1449 = vpop.permute.xlu0 %1448
  %v1451 = vadd.f32 %v1440, %v1449
  %v1452 = vtanh.pop %v1451
  %v1454 = vrot.slane %v1452, 2
  %1455 = vrot.lane.b32.xlu0 %v1454, 64
  %v1456 = vpop.permute.xlu0 %1455
  %v1458 = vmul.f32 %v1435, %v1456
  %v1459 = vpack.c.bf16 %v1458, %v1458
  %v1460 = vpack.c.bf16 %v1380, %v1380
  %1462 = vrot.lane.b32.xlu0 %v1460, 32
  %v1463 = vpop.permute.xlu0 %1462
  %v1465 = vsel %vm540, %v1463, 0
  %1467 = vmatprep.subr.bf16.mxu0 0
  %1468 = vmatpush1.bf16.msra.mxu0 %v851
  %1469 = vmatprep.subr.bf16.mxu0 0
  %1470 = vmatpush1.bf16.msra.mxu0 %v852
  %1471 = vmatprep.subr.bf16.mxu0 0
  %1472 = vmatpush1.bf16.msra.mxu0 0
  %1473 = vmatprep.subr.bf16.mxu0 0
  %1474 = vmatpush1.bf16.msra.mxu0 0
  %1475 = vmatprep.subr.bf16.mxu0 0
  %1476 = vmatpush1.bf16.msra.mxu0 0
  %1477 = vmatprep.subr.bf16.mxu0 0
  %1478 = vmatpush1.bf16.msra.mxu0 0
  %1479 = vmatprep.subr.bf16.mxu0 0
  %1480 = vmatpush1.bf16.msra.mxu0 0
  %1481 = vmatprep.subr.bf16.mxu0 0
  %1482 = vmatpush1.bf16.msra.mxu0 0
  %1483 = vmatprep.subr.bf16.mxu0 0
  %1484 = vmatpush1.bf16.msra.mxu0 0
  %1485 = vmatprep.subr.bf16.mxu0 0
  %1486 = vmatpush1.bf16.msra.mxu0 0
  %1487 = vmatprep.subr.bf16.mxu0 0
  %1488 = vmatpush1.bf16.msra.mxu0 0
  %1489 = vmatprep.subr.bf16.mxu0 0
  %1490 = vmatpush1.bf16.msra.mxu0 0
  %1491 = vmatprep.subr.bf16.mxu0 0
  %1492 = vmatpush1.bf16.msra.mxu0 0
  %1493 = vmatprep.subr.bf16.mxu0 0
  %1494 = vmatpush1.bf16.msra.mxu0 0
  %1495 = vmatprep.subr.bf16.mxu0 0
  %1496 = vmatpush1.bf16.msra.mxu0 0
  %1497 = vmatprep.subr.bf16.mxu0 0
  %1498 = vmatpush1.bf16.msra.mxu0 0
  %1499 = vmatprep.mubr.bf16.mxu0 0
  %1500 = vmatmul.mubr.bf16.gmra.mrb[0].mxu0 %v1465
  %v1501 = vpop.f32.mrb[0].mxu0
  %v1502 = vadd.f32 0.0, %v1501
  %v1503 = vpop.f32.mrb[0].mxu0
  %v1504 = vpop.f32.mrb[0].mxu0
  %v1505 = vpop.f32.mrb[0].mxu0
  %1506 = vdwg.mxu0
  %v1508 = vrot.slane %v1459, 3
  %1509 = vrot.lane.b32.xlu0 %v1508, 32
  %v1510 = vpop.permute.xlu0 %1509
  %v1512 = vsel %vm540, %v1510, 0
  %1514 = vmatprep.subr.bf16.mxu0 0
  %1515 = vmatpush1.bf16.msra.mxu0 %v906
  %1516 = vmatprep.subr.bf16.mxu0 0
  %1517 = vmatpush1.bf16.msra.mxu0 %v907
  %1518 = vmatprep.subr.bf16.mxu0 0
  %1519 = vmatpush1.bf16.msra.mxu0 0
  %1520 = vmatprep.subr.bf16.mxu0 0
  %1521 = vmatpush1.bf16.msra.mxu0 0
  %1522 = vmatprep.subr.bf16.mxu0 0
  %1523 = vmatpush1.bf16.msra.mxu0 0
  %1524 = vmatprep.subr.bf16.mxu0 0
  %1525 = vmatpush1.bf16.msra.mxu0 0
  %1526 = vmatprep.subr.bf16.mxu0 0
  %1527 = vmatpush1.bf16.msra.mxu0 0
  %1528 = vmatprep.subr.bf16.mxu0 0
  %1529 = vmatpush1.bf16.msra.mxu0 0
  %1530 = vmatprep.subr.bf16.mxu0 0
  %1531 = vmatpush1.bf16.msra.mxu0 0
  %1532 = vmatprep.subr.bf16.mxu0 0
  %1533 = vmatpush1.bf16.msra.mxu0 0
  %1534 = vmatprep.subr.bf16.mxu0 0
  %1535 = vmatpush1.bf16.msra.mxu0 0
  %1536 = vmatprep.subr.bf16.mxu0 0
  %1537 = vmatpush1.bf16.msra.mxu0 0
  %1538 = vmatprep.subr.bf16.mxu0 0
  %1539 = vmatpush1.bf16.msra.mxu0 0
  %1540 = vmatprep.subr.bf16.mxu0 0
  %1541 = vmatpush1.bf16.msra.mxu0 0
  %1542 = vmatprep.subr.bf16.mxu0 0
  %1543 = vmatpush1.bf16.msra.mxu0 0
  %1544 = vmatprep.subr.bf16.mxu0 0
  %1545 = vmatpush1.bf16.msra.mxu0 0
  %1546 = vmatprep.mubr.bf16.mxu0 0
  %1547 = vmatmul.mubr.bf16.gmra.mrb[0].mxu0 %v1512
  %v1548 = vpop.f32.mrb[0].mxu0
  %v1549 = vadd.f32 %v1502, %v1548
  %v1550 = vpop.f32.mrb[0].mxu0
  %v1551 = vpop.f32.mrb[0].mxu0
  %v1552 = vpop.f32.mrb[0].mxu0
  %1553 = vdwg.mxu0
  %v1554 = vadd.f32 %v1549, %v957
  %v1555 = vxor.u32 %v1554, 2147483648
  %v1556 = vmul.f32 %v1555, 1.442695
  %v1557 = vpow.pop %v1556
  %v1558 = vadd.f32 %v1557, 1.0
  %v1559 = vrcp.pop %v1558
  %v1560 = vmul.f32 1.0, %v1559
  %v1561 = vtanh.pop %v1554
  %v1562 = vmul.f32 %v1374, %v1560
  %1564 = vrot.lane.b32.xlu0 %v1561, 64
  %v1565 = vpop.permute.xlu0 %1564
  %v1567 = vmul.f32 %v1560, %v1565
  %1569 = vrot.lane.b32.xlu0 %v1567, 32
  %v1570 = vpop.permute.xlu0 %1569
  %v1572 = vadd.f32 %v1562, %v1570
  %v1573 = vtanh.pop %v1572
  %1575 = vrot.lane.b32.xlu0 %v1573, 64
  %v1576 = vpop.permute.xlu0 %1575
  %v1578 = vmul.f32 %v1560, %v1576
  %1580 = vrot.lane.b32.xlu0 %v1578, 32
  %v1581 = vpop.permute.xlu0 %1580
  %1583 = vst.msk [vmem:[%s8 + $0x6] sm:$0x3] %vm988, %v1581
  %1584 = vmatprep.subr.bf16.mxu0 0
  %1585 = vmatpush1.bf16.msra.mxu0 %v770
  %1586 = vmatprep.subr.bf16.mxu0 0
  %1587 = vmatpush1.bf16.msra.mxu0 %v771
  %1588 = vmatprep.subr.bf16.mxu0 0
  %1589 = vmatpush1.bf16.msra.mxu0 0
  %1590 = vmatprep.subr.bf16.mxu0 0
  %1591 = vmatpush1.bf16.msra.mxu0 0
  %1592 = vmatprep.subr.bf16.mxu0 0
  %1593 = vmatpush1.bf16.msra.mxu0 0
  %1594 = vmatprep.subr.bf16.mxu0 0
  %1595 = vmatpush1.bf16.msra.mxu0 0
  %1596 = vmatprep.subr.bf16.mxu0 0
  %1597 = vmatpush1.bf16.msra.mxu0 0
  %1598 = vmatprep.subr.bf16.mxu0 0
  %1599 = vmatpush1.bf16.msra.mxu0 0
  %1600 = vmatprep.subr.bf16.mxu0 0
  %1601 = vmatpush1.bf16.msra.mxu0 0
  %1602 = vmatprep.subr.bf16.mxu0 0
  %1603 = vmatpush1.bf16.msra.mxu0 0
  %1604 = vmatprep.subr.bf16.mxu0 0
  %1605 = vmatpush1.bf16.msra.mxu0 0
  %1606 = vmatprep.subr.bf16.mxu0 0
  %1607 = vmatpush1.bf16.msra.mxu0 0
  %1608 = vmatprep.subr.bf16.mxu0 0
  %1609 = vmatpush1.bf16.msra.mxu0 0
  %1610 = vmatprep.subr.bf16.mxu0 0
  %1611 = vmatpush1.bf16.msra.mxu0 0
  %1612 = vmatprep.subr.bf16.mxu0 0
  %1613 = vmatpush1.bf16.msra.mxu0 0
  %1614 = vmatprep.subr.bf16.mxu0 0
  %1615 = vmatpush1.bf16.msra.mxu0 0
  %1616 = vmatprep.mubr.bf16.mxu0 0
  %1617 = vmatmul.mubr.bf16.gmra.mrb[0].mxu0 %v1512
  %v1618 = vpop.f32.mrb[0].mxu0
  %v1619 = vadd.f32 0.0, %v1618
  %v1620 = vpop.f32.mrb[0].mxu0
  %v1621 = vpop.f32.mrb[0].mxu0
  %v1622 = vpop.f32.mrb[0].mxu0
  %1623 = vdwg.mxu0
  %v1624 = vadd.f32 %v719, %v1619
  %v1625 = vxor.u32 %v1624, 2147483648
  %v1626 = vmul.f32 %v1625, 1.442695
  %v1627 = vpow.pop %v1626
  %v1628 = vadd.f32 %v1627, 1.0
  %v1629 = vrcp.pop %v1628
  %v1630 = vmul.f32 1.0, %v1629
  %v1631 = vtanh.pop %v1624
  %v1632 = vmul.f32 %v1451, %v1630
  %1634 = vrot.lane.b32.xlu0 %v1631, 64
  %v1635 = vpop.permute.xlu0 %1634
  %v1637 = vmul.f32 %v1630, %v1635
  %1639 = vrot.lane.b32.xlu0 %v1637, 32
  %v1640 = vpop.permute.xlu0 %1639
  %v1642 = vadd.f32 %v1632, %v1640
  %v1643 = vtanh.pop %v1642
  %1645 = vrot.lane.b32.xlu0 %v1643, 64
  %v1646 = vpop.permute.xlu0 %1645
  %v1648 = vmul.f32 %v1630, %v1646
  %v1649 = vpack.c.bf16 %v1648, %v1648
  %v1650 = vpack.c.bf16 %v1578, %v1578
  %1652 = vrot.lane.b32.xlu0 %v1650, 32
  %v1653 = vpop.permute.xlu0 %1652
  %v1655 = vsel %vm540, %v1653, 0
  %1657 = vmatprep.subr.bf16.mxu0 0
  %1658 = vmatpush1.bf16.msra.mxu0 %v851
  %1659 = vmatprep.subr.bf16.mxu0 0
  %1660 = vmatpush1.bf16.msra.mxu0 %v852
  %1661 = vmatprep.subr.bf16.mxu0 0
  %1662 = vmatpush1.bf16.msra.mxu0 0
  %1663 = vmatprep.subr.bf16.mxu0 0
  %1664 = vmatpush1.bf16.msra.mxu0 0
  %1665 = vmatprep.subr.bf16.mxu0 0
  %1666 = vmatpush1.bf16.msra.mxu0 0
  %1667 = vmatprep.subr.bf16.mxu0 0
  %1668 = vmatpush1.bf16.msra.mxu0 0
  %1669 = vmatprep.subr.bf16.mxu0 0
  %1670 = vmatpush1.bf16.msra.mxu0 0
  %1671 = vmatprep.subr.bf16.mxu0 0
  %1672 = vmatpush1.bf16.msra.mxu0 0
  %1673 = vmatprep.subr.bf16.mxu0 0
  %1674 = vmatpush1.bf16.msra.mxu0 0
  %1675 = vmatprep.subr.bf16.mxu0 0
  %1676 = vmatpush1.bf16.msra.mxu0 0
  %1677 = vmatprep.subr.bf16.mxu0 0
  %1678 = vmatpush1.bf16.msra.mxu0 0
  %1679 = vmatprep.subr.bf16.mxu0 0
  %1680 = vmatpush1.bf16.msra.mxu0 0
  %1681 = vmatprep.subr.bf16.mxu0 0
  %1682 = vmatpush1.bf16.msra.mxu0 0
  %1683 = vmatprep.subr.bf16.mxu0 0
  %1684 = vmatpush1.bf16.msra.mxu0 0
  %1685 = vmatprep.subr.bf16.mxu0 0
  %1686 = vmatpush1.bf16.msra.mxu0 0
  %1687 = vmatprep.subr.bf16.mxu0 0
  %1688 = vmatpush1.bf16.msra.mxu0 0
  %1689 = vmatprep.mubr.bf16.mxu0 0
  %1690 = vmatmul.mubr.bf16.gmra.mrb[0].mxu0 %v1655
  %v1691 = vpop.f32.mrb[0].mxu0
  %v1692 = vadd.f32 0.0, %v1691
  %v1693 = vpop.f32.mrb[0].mxu0
  %v1694 = vpop.f32.mrb[0].mxu0
  %v1695 = vpop.f32.mrb[0].mxu0
  %1696 = vdwg.mxu0
  %1698 = vrot.lane.b32.xlu0 %v1649, 32
  %v1699 = vpop.permute.xlu0 %1698
  %v1701 = vsel %vm540, %v1699, 0
  %1703 = vmatprep.subr.bf16.mxu0 0
  %1704 = vmatpush1.bf16.msra.mxu0 %v906
  %1705 = vmatprep.subr.bf16.mxu0 0
  %1706 = vmatpush1.bf16.msra.mxu0 %v907
  %1707 = vmatprep.subr.bf16.mxu0 0
  %1708 = vmatpush1.bf16.msra.mxu0 0
  %1709 = vmatprep.subr.bf16.mxu0 0
  %1710 = vmatpush1.bf16.msra.mxu0 0
  %1711 = vmatprep.subr.bf16.mxu0 0
  %1712 = vmatpush1.bf16.msra.mxu0 0
  %1713 = vmatprep.subr.bf16.mxu0 0
  %1714 = vmatpush1.bf16.msra.mxu0 0
  %1715 = vmatprep.subr.bf16.mxu0 0
  %1716 = vmatpush1.bf16.msra.mxu0 0
  %1717 = vmatprep.subr.bf16.mxu0 0
  %1718 = vmatpush1.bf16.msra.mxu0 0
  %1719 = vmatprep.subr.bf16.mxu0 0
  %1720 = vmatpush1.bf16.msra.mxu0 0
  %1721 = vmatprep.subr.bf16.mxu0 0
  %1722 = vmatpush1.bf16.msra.mxu0 0
  %1723 = vmatprep.subr.bf16.mxu0 0
  %1724 = vmatpush1.bf16.msra.mxu0 0
  %1725 = vmatprep.subr.bf16.mxu0 0
  %1726 = vmatpush1.bf16.msra.mxu0 0
  %1727 = vmatprep.subr.bf16.mxu0 0
  %1728 = vmatpush1.bf16.msra.mxu0 0
  %1729 = vmatprep.subr.bf16.mxu0 0
  %1730 = vmatpush1.bf16.msra.mxu0 0
  %1731 = vmatprep.subr.bf16.mxu0 0
  %1732 = vmatpush1.bf16.msra.mxu0 0
  %1733 = vmatprep.subr.bf16.mxu0 0
  %1734 = vmatpush1.bf16.msra.mxu0 0
  %1735 = vmatprep.mubr.bf16.mxu0 0
  %1736 = vmatmul.mubr.bf16.gmra.mrb[0].mxu0 %v1701
  %v1737 = vpop.f32.mrb[0].mxu0
  %v1738 = vadd.f32 %v1692, %v1737
  %v1739 = vpop.f32.mrb[0].mxu0
  %v1740 = vpop.f32.mrb[0].mxu0
  %v1741 = vpop.f32.mrb[0].mxu0
  %1742 = vdwg.mxu0
  %v1743 = vadd.f32 %v1738, %v957
  %v1744 = vxor.u32 %v1743, 2147483648
  %v1745 = vmul.f32 %v1744, 1.442695
  %v1746 = vpow.pop %v1745
  %v1747 = vadd.f32 %v1746, 1.0
  %v1748 = vrcp.pop %v1747
  %v1749 = vmul.f32 1.0, %v1748
  %v1750 = vtanh.pop %v1743
  %v1751 = vmul.f32 %v1572, %v1749
  %1753 = vrot.lane.b32.xlu0 %v1750, 64
  %v1754 = vpop.permute.xlu0 %1753
  %v1756 = vmul.f32 %v1749, %v1754
  %1758 = vrot.lane.b32.xlu0 %v1756, 32
  %v1759 = vpop.permute.xlu0 %1758
  %v1761 = vadd.f32 %v1751, %v1759
  %v1762 = vtanh.pop %v1761
  %1764 = vrot.lane.b32.xlu0 %v1762, 64
  %v1765 = vpop.permute.xlu0 %1764
  %v1767 = vmul.f32 %v1749, %v1765
  %1769 = vrot.lane.b32.xlu0 %v1767, 32
  %v1770 = vpop.permute.xlu0 %1769
  %1772 = vst.msk [vmem:[%s8 + $0x8] sm:$0x3] %vm988, %v1770
  %1773 = vmatprep.subr.bf16.mxu0 0
  %1774 = vmatpush1.bf16.msra.mxu0 %v770
  %1775 = vmatprep.subr.bf16.mxu0 0
  %1776 = vmatpush1.bf16.msra.mxu0 %v771
  %1777 = vmatprep.subr.bf16.mxu0 0
  %1778 = vmatpush1.bf16.msra.mxu0 0
  %1779 = vmatprep.subr.bf16.mxu0 0
  %1780 = vmatpush1.bf16.msra.mxu0 0
  %1781 = vmatprep.subr.bf16.mxu0 0
  %1782 = vmatpush1.bf16.msra.mxu0 0
  %1783 = vmatprep.subr.bf16.mxu0 0
  %1784 = vmatpush1.bf16.msra.mxu0 0
  %1785 = vmatprep.subr.bf16.mxu0 0
  %1786 = vmatpush1.bf16.msra.mxu0 0
  %1787 = vmatprep.subr.bf16.mxu0 0
  %1788 = vmatpush1.bf16.msra.mxu0 0
  %1789 = vmatprep.subr.bf16.mxu0 0
  %1790 = vmatpush1.bf16.msra.mxu0 0
  %1791 = vmatprep.subr.bf16.mxu0 0
  %1792 = vmatpush1.bf16.msra.mxu0 0
  %1793 = vmatprep.subr.bf16.mxu0 0
  %1794 = vmatpush1.bf16.msra.mxu0 0
  %1795 = vmatprep.subr.bf16.mxu0 0
  %1796 = vmatpush1.bf16.msra.mxu0 0
  %1797 = vmatprep.subr.bf16.mxu0 0
  %1798 = vmatpush1.bf16.msra.mxu0 0
  %1799 = vmatprep.subr.bf16.mxu0 0
  %1800 = vmatpush1.bf16.msra.mxu0 0
  %1801 = vmatprep.subr.bf16.mxu0 0
  %1802 = vmatpush1.bf16.msra.mxu0 0
  %1803 = vmatprep.subr.bf16.mxu0 0
  %1804 = vmatpush1.bf16.msra.mxu0 0
  %1805 = vmatprep.mubr.bf16.mxu0 0
  %1806 = vmatmul.mubr.bf16.gmra.mrb[0].mxu0 %v1701
  %v1807 = vpop.f32.mrb[0].mxu0
  %v1808 = vadd.f32 0.0, %v1807
  %v1809 = vpop.f32.mrb[0].mxu0
  %v1810 = vpop.f32.mrb[0].mxu0
  %v1811 = vpop.f32.mrb[0].mxu0
  %1812 = vdwg.mxu0
  %v1814 = vrot.slane %v1808, 6
  %v1816 = vadd.f32 %v719, %v1814
  %v1817 = vxor.u32 %v1816, 2147483648
  %v1818 = vmul.f32 %v1817, 1.442695
  %v1819 = vpow.pop %v1818
  %v1820 = vadd.f32 %v1819, 1.0
  %v1821 = vrcp.pop %v1820
  %v1822 = vmul.f32 1.0, %v1821
  %v1823 = vtanh.pop %v1816
  %v1825 = vrot.slane %v1822, 2
  %v1827 = vmul.f32 %v1642, %v1825
  %1829 = vrot.lane.b32.xlu0 %v1823, 64
  %v1830 = vpop.permute.xlu0 %1829
  %v1832 = vmul.f32 %v1822, %v1830
  %v1834 = vrot.slane %v1832, 2
  %1835 = vrot.lane.b32.xlu0 %v1834, 32
  %v1836 = vpop.permute.xlu0 %1835
  %v1838 = vadd.f32 %v1827, %v1836
  %v1839 = vtanh.pop %v1838
  %v1841 = vrot.slane %v1839, 6
  %1842 = vrot.lane.b32.xlu0 %v1841, 64
  %v1843 = vpop.permute.xlu0 %1842
  %v1845 = vmul.f32 %v1822, %v1843
  %v1846 = vpack.c.bf16 %v1845, %v1845
  %v1847 = vpack.c.bf16 %v1767, %v1767
  %1849 = vrot.lane.b32.xlu0 %v1847, 32
  %v1850 = vpop.permute.xlu0 %1849
  %v1852 = vsel %vm540, %v1850, 0
  %1854 = vmatprep.subr.bf16.mxu0 0
  %1855 = vmatpush1.bf16.msra.mxu0 %v851
  %1856 = vmatprep.subr.bf16.mxu0 0
  %1857 = vmatpush1.bf16.msra.mxu0 %v852
  %1858 = vmatprep.subr.bf16.mxu0 0
  %1859 = vmatpush1.bf16.msra.mxu0 0
  %1860 = vmatprep.subr.bf16.mxu0 0
  %1861 = vmatpush1.bf16.msra.mxu0 0
  %1862 = vmatprep.subr.bf16.mxu0 0
  %1863 = vmatpush1.bf16.msra.mxu0 0
  %1864 = vmatprep.subr.bf16.mxu0 0
  %1865 = vmatpush1.bf16.msra.mxu0 0
  %1866 = vmatprep.subr.bf16.mxu0 0
  %1867 = vmatpush1.bf16.msra.mxu0 0
  %1868 = vmatprep.subr.bf16.mxu0 0
  %1869 = vmatpush1.bf16.msra.mxu0 0
  %1870 = vmatprep.subr.bf16.mxu0 0
  %1871 = vmatpush1.bf16.msra.mxu0 0
  %1872 = vmatprep.subr.bf16.mxu0 0
  %1873 = vmatpush1.bf16.msra.mxu0 0
  %1874 = vmatprep.subr.bf16.mxu0 0
  %1875 = vmatpush1.bf16.msra.mxu0 0
  %1876 = vmatprep.subr.bf16.mxu0 0
  %1877 = vmatpush1.bf16.msra.mxu0 0
  %1878 = vmatprep.subr.bf16.mxu0 0
  %1879 = vmatpush1.bf16.msra.mxu0 0
  %1880 = vmatprep.subr.bf16.mxu0 0
  %1881 = vmatpush1.bf16.msra.mxu0 0
  %1882 = vmatprep.subr.bf16.mxu0 0
  %1883 = vmatpush1.bf16.msra.mxu0 0
  %1884 = vmatprep.subr.bf16.mxu0 0
  %1885 = vmatpush1.bf16.msra.mxu0 0
  %1886 = vmatprep.mubr.bf16.mxu0 0
  %1887 = vmatmul.mubr.bf16.gmra.mrb[0].mxu0 %v1852
  %v1888 = vpop.f32.mrb[0].mxu0
  %v1889 = vadd.f32 0.0, %v1888
  %v1890 = vpop.f32.mrb[0].mxu0
  %v1891 = vpop.f32.mrb[0].mxu0
  %v1892 = vpop.f32.mrb[0].mxu0
  %1893 = vdwg.mxu0
  %v1895 = vrot.slane %v1846, 1
  %1896 = vrot.lane.b32.xlu0 %v1895, 32
  %v1897 = vpop.permute.xlu0 %1896
  %v1899 = vsel %vm540, %v1897, 0
  %1901 = vmatprep.subr.bf16.mxu0 0
  %1902 = vmatpush1.bf16.msra.mxu0 %v906
  %1903 = vmatprep.subr.bf16.mxu0 0
  %1904 = vmatpush1.bf16.msra.mxu0 %v907
  %1905 = vmatprep.subr.bf16.mxu0 0
  %1906 = vmatpush1.bf16.msra.mxu0 0
  %1907 = vmatprep.subr.bf16.mxu0 0
  %1908 = vmatpush1.bf16.msra.mxu0 0
  %1909 = vmatprep.subr.bf16.mxu0 0
  %1910 = vmatpush1.bf16.msra.mxu0 0
  %1911 = vmatprep.subr.bf16.mxu0 0
  %1912 = vmatpush1.bf16.msra.mxu0 0
  %1913 = vmatprep.subr.bf16.mxu0 0
  %1914 = vmatpush1.bf16.msra.mxu0 0
  %1915 = vmatprep.subr.bf16.mxu0 0
  %1916 = vmatpush1.bf16.msra.mxu0 0
  %1917 = vmatprep.subr.bf16.mxu0 0
  %1918 = vmatpush1.bf16.msra.mxu0 0
  %1919 = vmatprep.subr.bf16.mxu0 0
  %1920 = vmatpush1.bf16.msra.mxu0 0
  %1921 = vmatprep.subr.bf16.mxu0 0
  %1922 = vmatpush1.bf16.msra.mxu0 0
  %1923 = vmatprep.subr.bf16.mxu0 0
  %1924 = vmatpush1.bf16.msra.mxu0 0
  %1925 = vmatprep.subr.bf16.mxu0 0
  %1926 = vmatpush1.bf16.msra.mxu0 0
  %1927 = vmatprep.subr.bf16.mxu0 0
  %1928 = vmatpush1.bf16.msra.mxu0 0
  %1929 = vmatprep.subr.bf16.mxu0 0
  %1930 = vmatpush1.bf16.msra.mxu0 0
  %1931 = vmatprep.subr.bf16.mxu0 0
  %1932 = vmatpush1.bf16.msra.mxu0 0
  %1933 = vmatprep.mubr.bf16.mxu0 0
  %1934 = vmatmul.mubr.bf16.gmra.mrb[0].mxu0 %v1899
  %v1935 = vpop.f32.mrb[0].mxu0
  %v1936 = vadd.f32 %v1889, %v1935
  %v1937 = vpop.f32.mrb[0].mxu0
  %v1938 = vpop.f32.mrb[0].mxu0
  %v1939 = vpop.f32.mrb[0].mxu0
  %1940 = vdwg.mxu0
  %v1941 = vadd.f32 %v1936, %v957
  %v1942 = vxor.u32 %v1941, 2147483648
  %v1943 = vmul.f32 %v1942, 1.442695
  %v1944 = vpow.pop %v1943
  %v1945 = vadd.f32 %v1944, 1.0
  %v1946 = vrcp.pop %v1945
  %v1947 = vmul.f32 1.0, %v1946
  %v1948 = vtanh.pop %v1941
  %v1949 = vmul.f32 %v1761, %v1947
  %1951 = vrot.lane.b32.xlu0 %v1948, 64
  %v1952 = vpop.permute.xlu0 %1951
  %v1954 = vmul.f32 %v1947, %v1952
  %1956 = vrot.lane.b32.xlu0 %v1954, 32
  %v1957 = vpop.permute.xlu0 %1956
  %v1959 = vadd.f32 %v1949, %v1957
  %v1960 = vtanh.pop %v1959
  %1962 = vrot.lane.b32.xlu0 %v1960, 64
  %v1963 = vpop.permute.xlu0 %1962
  %v1965 = vmul.f32 %v1947, %v1963
  %1967 = vrot.lane.b32.xlu0 %v1965, 32
  %v1968 = vpop.permute.xlu0 %1967
  %1970 = vst.msk [vmem:[%s8 + $0xa] sm:$0x3] %vm988, %v1968
  %1971 = vmatprep.subr.bf16.mxu0 0
  %1972 = vmatpush1.bf16.msra.mxu0 %v770
  %1973 = vmatprep.subr.bf16.mxu0 0
  %1974 = vmatpush1.bf16.msra.mxu0 %v771
  %1975 = vmatprep.subr.bf16.mxu0 0
  %1976 = vmatpush1.bf16.msra.mxu0 0
  %1977 = vmatprep.subr.bf16.mxu0 0
  %1978 = vmatpush1.bf16.msra.mxu0 0
  %1979 = vmatprep.subr.bf16.mxu0 0
  %1980 = vmatpush1.bf16.msra.mxu0 0
  %1981 = vmatprep.subr.bf16.mxu0 0
  %1982 = vmatpush1.bf16.msra.mxu0 0
  %1983 = vmatprep.subr.bf16.mxu0 0
  %1984 = vmatpush1.bf16.msra.mxu0 0
  %1985 = vmatprep.subr.bf16.mxu0 0
  %1986 = vmatpush1.bf16.msra.mxu0 0
  %1987 = vmatprep.subr.bf16.mxu0 0
  %1988 = vmatpush1.bf16.msra.mxu0 0
  %1989 = vmatprep.subr.bf16.mxu0 0
  %1990 = vmatpush1.bf16.msra.mxu0 0
  %1991 = vmatprep.subr.bf16.mxu0 0
  %1992 = vmatpush1.bf16.msra.mxu0 0
  %1993 = vmatprep.subr.bf16.mxu0 0
  %1994 = vmatpush1.bf16.msra.mxu0 0
  %1995 = vmatprep.subr.bf16.mxu0 0
  %1996 = vmatpush1.bf16.msra.mxu0 0
  %1997 = vmatprep.subr.bf16.mxu0 0
  %1998 = vmatpush1.bf16.msra.mxu0 0
  %1999 = vmatprep.subr.bf16.mxu0 0
  %2000 = vmatpush1.bf16.msra.mxu0 0
  %2001 = vmatprep.subr.bf16.mxu0 0
  %2002 = vmatpush1.bf16.msra.mxu0 0
  %2003 = vmatprep.mubr.bf16.mxu0 0
  %2004 = vmatmul.mubr.bf16.gmra.mrb[0].mxu0 %v1899
  %v2005 = vpop.f32.mrb[0].mxu0
  %v2006 = vadd.f32 0.0, %v2005
  %v2007 = vpop.f32.mrb[0].mxu0
  %v2008 = vpop.f32.mrb[0].mxu0
  %v2009 = vpop.f32.mrb[0].mxu0
  %2010 = vdwg.mxu0
  %v2012 = vrot.slane %v2006, 4
  %v2014 = vadd.f32 %v719, %v2012
  %v2015 = vxor.u32 %v2014, 2147483648
  %v2016 = vmul.f32 %v2015, 1.442695
  %v2017 = vpow.pop %v2016
  %v2018 = vadd.f32 %v2017, 1.0
  %v2019 = vrcp.pop %v2018
  %v2020 = vmul.f32 1.0, %v2019
  %v2021 = vtanh.pop %v2014
  %v2023 = vrot.slane %v2020, 4
  %v2025 = vmul.f32 %v1838, %v2023
  %2027 = vrot.lane.b32.xlu0 %v2021, 64
  %v2028 = vpop.permute.xlu0 %2027
  %v2030 = vmul.f32 %v2020, %v2028
  %v2032 = vrot.slane %v2030, 4
  %2033 = vrot.lane.b32.xlu0 %v2032, 32
  %v2034 = vpop.permute.xlu0 %2033
  %v2036 = vadd.f32 %v2025, %v2034
  %v2037 = vtanh.pop %v2036
  %v2039 = vrot.slane %v2037, 4
  %2040 = vrot.lane.b32.xlu0 %v2039, 64
  %v2041 = vpop.permute.xlu0 %2040
  %v2043 = vmul.f32 %v2020, %v2041
  %v2044 = vpack.c.bf16 %v2043, %v2043
  %v2045 = vpack.c.bf16 %v1965, %v1965
  %2047 = vrot.lane.b32.xlu0 %v2045, 32
  %v2048 = vpop.permute.xlu0 %2047
  %v2050 = vsel %vm540, %v2048, 0
  %2052 = vmatprep.subr.bf16.mxu0 0
  %2053 = vmatpush1.bf16.msra.mxu0 %v851
  %2054 = vmatprep.subr.bf16.mxu0 0
  %2055 = vmatpush1.bf16.msra.mxu0 %v852
  %2056 = vmatprep.subr.bf16.mxu0 0
  %2057 = vmatpush1.bf16.msra.mxu0 0
  %2058 = vmatprep.subr.bf16.mxu0 0
  %2059 = vmatpush1.bf16.msra.mxu0 0
  %2060 = vmatprep.subr.bf16.mxu0 0
  %2061 = vmatpush1.bf16.msra.mxu0 0
  %2062 = vmatprep.subr.bf16.mxu0 0
  %2063 = vmatpush1.bf16.msra.mxu0 0
  %2064 = vmatprep.subr.bf16.mxu0 0
  %2065 = vmatpush1.bf16.msra.mxu0 0
  %2066 = vmatprep.subr.bf16.mxu0 0
  %2067 = vmatpush1.bf16.msra.mxu0 0
  %2068 = vmatprep.subr.bf16.mxu0 0
  %2069 = vmatpush1.bf16.msra.mxu0 0
  %2070 = vmatprep.subr.bf16.mxu0 0
  %2071 = vmatpush1.bf16.msra.mxu0 0
  %2072 = vmatprep.subr.bf16.mxu0 0
  %2073 = vmatpush1.bf16.msra.mxu0 0
  %2074 = vmatprep.subr.bf16.mxu0 0
  %2075 = vmatpush1.bf16.msra.mxu0 0
  %2076 = vmatprep.subr.bf16.mxu0 0
  %2077 = vmatpush1.bf16.msra.mxu0 0
  %2078 = vmatprep.subr.bf16.mxu0 0
  %2079 = vmatpush1.bf16.msra.mxu0 0
  %2080 = vmatprep.subr.bf16.mxu0 0
  %2081 = vmatpush1.bf16.msra.mxu0 0
  %2082 = vmatprep.subr.bf16.mxu0 0
  %2083 = vmatpush1.bf16.msra.mxu0 0
  %2084 = vmatprep.mubr.bf16.mxu0 0
  %2085 = vmatmul.mubr.bf16.gmra.mrb[0].mxu0 %v2050
  %v2086 = vpop.f32.mrb[0].mxu0
  %v2087 = vadd.f32 0.0, %v2086
  %v2088 = vpop.f32.mrb[0].mxu0
  %v2089 = vpop.f32.mrb[0].mxu0
  %v2090 = vpop.f32.mrb[0].mxu0
  %2091 = vdwg.mxu0
  %v2093 = vrot.slane %v2044, 2
  %2094 = vrot.lane.b32.xlu0 %v2093, 32
  %v2095 = vpop.permute.xlu0 %2094
  %v2097 = vsel %vm540, %v2095, 0
  %2099 = vmatprep.subr.bf16.mxu0 0
  %2100 = vmatpush1.bf16.msra.mxu0 %v906
  %2101 = vmatprep.subr.bf16.mxu0 0
  %2102 = vmatpush1.bf16.msra.mxu0 %v907
  %2103 = vmatprep.subr.bf16.mxu0 0
  %2104 = vmatpush1.bf16.msra.mxu0 0
  %2105 = vmatprep.subr.bf16.mxu0 0
  %2106 = vmatpush1.bf16.msra.mxu0 0
  %2107 = vmatprep.subr.bf16.mxu0 0
  %2108 = vmatpush1.bf16.msra.mxu0 0
  %2109 = vmatprep.subr.bf16.mxu0 0
  %2110 = vmatpush1.bf16.msra.mxu0 0
  %2111 = vmatprep.subr.bf16.mxu0 0
  %2112 = vmatpush1.bf16.msra.mxu0 0
  %2113 = vmatprep.subr.bf16.mxu0 0
  %2114 = vmatpush1.bf16.msra.mxu0 0
  %2115 = vmatprep.subr.bf16.mxu0 0
  %2116 = vmatpush1.bf16.msra.mxu0 0
  %2117 = vmatprep.subr.bf16.mxu0 0
  %2118 = vmatpush1.bf16.msra.mxu0 0
  %2119 = vmatprep.subr.bf16.mxu0 0
  %2120 = vmatpush1.bf16.msra.mxu0 0
  %2121 = vmatprep.subr.bf16.mxu0 0
  %2122 = vmatpush1.bf16.msra.mxu0 0
  %2123 = vmatprep.subr.bf16.mxu0 0
  %2124 = vmatpush1.bf16.msra.mxu0 0
  %2125 = vmatprep.subr.bf16.mxu0 0
  %2126 = vmatpush1.bf16.msra.mxu0 0
  %2127 = vmatprep.subr.bf16.mxu0 0
  %2128 = vmatpush1.bf16.msra.mxu0 0
  %2129 = vmatprep.subr.bf16.mxu0 0
  %2130 = vmatpush1.bf16.msra.mxu0 0
  %2131 = vmatprep.mubr.bf16.mxu0 0
  %2132 = vmatmul.mubr.bf16.gmra.mrb[0].mxu0 %v2097
  %v2133 = vpop.f32.mrb[0].mxu0
  %v2134 = vadd.f32 %v2087, %v2133
  %v2135 = vpop.f32.mrb[0].mxu0
  %v2136 = vpop.f32.mrb[0].mxu0
  %v2137 = vpop.f32.mrb[0].mxu0
  %2138 = vdwg.mxu0
  %v2139 = vadd.f32 %v2134, %v957
  %v2140 = vxor.u32 %v2139, 2147483648
  %v2141 = vmul.f32 %v2140, 1.442695
  %v2142 = vpow.pop %v2141
  %v2143 = vadd.f32 %v2142, 1.0
  %v2144 = vrcp.pop %v2143
  %v2145 = vmul.f32 1.0, %v2144
  %v2146 = vtanh.pop %v2139
  %v2147 = vmul.f32 %v1959, %v2145
  %2149 = vrot.lane.b32.xlu0 %v2146, 64
  %v2150 = vpop.permute.xlu0 %2149
  %v2152 = vmul.f32 %v2145, %v2150
  %2154 = vrot.lane.b32.xlu0 %v2152, 32
  %v2155 = vpop.permute.xlu0 %2154
  %v2157 = vadd.f32 %v2147, %v2155
  %v2158 = vtanh.pop %v2157
  %2160 = vrot.lane.b32.xlu0 %v2158, 64
  %v2161 = vpop.permute.xlu0 %2160
  %v2163 = vmul.f32 %v2145, %v2161
  %2165 = vrot.lane.b32.xlu0 %v2163, 32
  %v2166 = vpop.permute.xlu0 %2165
  %2168 = vst.msk [vmem:[%s8 + $0xc] sm:$0x3] %vm988, %v2166
  %2169 = vmatprep.subr.bf16.mxu0 0
  %2170 = vmatpush1.bf16.msra.mxu0 %v770
  %2171 = vmatprep.subr.bf16.mxu0 0
  %2172 = vmatpush1.bf16.msra.mxu0 %v771
  %2173 = vmatprep.subr.bf16.mxu0 0
  %2174 = vmatpush1.bf16.msra.mxu0 0
  %2175 = vmatprep.subr.bf16.mxu0 0
  %2176 = vmatpush1.bf16.msra.mxu0 0
  %2177 = vmatprep.subr.bf16.mxu0 0
  %2178 = vmatpush1.bf16.msra.mxu0 0
  %2179 = vmatprep.subr.bf16.mxu0 0
  %2180 = vmatpush1.bf16.msra.mxu0 0
  %2181 = vmatprep.subr.bf16.mxu0 0
  %2182 = vmatpush1.bf16.msra.mxu0 0
  %2183 = vmatprep.subr.bf16.mxu0 0
  %2184 = vmatpush1.bf16.msra.mxu0 0
  %2185 = vmatprep.subr.bf16.mxu0 0
  %2186 = vmatpush1.bf16.msra.mxu0 0
  %2187 = vmatprep.subr.bf16.mxu0 0
  %2188 = vmatpush1.bf16.msra.mxu0 0
  %2189 = vmatprep.subr.bf16.mxu0 0
  %2190 = vmatpush1.bf16.msra.mxu0 0
  %2191 = vmatprep.subr.bf16.mxu0 0
  %2192 = vmatpush1.bf16.msra.mxu0 0
  %2193 = vmatprep.subr.bf16.mxu0 0
  %2194 = vmatpush1.bf16.msra.mxu0 0
  %2195 = vmatprep.subr.bf16.mxu0 0
  %2196 = vmatpush1.bf16.msra.mxu0 0
  %2197 = vmatprep.subr.bf16.mxu0 0
  %2198 = vmatpush1.bf16.msra.mxu0 0
  %2199 = vmatprep.subr.bf16.mxu0 0
  %2200 = vmatpush1.bf16.msra.mxu0 0
  %2201 = vmatprep.mubr.bf16.mxu0 0
  %2202 = vmatmul.mubr.bf16.gmra.mrb[0].mxu0 %v2097
  %v2203 = vpop.f32.mrb[0].mxu0
  %v2204 = vadd.f32 0.0, %v2203
  %v2205 = vpop.f32.mrb[0].mxu0
  %v2206 = vpop.f32.mrb[0].mxu0
  %v2207 = vpop.f32.mrb[0].mxu0
  %2208 = vdwg.mxu0
  %v2210 = vrot.slane %v2204, 2
  %v2212 = vadd.f32 %v719, %v2210
  %v2213 = vxor.u32 %v2212, 2147483648
  %v2214 = vmul.f32 %v2213, 1.442695
  %v2215 = vpow.pop %v2214
  %v2216 = vadd.f32 %v2215, 1.0
  %v2217 = vrcp.pop %v2216
  %v2218 = vmul.f32 1.0, %v2217
  %v2219 = vtanh.pop %v2212
  %v2221 = vrot.slane %v2218, 6
  %v2223 = vmul.f32 %v2036, %v2221
  %2225 = vrot.lane.b32.xlu0 %v2219, 64
  %v2226 = vpop.permute.xlu0 %2225
  %v2228 = vmul.f32 %v2218, %v2226
  %v2230 = vrot.slane %v2228, 6
  %2231 = vrot.lane.b32.xlu0 %v2230, 32
  %v2232 = vpop.permute.xlu0 %2231
  %v2234 = vadd.f32 %v2223, %v2232
  %v2235 = vtanh.pop %v2234
  %v2237 = vrot.slane %v2235, 2
  %2238 = vrot.lane.b32.xlu0 %v2237, 64
  %v2239 = vpop.permute.xlu0 %2238
  %v2241 = vmul.f32 %v2218, %v2239
  %v2242 = vpack.c.bf16 %v2241, %v2241
  %v2243 = vpack.c.bf16 %v2163, %v2163
  %2245 = vrot.lane.b32.xlu0 %v2243, 32
  %v2246 = vpop.permute.xlu0 %2245
  %v2248 = vsel %vm540, %v2246, 0
  %2250 = vmatprep.subr.bf16.mxu0 0
  %2251 = vmatpush1.bf16.msra.mxu0 %v851
  %2252 = vmatprep.subr.bf16.mxu0 0
  %2253 = vmatpush1.bf16.msra.mxu0 %v852
  %2254 = vmatprep.subr.bf16.mxu0 0
  %2255 = vmatpush1.bf16.msra.mxu0 0
  %2256 = vmatprep.subr.bf16.mxu0 0
  %2257 = vmatpush1.bf16.msra.mxu0 0
  %2258 = vmatprep.subr.bf16.mxu0 0
  %2259 = vmatpush1.bf16.msra.mxu0 0
  %2260 = vmatprep.subr.bf16.mxu0 0
  %2261 = vmatpush1.bf16.msra.mxu0 0
  %2262 = vmatprep.subr.bf16.mxu0 0
  %2263 = vmatpush1.bf16.msra.mxu0 0
  %2264 = vmatprep.subr.bf16.mxu0 0
  %2265 = vmatpush1.bf16.msra.mxu0 0
  %2266 = vmatprep.subr.bf16.mxu0 0
  %2267 = vmatpush1.bf16.msra.mxu0 0
  %2268 = vmatprep.subr.bf16.mxu0 0
  %2269 = vmatpush1.bf16.msra.mxu0 0
  %2270 = vmatprep.subr.bf16.mxu0 0
  %2271 = vmatpush1.bf16.msra.mxu0 0
  %2272 = vmatprep.subr.bf16.mxu0 0
  %2273 = vmatpush1.bf16.msra.mxu0 0
  %2274 = vmatprep.subr.bf16.mxu0 0
  %2275 = vmatpush1.bf16.msra.mxu0 0
  %2276 = vmatprep.subr.bf16.mxu0 0
  %2277 = vmatpush1.bf16.msra.mxu0 0
  %2278 = vmatprep.subr.bf16.mxu0 0
  %2279 = vmatpush1.bf16.msra.mxu0 0
  %2280 = vmatprep.subr.bf16.mxu0 0
  %2281 = vmatpush1.bf16.msra.mxu0 0
  %2282 = vmatprep.mubr.bf16.mxu0 0
  %2283 = vmatmul.mubr.bf16.gmra.mrb[0].mxu0 %v2248
  %v2284 = vpop.f32.mrb[0].mxu0
  %v2285 = vadd.f32 0.0, %v2284
  %v2286 = vpop.f32.mrb[0].mxu0
  %v2287 = vpop.f32.mrb[0].mxu0
  %v2288 = vpop.f32.mrb[0].mxu0
  %2289 = vdwg.mxu0
  %v2291 = vrot.slane %v2242, 3
  %2292 = vrot.lane.b32.xlu0 %v2291, 32
  %v2293 = vpop.permute.xlu0 %2292
  %v2295 = vsel %vm540, %v2293, 0
  %2297 = vmatprep.subr.bf16.mxu0 0
  %2298 = vmatpush1.bf16.msra.mxu0 %v906
  %2299 = vmatprep.subr.bf16.mxu0 0
  %2300 = vmatpush1.bf16.msra.mxu0 %v907
  %2301 = vmatprep.subr.bf16.mxu0 0
  %2302 = vmatpush1.bf16.msra.mxu0 0
  %2303 = vmatprep.subr.bf16.mxu0 0
  %2304 = vmatpush1.bf16.msra.mxu0 0
  %2305 = vmatprep.subr.bf16.mxu0 0
  %2306 = vmatpush1.bf16.msra.mxu0 0
  %2307 = vmatprep.subr.bf16.mxu0 0
  %2308 = vmatpush1.bf16.msra.mxu0 0
  %2309 = vmatprep.subr.bf16.mxu0 0
  %2310 = vmatpush1.bf16.msra.mxu0 0
  %2311 = vmatprep.subr.bf16.mxu0 0
  %2312 = vmatpush1.bf16.msra.mxu0 0
  %2313 = vmatprep.subr.bf16.mxu0 0
  %2314 = vmatpush1.bf16.msra.mxu0 0
  %2315 = vmatprep.subr.bf16.mxu0 0
  %2316 = vmatpush1.bf16.msra.mxu0 0
  %2317 = vmatprep.subr.bf16.mxu0 0
  %2318 = vmatpush1.bf16.msra.mxu0 0
  %2319 = vmatprep.subr.bf16.mxu0 0
  %2320 = vmatpush1.bf16.msra.mxu0 0
  %2321 = vmatprep.subr.bf16.mxu0 0
  %2322 = vmatpush1.bf16.msra.mxu0 0
  %2323 = vmatprep.subr.bf16.mxu0 0
  %2324 = vmatpush1.bf16.msra.mxu0 0
  %2325 = vmatprep.subr.bf16.mxu0 0
  %2326 = vmatpush1.bf16.msra.mxu0 0
  %2327 = vmatprep.subr.bf16.mxu0 0
  %2328 = vmatpush1.bf16.msra.mxu0 0
  %2329 = vmatprep.mubr.bf16.mxu0 0
  %2330 = vmatmul.mubr.bf16.gmra.mrb[0].mxu0 %v2295
  %v2331 = vpop.f32.mrb[0].mxu0
  %v2332 = vadd.f32 %v2285, %v2331
  %v2333 = vpop.f32.mrb[0].mxu0
  %v2334 = vpop.f32.mrb[0].mxu0
  %v2335 = vpop.f32.mrb[0].mxu0
  %2336 = vdwg.mxu0
  %v2337 = vadd.f32 %v2332, %v957
  %v2338 = vxor.u32 %v2337, 2147483648
  %v2339 = vmul.f32 %v2338, 1.442695
  %v2340 = vpow.pop %v2339
  %v2341 = vadd.f32 %v2340, 1.0
  %v2342 = vrcp.pop %v2341
  %v2343 = vmul.f32 1.0, %v2342
  %v2344 = vtanh.pop %v2337
  %v2345 = vmul.f32 %v2157, %v2343
  %2347 = vrot.lane.b32.xlu0 %v2344, 64
  %v2348 = vpop.permute.xlu0 %2347
  %v2350 = vmul.f32 %v2343, %v2348
  %2352 = vrot.lane.b32.xlu0 %v2350, 32
  %v2353 = vpop.permute.xlu0 %2352
  %v2355 = vadd.f32 %v2345, %v2353
  %v2356 = vtanh.pop %v2355
  %2358 = vrot.lane.b32.xlu0 %v2356, 64
  %v2359 = vpop.permute.xlu0 %2358
  %v2361 = vmul.f32 %v2343, %v2359
  %2363 = vrot.lane.b32.xlu0 %v2361, 32
  %v2364 = vpop.permute.xlu0 %2363
  %2366 = vst.msk [vmem:[%s8 + $0xe] sm:$0x3] %vm988, %v2364
  %2367 = vmatprep.subr.bf16.mxu0 0
  %2368 = vmatpush1.bf16.msra.mxu0 %v770
  %2369 = vmatprep.subr.bf16.mxu0 0
  %2370 = vmatpush1.bf16.msra.mxu0 %v771
  %2371 = vmatprep.subr.bf16.mxu0 0
  %2372 = vmatpush1.bf16.msra.mxu0 0
  %2373 = vmatprep.subr.bf16.mxu0 0
  %2374 = vmatpush1.bf16.msra.mxu0 0
  %2375 = vmatprep.subr.bf16.mxu0 0
  %2376 = vmatpush1.bf16.msra.mxu0 0
  %2377 = vmatprep.subr.bf16.mxu0 0
  %2378 = vmatpush1.bf16.msra.mxu0 0
  %2379 = vmatprep.subr.bf16.mxu0 0
  %2380 = vmatpush1.bf16.msra.mxu0 0
  %2381 = vmatprep.subr.bf16.mxu0 0
  %2382 = vmatpush1.bf16.msra.mxu0 0
  %2383 = vmatprep.subr.bf16.mxu0 0
  %2384 = vmatpush1.bf16.msra.mxu0 0
  %2385 = vmatprep.subr.bf16.mxu0 0
  %2386 = vmatpush1.bf16.msra.mxu0 0
  %2387 = vmatprep.subr.bf16.mxu0 0
  %2388 = vmatpush1.bf16.msra.mxu0 0
  %2389 = vmatprep.subr.bf16.mxu0 0
  %2390 = vmatpush1.bf16.msra.mxu0 0
  %2391 = vmatprep.subr.bf16.mxu0 0
  %2392 = vmatpush1.bf16.msra.mxu0 0
  %2393 = vmatprep.subr.bf16.mxu0 0
  %2394 = vmatpush1.bf16.msra.mxu0 0
  %2395 = vmatprep.subr.bf16.mxu0 0
  %2396 = vmatpush1.bf16.msra.mxu0 0
  %2397 = vmatprep.subr.bf16.mxu0 0
  %2398 = vmatpush1.bf16.msra.mxu0 0
  %2399 = vmatprep.mubr.bf16.mxu0 0
  %2400 = vmatmul.mubr.bf16.gmra.mrb[0].mxu0 %v2295
  %v2401 = vpop.f32.mrb[0].mxu0
  %v2402 = vadd.f32 0.0, %v2401
  %v2403 = vpop.f32.mrb[0].mxu0
  %v2404 = vpop.f32.mrb[0].mxu0
  %v2405 = vpop.f32.mrb[0].mxu0
  %2406 = vdwg.mxu0
  %v2407 = vadd.f32 %v724, %v2402
  %v2408 = vxor.u32 %v2407, 2147483648
  %v2409 = vmul.f32 %v2408, 1.442695
  %v2410 = vpow.pop %v2409
  %v2411 = vadd.f32 %v2410, 1.0
  %v2412 = vrcp.pop %v2411
  %v2413 = vmul.f32 1.0, %v2412
  %v2414 = vtanh.pop %v2407
  %v2415 = vmul.f32 %v2234, %v2413
  %2417 = vrot.lane.b32.xlu0 %v2414, 64
  %v2418 = vpop.permute.xlu0 %2417
  %v2420 = vmul.f32 %v2413, %v2418
  %2422 = vrot.lane.b32.xlu0 %v2420, 32
  %v2423 = vpop.permute.xlu0 %2422
  %v2425 = vadd.f32 %v2415, %v2423
  %v2426 = vtanh.pop %v2425
  %2428 = vrot.lane.b32.xlu0 %v2426, 64
  %v2429 = vpop.permute.xlu0 %2428
  %v2431 = vmul.f32 %v2413, %v2429
  %v2432 = vpack.c.bf16 %v2431, %v2431
  %v2433 = vpack.c.bf16 %v2361, %v2361
  %2435 = vrot.lane.b32.xlu0 %v2433, 32
  %v2436 = vpop.permute.xlu0 %2435
  %v2438 = vsel %vm540, %v2436, 0
  %2440 = vmatprep.subr.bf16.mxu0 0
  %2441 = vmatpush1.bf16.msra.mxu0 %v851
  %2442 = vmatprep.subr.bf16.mxu0 0
  %2443 = vmatpush1.bf16.msra.mxu0 %v852
  %2444 = vmatprep.subr.bf16.mxu0 0
  %2445 = vmatpush1.bf16.msra.mxu0 0
  %2446 = vmatprep.subr.bf16.mxu0 0
  %2447 = vmatpush1.bf16.msra.mxu0 0
  %2448 = vmatprep.subr.bf16.mxu0 0
  %2449 = vmatpush1.bf16.msra.mxu0 0
  %2450 = vmatprep.subr.bf16.mxu0 0
  %2451 = vmatpush1.bf16.msra.mxu0 0
  %2452 = vmatprep.subr.bf16.mxu0 0
  %2453 = vmatpush1.bf16.msra.mxu0 0
  %2454 = vmatprep.subr.bf16.mxu0 0
  %2455 = vmatpush1.bf16.msra.mxu0 0
  %2456 = vmatprep.subr.bf16.mxu0 0
  %2457 = vmatpush1.bf16.msra.mxu0 0
  %2458 = vmatprep.subr.bf16.mxu0 0
  %2459 = vmatpush1.bf16.msra.mxu0 0
  %2460 = vmatprep.subr.bf16.mxu0 0
  %2461 = vmatpush1.bf16.msra.mxu0 0
  %2462 = vmatprep.subr.bf16.mxu0 0
  %2463 = vmatpush1.bf16.msra.mxu0 0
  %2464 = vmatprep.subr.bf16.mxu0 0
  %2465 = vmatpush1.bf16.msra.mxu0 0
  %2466 = vmatprep.subr.bf16.mxu0 0
  %2467 = vmatpush1.bf16.msra.mxu0 0
  %2468 = vmatprep.subr.bf16.mxu0 0
  %2469 = vmatpush1.bf16.msra.mxu0 0
  %2470 = vmatprep.subr.bf16.mxu0 0
  %2471 = vmatpush1.bf16.msra.mxu0 0
  %2472 = vmatprep.mubr.bf16.mxu0 0
  %2473 = vmatmul.mubr.bf16.gmra.mrb[0].mxu0 %v2438
  %v2474 = vpop.f32.mrb[0].mxu0
  %v2475 = vadd.f32 0.0, %v2474
  %v2476 = vpop.f32.mrb[0].mxu0
  %v2477 = vpop.f32.mrb[0].mxu0
  %v2478 = vpop.f32.mrb[0].mxu0
  %2479 = vdwg.mxu0
  %2481 = vrot.lane.b32.xlu0 %v2432, 32
  %v2482 = vpop.permute.xlu0 %2481
  %v2484 = vsel %vm540, %v2482, 0
  %2486 = vmatprep.subr.bf16.mxu0 0
  %2487 = vmatpush1.bf16.msra.mxu0 %v906
  %2488 = vmatprep.subr.bf16.mxu0 0
  %2489 = vmatpush1.bf16.msra.mxu0 %v907
  %2490 = vmatprep.subr.bf16.mxu0 0
  %2491 = vmatpush1.bf16.msra.mxu0 0
  %2492 = vmatprep.subr.bf16.mxu0 0
  %2493 = vmatpush1.bf16.msra.mxu0 0
  %2494 = vmatprep.subr.bf16.mxu0 0
  %2495 = vmatpush1.bf16.msra.mxu0 0
  %2496 = vmatprep.subr.bf16.mxu0 0
  %2497 = vmatpush1.bf16.msra.mxu0 0
  %2498 = vmatprep.subr.bf16.mxu0 0
  %2499 = vmatpush1.bf16.msra.mxu0 0
  %2500 = vmatprep.subr.bf16.mxu0 0
  %2501 = vmatpush1.bf16.msra.mxu0 0
  %2502 = vmatprep.subr.bf16.mxu0 0
  %2503 = vmatpush1.bf16.msra.mxu0 0
  %2504 = vmatprep.subr.bf16.mxu0 0
  %2505 = vmatpush1.bf16.msra.mxu0 0
  %2506 = vmatprep.subr.bf16.mxu0 0
  %2507 = vmatpush1.bf16.msra.mxu0 0
  %2508 = vmatprep.subr.bf16.mxu0 0
  %2509 = vmatpush1.bf16.msra.mxu0 0
  %2510 = vmatprep.subr.bf16.mxu0 0
  %2511 = vmatpush1.bf16.msra.mxu0 0
  %2512 = vmatprep.subr.bf16.mxu0 0
  %2513 = vmatpush1.bf16.msra.mxu0 0
  %2514 = vmatprep.subr.bf16.mxu0 0
  %2515 = vmatpush1.bf16.msra.mxu0 0
  %2516 = vmatprep.subr.bf16.mxu0 0
  %2517 = vmatpush1.bf16.msra.mxu0 0
  %2518 = vmatprep.mubr.bf16.mxu0 0
  %2519 = vmatmul.mubr.bf16.gmra.mrb[0].mxu0 %v2484
  %v2520 = vpop.f32.mrb[0].mxu0
  %v2521 = vadd.f32 %v2475, %v2520
  %v2522 = vpop.f32.mrb[0].mxu0
  %v2523 = vpop.f32.mrb[0].mxu0
  %v2524 = vpop.f32.mrb[0].mxu0
  %2525 = vdwg.mxu0
  %v2526 = vadd.f32 %v2521, %v957
  %v2527 = vxor.u32 %v2526, 2147483648
  %v2528 = vmul.f32 %v2527, 1.442695
  %v2529 = vpow.pop %v2528
  %v2530 = vadd.f32 %v2529, 1.0
  %v2531 = vrcp.pop %v2530
  %v2532 = vmul.f32 1.0, %v2531
  %v2533 = vtanh.pop %v2526
  %v2534 = vmul.f32 %v2355, %v2532
  %2536 = vrot.lane.b32.xlu0 %v2533, 64
  %v2537 = vpop.permute.xlu0 %2536
  %v2539 = vmul.f32 %v2532, %v2537
  %2541 = vrot.lane.b32.xlu0 %v2539, 32
  %v2542 = vpop.permute.xlu0 %2541
  %v2544 = vadd.f32 %v2534, %v2542
  %v2545 = vtanh.pop %v2544
  %2547 = vrot.lane.b32.xlu0 %v2545, 64
  %v2548 = vpop.permute.xlu0 %2547
  %v2550 = vmul.f32 %v2532, %v2548
  %2552 = vrot.lane.b32.xlu0 %v2550, 32
  %v2553 = vpop.permute.xlu0 %2552
  %2555 = vst.msk [vmem:[%s8 + $0x10] sm:$0x3] %vm988, %v2553
  %2556 = vmatprep.subr.bf16.mxu0 0
  %2557 = vmatpush1.bf16.msra.mxu0 %v770
  %2558 = vmatprep.subr.bf16.mxu0 0
  %2559 = vmatpush1.bf16.msra.mxu0 %v771
  %2560 = vmatprep.subr.bf16.mxu0 0
  %2561 = vmatpush1.bf16.msra.mxu0 0
  %2562 = vmatprep.subr.bf16.mxu0 0
  %2563 = vmatpush1.bf16.msra.mxu0 0
  %2564 = vmatprep.subr.bf16.mxu0 0
  %2565 = vmatpush1.bf16.msra.mxu0 0
  %2566 = vmatprep.subr.bf16.mxu0 0
  %2567 = vmatpush1.bf16.msra.mxu0 0
  %2568 = vmatprep.subr.bf16.mxu0 0
  %2569 = vmatpush1.bf16.msra.mxu0 0
  %2570 = vmatprep.subr.bf16.mxu0 0
  %2571 = vmatpush1.bf16.msra.mxu0 0
  %2572 = vmatprep.subr.bf16.mxu0 0
  %2573 = vmatpush1.bf16.msra.mxu0 0
  %2574 = vmatprep.subr.bf16.mxu0 0
  %2575 = vmatpush1.bf16.msra.mxu0 0
  %2576 = vmatprep.subr.bf16.mxu0 0
  %2577 = vmatpush1.bf16.msra.mxu0 0
  %2578 = vmatprep.subr.bf16.mxu0 0
  %2579 = vmatpush1.bf16.msra.mxu0 0
  %2580 = vmatprep.subr.bf16.mxu0 0
  %2581 = vmatpush1.bf16.msra.mxu0 0
  %2582 = vmatprep.subr.bf16.mxu0 0
  %2583 = vmatpush1.bf16.msra.mxu0 0
  %2584 = vmatprep.subr.bf16.mxu0 0
  %2585 = vmatpush1.bf16.msra.mxu0 0
  %2586 = vmatprep.subr.bf16.mxu0 0
  %2587 = vmatpush1.bf16.msra.mxu0 0
  %2588 = vmatprep.mubr.bf16.mxu0 0
  %2589 = vmatmul.mubr.bf16.gmra.mrb[0].mxu0 %v2484
  %v2590 = vpop.f32.mrb[0].mxu0
  %v2591 = vadd.f32 0.0, %v2590
  %v2592 = vpop.f32.mrb[0].mxu0
  %v2593 = vpop.f32.mrb[0].mxu0
  %v2594 = vpop.f32.mrb[0].mxu0
  %2595 = vdwg.mxu0
  %v2597 = vrot.slane %v2591, 6
  %v2599 = vadd.f32 %v724, %v2597
  %v2600 = vxor.u32 %v2599, 2147483648
  %v2601 = vmul.f32 %v2600, 1.442695
  %v2602 = vpow.pop %v2601
  %v2603 = vadd.f32 %v2602, 1.0
  %v2604 = vrcp.pop %v2603
  %v2605 = vmul.f32 1.0, %v2604
  %v2606 = vtanh.pop %v2599
  %v2608 = vrot.slane %v2605, 2
  %v2610 = vmul.f32 %v2425, %v2608
  %2612 = vrot.lane.b32.xlu0 %v2606, 64
  %v2613 = vpop.permute.xlu0 %2612
  %v2615 = vmul.f32 %v2605, %v2613
  %v2617 = vrot.slane %v2615, 2
  %2618 = vrot.lane.b32.xlu0 %v2617, 32
  %v2619 = vpop.permute.xlu0 %2618
  %v2621 = vadd.f32 %v2610, %v2619
  %v2622 = vtanh.pop %v2621
  %v2624 = vrot.slane %v2622, 6
  %2625 = vrot.lane.b32.xlu0 %v2624, 64
  %v2626 = vpop.permute.xlu0 %2625
  %v2628 = vmul.f32 %v2605, %v2626
  %v2629 = vpack.c.bf16 %v2628, %v2628
  %v2630 = vpack.c.bf16 %v2550, %v2550
  %2632 = vrot.lane.b32.xlu0 %v2630, 32
  %v2633 = vpop.permute.xlu0 %2632
  %v2635 = vsel %vm540, %v2633, 0
  %2637 = vmatprep.subr.bf16.mxu0 0
  %2638 = vmatpush1.bf16.msra.mxu0 %v851
  %2639 = vmatprep.subr.bf16.mxu0 0
  %2640 = vmatpush1.bf16.msra.mxu0 %v852
  %2641 = vmatprep.subr.bf16.mxu0 0
  %2642 = vmatpush1.bf16.msra.mxu0 0
  %2643 = vmatprep.subr.bf16.mxu0 0
  %2644 = vmatpush1.bf16.msra.mxu0 0
  %2645 = vmatprep.subr.bf16.mxu0 0
  %2646 = vmatpush1.bf16.msra.mxu0 0
  %2647 = vmatprep.subr.bf16.mxu0 0
  %2648 = vmatpush1.bf16.msra.mxu0 0
  %2649 = vmatprep.subr.bf16.mxu0 0
  %2650 = vmatpush1.bf16.msra.mxu0 0
  %2651 = vmatprep.subr.bf16.mxu0 0
  %2652 = vmatpush1.bf16.msra.mxu0 0
  %2653 = vmatprep.subr.bf16.mxu0 0
  %2654 = vmatpush1.bf16.msra.mxu0 0
  %2655 = vmatprep.subr.bf16.mxu0 0
  %2656 = vmatpush1.bf16.msra.mxu0 0
  %2657 = vmatprep.subr.bf16.mxu0 0
  %2658 = vmatpush1.bf16.msra.mxu0 0
  %2659 = vmatprep.subr.bf16.mxu0 0
  %2660 = vmatpush1.bf16.msra.mxu0 0
  %2661 = vmatprep.subr.bf16.mxu0 0
  %2662 = vmatpush1.bf16.msra.mxu0 0
  %2663 = vmatprep.subr.bf16.mxu0 0
  %2664 = vmatpush1.bf16.msra.mxu0 0
  %2665 = vmatprep.subr.bf16.mxu0 0
  %2666 = vmatpush1.bf16.msra.mxu0 0
  %2667 = vmatprep.subr.bf16.mxu0 0
  %2668 = vmatpush1.bf16.msra.mxu0 0
  %2669 = vmatprep.mubr.bf16.mxu0 0
  %2670 = vmatmul.mubr.bf16.gmra.mrb[0].mxu0 %v2635
  %v2671 = vpop.f32.mrb[0].mxu0
  %v2672 = vadd.f32 0.0, %v2671
  %v2673 = vpop.f32.mrb[0].mxu0
  %v2674 = vpop.f32.mrb[0].mxu0
  %v2675 = vpop.f32.mrb[0].mxu0
  %2676 = vdwg.mxu0
  %v2678 = vrot.slane %v2629, 1
  %2679 = vrot.lane.b32.xlu0 %v2678, 32
  %v2680 = vpop.permute.xlu0 %2679
  %v2682 = vsel %vm540, %v2680, 0
  %2684 = vmatprep.subr.bf16.mxu0 0
  %2685 = vmatpush1.bf16.msra.mxu0 %v906
  %2686 = vmatprep.subr.bf16.mxu0 0
  %2687 = vmatpush1.bf16.msra.mxu0 %v907
  %2688 = vmatprep.subr.bf16.mxu0 0
  %2689 = vmatpush1.bf16.msra.mxu0 0
  %2690 = vmatprep.subr.bf16.mxu0 0
  %2691 = vmatpush1.bf16.msra.mxu0 0
  %2692 = vmatprep.subr.bf16.mxu0 0
  %2693 = vmatpush1.bf16.msra.mxu0 0
  %2694 = vmatprep.subr.bf16.mxu0 0
  %2695 = vmatpush1.bf16.msra.mxu0 0
  %2696 = vmatprep.subr.bf16.mxu0 0
  %2697 = vmatpush1.bf16.msra.mxu0 0
  %2698 = vmatprep.subr.bf16.mxu0 0
  %2699 = vmatpush1.bf16.msra.mxu0 0
  %2700 = vmatprep.subr.bf16.mxu0 0
  %2701 = vmatpush1.bf16.msra.mxu0 0
  %2702 = vmatprep.subr.bf16.mxu0 0
  %2703 = vmatpush1.bf16.msra.mxu0 0
  %2704 = vmatprep.subr.bf16.mxu0 0
  %2705 = vmatpush1.bf16.msra.mxu0 0
  %2706 = vmatprep.subr.bf16.mxu0 0
  %2707 = vmatpush1.bf16.msra.mxu0 0
  %2708 = vmatprep.subr.bf16.mxu0 0
  %2709 = vmatpush1.bf16.msra.mxu0 0
  %2710 = vmatprep.subr.bf16.mxu0 0
  %2711 = vmatpush1.bf16.msra.mxu0 0
  %2712 = vmatprep.subr.bf16.mxu0 0
  %2713 = vmatpush1.bf16.msra.mxu0 0
  %2714 = vmatprep.subr.bf16.mxu0 0
  %2715 = vmatpush1.bf16.msra.mxu0 0
  %2716 = vmatprep.mubr.bf16.mxu0 0
  %2717 = vmatmul.mubr.bf16.gmra.mrb[0].mxu0 %v2682
  %v2718 = vpop.f32.mrb[0].mxu0
  %v2719 = vadd.f32 %v2672, %v2718
  %v2720 = vpop.f32.mrb[0].mxu0
  %v2721 = vpop.f32.mrb[0].mxu0
  %v2722 = vpop.f32.mrb[0].mxu0
  %2723 = vdwg.mxu0
  %v2724 = vadd.f32 %v2719, %v957
  %v2725 = vxor.u32 %v2724, 2147483648
  %v2726 = vmul.f32 %v2725, 1.442695
  %v2727 = vpow.pop %v2726
  %v2728 = vadd.f32 %v2727, 1.0
  %v2729 = vrcp.pop %v2728
  %v2730 = vmul.f32 1.0, %v2729
  %v2731 = vtanh.pop %v2724
  %v2732 = vmul.f32 %v2544, %v2730
  %2734 = vrot.lane.b32.xlu0 %v2731, 64
  %v2735 = vpop.permute.xlu0 %2734
  %v2737 = vmul.f32 %v2730, %v2735
  %2739 = vrot.lane.b32.xlu0 %v2737, 32
  %v2740 = vpop.permute.xlu0 %2739
  %v2742 = vadd.f32 %v2732, %v2740
  %v2743 = vtanh.pop %v2742
  %2745 = vrot.lane.b32.xlu0 %v2743, 64
  %v2746 = vpop.permute.xlu0 %2745
  %v2748 = vmul.f32 %v2730, %v2746
  %2750 = vrot.lane.b32.xlu0 %v2748, 32
  %v2751 = vpop.permute.xlu0 %2750
  %2753 = vst.msk [vmem:[%s8 + $0x12] sm:$0x3] %vm988, %v2751
  %2754 = vmatprep.subr.bf16.mxu0 0
  %2755 = vmatpush1.bf16.msra.mxu0 %v770
  %2756 = vmatprep.subr.bf16.mxu0 0
  %2757 = vmatpush1.bf16.msra.mxu0 %v771
  %2758 = vmatprep.subr.bf16.mxu0 0
  %2759 = vmatpush1.bf16.msra.mxu0 0
  %2760 = vmatprep.subr.bf16.mxu0 0
  %2761 = vmatpush1.bf16.msra.mxu0 0
  %2762 = vmatprep.subr.bf16.mxu0 0
  %2763 = vmatpush1.bf16.msra.mxu0 0
  %2764 = vmatprep.subr.bf16.mxu0 0
  %2765 = vmatpush1.bf16.msra.mxu0 0
  %2766 = vmatprep.subr.bf16.mxu0 0
  %2767 = vmatpush1.bf16.msra.mxu0 0
  %2768 = vmatprep.subr.bf16.mxu0 0
  %2769 = vmatpush1.bf16.msra.mxu0 0
  %2770 = vmatprep.subr.bf16.mxu0 0
  %2771 = vmatpush1.bf16.msra.mxu0 0
  %2772 = vmatprep.subr.bf16.mxu0 0
  %2773 = vmatpush1.bf16.msra.mxu0 0
  %2774 = vmatprep.subr.bf16.mxu0 0
  %2775 = vmatpush1.bf16.msra.mxu0 0
  %2776 = vmatprep.subr.bf16.mxu0 0
  %2777 = vmatpush1.bf16.msra.mxu0 0
  %2778 = vmatprep.subr.bf16.mxu0 0
  %2779 = vmatpush1.bf16.msra.mxu0 0
  %2780 = vmatprep.subr.bf16.mxu0 0
  %2781 = vmatpush1.bf16.msra.mxu0 0
  %2782 = vmatprep.subr.bf16.mxu0 0
  %2783 = vmatpush1.bf16.msra.mxu0 0
  %2784 = vmatprep.subr.bf16.mxu0 0
  %2785 = vmatpush1.bf16.msra.mxu0 0
  %2786 = vmatprep.mubr.bf16.mxu0 0
  %2787 = vmatmul.mubr.bf16.gmra.mrb[0].mxu0 %v2682
  %v2788 = vpop.f32.mrb[0].mxu0
  %v2789 = vadd.f32 0.0, %v2788
  %v2790 = vpop.f32.mrb[0].mxu0
  %v2791 = vpop.f32.mrb[0].mxu0
  %v2792 = vpop.f32.mrb[0].mxu0
  %2793 = vdwg.mxu0
  %v2795 = vrot.slane %v2789, 4
  %v2797 = vadd.f32 %v724, %v2795
  %v2798 = vxor.u32 %v2797, 2147483648
  %v2799 = vmul.f32 %v2798, 1.442695
  %v2800 = vpow.pop %v2799
  %v2801 = vadd.f32 %v2800, 1.0
  %v2802 = vrcp.pop %v2801
  %v2803 = vmul.f32 1.0, %v2802
  %v2804 = vtanh.pop %v2797
  %v2806 = vrot.slane %v2803, 4
  %v2808 = vmul.f32 %v2621, %v2806
  %2810 = vrot.lane.b32.xlu0 %v2804, 64
  %v2811 = vpop.permute.xlu0 %2810
  %v2813 = vmul.f32 %v2803, %v2811
  %v2815 = vrot.slane %v2813, 4
  %2816 = vrot.lane.b32.xlu0 %v2815, 32
  %v2817 = vpop.permute.xlu0 %2816
  %v2819 = vadd.f32 %v2808, %v2817
  %v2820 = vtanh.pop %v2819
  %v2822 = vrot.slane %v2820, 4
  %2823 = vrot.lane.b32.xlu0 %v2822, 64
  %v2824 = vpop.permute.xlu0 %2823
  %v2826 = vmul.f32 %v2803, %v2824
  %v2827 = vpack.c.bf16 %v2826, %v2826
  %v2828 = vpack.c.bf16 %v2748, %v2748
  %2830 = vrot.lane.b32.xlu0 %v2828, 32
  %v2831 = vpop.permute.xlu0 %2830
  %v2833 = vsel %vm540, %v2831, 0
  %2835 = vmatprep.subr.bf16.mxu0 0
  %2836 = vmatpush1.bf16.msra.mxu0 %v851
  %2837 = vmatprep.subr.bf16.mxu0 0
  %2838 = vmatpush1.bf16.msra.mxu0 %v852
  %2839 = vmatprep.subr.bf16.mxu0 0
  %2840 = vmatpush1.bf16.msra.mxu0 0
  %2841 = vmatprep.subr.bf16.mxu0 0
  %2842 = vmatpush1.bf16.msra.mxu0 0
  %2843 = vmatprep.subr.bf16.mxu0 0
  %2844 = vmatpush1.bf16.msra.mxu0 0
  %2845 = vmatprep.subr.bf16.mxu0 0
  %2846 = vmatpush1.bf16.msra.mxu0 0
  %2847 = vmatprep.subr.bf16.mxu0 0
  %2848 = vmatpush1.bf16.msra.mxu0 0
  %2849 = vmatprep.subr.bf16.mxu0 0
  %2850 = vmatpush1.bf16.msra.mxu0 0
  %2851 = vmatprep.subr.bf16.mxu0 0
  %2852 = vmatpush1.bf16.msra.mxu0 0
  %2853 = vmatprep.subr.bf16.mxu0 0
  %2854 = vmatpush1.bf16.msra.mxu0 0
  %2855 = vmatprep.subr.bf16.mxu0 0
  %2856 = vmatpush1.bf16.msra.mxu0 0
  %2857 = vmatprep.subr.bf16.mxu0 0
  %2858 = vmatpush1.bf16.msra.mxu0 0
  %2859 = vmatprep.subr.bf16.mxu0 0
  %2860 = vmatpush1.bf16.msra.mxu0 0
  %2861 = vmatprep.subr.bf16.mxu0 0
  %2862 = vmatpush1.bf16.msra.mxu0 0
  %2863 = vmatprep.subr.bf16.mxu0 0
  %2864 = vmatpush1.bf16.msra.mxu0 0
  %2865 = vmatprep.subr.bf16.mxu0 0
  %2866 = vmatpush1.bf16.msra.mxu0 0
  %2867 = vmatprep.mubr.bf16.mxu0 0
  %2868 = vmatmul.mubr.bf16.gmra.mrb[0].mxu0 %v2833
  %v2869 = vpop.f32.mrb[0].mxu0
  %v2870 = vadd.f32 0.0, %v2869
  %v2871 = vpop.f32.mrb[0].mxu0
  %v2872 = vpop.f32.mrb[0].mxu0
  %v2873 = vpop.f32.mrb[0].mxu0
  %2874 = vdwg.mxu0
  %v2876 = vrot.slane %v2827, 2
  %2877 = vrot.lane.b32.xlu0 %v2876, 32
  %v2878 = vpop.permute.xlu0 %2877
  %v2880 = vsel %vm540, %v2878, 0
  %2882 = vmatprep.subr.bf16.mxu0 0
  %2883 = vmatpush1.bf16.msra.mxu0 %v906
  %2884 = vmatprep.subr.bf16.mxu0 0
  %2885 = vmatpush1.bf16.msra.mxu0 %v907
  %2886 = vmatprep.subr.bf16.mxu0 0
  %2887 = vmatpush1.bf16.msra.mxu0 0
  %2888 = vmatprep.subr.bf16.mxu0 0
  %2889 = vmatpush1.bf16.msra.mxu0 0
  %2890 = vmatprep.subr.bf16.mxu0 0
  %2891 = vmatpush1.bf16.msra.mxu0 0
  %2892 = vmatprep.subr.bf16.mxu0 0
  %2893 = vmatpush1.bf16.msra.mxu0 0
  %2894 = vmatprep.subr.bf16.mxu0 0
  %2895 = vmatpush1.bf16.msra.mxu0 0
  %2896 = vmatprep.subr.bf16.mxu0 0
  %2897 = vmatpush1.bf16.msra.mxu0 0
  %2898 = vmatprep.subr.bf16.mxu0 0
  %2899 = vmatpush1.bf16.msra.mxu0 0
  %2900 = vmatprep.subr.bf16.mxu0 0
  %2901 = vmatpush1.bf16.msra.mxu0 0
  %2902 = vmatprep.subr.bf16.mxu0 0
  %2903 = vmatpush1.bf16.msra.mxu0 0
  %2904 = vmatprep.subr.bf16.mxu0 0
  %2905 = vmatpush1.bf16.msra.mxu0 0
  %2906 = vmatprep.subr.bf16.mxu0 0
  %2907 = vmatpush1.bf16.msra.mxu0 0
  %2908 = vmatprep.subr.bf16.mxu0 0
  %2909 = vmatpush1.bf16.msra.mxu0 0
  %2910 = vmatprep.subr.bf16.mxu0 0
  %2911 = vmatpush1.bf16.msra.mxu0 0
  %2912 = vmatprep.subr.bf16.mxu0 0
  %2913 = vmatpush1.bf16.msra.mxu0 0
  %2914 = vmatprep.mubr.bf16.mxu0 0
  %2915 = vmatmul.mubr.bf16.gmra.mrb[0].mxu0 %v2880
  %v2916 = vpop.f32.mrb[0].mxu0
  %v2917 = vadd.f32 %v2870, %v2916
  %v2918 = vpop.f32.mrb[0].mxu0
  %v2919 = vpop.f32.mrb[0].mxu0
  %v2920 = vpop.f32.mrb[0].mxu0
  %2921 = vdwg.mxu0
  %v2922 = vadd.f32 %v2917, %v957
  %v2923 = vxor.u32 %v2922, 2147483648
  %v2924 = vmul.f32 %v2923, 1.442695
  %v2925 = vpow.pop %v2924
  %v2926 = vadd.f32 %v2925, 1.0
  %v2927 = vrcp.pop %v2926
  %v2928 = vmul.f32 1.0, %v2927
  %v2929 = vtanh.pop %v2922
  %v2930 = vmul.f32 %v2742, %v2928
  %2932 = vrot.lane.b32.xlu0 %v2929, 64
  %v2933 = vpop.permute.xlu0 %2932
  %v2935 = vmul.f32 %v2928, %v2933
  %2937 = vrot.lane.b32.xlu0 %v2935, 32
  %v2938 = vpop.permute.xlu0 %2937
  %v2940 = vadd.f32 %v2930, %v2938
  %v2941 = vtanh.pop %v2940
  %2943 = vrot.lane.b32.xlu0 %v2941, 64
  %v2944 = vpop.permute.xlu0 %2943
  %v2946 = vmul.f32 %v2928, %v2944
  %2948 = vrot.lane.b32.xlu0 %v2946, 32
  %v2949 = vpop.permute.xlu0 %2948
  %2951 = vst.msk [vmem:[%s8 + $0x14] sm:$0x3] %vm988, %v2949
  %2952 = vmatprep.subr.bf16.mxu0 0
  %2953 = vmatpush1.bf16.msra.mxu0 %v770
  %2954 = vmatprep.subr.bf16.mxu0 0
  %2955 = vmatpush1.bf16.msra.mxu0 %v771
  %2956 = vmatprep.subr.bf16.mxu0 0
  %2957 = vmatpush1.bf16.msra.mxu0 0
  %2958 = vmatprep.subr.bf16.mxu0 0
  %2959 = vmatpush1.bf16.msra.mxu0 0
  %2960 = vmatprep.subr.bf16.mxu0 0
  %2961 = vmatpush1.bf16.msra.mxu0 0
  %2962 = vmatprep.subr.bf16.mxu0 0
  %2963 = vmatpush1.bf16.msra.mxu0 0
  %2964 = vmatprep.subr.bf16.mxu0 0
  %2965 = vmatpush1.bf16.msra.mxu0 0
  %2966 = vmatprep.subr.bf16.mxu0 0
  %2967 = vmatpush1.bf16.msra.mxu0 0
  %2968 = vmatprep.subr.bf16.mxu0 0
  %2969 = vmatpush1.bf16.msra.mxu0 0
  %2970 = vmatprep.subr.bf16.mxu0 0
  %2971 = vmatpush1.bf16.msra.mxu0 0
  %2972 = vmatprep.subr.bf16.mxu0 0
  %2973 = vmatpush1.bf16.msra.mxu0 0
  %2974 = vmatprep.subr.bf16.mxu0 0
  %2975 = vmatpush1.bf16.msra.mxu0 0
  %2976 = vmatprep.subr.bf16.mxu0 0
  %2977 = vmatpush1.bf16.msra.mxu0 0
  %2978 = vmatprep.subr.bf16.mxu0 0
  %2979 = vmatpush1.bf16.msra.mxu0 0
  %2980 = vmatprep.subr.bf16.mxu0 0
  %2981 = vmatpush1.bf16.msra.mxu0 0
  %2982 = vmatprep.subr.bf16.mxu0 0
  %2983 = vmatpush1.bf16.msra.mxu0 0
  %2984 = vmatprep.mubr.bf16.mxu0 0
  %2985 = vmatmul.mubr.bf16.gmra.mrb[0].mxu0 %v2880
  %v2986 = vpop.f32.mrb[0].mxu0
  %v2987 = vadd.f32 0.0, %v2986
  %v2988 = vpop.f32.mrb[0].mxu0
  %v2989 = vpop.f32.mrb[0].mxu0
  %v2990 = vpop.f32.mrb[0].mxu0
  %2991 = vdwg.mxu0
  %v2993 = vrot.slane %v2987, 2
  %v2995 = vadd.f32 %v724, %v2993
  %v2996 = vxor.u32 %v2995, 2147483648
  %v2997 = vmul.f32 %v2996, 1.442695
  %v2998 = vpow.pop %v2997
  %v2999 = vadd.f32 %v2998, 1.0
  %v3000 = vrcp.pop %v2999
  %v3001 = vmul.f32 1.0, %v3000
  %v3002 = vtanh.pop %v2995
  %v3004 = vrot.slane %v3001, 6
  %v3006 = vmul.f32 %v2819, %v3004
  %3008 = vrot.lane.b32.xlu0 %v3002, 64
  %v3009 = vpop.permute.xlu0 %3008
  %v3011 = vmul.f32 %v3001, %v3009
  %v3013 = vrot.slane %v3011, 6
  %3014 = vrot.lane.b32.xlu0 %v3013, 32
  %v3015 = vpop.permute.xlu0 %3014
  %v3017 = vadd.f32 %v3006, %v3015
  %v3018 = vtanh.pop %v3017
  %v3020 = vrot.slane %v3018, 2
  %3021 = vrot.lane.b32.xlu0 %v3020, 64
  %v3022 = vpop.permute.xlu0 %3021
  %v3024 = vmul.f32 %v3001, %v3022
  %v3025 = vpack.c.bf16 %v3024, %v3024
  %v3026 = vpack.c.bf16 %v2946, %v2946
  %3028 = vrot.lane.b32.xlu0 %v3026, 32
  %v3029 = vpop.permute.xlu0 %3028
  %v3031 = vsel %vm540, %v3029, 0
  %3033 = vmatprep.subr.bf16.mxu0 0
  %3034 = vmatpush1.bf16.msra.mxu0 %v851
  %3035 = vmatprep.subr.bf16.mxu0 0
  %3036 = vmatpush1.bf16.msra.mxu0 %v852
  %3037 = vmatprep.subr.bf16.mxu0 0
  %3038 = vmatpush1.bf16.msra.mxu0 0
  %3039 = vmatprep.subr.bf16.mxu0 0
  %3040 = vmatpush1.bf16.msra.mxu0 0
  %3041 = vmatprep.subr.bf16.mxu0 0
  %3042 = vmatpush1.bf16.msra.mxu0 0
  %3043 = vmatprep.subr.bf16.mxu0 0
  %3044 = vmatpush1.bf16.msra.mxu0 0
  %3045 = vmatprep.subr.bf16.mxu0 0
  %3046 = vmatpush1.bf16.msra.mxu0 0
  %3047 = vmatprep.subr.bf16.mxu0 0
  %3048 = vmatpush1.bf16.msra.mxu0 0
  %3049 = vmatprep.subr.bf16.mxu0 0
  %3050 = vmatpush1.bf16.msra.mxu0 0
  %3051 = vmatprep.subr.bf16.mxu0 0
  %3052 = vmatpush1.bf16.msra.mxu0 0
  %3053 = vmatprep.subr.bf16.mxu0 0
  %3054 = vmatpush1.bf16.msra.mxu0 0
  %3055 = vmatprep.subr.bf16.mxu0 0
  %3056 = vmatpush1.bf16.msra.mxu0 0
  %3057 = vmatprep.subr.bf16.mxu0 0
  %3058 = vmatpush1.bf16.msra.mxu0 0
  %3059 = vmatprep.subr.bf16.mxu0 0
  %3060 = vmatpush1.bf16.msra.mxu0 0
  %3061 = vmatprep.subr.bf16.mxu0 0
  %3062 = vmatpush1.bf16.msra.mxu0 0
  %3063 = vmatprep.subr.bf16.mxu0 0
  %3064 = vmatpush1.bf16.msra.mxu0 0
  %3065 = vmatprep.mubr.bf16.mxu0 0
  %3066 = vmatmul.mubr.bf16.gmra.mrb[0].mxu0 %v3031
  %v3067 = vpop.f32.mrb[0].mxu0
  %v3068 = vadd.f32 0.0, %v3067
  %v3069 = vpop.f32.mrb[0].mxu0
  %v3070 = vpop.f32.mrb[0].mxu0
  %v3071 = vpop.f32.mrb[0].mxu0
  %3072 = vdwg.mxu0
  %v3074 = vrot.slane %v3025, 3
  %3075 = vrot.lane.b32.xlu0 %v3074, 32
  %v3076 = vpop.permute.xlu0 %3075
  %v3078 = vsel %vm540, %v3076, 0
  %3080 = vmatprep.subr.bf16.mxu0 0
  %3081 = vmatpush1.bf16.msra.mxu0 %v906
  %3082 = vmatprep.subr.bf16.mxu0 0
  %3083 = vmatpush1.bf16.msra.mxu0 %v907
  %3084 = vmatprep.subr.bf16.mxu0 0
  %3085 = vmatpush1.bf16.msra.mxu0 0
  %3086 = vmatprep.subr.bf16.mxu0 0
  %3087 = vmatpush1.bf16.msra.mxu0 0
  %3088 = vmatprep.subr.bf16.mxu0 0
  %3089 = vmatpush1.bf16.msra.mxu0 0
  %3090 = vmatprep.subr.bf16.mxu0 0
  %3091 = vmatpush1.bf16.msra.mxu0 0
  %3092 = vmatprep.subr.bf16.mxu0 0
  %3093 = vmatpush1.bf16.msra.mxu0 0
  %3094 = vmatprep.subr.bf16.mxu0 0
  %3095 = vmatpush1.bf16.msra.mxu0 0
  %3096 = vmatprep.subr.bf16.mxu0 0
  %3097 = vmatpush1.bf16.msra.mxu0 0
  %3098 = vmatprep.subr.bf16.mxu0 0
  %3099 = vmatpush1.bf16.msra.mxu0 0
  %3100 = vmatprep.subr.bf16.mxu0 0
  %3101 = vmatpush1.bf16.msra.mxu0 0
  %3102 = vmatprep.subr.bf16.mxu0 0
  %3103 = vmatpush1.bf16.msra.mxu0 0
  %3104 = vmatprep.subr.bf16.mxu0 0
  %3105 = vmatpush1.bf16.msra.mxu0 0
  %3106 = vmatprep.subr.bf16.mxu0 0
  %3107 = vmatpush1.bf16.msra.mxu0 0
  %3108 = vmatprep.subr.bf16.mxu0 0
  %3109 = vmatpush1.bf16.msra.mxu0 0
  %3110 = vmatprep.subr.bf16.mxu0 0
  %3111 = vmatpush1.bf16.msra.mxu0 0
  %3112 = vmatprep.mubr.bf16.mxu0 0
  %3113 = vmatmul.mubr.bf16.gmra.mrb[0].mxu0 %v3078
  %v3114 = vpop.f32.mrb[0].mxu0
  %v3115 = vadd.f32 %v3068, %v3114
  %v3116 = vpop.f32.mrb[0].mxu0
  %v3117 = vpop.f32.mrb[0].mxu0
  %v3118 = vpop.f32.mrb[0].mxu0
  %3119 = vdwg.mxu0
  %v3120 = vadd.f32 %v3115, %v957
  %v3121 = vxor.u32 %v3120, 2147483648
  %v3122 = vmul.f32 %v3121, 1.442695
  %v3123 = vpow.pop %v3122
  %v3124 = vadd.f32 %v3123, 1.0
  %v3125 = vrcp.pop %v3124
  %v3126 = vmul.f32 1.0, %v3125
  %v3127 = vtanh.pop %v3120
  %v3128 = vmul.f32 %v2940, %v3126
  %3130 = vrot.lane.b32.xlu0 %v3127, 64
  %v3131 = vpop.permute.xlu0 %3130
  %v3133 = vmul.f32 %v3126, %v3131
  %3135 = vrot.lane.b32.xlu0 %v3133, 32
  %v3136 = vpop.permute.xlu0 %3135
  %v3138 = vadd.f32 %v3128, %v3136
  %v3139 = vtanh.pop %v3138
  %3141 = vrot.lane.b32.xlu0 %v3139, 64
  %v3142 = vpop.permute.xlu0 %3141
  %v3144 = vmul.f32 %v3126, %v3142
  %3146 = vrot.lane.b32.xlu0 %v3144, 32
  %v3147 = vpop.permute.xlu0 %3146
  %3149 = vst.msk [vmem:[%s8 + $0x16] sm:$0x3] %vm988, %v3147
  %3150 = vmatprep.subr.bf16.mxu0 0
  %3151 = vmatpush1.bf16.msra.mxu0 %v770
  %3152 = vmatprep.subr.bf16.mxu0 0
  %3153 = vmatpush1.bf16.msra.mxu0 %v771
  %3154 = vmatprep.subr.bf16.mxu0 0
  %3155 = vmatpush1.bf16.msra.mxu0 0
  %3156 = vmatprep.subr.bf16.mxu0 0
  %3157 = vmatpush1.bf16.msra.mxu0 0
  %3158 = vmatprep.subr.bf16.mxu0 0
  %3159 = vmatpush1.bf16.msra.mxu0 0
  %3160 = vmatprep.subr.bf16.mxu0 0
  %3161 = vmatpush1.bf16.msra.mxu0 0
  %3162 = vmatprep.subr.bf16.mxu0 0
  %3163 = vmatpush1.bf16.msra.mxu0 0
  %3164 = vmatprep.subr.bf16.mxu0 0
  %3165 = vmatpush1.bf16.msra.mxu0 0
  %3166 = vmatprep.subr.bf16.mxu0 0
  %3167 = vmatpush1.bf16.msra.mxu0 0
  %3168 = vmatprep.subr.bf16.mxu0 0
  %3169 = vmatpush1.bf16.msra.mxu0 0
  %3170 = vmatprep.subr.bf16.mxu0 0
  %3171 = vmatpush1.bf16.msra.mxu0 0
  %3172 = vmatprep.subr.bf16.mxu0 0
  %3173 = vmatpush1.bf16.msra.mxu0 0
  %3174 = vmatprep.subr.bf16.mxu0 0
  %3175 = vmatpush1.bf16.msra.mxu0 0
  %3176 = vmatprep.subr.bf16.mxu0 0
  %3177 = vmatpush1.bf16.msra.mxu0 0
  %3178 = vmatprep.subr.bf16.mxu0 0
  %3179 = vmatpush1.bf16.msra.mxu0 0
  %3180 = vmatprep.subr.bf16.mxu0 0
  %3181 = vmatpush1.bf16.msra.mxu0 0
  %3182 = vmatprep.mubr.bf16.mxu0 0
  %3183 = vmatmul.mubr.bf16.gmra.mrb[0].mxu0 %v3078
  %v3184 = vpop.f32.mrb[0].mxu0
  %v3185 = vadd.f32 0.0, %v3184
  %v3186 = vpop.f32.mrb[0].mxu0
  %v3187 = vpop.f32.mrb[0].mxu0
  %v3188 = vpop.f32.mrb[0].mxu0
  %3189 = vdwg.mxu0
  %v3190 = vadd.f32 %v727, %v3185
  %v3191 = vxor.u32 %v3190, 2147483648
  %v3192 = vmul.f32 %v3191, 1.442695
  %v3193 = vpow.pop %v3192
  %v3194 = vadd.f32 %v3193, 1.0
  %v3195 = vrcp.pop %v3194
  %v3196 = vmul.f32 1.0, %v3195
  %v3197 = vtanh.pop %v3190
  %v3198 = vmul.f32 %v3017, %v3196
  %3200 = vrot.lane.b32.xlu0 %v3197, 64
  %v3201 = vpop.permute.xlu0 %3200
  %v3203 = vmul.f32 %v3196, %v3201
  %3205 = vrot.lane.b32.xlu0 %v3203, 32
  %v3206 = vpop.permute.xlu0 %3205
  %v3208 = vadd.f32 %v3198, %v3206
  %v3209 = vtanh.pop %v3208
  %3211 = vrot.lane.b32.xlu0 %v3209, 64
  %v3212 = vpop.permute.xlu0 %3211
  %v3214 = vmul.f32 %v3196, %v3212
  %v3215 = vpack.c.bf16 %v3214, %v3214
  %v3216 = vpack.c.bf16 %v3144, %v3144
  %3218 = vrot.lane.b32.xlu0 %v3216, 32
  %v3219 = vpop.permute.xlu0 %3218
  %v3221 = vsel %vm540, %v3219, 0
  %3223 = vmatprep.subr.bf16.mxu0 0
  %3224 = vmatpush1.bf16.msra.mxu0 %v851
  %3225 = vmatprep.subr.bf16.mxu0 0
  %3226 = vmatpush1.bf16.msra.mxu0 %v852
  %3227 = vmatprep.subr.bf16.mxu0 0
  %3228 = vmatpush1.bf16.msra.mxu0 0
  %3229 = vmatprep.subr.bf16.mxu0 0
  %3230 = vmatpush1.bf16.msra.mxu0 0
  %3231 = vmatprep.subr.bf16.mxu0 0
  %3232 = vmatpush1.bf16.msra.mxu0 0
  %3233 = vmatprep.subr.bf16.mxu0 0
  %3234 = vmatpush1.bf16.msra.mxu0 0
  %3235 = vmatprep.subr.bf16.mxu0 0
  %3236 = vmatpush1.bf16.msra.mxu0 0
  %3237 = vmatprep.subr.bf16.mxu0 0
  %3238 = vmatpush1.bf16.msra.mxu0 0
  %3239 = vmatprep.subr.bf16.mxu0 0
  %3240 = vmatpush1.bf16.msra.mxu0 0
  %3241 = vmatprep.subr.bf16.mxu0 0
  %3242 = vmatpush1.bf16.msra.mxu0 0
  %3243 = vmatprep.subr.bf16.mxu0 0
  %3244 = vmatpush1.bf16.msra.mxu0 0
  %3245 = vmatprep.subr.bf16.mxu0 0
  %3246 = vmatpush1.bf16.msra.mxu0 0
  %3247 = vmatprep.subr.bf16.mxu0 0
  %3248 = vmatpush1.bf16.msra.mxu0 0
  %3249 = vmatprep.subr.bf16.mxu0 0
  %3250 = vmatpush1.bf16.msra.mxu0 0
  %3251 = vmatprep.subr.bf16.mxu0 0
  %3252 = vmatpush1.bf16.msra.mxu0 0
  %3253 = vmatprep.subr.bf16.mxu0 0
  %3254 = vmatpush1.bf16.msra.mxu0 0
  %3255 = vmatprep.mubr.bf16.mxu0 0
  %3256 = vmatmul.mubr.bf16.gmra.mrb[0].mxu0 %v3221
  %v3257 = vpop.f32.mrb[0].mxu0
  %v3258 = vadd.f32 0.0, %v3257
  %v3259 = vpop.f32.mrb[0].mxu0
  %v3260 = vpop.f32.mrb[0].mxu0
  %v3261 = vpop.f32.mrb[0].mxu0
  %3262 = vdwg.mxu0
  %3264 = vrot.lane.b32.xlu0 %v3215, 32
  %v3265 = vpop.permute.xlu0 %3264
  %v3267 = vsel %vm540, %v3265, 0
  %3269 = vmatprep.subr.bf16.mxu0 0
  %3270 = vmatpush1.bf16.msra.mxu0 %v906
  %3271 = vmatprep.subr.bf16.mxu0 0
  %3272 = vmatpush1.bf16.msra.mxu0 %v907
  %3273 = vmatprep.subr.bf16.mxu0 0
  %3274 = vmatpush1.bf16.msra.mxu0 0
  %3275 = vmatprep.subr.bf16.mxu0 0
  %3276 = vmatpush1.bf16.msra.mxu0 0
  %3277 = vmatprep.subr.bf16.mxu0 0
  %3278 = vmatpush1.bf16.msra.mxu0 0
  %3279 = vmatprep.subr.bf16.mxu0 0
  %3280 = vmatpush1.bf16.msra.mxu0 0
  %3281 = vmatprep.subr.bf16.mxu0 0
  %3282 = vmatpush1.bf16.msra.mxu0 0
  %3283 = vmatprep.subr.bf16.mxu0 0
  %3284 = vmatpush1.bf16.msra.mxu0 0
  %3285 = vmatprep.subr.bf16.mxu0 0
  %3286 = vmatpush1.bf16.msra.mxu0 0
  %3287 = vmatprep.subr.bf16.mxu0 0
  %3288 = vmatpush1.bf16.msra.mxu0 0
  %3289 = vmatprep.subr.bf16.mxu0 0
  %3290 = vmatpush1.bf16.msra.mxu0 0
  %3291 = vmatprep.subr.bf16.mxu0 0
  %3292 = vmatpush1.bf16.msra.mxu0 0
  %3293 = vmatprep.subr.bf16.mxu0 0
  %3294 = vmatpush1.bf16.msra.mxu0 0
  %3295 = vmatprep.subr.bf16.mxu0 0
  %3296 = vmatpush1.bf16.msra.mxu0 0
  %3297 = vmatprep.subr.bf16.mxu0 0
  %3298 = vmatpush1.bf16.msra.mxu0 0
  %3299 = vmatprep.subr.bf16.mxu0 0
  %3300 = vmatpush1.bf16.msra.mxu0 0
  %3301 = vmatprep.mubr.bf16.mxu0 0
  %3302 = vmatmul.mubr.bf16.gmra.mrb[0].mxu0 %v3267
  %v3303 = vpop.f32.mrb[0].mxu0
  %v3304 = vadd.f32 %v3258, %v3303
  %v3305 = vpop.f32.mrb[0].mxu0
  %v3306 = vpop.f32.mrb[0].mxu0
  %v3307 = vpop.f32.mrb[0].mxu0
  %3308 = vdwg.mxu0
  %v3309 = vadd.f32 %v3304, %v957
  %v3310 = vxor.u32 %v3309, 2147483648
  %v3311 = vmul.f32 %v3310, 1.442695
  %v3312 = vpow.pop %v3311
  %v3313 = vadd.f32 %v3312, 1.0
  %v3314 = vrcp.pop %v3313
  %v3315 = vmul.f32 1.0, %v3314
  %v3316 = vtanh.pop %v3309
  %v3317 = vmul.f32 %v3138, %v3315
  %3319 = vrot.lane.b32.xlu0 %v3316, 64
  %v3320 = vpop.permute.xlu0 %3319
  %v3322 = vmul.f32 %v3315, %v3320
  %3324 = vrot.lane.b32.xlu0 %v3322, 32
  %v3325 = vpop.permute.xlu0 %3324
  %v3327 = vadd.f32 %v3317, %v3325
  %v3328 = vtanh.pop %v3327
  %3330 = vrot.lane.b32.xlu0 %v3328, 64
  %v3331 = vpop.permute.xlu0 %3330
  %v3333 = vmul.f32 %v3315, %v3331
  %3335 = vrot.lane.b32.xlu0 %v3333, 32
  %v3336 = vpop.permute.xlu0 %3335
  %3338 = vst.msk [vmem:[%s8 + $0x18] sm:$0x3] %vm988, %v3336
  %3339 = vmatprep.subr.bf16.mxu0 0
  %3340 = vmatpush1.bf16.msra.mxu0 %v770
  %3341 = vmatprep.subr.bf16.mxu0 0
  %3342 = vmatpush1.bf16.msra.mxu0 %v771
  %3343 = vmatprep.subr.bf16.mxu0 0
  %3344 = vmatpush1.bf16.msra.mxu0 0
  %3345 = vmatprep.subr.bf16.mxu0 0
  %3346 = vmatpush1.bf16.msra.mxu0 0
  %3347 = vmatprep.subr.bf16.mxu0 0
  %3348 = vmatpush1.bf16.msra.mxu0 0
  %3349 = vmatprep.subr.bf16.mxu0 0
  %3350 = vmatpush1.bf16.msra.mxu0 0
  %3351 = vmatprep.subr.bf16.mxu0 0
  %3352 = vmatpush1.bf16.msra.mxu0 0
  %3353 = vmatprep.subr.bf16.mxu0 0
  %3354 = vmatpush1.bf16.msra.mxu0 0
  %3355 = vmatprep.subr.bf16.mxu0 0
  %3356 = vmatpush1.bf16.msra.mxu0 0
  %3357 = vmatprep.subr.bf16.mxu0 0
  %3358 = vmatpush1.bf16.msra.mxu0 0
  %3359 = vmatprep.subr.bf16.mxu0 0
  %3360 = vmatpush1.bf16.msra.mxu0 0
  %3361 = vmatprep.subr.bf16.mxu0 0
  %3362 = vmatpush1.bf16.msra.mxu0 0
  %3363 = vmatprep.subr.bf16.mxu0 0
  %3364 = vmatpush1.bf16.msra.mxu0 0
  %3365 = vmatprep.subr.bf16.mxu0 0
  %3366 = vmatpush1.bf16.msra.mxu0 0
  %3367 = vmatprep.subr.bf16.mxu0 0
  %3368 = vmatpush1.bf16.msra.mxu0 0
  %3369 = vmatprep.subr.bf16.mxu0 0
  %3370 = vmatpush1.bf16.msra.mxu0 0
  %3371 = vmatprep.mubr.bf16.mxu0 0
  %3372 = vmatmul.mubr.bf16.gmra.mrb[0].mxu0 %v3267
  %v3373 = vpop.f32.mrb[0].mxu0
  %v3374 = vadd.f32 0.0, %v3373
  %v3375 = vpop.f32.mrb[0].mxu0
  %v3376 = vpop.f32.mrb[0].mxu0
  %v3377 = vpop.f32.mrb[0].mxu0
  %3378 = vdwg.mxu0
  %v3380 = vrot.slane %v3374, 6
  %v3382 = vadd.f32 %v727, %v3380
  %v3383 = vxor.u32 %v3382, 2147483648
  %v3384 = vmul.f32 %v3383, 1.442695
  %v3385 = vpow.pop %v3384
  %v3386 = vadd.f32 %v3385, 1.0
  %v3387 = vrcp.pop %v3386
  %v3388 = vmul.f32 1.0, %v3387
  %v3389 = vtanh.pop %v3382
  %v3391 = vrot.slane %v3388, 2
  %v3393 = vmul.f32 %v3208, %v3391
  %3395 = vrot.lane.b32.xlu0 %v3389, 64
  %v3396 = vpop.permute.xlu0 %3395
  %v3398 = vmul.f32 %v3388, %v3396
  %v3400 = vrot.slane %v3398, 2
  %3401 = vrot.lane.b32.xlu0 %v3400, 32
  %v3402 = vpop.permute.xlu0 %3401
  %v3404 = vadd.f32 %v3393, %v3402
  %v3405 = vtanh.pop %v3404
  %v3407 = vrot.slane %v3405, 6
  %3408 = vrot.lane.b32.xlu0 %v3407, 64
  %v3409 = vpop.permute.xlu0 %3408
  %v3411 = vmul.f32 %v3388, %v3409
  %v3412 = vpack.c.bf16 %v3411, %v3411
  %v3413 = vpack.c.bf16 %v3333, %v3333
  %3415 = vrot.lane.b32.xlu0 %v3413, 32
  %v3416 = vpop.permute.xlu0 %3415
  %v3418 = vsel %vm540, %v3416, 0
  %3420 = vmatprep.subr.bf16.mxu0 0
  %3421 = vmatpush1.bf16.msra.mxu0 %v851
  %3422 = vmatprep.subr.bf16.mxu0 0
  %3423 = vmatpush1.bf16.msra.mxu0 %v852
  %3424 = vmatprep.subr.bf16.mxu0 0
  %3425 = vmatpush1.bf16.msra.mxu0 0
  %3426 = vmatprep.subr.bf16.mxu0 0
  %3427 = vmatpush1.bf16.msra.mxu0 0
  %3428 = vmatprep.subr.bf16.mxu0 0
  %3429 = vmatpush1.bf16.msra.mxu0 0
  %3430 = vmatprep.subr.bf16.mxu0 0
  %3431 = vmatpush1.bf16.msra.mxu0 0
  %3432 = vmatprep.subr.bf16.mxu0 0
  %3433 = vmatpush1.bf16.msra.mxu0 0
  %3434 = vmatprep.subr.bf16.mxu0 0
  %3435 = vmatpush1.bf16.msra.mxu0 0
  %3436 = vmatprep.subr.bf16.mxu0 0
  %3437 = vmatpush1.bf16.msra.mxu0 0
  %3438 = vmatprep.subr.bf16.mxu0 0
  %3439 = vmatpush1.bf16.msra.mxu0 0
  %3440 = vmatprep.subr.bf16.mxu0 0
  %3441 = vmatpush1.bf16.msra.mxu0 0
  %3442 = vmatprep.subr.bf16.mxu0 0
  %3443 = vmatpush1.bf16.msra.mxu0 0
  %3444 = vmatprep.subr.bf16.mxu0 0
  %3445 = vmatpush1.bf16.msra.mxu0 0
  %3446 = vmatprep.subr.bf16.mxu0 0
  %3447 = vmatpush1.bf16.msra.mxu0 0
  %3448 = vmatprep.subr.bf16.mxu0 0
  %3449 = vmatpush1.bf16.msra.mxu0 0
  %3450 = vmatprep.subr.bf16.mxu0 0
  %3451 = vmatpush1.bf16.msra.mxu0 0
  %3452 = vmatprep.mubr.bf16.mxu0 0
  %3453 = vmatmul.mubr.bf16.gmra.mrb[0].mxu0 %v3418
  %v3454 = vpop.f32.mrb[0].mxu0
  %v3455 = vadd.f32 0.0, %v3454
  %v3456 = vpop.f32.mrb[0].mxu0
  %v3457 = vpop.f32.mrb[0].mxu0
  %v3458 = vpop.f32.mrb[0].mxu0
  %3459 = vdwg.mxu0
  %v3461 = vrot.slane %v3412, 1
  %3462 = vrot.lane.b32.xlu0 %v3461, 32
  %v3463 = vpop.permute.xlu0 %3462
  %v3465 = vsel %vm540, %v3463, 0
  %3467 = vmatprep.subr.bf16.mxu0 0
  %3468 = vmatpush1.bf16.msra.mxu0 %v906
  %3469 = vmatprep.subr.bf16.mxu0 0
  %3470 = vmatpush1.bf16.msra.mxu0 %v907
  %3471 = vmatprep.subr.bf16.mxu0 0
  %3472 = vmatpush1.bf16.msra.mxu0 0
  %3473 = vmatprep.subr.bf16.mxu0 0
  %3474 = vmatpush1.bf16.msra.mxu0 0
  %3475 = vmatprep.subr.bf16.mxu0 0
  %3476 = vmatpush1.bf16.msra.mxu0 0
  %3477 = vmatprep.subr.bf16.mxu0 0
  %3478 = vmatpush1.bf16.msra.mxu0 0
  %3479 = vmatprep.subr.bf16.mxu0 0
  %3480 = vmatpush1.bf16.msra.mxu0 0
  %3481 = vmatprep.subr.bf16.mxu0 0
  %3482 = vmatpush1.bf16.msra.mxu0 0
  %3483 = vmatprep.subr.bf16.mxu0 0
  %3484 = vmatpush1.bf16.msra.mxu0 0
  %3485 = vmatprep.subr.bf16.mxu0 0
  %3486 = vmatpush1.bf16.msra.mxu0 0
  %3487 = vmatprep.subr.bf16.mxu0 0
  %3488 = vmatpush1.bf16.msra.mxu0 0
  %3489 = vmatprep.subr.bf16.mxu0 0
  %3490 = vmatpush1.bf16.msra.mxu0 0
  %3491 = vmatprep.subr.bf16.mxu0 0
  %3492 = vmatpush1.bf16.msra.mxu0 0
  %3493 = vmatprep.subr.bf16.mxu0 0
  %3494 = vmatpush1.bf16.msra.mxu0 0
  %3495 = vmatprep.subr.bf16.mxu0 0
  %3496 = vmatpush1.bf16.msra.mxu0 0
  %3497 = vmatprep.subr.bf16.mxu0 0
  %3498 = vmatpush1.bf16.msra.mxu0 0
  %3499 = vmatprep.mubr.bf16.mxu0 0
  %3500 = vmatmul.mubr.bf16.gmra.mrb[0].mxu0 %v3465
  %v3501 = vpop.f32.mrb[0].mxu0
  %v3502 = vadd.f32 %v3455, %v3501
  %v3503 = vpop.f32.mrb[0].mxu0
  %v3504 = vpop.f32.mrb[0].mxu0
  %v3505 = vpop.f32.mrb[0].mxu0
  %3506 = vdwg.mxu0
  %v3507 = vadd.f32 %v3502, %v957
  %v3508 = vxor.u32 %v3507, 2147483648
  %v3509 = vmul.f32 %v3508, 1.442695
  %v3510 = vpow.pop %v3509
  %v3511 = vadd.f32 %v3510, 1.0
  %v3512 = vrcp.pop %v3511
  %v3513 = vmul.f32 1.0, %v3512
  %v3514 = vtanh.pop %v3507
  %v3515 = vmul.f32 %v3327, %v3513
  %3517 = vrot.lane.b32.xlu0 %v3514, 64
  %v3518 = vpop.permute.xlu0 %3517
  %v3520 = vmul.f32 %v3513, %v3518
  %3522 = vrot.lane.b32.xlu0 %v3520, 32
  %v3523 = vpop.permute.xlu0 %3522
  %v3525 = vadd.f32 %v3515, %v3523
  %v3526 = vtanh.pop %v3525
  %3528 = vrot.lane.b32.xlu0 %v3526, 64
  %v3529 = vpop.permute.xlu0 %3528
  %v3531 = vmul.f32 %v3513, %v3529
  %3533 = vrot.lane.b32.xlu0 %v3531, 32
  %v3534 = vpop.permute.xlu0 %3533
  %3536 = vst.msk [vmem:[%s8 + $0x1a] sm:$0x3] %vm988, %v3534
  %3537 = vmatprep.subr.bf16.mxu0 0
  %3538 = vmatpush1.bf16.msra.mxu0 %v770
  %3539 = vmatprep.subr.bf16.mxu0 0
  %3540 = vmatpush1.bf16.msra.mxu0 %v771
  %3541 = vmatprep.subr.bf16.mxu0 0
  %3542 = vmatpush1.bf16.msra.mxu0 0
  %3543 = vmatprep.subr.bf16.mxu0 0
  %3544 = vmatpush1.bf16.msra.mxu0 0
  %3545 = vmatprep.subr.bf16.mxu0 0
  %3546 = vmatpush1.bf16.msra.mxu0 0
  %3547 = vmatprep.subr.bf16.mxu0 0
  %3548 = vmatpush1.bf16.msra.mxu0 0
  %3549 = vmatprep.subr.bf16.mxu0 0
  %3550 = vmatpush1.bf16.msra.mxu0 0
  %3551 = vmatprep.subr.bf16.mxu0 0
  %3552 = vmatpush1.bf16.msra.mxu0 0
  %3553 = vmatprep.subr.bf16.mxu0 0
  %3554 = vmatpush1.bf16.msra.mxu0 0
  %3555 = vmatprep.subr.bf16.mxu0 0
  %3556 = vmatpush1.bf16.msra.mxu0 0
  %3557 = vmatprep.subr.bf16.mxu0 0
  %3558 = vmatpush1.bf16.msra.mxu0 0
  %3559 = vmatprep.subr.bf16.mxu0 0
  %3560 = vmatpush1.bf16.msra.mxu0 0
  %3561 = vmatprep.subr.bf16.mxu0 0
  %3562 = vmatpush1.bf16.msra.mxu0 0
  %3563 = vmatprep.subr.bf16.mxu0 0
  %3564 = vmatpush1.bf16.msra.mxu0 0
  %3565 = vmatprep.subr.bf16.mxu0 0
  %3566 = vmatpush1.bf16.msra.mxu0 0
  %3567 = vmatprep.subr.bf16.mxu0 0
  %3568 = vmatpush1.bf16.msra.mxu0 0
  %3569 = vmatprep.mubr.bf16.mxu0 0
  %3570 = vmatmul.mubr.bf16.gmra.mrb[0].mxu0 %v3465
  %v3571 = vpop.f32.mrb[0].mxu0
  %v3572 = vadd.f32 0.0, %v3571
  %v3573 = vpop.f32.mrb[0].mxu0
  %v3574 = vpop.f32.mrb[0].mxu0
  %v3575 = vpop.f32.mrb[0].mxu0
  %3576 = vdwg.mxu0
  %v3578 = vrot.slane %v3572, 4
  %v3580 = vadd.f32 %v727, %v3578
  %v3581 = vxor.u32 %v3580, 2147483648
  %v3582 = vmul.f32 %v3581, 1.442695
  %v3583 = vpow.pop %v3582
  %v3584 = vadd.f32 %v3583, 1.0
  %v3585 = vrcp.pop %v3584
  %v3586 = vmul.f32 1.0, %v3585
  %v3587 = vtanh.pop %v3580
  %v3589 = vrot.slane %v3586, 4
  %v3591 = vmul.f32 %v3404, %v3589
  %3593 = vrot.lane.b32.xlu0 %v3587, 64
  %v3594 = vpop.permute.xlu0 %3593
  %v3596 = vmul.f32 %v3586, %v3594
  %v3598 = vrot.slane %v3596, 4
  %3599 = vrot.lane.b32.xlu0 %v3598, 32
  %v3600 = vpop.permute.xlu0 %3599
  %v3602 = vadd.f32 %v3591, %v3600
  %v3603 = vtanh.pop %v3602
  %v3605 = vrot.slane %v3603, 4
  %3606 = vrot.lane.b32.xlu0 %v3605, 64
  %v3607 = vpop.permute.xlu0 %3606
  %v3609 = vmul.f32 %v3586, %v3607
  %v3610 = vpack.c.bf16 %v3609, %v3609
  %v3611 = vpack.c.bf16 %v3531, %v3531
  %3613 = vrot.lane.b32.xlu0 %v3611, 32
  %v3614 = vpop.permute.xlu0 %3613
  %v3616 = vsel %vm540, %v3614, 0
  %3618 = vmatprep.subr.bf16.mxu0 0
  %3619 = vmatpush1.bf16.msra.mxu0 %v851
  %3620 = vmatprep.subr.bf16.mxu0 0
  %3621 = vmatpush1.bf16.msra.mxu0 %v852
  %3622 = vmatprep.subr.bf16.mxu0 0
  %3623 = vmatpush1.bf16.msra.mxu0 0
  %3624 = vmatprep.subr.bf16.mxu0 0
  %3625 = vmatpush1.bf16.msra.mxu0 0
  %3626 = vmatprep.subr.bf16.mxu0 0
  %3627 = vmatpush1.bf16.msra.mxu0 0
  %3628 = vmatprep.subr.bf16.mxu0 0
  %3629 = vmatpush1.bf16.msra.mxu0 0
  %3630 = vmatprep.subr.bf16.mxu0 0
  %3631 = vmatpush1.bf16.msra.mxu0 0
  %3632 = vmatprep.subr.bf16.mxu0 0
  %3633 = vmatpush1.bf16.msra.mxu0 0
  %3634 = vmatprep.subr.bf16.mxu0 0
  %3635 = vmatpush1.bf16.msra.mxu0 0
  %3636 = vmatprep.subr.bf16.mxu0 0
  %3637 = vmatpush1.bf16.msra.mxu0 0
  %3638 = vmatprep.subr.bf16.mxu0 0
  %3639 = vmatpush1.bf16.msra.mxu0 0
  %3640 = vmatprep.subr.bf16.mxu0 0
  %3641 = vmatpush1.bf16.msra.mxu0 0
  %3642 = vmatprep.subr.bf16.mxu0 0
  %3643 = vmatpush1.bf16.msra.mxu0 0
  %3644 = vmatprep.subr.bf16.mxu0 0
  %3645 = vmatpush1.bf16.msra.mxu0 0
  %3646 = vmatprep.subr.bf16.mxu0 0
  %3647 = vmatpush1.bf16.msra.mxu0 0
  %3648 = vmatprep.subr.bf16.mxu0 0
  %3649 = vmatpush1.bf16.msra.mxu0 0
  %3650 = vmatprep.mubr.bf16.mxu0 0
  %3651 = vmatmul.mubr.bf16.gmra.mrb[0].mxu0 %v3616
  %v3652 = vpop.f32.mrb[0].mxu0
  %v3653 = vadd.f32 0.0, %v3652
  %v3654 = vpop.f32.mrb[0].mxu0
  %v3655 = vpop.f32.mrb[0].mxu0
  %v3656 = vpop.f32.mrb[0].mxu0
  %3657 = vdwg.mxu0
  %v3659 = vrot.slane %v3610, 2
  %3660 = vrot.lane.b32.xlu0 %v3659, 32
  %v3661 = vpop.permute.xlu0 %3660
  %v3663 = vsel %vm540, %v3661, 0
  %3665 = vmatprep.subr.bf16.mxu0 0
  %3666 = vmatpush1.bf16.msra.mxu0 %v906
  %3667 = vmatprep.subr.bf16.mxu0 0
  %3668 = vmatpush1.bf16.msra.mxu0 %v907
  %3669 = vmatprep.subr.bf16.mxu0 0
  %3670 = vmatpush1.bf16.msra.mxu0 0
  %3671 = vmatprep.subr.bf16.mxu0 0
  %3672 = vmatpush1.bf16.msra.mxu0 0
  %3673 = vmatprep.subr.bf16.mxu0 0
  %3674 = vmatpush1.bf16.msra.mxu0 0
  %3675 = vmatprep.subr.bf16.mxu0 0
  %3676 = vmatpush1.bf16.msra.mxu0 0
  %3677 = vmatprep.subr.bf16.mxu0 0
  %3678 = vmatpush1.bf16.msra.mxu0 0
  %3679 = vmatprep.subr.bf16.mxu0 0
  %3680 = vmatpush1.bf16.msra.mxu0 0
  %3681 = vmatprep.subr.bf16.mxu0 0
  %3682 = vmatpush1.bf16.msra.mxu0 0
  %3683 = vmatprep.subr.bf16.mxu0 0
  %3684 = vmatpush1.bf16.msra.mxu0 0
  %3685 = vmatprep.subr.bf16.mxu0 0
  %3686 = vmatpush1.bf16.msra.mxu0 0
  %3687 = vmatprep.subr.bf16.mxu0 0
  %3688 = vmatpush1.bf16.msra.mxu0 0
  %3689 = vmatprep.subr.bf16.mxu0 0
  %3690 = vmatpush1.bf16.msra.mxu0 0
  %3691 = vmatprep.subr.bf16.mxu0 0
  %3692 = vmatpush1.bf16.msra.mxu0 0
  %3693 = vmatprep.subr.bf16.mxu0 0
  %3694 = vmatpush1.bf16.msra.mxu0 0
  %3695 = vmatprep.subr.bf16.mxu0 0
  %3696 = vmatpush1.bf16.msra.mxu0 0
  %3697 = vmatprep.mubr.bf16.mxu0 0
  %3698 = vmatmul.mubr.bf16.gmra.mrb[0].mxu0 %v3663
  %v3699 = vpop.f32.mrb[0].mxu0
  %v3700 = vadd.f32 %v3653, %v3699
  %v3701 = vpop.f32.mrb[0].mxu0
  %v3702 = vpop.f32.mrb[0].mxu0
  %v3703 = vpop.f32.mrb[0].mxu0
  %3704 = vdwg.mxu0
  %v3705 = vadd.f32 %v3700, %v957
  %v3706 = vxor.u32 %v3705, 2147483648
  %v3707 = vmul.f32 %v3706, 1.442695
  %v3708 = vpow.pop %v3707
  %v3709 = vadd.f32 %v3708, 1.0
  %v3710 = vrcp.pop %v3709
  %v3711 = vmul.f32 1.0, %v3710
  %v3712 = vtanh.pop %v3705
  %v3713 = vmul.f32 %v3525, %v3711
  %3715 = vrot.lane.b32.xlu0 %v3712, 64
  %v3716 = vpop.permute.xlu0 %3715
  %v3718 = vmul.f32 %v3711, %v3716
  %3720 = vrot.lane.b32.xlu0 %v3718, 32
  %v3721 = vpop.permute.xlu0 %3720
  %v3723 = vadd.f32 %v3713, %v3721
  %v3724 = vtanh.pop %v3723
  %3726 = vrot.lane.b32.xlu0 %v3724, 64
  %v3727 = vpop.permute.xlu0 %3726
  %v3729 = vmul.f32 %v3711, %v3727
  %3731 = vrot.lane.b32.xlu0 %v3729, 32
  %v3732 = vpop.permute.xlu0 %3731
  %3734 = vst.msk [vmem:[%s8 + $0x1c] sm:$0x3] %vm988, %v3732
  %3735 = vmatprep.subr.bf16.mxu0 0
  %3736 = vmatpush1.bf16.msra.mxu0 %v770
  %3737 = vmatprep.subr.bf16.mxu0 0
  %3738 = vmatpush1.bf16.msra.mxu0 %v771
  %3739 = vmatprep.subr.bf16.mxu0 0
  %3740 = vmatpush1.bf16.msra.mxu0 0
  %3741 = vmatprep.subr.bf16.mxu0 0
  %3742 = vmatpush1.bf16.msra.mxu0 0
  %3743 = vmatprep.subr.bf16.mxu0 0
  %3744 = vmatpush1.bf16.msra.mxu0 0
  %3745 = vmatprep.subr.bf16.mxu0 0
  %3746 = vmatpush1.bf16.msra.mxu0 0
  %3747 = vmatprep.subr.bf16.mxu0 0
  %3748 = vmatpush1.bf16.msra.mxu0 0
  %3749 = vmatprep.subr.bf16.mxu0 0
  %3750 = vmatpush1.bf16.msra.mxu0 0
  %3751 = vmatprep.subr.bf16.mxu0 0
  %3752 = vmatpush1.bf16.msra.mxu0 0
  %3753 = vmatprep.subr.bf16.mxu0 0
  %3754 = vmatpush1.bf16.msra.mxu0 0
  %3755 = vmatprep.subr.bf16.mxu0 0
  %3756 = vmatpush1.bf16.msra.mxu0 0
  %3757 = vmatprep.subr.bf16.mxu0 0
  %3758 = vmatpush1.bf16.msra.mxu0 0
  %3759 = vmatprep.subr.bf16.mxu0 0
  %3760 = vmatpush1.bf16.msra.mxu0 0
  %3761 = vmatprep.subr.bf16.mxu0 0
  %3762 = vmatpush1.bf16.msra.mxu0 0
  %3763 = vmatprep.subr.bf16.mxu0 0
  %3764 = vmatpush1.bf16.msra.mxu0 0
  %3765 = vmatprep.subr.bf16.mxu0 0
  %3766 = vmatpush1.bf16.msra.mxu0 0
  %3767 = vmatprep.mubr.bf16.mxu0 0
  %3768 = vmatmul.mubr.bf16.gmra.mrb[0].mxu0 %v3663
  %v3769 = vpop.f32.mrb[0].mxu0
  %v3770 = vadd.f32 0.0, %v3769
  %v3771 = vpop.f32.mrb[0].mxu0
  %v3772 = vpop.f32.mrb[0].mxu0
  %v3773 = vpop.f32.mrb[0].mxu0
  %3774 = vdwg.mxu0
  %v3776 = vrot.slane %v3770, 2
  %v3778 = vadd.f32 %v727, %v3776
  %v3779 = vxor.u32 %v3778, 2147483648
  %v3780 = vmul.f32 %v3779, 1.442695
  %v3781 = vpow.pop %v3780
  %v3782 = vadd.f32 %v3781, 1.0
  %v3783 = vrcp.pop %v3782
  %v3784 = vmul.f32 1.0, %v3783
  %v3785 = vtanh.pop %v3778
  %v3787 = vrot.slane %v3784, 6
  %v3789 = vmul.f32 %v3602, %v3787
  %3791 = vrot.lane.b32.xlu0 %v3785, 64
  %v3792 = vpop.permute.xlu0 %3791
  %v3794 = vmul.f32 %v3784, %v3792
  %v3796 = vrot.slane %v3794, 6
  %3797 = vrot.lane.b32.xlu0 %v3796, 32
  %v3798 = vpop.permute.xlu0 %3797
  %v3800 = vadd.f32 %v3789, %v3798
  %v3801 = vtanh.pop %v3800
  %v3803 = vrot.slane %v3801, 2
  %3804 = vrot.lane.b32.xlu0 %v3803, 64
  %v3805 = vpop.permute.xlu0 %3804
  %v3807 = vmul.f32 %v3784, %v3805
  %v3808 = vpack.c.bf16 %v3807, %v3807
  %v3809 = vpack.c.bf16 %v3729, %v3729
  %3811 = vrot.lane.b32.xlu0 %v3809, 32
  %v3812 = vpop.permute.xlu0 %3811
  %v3814 = vsel %vm540, %v3812, 0
  %3816 = vmatprep.subr.bf16.mxu0 0
  %3817 = vmatpush1.bf16.msra.mxu0 %v851
  %3818 = vmatprep.subr.bf16.mxu0 0
  %3819 = vmatpush1.bf16.msra.mxu0 %v852
  %3820 = vmatprep.subr.bf16.mxu0 0
  %3821 = vmatpush1.bf16.msra.mxu0 0
  %3822 = vmatprep.subr.bf16.mxu0 0
  %3823 = vmatpush1.bf16.msra.mxu0 0
  %3824 = vmatprep.subr.bf16.mxu0 0
  %3825 = vmatpush1.bf16.msra.mxu0 0
  %3826 = vmatprep.subr.bf16.mxu0 0
  %3827 = vmatpush1.bf16.msra.mxu0 0
  %3828 = vmatprep.subr.bf16.mxu0 0
  %3829 = vmatpush1.bf16.msra.mxu0 0
  %3830 = vmatprep.subr.bf16.mxu0 0
  %3831 = vmatpush1.bf16.msra.mxu0 0
  %3832 = vmatprep.subr.bf16.mxu0 0
  %3833 = vmatpush1.bf16.msra.mxu0 0
  %3834 = vmatprep.subr.bf16.mxu0 0
  %3835 = vmatpush1.bf16.msra.mxu0 0
  %3836 = vmatprep.subr.bf16.mxu0 0
  %3837 = vmatpush1.bf16.msra.mxu0 0
  %3838 = vmatprep.subr.bf16.mxu0 0
  %3839 = vmatpush1.bf16.msra.mxu0 0
  %3840 = vmatprep.subr.bf16.mxu0 0
  %3841 = vmatpush1.bf16.msra.mxu0 0
  %3842 = vmatprep.subr.bf16.mxu0 0
  %3843 = vmatpush1.bf16.msra.mxu0 0
  %3844 = vmatprep.subr.bf16.mxu0 0
  %3845 = vmatpush1.bf16.msra.mxu0 0
  %3846 = vmatprep.subr.bf16.mxu0 0
  %3847 = vmatpush1.bf16.msra.mxu0 0
  %3848 = vmatprep.mubr.bf16.mxu0 0
  %3849 = vmatmul.mubr.bf16.gmra.mrb[0].mxu0 %v3814
  %v3850 = vpop.f32.mrb[0].mxu0
  %v3851 = vadd.f32 0.0, %v3850
  %v3852 = vpop.f32.mrb[0].mxu0
  %v3853 = vpop.f32.mrb[0].mxu0
  %v3854 = vpop.f32.mrb[0].mxu0
  %3855 = vdwg.mxu0
  %v3857 = vrot.slane %v3808, 3
  %3858 = vrot.lane.b32.xlu0 %v3857, 32
  %v3859 = vpop.permute.xlu0 %3858
  %v3861 = vsel %vm540, %v3859, 0
  %3863 = vmatprep.subr.bf16.mxu0 0
  %3864 = vmatpush1.bf16.msra.mxu0 %v906
  %3865 = vmatprep.subr.bf16.mxu0 0
  %3866 = vmatpush1.bf16.msra.mxu0 %v907
  %3867 = vmatprep.subr.bf16.mxu0 0
  %3868 = vmatpush1.bf16.msra.mxu0 0
  %3869 = vmatprep.subr.bf16.mxu0 0
  %3870 = vmatpush1.bf16.msra.mxu0 0
  %3871 = vmatprep.subr.bf16.mxu0 0
  %3872 = vmatpush1.bf16.msra.mxu0 0
  %3873 = vmatprep.subr.bf16.mxu0 0
  %3874 = vmatpush1.bf16.msra.mxu0 0
  %3875 = vmatprep.subr.bf16.mxu0 0
  %3876 = vmatpush1.bf16.msra.mxu0 0
  %3877 = vmatprep.subr.bf16.mxu0 0
  %3878 = vmatpush1.bf16.msra.mxu0 0
  %3879 = vmatprep.subr.bf16.mxu0 0
  %3880 = vmatpush1.bf16.msra.mxu0 0
  %3881 = vmatprep.subr.bf16.mxu0 0
  %3882 = vmatpush1.bf16.msra.mxu0 0
  %3883 = vmatprep.subr.bf16.mxu0 0
  %3884 = vmatpush1.bf16.msra.mxu0 0
  %3885 = vmatprep.subr.bf16.mxu0 0
  %3886 = vmatpush1.bf16.msra.mxu0 0
  %3887 = vmatprep.subr.bf16.mxu0 0
  %3888 = vmatpush1.bf16.msra.mxu0 0
  %3889 = vmatprep.subr.bf16.mxu0 0
  %3890 = vmatpush1.bf16.msra.mxu0 0
  %3891 = vmatprep.subr.bf16.mxu0 0
  %3892 = vmatpush1.bf16.msra.mxu0 0
  %3893 = vmatprep.subr.bf16.mxu0 0
  %3894 = vmatpush1.bf16.msra.mxu0 0
  %3895 = vmatprep.mubr.bf16.mxu0 0
  %3896 = vmatmul.mubr.bf16.gmra.mrb[0].mxu0 %v3861
  %v3897 = vpop.f32.mrb[0].mxu0
  %v3898 = vadd.f32 %v3851, %v3897
  %v3899 = vpop.f32.mrb[0].mxu0
  %v3900 = vpop.f32.mrb[0].mxu0
  %v3901 = vpop.f32.mrb[0].mxu0
  %3902 = vdwg.mxu0
  %v3903 = vadd.f32 %v3898, %v957
  %v3904 = vxor.u32 %v3903, 2147483648
  %v3905 = vmul.f32 %v3904, 1.442695
  %v3906 = vpow.pop %v3905
  %v3907 = vadd.f32 %v3906, 1.0
  %v3908 = vrcp.pop %v3907
  %v3909 = vmul.f32 1.0, %v3908
  %v3910 = vtanh.pop %v3903
  %v3911 = vmul.f32 %v3723, %v3909
  %3913 = vrot.lane.b32.xlu0 %v3910, 64
  %v3914 = vpop.permute.xlu0 %3913
  %v3916 = vmul.f32 %v3909, %v3914
  %3918 = vrot.lane.b32.xlu0 %v3916, 32
  %v3919 = vpop.permute.xlu0 %3918
  %v3921 = vadd.f32 %v3911, %v3919
  %v3922 = vtanh.pop %v3921
  %3924 = vrot.lane.b32.xlu0 %v3922, 64
  %v3925 = vpop.permute.xlu0 %3924
  %v3927 = vmul.f32 %v3909, %v3925
  %3929 = vrot.lane.b32.xlu0 %v3927, 32
  %v3930 = vpop.permute.xlu0 %3929
  %3932 = vst.msk [vmem:[%s8 + $0x1e] sm:$0x3] %vm988, %v3930
  %3933 = vmatprep.subr.bf16.mxu0 0
  %3934 = vmatpush1.bf16.msra.mxu0 %v770
  %3935 = vmatprep.subr.bf16.mxu0 0
  %3936 = vmatpush1.bf16.msra.mxu0 %v771
  %3937 = vmatprep.subr.bf16.mxu0 0
  %3938 = vmatpush1.bf16.msra.mxu0 0
  %3939 = vmatprep.subr.bf16.mxu0 0
  %3940 = vmatpush1.bf16.msra.mxu0 0
  %3941 = vmatprep.subr.bf16.mxu0 0
  %3942 = vmatpush1.bf16.msra.mxu0 0
  %3943 = vmatprep.subr.bf16.mxu0 0
  %3944 = vmatpush1.bf16.msra.mxu0 0
  %3945 = vmatprep.subr.bf16.mxu0 0
  %3946 = vmatpush1.bf16.msra.mxu0 0
  %3947 = vmatprep.subr.bf16.mxu0 0
  %3948 = vmatpush1.bf16.msra.mxu0 0
  %3949 = vmatprep.subr.bf16.mxu0 0
  %3950 = vmatpush1.bf16.msra.mxu0 0
  %3951 = vmatprep.subr.bf16.mxu0 0
  %3952 = vmatpush1.bf16.msra.mxu0 0
  %3953 = vmatprep.subr.bf16.mxu0 0
  %3954 = vmatpush1.bf16.msra.mxu0 0
  %3955 = vmatprep.subr.bf16.mxu0 0
  %3956 = vmatpush1.bf16.msra.mxu0 0
  %3957 = vmatprep.subr.bf16.mxu0 0
  %3958 = vmatpush1.bf16.msra.mxu0 0
  %3959 = vmatprep.subr.bf16.mxu0 0
  %3960 = vmatpush1.bf16.msra.mxu0 0
  %3961 = vmatprep.subr.bf16.mxu0 0
  %3962 = vmatpush1.bf16.msra.mxu0 0
  %3963 = vmatprep.subr.bf16.mxu0 0
  %3964 = vmatpush1.bf16.msra.mxu0 0
  %3965 = vmatprep.mubr.bf16.mxu0 0
  %3966 = vmatmul.mubr.bf16.gmra.mrb[0].mxu0 %v3861
  %v3967 = vpop.f32.mrb[0].mxu0
  %v3968 = vadd.f32 0.0, %v3967
  %v3969 = vpop.f32.mrb[0].mxu0
  %v3970 = vpop.f32.mrb[0].mxu0
  %v3971 = vpop.f32.mrb[0].mxu0
  %3972 = vdwg.mxu0
  %v3973 = vadd.f32 %v732, %v3968
  %v3974 = vxor.u32 %v3973, 2147483648
  %v3975 = vmul.f32 %v3974, 1.442695
  %v3976 = vpow.pop %v3975
  %v3977 = vadd.f32 %v3976, 1.0
  %v3978 = vrcp.pop %v3977
  %v3979 = vmul.f32 1.0, %v3978
  %v3980 = vtanh.pop %v3973
  %v3981 = vmul.f32 %v3800, %v3979
  %3983 = vrot.lane.b32.xlu0 %v3980, 64
  %v3984 = vpop.permute.xlu0 %3983
  %v3986 = vmul.f32 %v3979, %v3984
  %3988 = vrot.lane.b32.xlu0 %v3986, 32
  %v3989 = vpop.permute.xlu0 %3988
  %v3991 = vadd.f32 %v3981, %v3989
  %v3992 = vtanh.pop %v3991
  %3994 = vrot.lane.b32.xlu0 %v3992, 64
  %v3995 = vpop.permute.xlu0 %3994
  %v3997 = vmul.f32 %v3979, %v3995
  %v3998 = vpack.c.bf16 %v3997, %v3997
  %v3999 = vpack.c.bf16 %v3927, %v3927
  %4001 = vrot.lane.b32.xlu0 %v3999, 32
  %v4002 = vpop.permute.xlu0 %4001
  %v4004 = vsel %vm540, %v4002, 0
  %4006 = vmatprep.subr.bf16.mxu0 0
  %4007 = vmatpush1.bf16.msra.mxu0 %v851
  %4008 = vmatprep.subr.bf16.mxu0 0
  %4009 = vmatpush1.bf16.msra.mxu0 %v852
  %4010 = vmatprep.subr.bf16.mxu0 0
  %4011 = vmatpush1.bf16.msra.mxu0 0
  %4012 = vmatprep.subr.bf16.mxu0 0
  %4013 = vmatpush1.bf16.msra.mxu0 0
  %4014 = vmatprep.subr.bf16.mxu0 0
  %4015 = vmatpush1.bf16.msra.mxu0 0
  %4016 = vmatprep.subr.bf16.mxu0 0
  %4017 = vmatpush1.bf16.msra.mxu0 0
  %4018 = vmatprep.subr.bf16.mxu0 0
  %4019 = vmatpush1.bf16.msra.mxu0 0
  %4020 = vmatprep.subr.bf16.mxu0 0
  %4021 = vmatpush1.bf16.msra.mxu0 0
  %4022 = vmatprep.subr.bf16.mxu0 0
  %4023 = vmatpush1.bf16.msra.mxu0 0
  %4024 = vmatprep.subr.bf16.mxu0 0
  %4025 = vmatpush1.bf16.msra.mxu0 0
  %4026 = vmatprep.subr.bf16.mxu0 0
  %4027 = vmatpush1.bf16.msra.mxu0 0
  %4028 = vmatprep.subr.bf16.mxu0 0
  %4029 = vmatpush1.bf16.msra.mxu0 0
  %4030 = vmatprep.subr.bf16.mxu0 0
  %4031 = vmatpush1.bf16.msra.mxu0 0
  %4032 = vmatprep.subr.bf16.mxu0 0
  %4033 = vmatpush1.bf16.msra.mxu0 0
  %4034 = vmatprep.subr.bf16.mxu0 0
  %4035 = vmatpush1.bf16.msra.mxu0 0
  %4036 = vmatprep.subr.bf16.mxu0 0
  %4037 = vmatpush1.bf16.msra.mxu0 0
  %4038 = vmatprep.mubr.bf16.mxu0 0
  %4039 = vmatmul.mubr.bf16.gmra.mrb[0].mxu0 %v4004
  %v4040 = vpop.f32.mrb[0].mxu0
  %v4041 = vadd.f32 0.0, %v4040
  %v4042 = vpop.f32.mrb[0].mxu0
  %v4043 = vpop.f32.mrb[0].mxu0
  %v4044 = vpop.f32.mrb[0].mxu0
  %4045 = vdwg.mxu0
  %4047 = vrot.lane.b32.xlu0 %v3998, 32
  %v4048 = vpop.permute.xlu0 %4047
  %v4050 = vsel %vm540, %v4048, 0
  %4052 = vmatprep.subr.bf16.mxu0 0
  %4053 = vmatpush1.bf16.msra.mxu0 %v906
  %4054 = vmatprep.subr.bf16.mxu0 0
  %4055 = vmatpush1.bf16.msra.mxu0 %v907
  %4056 = vmatprep.subr.bf16.mxu0 0
  %4057 = vmatpush1.bf16.msra.mxu0 0
  %4058 = vmatprep.subr.bf16.mxu0 0
  %4059 = vmatpush1.bf16.msra.mxu0 0
  %4060 = vmatprep.subr.bf16.mxu0 0
  %4061 = vmatpush1.bf16.msra.mxu0 0
  %4062 = vmatprep.subr.bf16.mxu0 0
  %4063 = vmatpush1.bf16.msra.mxu0 0
  %4064 = vmatprep.subr.bf16.mxu0 0
  %4065 = vmatpush1.bf16.msra.mxu0 0
  %4066 = vmatprep.subr.bf16.mxu0 0
  %4067 = vmatpush1.bf16.msra.mxu0 0
  %4068 = vmatprep.subr.bf16.mxu0 0
  %4069 = vmatpush1.bf16.msra.mxu0 0
  %4070 = vmatprep.subr.bf16.mxu0 0
  %4071 = vmatpush1.bf16.msra.mxu0 0
  %4072 = vmatprep.subr.bf16.mxu0 0
  %4073 = vmatpush1.bf16.msra.mxu0 0
  %4074 = vmatprep.subr.bf16.mxu0 0
  %4075 = vmatpush1.bf16.msra.mxu0 0
  %4076 = vmatprep.subr.bf16.mxu0 0
  %4077 = vmatpush1.bf16.msra.mxu0 0
  %4078 = vmatprep.subr.bf16.mxu0 0
  %4079 = vmatpush1.bf16.msra.mxu0 0
  %4080 = vmatprep.subr.bf16.mxu0 0
  %4081 = vmatpush1.bf16.msra.mxu0 0
  %4082 = vmatprep.subr.bf16.mxu0 0
  %4083 = vmatpush1.bf16.msra.mxu0 0
  %4084 = vmatprep.mubr.bf16.mxu0 0
  %4085 = vmatmul.mubr.bf16.gmra.mrb[0].mxu0 %v4050
  %v4086 = vpop.f32.mrb[0].mxu0
  %v4087 = vadd.f32 %v4041, %v4086
  %v4088 = vpop.f32.mrb[0].mxu0
  %v4089 = vpop.f32.mrb[0].mxu0
  %v4090 = vpop.f32.mrb[0].mxu0
  %4091 = vdwg.mxu0
  %v4092 = vadd.f32 %v4087, %v957
  %v4093 = vxor.u32 %v4092, 2147483648
  %v4094 = vmul.f32 %v4093, 1.442695
  %v4095 = vpow.pop %v4094
  %v4096 = vadd.f32 %v4095, 1.0
  %v4097 = vrcp.pop %v4096
  %v4098 = vmul.f32 1.0, %v4097
  %v4099 = vtanh.pop %v4092
  %v4100 = vmul.f32 %v3921, %v4098
  %4102 = vrot.lane.b32.xlu0 %v4099, 64
  %v4103 = vpop.permute.xlu0 %4102
  %v4105 = vmul.f32 %v4098, %v4103
  %4107 = vrot.lane.b32.xlu0 %v4105, 32
  %v4108 = vpop.permute.xlu0 %4107
  %v4110 = vadd.f32 %v4100, %v4108
  %v4111 = vtanh.pop %v4110
  %4113 = vrot.lane.b32.xlu0 %v4111, 64
  %v4114 = vpop.permute.xlu0 %4113
  %v4116 = vmul.f32 %v4098, %v4114
  %4118 = vrot.lane.b32.xlu0 %v4116, 32
  %v4119 = vpop.permute.xlu0 %4118
  %4121 = vst.msk [vmem:[%s8 + $0x20] sm:$0x3] %vm988, %v4119
  %4122 = vmatprep.subr.bf16.mxu0 0
  %4123 = vmatpush1.bf16.msra.mxu0 %v770
  %4124 = vmatprep.subr.bf16.mxu0 0
  %4125 = vmatpush1.bf16.msra.mxu0 %v771
  %4126 = vmatprep.subr.bf16.mxu0 0
  %4127 = vmatpush1.bf16.msra.mxu0 0
  %4128 = vmatprep.subr.bf16.mxu0 0
  %4129 = vmatpush1.bf16.msra.mxu0 0
  %4130 = vmatprep.subr.bf16.mxu0 0
  %4131 = vmatpush1.bf16.msra.mxu0 0
  %4132 = vmatprep.subr.bf16.mxu0 0
  %4133 = vmatpush1.bf16.msra.mxu0 0
  %4134 = vmatprep.subr.bf16.mxu0 0
  %4135 = vmatpush1.bf16.msra.mxu0 0
  %4136 = vmatprep.subr.bf16.mxu0 0
  %4137 = vmatpush1.bf16.msra.mxu0 0
  %4138 = vmatprep.subr.bf16.mxu0 0
  %4139 = vmatpush1.bf16.msra.mxu0 0
  %4140 = vmatprep.subr.bf16.mxu0 0
  %4141 = vmatpush1.bf16.msra.mxu0 0
  %4142 = vmatprep.subr.bf16.mxu0 0
  %4143 = vmatpush1.bf16.msra.mxu0 0
  %4144 = vmatprep.subr.bf16.mxu0 0
  %4145 = vmatpush1.bf16.msra.mxu0 0
  %4146 = vmatprep.subr.bf16.mxu0 0
  %4147 = vmatpush1.bf16.msra.mxu0 0
  %4148 = vmatprep.subr.bf16.mxu0 0
  %4149 = vmatpush1.bf16.msra.mxu0 0
  %4150 = vmatprep.subr.bf16.mxu0 0
  %4151 = vmatpush1.bf16.msra.mxu0 0
  %4152 = vmatprep.subr.bf16.mxu0 0
  %4153 = vmatpush1.bf16.msra.mxu0 0
  %4154 = vmatprep.mubr.bf16.mxu0 0
  %4155 = vmatmul.mubr.bf16.gmra.mrb[0].mxu0 %v4050
  %v4156 = vpop.f32.mrb[0].mxu0
  %v4157 = vadd.f32 0.0, %v4156
  %v4158 = vpop.f32.mrb[0].mxu0
  %v4159 = vpop.f32.mrb[0].mxu0
  %v4160 = vpop.f32.mrb[0].mxu0
  %4161 = vdwg.mxu0
  %v4163 = vrot.slane %v4157, 6
  %v4165 = vadd.f32 %v732, %v4163
  %v4166 = vxor.u32 %v4165, 2147483648
  %v4167 = vmul.f32 %v4166, 1.442695
  %v4168 = vpow.pop %v4167
  %v4169 = vadd.f32 %v4168, 1.0
  %v4170 = vrcp.pop %v4169
  %v4171 = vmul.f32 1.0, %v4170
  %v4172 = vtanh.pop %v4165
  %v4174 = vrot.slane %v4171, 2
  %v4176 = vmul.f32 %v3991, %v4174
  %4178 = vrot.lane.b32.xlu0 %v4172, 64
  %v4179 = vpop.permute.xlu0 %4178
  %v4181 = vmul.f32 %v4171, %v4179
  %v4183 = vrot.slane %v4181, 2
  %4184 = vrot.lane.b32.xlu0 %v4183, 32
  %v4185 = vpop.permute.xlu0 %4184
  %v4187 = vadd.f32 %v4176, %v4185
  %v4188 = vtanh.pop %v4187
  %v4190 = vrot.slane %v4188, 6
  %4191 = vrot.lane.b32.xlu0 %v4190, 64
  %v4192 = vpop.permute.xlu0 %4191
  %v4194 = vmul.f32 %v4171, %v4192
  %v4195 = vpack.c.bf16 %v4194, %v4194
  %v4196 = vpack.c.bf16 %v4116, %v4116
  %4198 = vrot.lane.b32.xlu0 %v4196, 32
  %v4199 = vpop.permute.xlu0 %4198
  %v4201 = vsel %vm540, %v4199, 0
  %4203 = vmatprep.subr.bf16.mxu0 0
  %4204 = vmatpush1.bf16.msra.mxu0 %v851
  %4205 = vmatprep.subr.bf16.mxu0 0
  %4206 = vmatpush1.bf16.msra.mxu0 %v852
  %4207 = vmatprep.subr.bf16.mxu0 0
  %4208 = vmatpush1.bf16.msra.mxu0 0
  %4209 = vmatprep.subr.bf16.mxu0 0
  %4210 = vmatpush1.bf16.msra.mxu0 0
  %4211 = vmatprep.subr.bf16.mxu0 0
  %4212 = vmatpush1.bf16.msra.mxu0 0
  %4213 = vmatprep.subr.bf16.mxu0 0
  %4214 = vmatpush1.bf16.msra.mxu0 0
  %4215 = vmatprep.subr.bf16.mxu0 0
  %4216 = vmatpush1.bf16.msra.mxu0 0
  %4217 = vmatprep.subr.bf16.mxu0 0
  %4218 = vmatpush1.bf16.msra.mxu0 0
  %4219 = vmatprep.subr.bf16.mxu0 0
  %4220 = vmatpush1.bf16.msra.mxu0 0
  %4221 = vmatprep.subr.bf16.mxu0 0
  %4222 = vmatpush1.bf16.msra.mxu0 0
  %4223 = vmatprep.subr.bf16.mxu0 0
  %4224 = vmatpush1.bf16.msra.mxu0 0
  %4225 = vmatprep.subr.bf16.mxu0 0
  %4226 = vmatpush1.bf16.msra.mxu0 0
  %4227 = vmatprep.subr.bf16.mxu0 0
  %4228 = vmatpush1.bf16.msra.mxu0 0
  %4229 = vmatprep.subr.bf16.mxu0 0
  %4230 = vmatpush1.bf16.msra.mxu0 0
  %4231 = vmatprep.subr.bf16.mxu0 0
  %4232 = vmatpush1.bf16.msra.mxu0 0
  %4233 = vmatprep.subr.bf16.mxu0 0
  %4234 = vmatpush1.bf16.msra.mxu0 0
  %4235 = vmatprep.mubr.bf16.mxu0 0
  %4236 = vmatmul.mubr.bf16.gmra.mrb[0].mxu0 %v4201
  %v4237 = vpop.f32.mrb[0].mxu0
  %v4238 = vadd.f32 0.0, %v4237
  %v4239 = vpop.f32.mrb[0].mxu0
  %v4240 = vpop.f32.mrb[0].mxu0
  %v4241 = vpop.f32.mrb[0].mxu0
  %4242 = vdwg.mxu0
  %v4244 = vrot.slane %v4195, 1
  %4245 = vrot.lane.b32.xlu0 %v4244, 32
  %v4246 = vpop.permute.xlu0 %4245
  %v4248 = vsel %vm540, %v4246, 0
  %4250 = vmatprep.subr.bf16.mxu0 0
  %4251 = vmatpush1.bf16.msra.mxu0 %v906
  %4252 = vmatprep.subr.bf16.mxu0 0
  %4253 = vmatpush1.bf16.msra.mxu0 %v907
  %4254 = vmatprep.subr.bf16.mxu0 0
  %4255 = vmatpush1.bf16.msra.mxu0 0
  %4256 = vmatprep.subr.bf16.mxu0 0
  %4257 = vmatpush1.bf16.msra.mxu0 0
  %4258 = vmatprep.subr.bf16.mxu0 0
  %4259 = vmatpush1.bf16.msra.mxu0 0
  %4260 = vmatprep.subr.bf16.mxu0 0
  %4261 = vmatpush1.bf16.msra.mxu0 0
  %4262 = vmatprep.subr.bf16.mxu0 0
  %4263 = vmatpush1.bf16.msra.mxu0 0
  %4264 = vmatprep.subr.bf16.mxu0 0
  %4265 = vmatpush1.bf16.msra.mxu0 0
  %4266 = vmatprep.subr.bf16.mxu0 0
  %4267 = vmatpush1.bf16.msra.mxu0 0
  %4268 = vmatprep.subr.bf16.mxu0 0
  %4269 = vmatpush1.bf16.msra.mxu0 0
  %4270 = vmatprep.subr.bf16.mxu0 0
  %4271 = vmatpush1.bf16.msra.mxu0 0
  %4272 = vmatprep.subr.bf16.mxu0 0
  %4273 = vmatpush1.bf16.msra.mxu0 0
  %4274 = vmatprep.subr.bf16.mxu0 0
  %4275 = vmatpush1.bf16.msra.mxu0 0
  %4276 = vmatprep.subr.bf16.mxu0 0
  %4277 = vmatpush1.bf16.msra.mxu0 0
  %4278 = vmatprep.subr.bf16.mxu0 0
  %4279 = vmatpush1.bf16.msra.mxu0 0
  %4280 = vmatprep.subr.bf16.mxu0 0
  %4281 = vmatpush1.bf16.msra.mxu0 0
  %4282 = vmatprep.mubr.bf16.mxu0 0
  %4283 = vmatmul.mubr.bf16.gmra.mrb[0].mxu0 %v4248
  %v4284 = vpop.f32.mrb[0].mxu0
  %v4285 = vadd.f32 %v4238, %v4284
  %v4286 = vpop.f32.mrb[0].mxu0
  %v4287 = vpop.f32.mrb[0].mxu0
  %v4288 = vpop.f32.mrb[0].mxu0
  %4289 = vdwg.mxu0
  %v4290 = vadd.f32 %v4285, %v957
  %v4291 = vxor.u32 %v4290, 2147483648
  %v4292 = vmul.f32 %v4291, 1.442695
  %v4293 = vpow.pop %v4292
  %v4294 = vadd.f32 %v4293, 1.0
  %v4295 = vrcp.pop %v4294
  %v4296 = vmul.f32 1.0, %v4295
  %v4297 = vtanh.pop %v4290
  %v4298 = vmul.f32 %v4110, %v4296
  %4300 = vrot.lane.b32.xlu0 %v4297, 64
  %v4301 = vpop.permute.xlu0 %4300
  %v4303 = vmul.f32 %v4296, %v4301
  %4305 = vrot.lane.b32.xlu0 %v4303, 32
  %v4306 = vpop.permute.xlu0 %4305
  %v4308 = vadd.f32 %v4298, %v4306
  %v4309 = vtanh.pop %v4308
  %4311 = vrot.lane.b32.xlu0 %v4309, 64
  %v4312 = vpop.permute.xlu0 %4311
  %v4314 = vmul.f32 %v4296, %v4312
  %4316 = vrot.lane.b32.xlu0 %v4314, 32
  %v4317 = vpop.permute.xlu0 %4316
  %4319 = vst.msk [vmem:[%s8 + $0x22] sm:$0x3] %vm988, %v4317
  %4320 = vmatprep.subr.bf16.mxu0 0
  %4321 = vmatpush1.bf16.msra.mxu0 %v770
  %4322 = vmatprep.subr.bf16.mxu0 0
  %4323 = vmatpush1.bf16.msra.mxu0 %v771
  %4324 = vmatprep.subr.bf16.mxu0 0
  %4325 = vmatpush1.bf16.msra.mxu0 0
  %4326 = vmatprep.subr.bf16.mxu0 0
  %4327 = vmatpush1.bf16.msra.mxu0 0
  %4328 = vmatprep.subr.bf16.mxu0 0
  %4329 = vmatpush1.bf16.msra.mxu0 0
  %4330 = vmatprep.subr.bf16.mxu0 0
  %4331 = vmatpush1.bf16.msra.mxu0 0
  %4332 = vmatprep.subr.bf16.mxu0 0
  %4333 = vmatpush1.bf16.msra.mxu0 0
  %4334 = vmatprep.subr.bf16.mxu0 0
  %4335 = vmatpush1.bf16.msra.mxu0 0
  %4336 = vmatprep.subr.bf16.mxu0 0
  %4337 = vmatpush1.bf16.msra.mxu0 0
  %4338 = vmatprep.subr.bf16.mxu0 0
  %4339 = vmatpush1.bf16.msra.mxu0 0
  %4340 = vmatprep.subr.bf16.mxu0 0
  %4341 = vmatpush1.bf16.msra.mxu0 0
  %4342 = vmatprep.subr.bf16.mxu0 0
  %4343 = vmatpush1.bf16.msra.mxu0 0
  %4344 = vmatprep.subr.bf16.mxu0 0
  %4345 = vmatpush1.bf16.msra.mxu0 0
  %4346 = vmatprep.subr.bf16.mxu0 0
  %4347 = vmatpush1.bf16.msra.mxu0 0
  %4348 = vmatprep.subr.bf16.mxu0 0
  %4349 = vmatpush1.bf16.msra.mxu0 0
  %4350 = vmatprep.subr.bf16.mxu0 0
  %4351 = vmatpush1.bf16.msra.mxu0 0
  %4352 = vmatprep.mubr.bf16.mxu0 0
  %4353 = vmatmul.mubr.bf16.gmra.mrb[0].mxu0 %v4248
  %v4354 = vpop.f32.mrb[0].mxu0
  %v4355 = vadd.f32 0.0, %v4354
  %v4356 = vpop.f32.mrb[0].mxu0
  %v4357 = vpop.f32.mrb[0].mxu0
  %v4358 = vpop.f32.mrb[0].mxu0
  %4359 = vdwg.mxu0
  %v4361 = vrot.slane %v4355, 4
  %v4363 = vadd.f32 %v732, %v4361
  %v4364 = vxor.u32 %v4363, 2147483648
  %v4365 = vmul.f32 %v4364, 1.442695
  %v4366 = vpow.pop %v4365
  %v4367 = vadd.f32 %v4366, 1.0
  %v4368 = vrcp.pop %v4367
  %v4369 = vmul.f32 1.0, %v4368
  %v4370 = vtanh.pop %v4363
  %v4372 = vrot.slane %v4369, 4
  %v4374 = vmul.f32 %v4187, %v4372
  %4376 = vrot.lane.b32.xlu0 %v4370, 64
  %v4377 = vpop.permute.xlu0 %4376
  %v4379 = vmul.f32 %v4369, %v4377
  %v4381 = vrot.slane %v4379, 4
  %4382 = vrot.lane.b32.xlu0 %v4381, 32
  %v4383 = vpop.permute.xlu0 %4382
  %v4385 = vadd.f32 %v4374, %v4383
  %v4386 = vtanh.pop %v4385
  %v4388 = vrot.slane %v4386, 4
  %4389 = vrot.lane.b32.xlu0 %v4388, 64
  %v4390 = vpop.permute.xlu0 %4389
  %v4392 = vmul.f32 %v4369, %v4390
  %v4393 = vpack.c.bf16 %v4392, %v4392
  %v4394 = vpack.c.bf16 %v4314, %v4314
  %4396 = vrot.lane.b32.xlu0 %v4394, 32
  %v4397 = vpop.permute.xlu0 %4396
  %v4399 = vsel %vm540, %v4397, 0
  %4401 = vmatprep.subr.bf16.mxu0 0
  %4402 = vmatpush1.bf16.msra.mxu0 %v851
  %4403 = vmatprep.subr.bf16.mxu0 0
  %4404 = vmatpush1.bf16.msra.mxu0 %v852
  %4405 = vmatprep.subr.bf16.mxu0 0
  %4406 = vmatpush1.bf16.msra.mxu0 0
  %4407 = vmatprep.subr.bf16.mxu0 0
  %4408 = vmatpush1.bf16.msra.mxu0 0
  %4409 = vmatprep.subr.bf16.mxu0 0
  %4410 = vmatpush1.bf16.msra.mxu0 0
  %4411 = vmatprep.subr.bf16.mxu0 0
  %4412 = vmatpush1.bf16.msra.mxu0 0
  %4413 = vmatprep.subr.bf16.mxu0 0
  %4414 = vmatpush1.bf16.msra.mxu0 0
  %4415 = vmatprep.subr.bf16.mxu0 0
  %4416 = vmatpush1.bf16.msra.mxu0 0
  %4417 = vmatprep.subr.bf16.mxu0 0
  %4418 = vmatpush1.bf16.msra.mxu0 0
  %4419 = vmatprep.subr.bf16.mxu0 0
  %4420 = vmatpush1.bf16.msra.mxu0 0
  %4421 = vmatprep.subr.bf16.mxu0 0
  %4422 = vmatpush1.bf16.msra.mxu0 0
  %4423 = vmatprep.subr.bf16.mxu0 0
  %4424 = vmatpush1.bf16.msra.mxu0 0
  %4425 = vmatprep.subr.bf16.mxu0 0
  %4426 = vmatpush1.bf16.msra.mxu0 0
  %4427 = vmatprep.subr.bf16.mxu0 0
  %4428 = vmatpush1.bf16.msra.mxu0 0
  %4429 = vmatprep.subr.bf16.mxu0 0
  %4430 = vmatpush1.bf16.msra.mxu0 0
  %4431 = vmatprep.subr.bf16.mxu0 0
  %4432 = vmatpush1.bf16.msra.mxu0 0
  %4433 = vmatprep.mubr.bf16.mxu0 0
  %4434 = vmatmul.mubr.bf16.gmra.mrb[0].mxu0 %v4399
  %v4435 = vpop.f32.mrb[0].mxu0
  %v4436 = vadd.f32 0.0, %v4435
  %v4437 = vpop.f32.mrb[0].mxu0
  %v4438 = vpop.f32.mrb[0].mxu0
  %v4439 = vpop.f32.mrb[0].mxu0
  %4440 = vdwg.mxu0
  %v4442 = vrot.slane %v4393, 2
  %4443 = vrot.lane.b32.xlu0 %v4442, 32
  %v4444 = vpop.permute.xlu0 %4443
  %v4446 = vsel %vm540, %v4444, 0
  %4448 = vmatprep.subr.bf16.mxu0 0
  %4449 = vmatpush1.bf16.msra.mxu0 %v906
  %4450 = vmatprep.subr.bf16.mxu0 0
  %4451 = vmatpush1.bf16.msra.mxu0 %v907
  %4452 = vmatprep.subr.bf16.mxu0 0
  %4453 = vmatpush1.bf16.msra.mxu0 0
  %4454 = vmatprep.subr.bf16.mxu0 0
  %4455 = vmatpush1.bf16.msra.mxu0 0
  %4456 = vmatprep.subr.bf16.mxu0 0
  %4457 = vmatpush1.bf16.msra.mxu0 0
  %4458 = vmatprep.subr.bf16.mxu0 0
  %4459 = vmatpush1.bf16.msra.mxu0 0
  %4460 = vmatprep.subr.bf16.mxu0 0
  %4461 = vmatpush1.bf16.msra.mxu0 0
  %4462 = vmatprep.subr.bf16.mxu0 0
  %4463 = vmatpush1.bf16.msra.mxu0 0
  %4464 = vmatprep.subr.bf16.mxu0 0
  %4465 = vmatpush1.bf16.msra.mxu0 0
  %4466 = vmatprep.subr.bf16.mxu0 0
  %4467 = vmatpush1.bf16.msra.mxu0 0
  %4468 = vmatprep.subr.bf16.mxu0 0
  %4469 = vmatpush1.bf16.msra.mxu0 0
  %4470 = vmatprep.subr.bf16.mxu0 0
  %4471 = vmatpush1.bf16.msra.mxu0 0
  %4472 = vmatprep.subr.bf16.mxu0 0
  %4473 = vmatpush1.bf16.msra.mxu0 0
  %4474 = vmatprep.subr.bf16.mxu0 0
  %4475 = vmatpush1.bf16.msra.mxu0 0
  %4476 = vmatprep.subr.bf16.mxu0 0
  %4477 = vmatpush1.bf16.msra.mxu0 0
  %4478 = vmatprep.subr.bf16.mxu0 0
  %4479 = vmatpush1.bf16.msra.mxu0 0
  %4480 = vmatprep.mubr.bf16.mxu0 0
  %4481 = vmatmul.mubr.bf16.gmra.mrb[0].mxu0 %v4446
  %v4482 = vpop.f32.mrb[0].mxu0
  %v4483 = vadd.f32 %v4436, %v4482
  %v4484 = vpop.f32.mrb[0].mxu0
  %v4485 = vpop.f32.mrb[0].mxu0
  %v4486 = vpop.f32.mrb[0].mxu0
  %4487 = vdwg.mxu0
  %v4488 = vadd.f32 %v4483, %v957
  %v4489 = vxor.u32 %v4488, 2147483648
  %v4490 = vmul.f32 %v4489, 1.442695
  %v4491 = vpow.pop %v4490
  %v4492 = vadd.f32 %v4491, 1.0
  %v4493 = vrcp.pop %v4492
  %v4494 = vmul.f32 1.0, %v4493
  %v4495 = vtanh.pop %v4488
  %v4496 = vmul.f32 %v4308, %v4494
  %4498 = vrot.lane.b32.xlu0 %v4495, 64
  %v4499 = vpop.permute.xlu0 %4498
  %v4501 = vmul.f32 %v4494, %v4499
  %4503 = vrot.lane.b32.xlu0 %v4501, 32
  %v4504 = vpop.permute.xlu0 %4503
  %v4506 = vadd.f32 %v4496, %v4504
  %v4507 = vtanh.pop %v4506
  %4509 = vrot.lane.b32.xlu0 %v4507, 64
  %v4510 = vpop.permute.xlu0 %4509
  %v4512 = vmul.f32 %v4494, %v4510
  %4514 = vrot.lane.b32.xlu0 %v4512, 32
  %v4515 = vpop.permute.xlu0 %4514
  %4517 = vst.msk [vmem:[%s8 + $0x24] sm:$0x3] %vm988, %v4515
  %4518 = vmatprep.subr.bf16.mxu0 0
  %4519 = vmatpush1.bf16.msra.mxu0 %v770
  %4520 = vmatprep.subr.bf16.mxu0 0
  %4521 = vmatpush1.bf16.msra.mxu0 %v771
  %4522 = vmatprep.subr.bf16.mxu0 0
  %4523 = vmatpush1.bf16.msra.mxu0 0
  %4524 = vmatprep.subr.bf16.mxu0 0
  %4525 = vmatpush1.bf16.msra.mxu0 0
  %4526 = vmatprep.subr.bf16.mxu0 0
  %4527 = vmatpush1.bf16.msra.mxu0 0
  %4528 = vmatprep.subr.bf16.mxu0 0
  %4529 = vmatpush1.bf16.msra.mxu0 0
  %4530 = vmatprep.subr.bf16.mxu0 0
  %4531 = vmatpush1.bf16.msra.mxu0 0
  %4532 = vmatprep.subr.bf16.mxu0 0
  %4533 = vmatpush1.bf16.msra.mxu0 0
  %4534 = vmatprep.subr.bf16.mxu0 0
  %4535 = vmatpush1.bf16.msra.mxu0 0
  %4536 = vmatprep.subr.bf16.mxu0 0
  %4537 = vmatpush1.bf16.msra.mxu0 0
  %4538 = vmatprep.subr.bf16.mxu0 0
  %4539 = vmatpush1.bf16.msra.mxu0 0
  %4540 = vmatprep.subr.bf16.mxu0 0
  %4541 = vmatpush1.bf16.msra.mxu0 0
  %4542 = vmatprep.subr.bf16.mxu0 0
  %4543 = vmatpush1.bf16.msra.mxu0 0
  %4544 = vmatprep.subr.bf16.mxu0 0
  %4545 = vmatpush1.bf16.msra.mxu0 0
  %4546 = vmatprep.subr.bf16.mxu0 0
  %4547 = vmatpush1.bf16.msra.mxu0 0
  %4548 = vmatprep.subr.bf16.mxu0 0
  %4549 = vmatpush1.bf16.msra.mxu0 0
  %4550 = vmatprep.mubr.bf16.mxu0 0
  %4551 = vmatmul.mubr.bf16.gmra.mrb[0].mxu0 %v4446
  %v4552 = vpop.f32.mrb[0].mxu0
  %v4553 = vadd.f32 0.0, %v4552
  %v4554 = vpop.f32.mrb[0].mxu0
  %v4555 = vpop.f32.mrb[0].mxu0
  %v4556 = vpop.f32.mrb[0].mxu0
  %4557 = vdwg.mxu0
  %v4559 = vrot.slane %v4553, 2
  %v4561 = vadd.f32 %v732, %v4559
  %v4562 = vxor.u32 %v4561, 2147483648
  %v4563 = vmul.f32 %v4562, 1.442695
  %v4564 = vpow.pop %v4563
  %v4565 = vadd.f32 %v4564, 1.0
  %v4566 = vrcp.pop %v4565
  %v4567 = vmul.f32 1.0, %v4566
  %v4568 = vtanh.pop %v4561
  %v4570 = vrot.slane %v4567, 6
  %v4572 = vmul.f32 %v4385, %v4570
  %4574 = vrot.lane.b32.xlu0 %v4568, 64
  %v4575 = vpop.permute.xlu0 %4574
  %v4577 = vmul.f32 %v4567, %v4575
  %v4579 = vrot.slane %v4577, 6
  %4580 = vrot.lane.b32.xlu0 %v4579, 32
  %v4581 = vpop.permute.xlu0 %4580
  %v4583 = vadd.f32 %v4572, %v4581
  %v4584 = vtanh.pop %v4583
  %v4586 = vrot.slane %v4584, 2
  %4587 = vrot.lane.b32.xlu0 %v4586, 64
  %v4588 = vpop.permute.xlu0 %4587
  %v4590 = vmul.f32 %v4567, %v4588
  %v4591 = vpack.c.bf16 %v4590, %v4590
  %v4592 = vpack.c.bf16 %v4512, %v4512
  %4594 = vrot.lane.b32.xlu0 %v4592, 32
  %v4595 = vpop.permute.xlu0 %4594
  %v4597 = vsel %vm540, %v4595, 0
  %4599 = vmatprep.subr.bf16.mxu0 0
  %4600 = vmatpush1.bf16.msra.mxu0 %v851
  %4601 = vmatprep.subr.bf16.mxu0 0
  %4602 = vmatpush1.bf16.msra.mxu0 %v852
  %4603 = vmatprep.subr.bf16.mxu0 0
  %4604 = vmatpush1.bf16.msra.mxu0 0
  %4605 = vmatprep.subr.bf16.mxu0 0
  %4606 = vmatpush1.bf16.msra.mxu0 0
  %4607 = vmatprep.subr.bf16.mxu0 0
  %4608 = vmatpush1.bf16.msra.mxu0 0
  %4609 = vmatprep.subr.bf16.mxu0 0
  %4610 = vmatpush1.bf16.msra.mxu0 0
  %4611 = vmatprep.subr.bf16.mxu0 0
  %4612 = vmatpush1.bf16.msra.mxu0 0
  %4613 = vmatprep.subr.bf16.mxu0 0
  %4614 = vmatpush1.bf16.msra.mxu0 0
  %4615 = vmatprep.subr.bf16.mxu0 0
  %4616 = vmatpush1.bf16.msra.mxu0 0
  %4617 = vmatprep.subr.bf16.mxu0 0
  %4618 = vmatpush1.bf16.msra.mxu0 0
  %4619 = vmatprep.subr.bf16.mxu0 0
  %4620 = vmatpush1.bf16.msra.mxu0 0
  %4621 = vmatprep.subr.bf16.mxu0 0
  %4622 = vmatpush1.bf16.msra.mxu0 0
  %4623 = vmatprep.subr.bf16.mxu0 0
  %4624 = vmatpush1.bf16.msra.mxu0 0
  %4625 = vmatprep.subr.bf16.mxu0 0
  %4626 = vmatpush1.bf16.msra.mxu0 0
  %4627 = vmatprep.subr.bf16.mxu0 0
  %4628 = vmatpush1.bf16.msra.mxu0 0
  %4629 = vmatprep.subr.bf16.mxu0 0
  %4630 = vmatpush1.bf16.msra.mxu0 0
  %4631 = vmatprep.mubr.bf16.mxu0 0
  %4632 = vmatmul.mubr.bf16.gmra.mrb[0].mxu0 %v4597
  %v4633 = vpop.f32.mrb[0].mxu0
  %v4634 = vadd.f32 0.0, %v4633
  %v4635 = vpop.f32.mrb[0].mxu0
  %v4636 = vpop.f32.mrb[0].mxu0
  %v4637 = vpop.f32.mrb[0].mxu0
  %4638 = vdwg.mxu0
  %v4640 = vrot.slane %v4591, 3
  %4641 = vrot.lane.b32.xlu0 %v4640, 32
  %v4642 = vpop.permute.xlu0 %4641
  %v4644 = vsel %vm540, %v4642, 0
  %4646 = vmatprep.subr.bf16.mxu0 0
  %4647 = vmatpush1.bf16.msra.mxu0 %v906
  %4648 = vmatprep.subr.bf16.mxu0 0
  %4649 = vmatpush1.bf16.msra.mxu0 %v907
  %4650 = vmatprep.subr.bf16.mxu0 0
  %4651 = vmatpush1.bf16.msra.mxu0 0
  %4652 = vmatprep.subr.bf16.mxu0 0
  %4653 = vmatpush1.bf16.msra.mxu0 0
  %4654 = vmatprep.subr.bf16.mxu0 0
  %4655 = vmatpush1.bf16.msra.mxu0 0
  %4656 = vmatprep.subr.bf16.mxu0 0
  %4657 = vmatpush1.bf16.msra.mxu0 0
  %4658 = vmatprep.subr.bf16.mxu0 0
  %4659 = vmatpush1.bf16.msra.mxu0 0
  %4660 = vmatprep.subr.bf16.mxu0 0
  %4661 = vmatpush1.bf16.msra.mxu0 0
  %4662 = vmatprep.subr.bf16.mxu0 0
  %4663 = vmatpush1.bf16.msra.mxu0 0
  %4664 = vmatprep.subr.bf16.mxu0 0
  %4665 = vmatpush1.bf16.msra.mxu0 0
  %4666 = vmatprep.subr.bf16.mxu0 0
  %4667 = vmatpush1.bf16.msra.mxu0 0
  %4668 = vmatprep.subr.bf16.mxu0 0
  %4669 = vmatpush1.bf16.msra.mxu0 0
  %4670 = vmatprep.subr.bf16.mxu0 0
  %4671 = vmatpush1.bf16.msra.mxu0 0
  %4672 = vmatprep.subr.bf16.mxu0 0
  %4673 = vmatpush1.bf16.msra.mxu0 0
  %4674 = vmatprep.subr.bf16.mxu0 0
  %4675 = vmatpush1.bf16.msra.mxu0 0
  %4676 = vmatprep.subr.bf16.mxu0 0
  %4677 = vmatpush1.bf16.msra.mxu0 0
  %4678 = vmatprep.mubr.bf16.mxu0 0
  %4679 = vmatmul.mubr.bf16.gmra.mrb[0].mxu0 %v4644
  %v4680 = vpop.f32.mrb[0].mxu0
  %v4681 = vadd.f32 %v4634, %v4680
  %v4682 = vpop.f32.mrb[0].mxu0
  %v4683 = vpop.f32.mrb[0].mxu0
  %v4684 = vpop.f32.mrb[0].mxu0
  %4685 = vdwg.mxu0
  %v4686 = vadd.f32 %v4681, %v957
  %v4687 = vxor.u32 %v4686, 2147483648
  %v4688 = vmul.f32 %v4687, 1.442695
  %v4689 = vpow.pop %v4688
  %v4690 = vadd.f32 %v4689, 1.0
  %v4691 = vrcp.pop %v4690
  %v4692 = vmul.f32 1.0, %v4691
  %v4693 = vtanh.pop %v4686
  %v4694 = vmul.f32 %v4506, %v4692
  %4696 = vrot.lane.b32.xlu0 %v4693, 64
  %v4697 = vpop.permute.xlu0 %4696
  %v4699 = vmul.f32 %v4692, %v4697
  %4701 = vrot.lane.b32.xlu0 %v4699, 32
  %v4702 = vpop.permute.xlu0 %4701
  %v4704 = vadd.f32 %v4694, %v4702
  %v4705 = vtanh.pop %v4704
  %4707 = vrot.lane.b32.xlu0 %v4705, 64
  %v4708 = vpop.permute.xlu0 %4707
  %v4710 = vmul.f32 %v4692, %v4708
  %4712 = vrot.lane.b32.xlu0 %v4710, 32
  %v4713 = vpop.permute.xlu0 %4712
  %4715 = vst.msk [vmem:[%s8 + $0x26] sm:$0x3] %vm988, %v4713
  %4716 = vmatprep.subr.bf16.mxu0 0
  %4717 = vmatpush1.bf16.msra.mxu0 %v770
  %4718 = vmatprep.subr.bf16.mxu0 0
  %4719 = vmatpush1.bf16.msra.mxu0 %v771
  %4720 = vmatprep.subr.bf16.mxu0 0
  %4721 = vmatpush1.bf16.msra.mxu0 0
  %4722 = vmatprep.subr.bf16.mxu0 0
  %4723 = vmatpush1.bf16.msra.mxu0 0
  %4724 = vmatprep.subr.bf16.mxu0 0
  %4725 = vmatpush1.bf16.msra.mxu0 0
  %4726 = vmatprep.subr.bf16.mxu0 0
  %4727 = vmatpush1.bf16.msra.mxu0 0
  %4728 = vmatprep.subr.bf16.mxu0 0
  %4729 = vmatpush1.bf16.msra.mxu0 0
  %4730 = vmatprep.subr.bf16.mxu0 0
  %4731 = vmatpush1.bf16.msra.mxu0 0
  %4732 = vmatprep.subr.bf16.mxu0 0
  %4733 = vmatpush1.bf16.msra.mxu0 0
  %4734 = vmatprep.subr.bf16.mxu0 0
  %4735 = vmatpush1.bf16.msra.mxu0 0
  %4736 = vmatprep.subr.bf16.mxu0 0
  %4737 = vmatpush1.bf16.msra.mxu0 0
  %4738 = vmatprep.subr.bf16.mxu0 0
  %4739 = vmatpush1.bf16.msra.mxu0 0
  %4740 = vmatprep.subr.bf16.mxu0 0
  %4741 = vmatpush1.bf16.msra.mxu0 0
  %4742 = vmatprep.subr.bf16.mxu0 0
  %4743 = vmatpush1.bf16.msra.mxu0 0
  %4744 = vmatprep.subr.bf16.mxu0 0
  %4745 = vmatpush1.bf16.msra.mxu0 0
  %4746 = vmatprep.subr.bf16.mxu0 0
  %4747 = vmatpush1.bf16.msra.mxu0 0
  %4748 = vmatprep.mubr.bf16.mxu0 0
  %4749 = vmatmul.mubr.bf16.gmra.mrb[0].mxu0 %v4644
  %v4750 = vpop.f32.mrb[0].mxu0
  %v4751 = vadd.f32 0.0, %v4750
  %v4752 = vpop.f32.mrb[0].mxu0
  %v4753 = vpop.f32.mrb[0].mxu0
  %v4754 = vpop.f32.mrb[0].mxu0
  %4755 = vdwg.mxu0
  %v4756 = vadd.f32 %v735, %v4751
  %v4757 = vxor.u32 %v4756, 2147483648
  %v4758 = vmul.f32 %v4757, 1.442695
  %v4759 = vpow.pop %v4758
  %v4760 = vadd.f32 %v4759, 1.0
  %v4761 = vrcp.pop %v4760
  %v4762 = vmul.f32 1.0, %v4761
  %v4763 = vtanh.pop %v4756
  %v4764 = vmul.f32 %v4583, %v4762
  %4766 = vrot.lane.b32.xlu0 %v4763, 64
  %v4767 = vpop.permute.xlu0 %4766
  %v4769 = vmul.f32 %v4762, %v4767
  %4771 = vrot.lane.b32.xlu0 %v4769, 32
  %v4772 = vpop.permute.xlu0 %4771
  %v4774 = vadd.f32 %v4764, %v4772
  %v4775 = vtanh.pop %v4774
  %4777 = vrot.lane.b32.xlu0 %v4775, 64
  %v4778 = vpop.permute.xlu0 %4777
  %v4780 = vmul.f32 %v4762, %v4778
  %v4781 = vpack.c.bf16 %v4780, %v4780
  %v4782 = vpack.c.bf16 %v4710, %v4710
  %4784 = vrot.lane.b32.xlu0 %v4782, 32
  %v4785 = vpop.permute.xlu0 %4784
  %v4787 = vsel %vm540, %v4785, 0
  %4789 = vmatprep.subr.bf16.mxu0 0
  %4790 = vmatpush1.bf16.msra.mxu0 %v851
  %4791 = vmatprep.subr.bf16.mxu0 0
  %4792 = vmatpush1.bf16.msra.mxu0 %v852
  %4793 = vmatprep.subr.bf16.mxu0 0
  %4794 = vmatpush1.bf16.msra.mxu0 0
  %4795 = vmatprep.subr.bf16.mxu0 0
  %4796 = vmatpush1.bf16.msra.mxu0 0
  %4797 = vmatprep.subr.bf16.mxu0 0
  %4798 = vmatpush1.bf16.msra.mxu0 0
  %4799 = vmatprep.subr.bf16.mxu0 0
  %4800 = vmatpush1.bf16.msra.mxu0 0
  %4801 = vmatprep.subr.bf16.mxu0 0
  %4802 = vmatpush1.bf16.msra.mxu0 0
  %4803 = vmatprep.subr.bf16.mxu0 0
  %4804 = vmatpush1.bf16.msra.mxu0 0
  %4805 = vmatprep.subr.bf16.mxu0 0
  %4806 = vmatpush1.bf16.msra.mxu0 0
  %4807 = vmatprep.subr.bf16.mxu0 0
  %4808 = vmatpush1.bf16.msra.mxu0 0
  %4809 = vmatprep.subr.bf16.mxu0 0
  %4810 = vmatpush1.bf16.msra.mxu0 0
  %4811 = vmatprep.subr.bf16.mxu0 0
  %4812 = vmatpush1.bf16.msra.mxu0 0
  %4813 = vmatprep.subr.bf16.mxu0 0
  %4814 = vmatpush1.bf16.msra.mxu0 0
  %4815 = vmatprep.subr.bf16.mxu0 0
  %4816 = vmatpush1.bf16.msra.mxu0 0
  %4817 = vmatprep.subr.bf16.mxu0 0
  %4818 = vmatpush1.bf16.msra.mxu0 0
  %4819 = vmatprep.subr.bf16.mxu0 0
  %4820 = vmatpush1.bf16.msra.mxu0 0
  %4821 = vmatprep.mubr.bf16.mxu0 0
  %4822 = vmatmul.mubr.bf16.gmra.mrb[0].mxu0 %v4787
  %v4823 = vpop.f32.mrb[0].mxu0
  %v4824 = vadd.f32 0.0, %v4823
  %v4825 = vpop.f32.mrb[0].mxu0
  %v4826 = vpop.f32.mrb[0].mxu0
  %v4827 = vpop.f32.mrb[0].mxu0
  %4828 = vdwg.mxu0
  %4830 = vrot.lane.b32.xlu0 %v4781, 32
  %v4831 = vpop.permute.xlu0 %4830
  %v4833 = vsel %vm540, %v4831, 0
  %4835 = vmatprep.subr.bf16.mxu0 0
  %4836 = vmatpush1.bf16.msra.mxu0 %v906
  %4837 = vmatprep.subr.bf16.mxu0 0
  %4838 = vmatpush1.bf16.msra.mxu0 %v907
  %4839 = vmatprep.subr.bf16.mxu0 0
  %4840 = vmatpush1.bf16.msra.mxu0 0
  %4841 = vmatprep.subr.bf16.mxu0 0
  %4842 = vmatpush1.bf16.msra.mxu0 0
  %4843 = vmatprep.subr.bf16.mxu0 0
  %4844 = vmatpush1.bf16.msra.mxu0 0
  %4845 = vmatprep.subr.bf16.mxu0 0
  %4846 = vmatpush1.bf16.msra.mxu0 0
  %4847 = vmatprep.subr.bf16.mxu0 0
  %4848 = vmatpush1.bf16.msra.mxu0 0
  %4849 = vmatprep.subr.bf16.mxu0 0
  %4850 = vmatpush1.bf16.msra.mxu0 0
  %4851 = vmatprep.subr.bf16.mxu0 0
  %4852 = vmatpush1.bf16.msra.mxu0 0
  %4853 = vmatprep.subr.bf16.mxu0 0
  %4854 = vmatpush1.bf16.msra.mxu0 0
  %4855 = vmatprep.subr.bf16.mxu0 0
  %4856 = vmatpush1.bf16.msra.mxu0 0
  %4857 = vmatprep.subr.bf16.mxu0 0
  %4858 = vmatpush1.bf16.msra.mxu0 0
  %4859 = vmatprep.subr.bf16.mxu0 0
  %4860 = vmatpush1.bf16.msra.mxu0 0
  %4861 = vmatprep.subr.bf16.mxu0 0
  %4862 = vmatpush1.bf16.msra.mxu0 0
  %4863 = vmatprep.subr.bf16.mxu0 0
  %4864 = vmatpush1.bf16.msra.mxu0 0
  %4865 = vmatprep.subr.bf16.mxu0 0
  %4866 = vmatpush1.bf16.msra.mxu0 0
  %4867 = vmatprep.mubr.bf16.mxu0 0
  %4868 = vmatmul.mubr.bf16.gmra.mrb[0].mxu0 %v4833
  %v4869 = vpop.f32.mrb[0].mxu0
  %v4870 = vadd.f32 %v4824, %v4869
  %v4871 = vpop.f32.mrb[0].mxu0
  %v4872 = vpop.f32.mrb[0].mxu0
  %v4873 = vpop.f32.mrb[0].mxu0
  %4874 = vdwg.mxu0
  %v4875 = vadd.f32 %v4870, %v957
  %v4876 = vxor.u32 %v4875, 2147483648
  %v4877 = vmul.f32 %v4876, 1.442695
  %v4878 = vpow.pop %v4877
  %v4879 = vadd.f32 %v4878, 1.0
  %v4880 = vrcp.pop %v4879
  %v4881 = vmul.f32 1.0, %v4880
  %v4882 = vtanh.pop %v4875
  %v4883 = vmul.f32 %v4704, %v4881
  %4885 = vrot.lane.b32.xlu0 %v4882, 64
  %v4886 = vpop.permute.xlu0 %4885
  %v4888 = vmul.f32 %v4881, %v4886
  %4890 = vrot.lane.b32.xlu0 %v4888, 32
  %v4891 = vpop.permute.xlu0 %4890
  %v4893 = vadd.f32 %v4883, %v4891
  %v4894 = vtanh.pop %v4893
  %4896 = vrot.lane.b32.xlu0 %v4894, 64
  %v4897 = vpop.permute.xlu0 %4896
  %v4899 = vmul.f32 %v4881, %v4897
  %4901 = vrot.lane.b32.xlu0 %v4899, 32
  %v4902 = vpop.permute.xlu0 %4901
  %4904 = vst.msk [vmem:[%s8 + $0x28] sm:$0x3] %vm988, %v4902
  %4905 = vmatprep.subr.bf16.mxu0 0
  %4906 = vmatpush1.bf16.msra.mxu0 %v770
  %4907 = vmatprep.subr.bf16.mxu0 0
  %4908 = vmatpush1.bf16.msra.mxu0 %v771
  %4909 = vmatprep.subr.bf16.mxu0 0
  %4910 = vmatpush1.bf16.msra.mxu0 0
  %4911 = vmatprep.subr.bf16.mxu0 0
  %4912 = vmatpush1.bf16.msra.mxu0 0
  %4913 = vmatprep.subr.bf16.mxu0 0
  %4914 = vmatpush1.bf16.msra.mxu0 0
  %4915 = vmatprep.subr.bf16.mxu0 0
  %4916 = vmatpush1.bf16.msra.mxu0 0
  %4917 = vmatprep.subr.bf16.mxu0 0
  %4918 = vmatpush1.bf16.msra.mxu0 0
  %4919 = vmatprep.subr.bf16.mxu0 0
  %4920 = vmatpush1.bf16.msra.mxu0 0
  %4921 = vmatprep.subr.bf16.mxu0 0
  %4922 = vmatpush1.bf16.msra.mxu0 0
  %4923 = vmatprep.subr.bf16.mxu0 0
  %4924 = vmatpush1.bf16.msra.mxu0 0
  %4925 = vmatprep.subr.bf16.mxu0 0
  %4926 = vmatpush1.bf16.msra.mxu0 0
  %4927 = vmatprep.subr.bf16.mxu0 0
  %4928 = vmatpush1.bf16.msra.mxu0 0
  %4929 = vmatprep.subr.bf16.mxu0 0
  %4930 = vmatpush1.bf16.msra.mxu0 0
  %4931 = vmatprep.subr.bf16.mxu0 0
  %4932 = vmatpush1.bf16.msra.mxu0 0
  %4933 = vmatprep.subr.bf16.mxu0 0
  %4934 = vmatpush1.bf16.msra.mxu0 0
  %4935 = vmatprep.subr.bf16.mxu0 0
  %4936 = vmatpush1.bf16.msra.mxu0 0
  %4937 = vmatprep.mubr.bf16.mxu0 0
  %4938 = vmatmul.mubr.bf16.gmra.mrb[0].mxu0 %v4833
  %v4939 = vpop.f32.mrb[0].mxu0
  %v4940 = vadd.f32 0.0, %v4939
  %v4941 = vpop.f32.mrb[0].mxu0
  %v4942 = vpop.f32.mrb[0].mxu0
  %v4943 = vpop.f32.mrb[0].mxu0
  %4944 = vdwg.mxu0
  %v4946 = vrot.slane %v4940, 6
  %v4948 = vadd.f32 %v735, %v4946
  %v4949 = vxor.u32 %v4948, 2147483648
  %v4950 = vmul.f32 %v4949, 1.442695
  %v4951 = vpow.pop %v4950
  %v4952 = vadd.f32 %v4951, 1.0
  %v4953 = vrcp.pop %v4952
  %v4954 = vmul.f32 1.0, %v4953
  %v4955 = vtanh.pop %v4948
  %v4957 = vrot.slane %v4954, 2
  %v4959 = vmul.f32 %v4774, %v4957
  %4961 = vrot.lane.b32.xlu0 %v4955, 64
  %v4962 = vpop.permute.xlu0 %4961
  %v4964 = vmul.f32 %v4954, %v4962
  %v4966 = vrot.slane %v4964, 2
  %4967 = vrot.lane.b32.xlu0 %v4966, 32
  %v4968 = vpop.permute.xlu0 %4967
  %v4970 = vadd.f32 %v4959, %v4968
  %v4971 = vtanh.pop %v4970
  %v4973 = vrot.slane %v4971, 6
  %4974 = vrot.lane.b32.xlu0 %v4973, 64
  %v4975 = vpop.permute.xlu0 %4974
  %v4977 = vmul.f32 %v4954, %v4975
  %v4978 = vpack.c.bf16 %v4977, %v4977
  %v4979 = vpack.c.bf16 %v4899, %v4899
  %4981 = vrot.lane.b32.xlu0 %v4979, 32
  %v4982 = vpop.permute.xlu0 %4981
  %v4984 = vsel %vm540, %v4982, 0
  %4986 = vmatprep.subr.bf16.mxu0 0
  %4987 = vmatpush1.bf16.msra.mxu0 %v851
  %4988 = vmatprep.subr.bf16.mxu0 0
  %4989 = vmatpush1.bf16.msra.mxu0 %v852
  %4990 = vmatprep.subr.bf16.mxu0 0
  %4991 = vmatpush1.bf16.msra.mxu0 0
  %4992 = vmatprep.subr.bf16.mxu0 0
  %4993 = vmatpush1.bf16.msra.mxu0 0
  %4994 = vmatprep.subr.bf16.mxu0 0
  %4995 = vmatpush1.bf16.msra.mxu0 0
  %4996 = vmatprep.subr.bf16.mxu0 0
  %4997 = vmatpush1.bf16.msra.mxu0 0
  %4998 = vmatprep.subr.bf16.mxu0 0
  %4999 = vmatpush1.bf16.msra.mxu0 0
  %5000 = vmatprep.subr.bf16.mxu0 0
  %5001 = vmatpush1.bf16.msra.mxu0 0
  %5002 = vmatprep.subr.bf16.mxu0 0
  %5003 = vmatpush1.bf16.msra.mxu0 0
  %5004 = vmatprep.subr.bf16.mxu0 0
  %5005 = vmatpush1.bf16.msra.mxu0 0
  %5006 = vmatprep.subr.bf16.mxu0 0
  %5007 = vmatpush1.bf16.msra.mxu0 0
  %5008 = vmatprep.subr.bf16.mxu0 0
  %5009 = vmatpush1.bf16.msra.mxu0 0
  %5010 = vmatprep.subr.bf16.mxu0 0
  %5011 = vmatpush1.bf16.msra.mxu0 0
  %5012 = vmatprep.subr.bf16.mxu0 0
  %5013 = vmatpush1.bf16.msra.mxu0 0
  %5014 = vmatprep.subr.bf16.mxu0 0
  %5015 = vmatpush1.bf16.msra.mxu0 0
  %5016 = vmatprep.subr.bf16.mxu0 0
  %5017 = vmatpush1.bf16.msra.mxu0 0
  %5018 = vmatprep.mubr.bf16.mxu0 0
  %5019 = vmatmul.mubr.bf16.gmra.mrb[0].mxu0 %v4984
  %v5020 = vpop.f32.mrb[0].mxu0
  %v5021 = vadd.f32 0.0, %v5020
  %v5022 = vpop.f32.mrb[0].mxu0
  %v5023 = vpop.f32.mrb[0].mxu0
  %v5024 = vpop.f32.mrb[0].mxu0
  %5025 = vdwg.mxu0
  %v5027 = vrot.slane %v4978, 1
  %5028 = vrot.lane.b32.xlu0 %v5027, 32
  %v5029 = vpop.permute.xlu0 %5028
  %v5031 = vsel %vm540, %v5029, 0
  %5033 = vmatprep.subr.bf16.mxu0 0
  %5034 = vmatpush1.bf16.msra.mxu0 %v906
  %5035 = vmatprep.subr.bf16.mxu0 0
  %5036 = vmatpush1.bf16.msra.mxu0 %v907
  %5037 = vmatprep.subr.bf16.mxu0 0
  %5038 = vmatpush1.bf16.msra.mxu0 0
  %5039 = vmatprep.subr.bf16.mxu0 0
  %5040 = vmatpush1.bf16.msra.mxu0 0
  %5041 = vmatprep.subr.bf16.mxu0 0
  %5042 = vmatpush1.bf16.msra.mxu0 0
  %5043 = vmatprep.subr.bf16.mxu0 0
  %5044 = vmatpush1.bf16.msra.mxu0 0
  %5045 = vmatprep.subr.bf16.mxu0 0
  %5046 = vmatpush1.bf16.msra.mxu0 0
  %5047 = vmatprep.subr.bf16.mxu0 0
  %5048 = vmatpush1.bf16.msra.mxu0 0
  %5049 = vmatprep.subr.bf16.mxu0 0
  %5050 = vmatpush1.bf16.msra.mxu0 0
  %5051 = vmatprep.subr.bf16.mxu0 0
  %5052 = vmatpush1.bf16.msra.mxu0 0
  %5053 = vmatprep.subr.bf16.mxu0 0
  %5054 = vmatpush1.bf16.msra.mxu0 0
  %5055 = vmatprep.subr.bf16.mxu0 0
  %5056 = vmatpush1.bf16.msra.mxu0 0
  %5057 = vmatprep.subr.bf16.mxu0 0
  %5058 = vmatpush1.bf16.msra.mxu0 0
  %5059 = vmatprep.subr.bf16.mxu0 0
  %5060 = vmatpush1.bf16.msra.mxu0 0
  %5061 = vmatprep.subr.bf16.mxu0 0
  %5062 = vmatpush1.bf16.msra.mxu0 0
  %5063 = vmatprep.subr.bf16.mxu0 0
  %5064 = vmatpush1.bf16.msra.mxu0 0
  %5065 = vmatprep.mubr.bf16.mxu0 0
  %5066 = vmatmul.mubr.bf16.gmra.mrb[0].mxu0 %v5031
  %v5067 = vpop.f32.mrb[0].mxu0
  %v5068 = vadd.f32 %v5021, %v5067
  %v5069 = vpop.f32.mrb[0].mxu0
  %v5070 = vpop.f32.mrb[0].mxu0
  %v5071 = vpop.f32.mrb[0].mxu0
  %5072 = vdwg.mxu0
  %v5073 = vadd.f32 %v5068, %v957
  %v5074 = vxor.u32 %v5073, 2147483648
  %v5075 = vmul.f32 %v5074, 1.442695
  %v5076 = vpow.pop %v5075
  %v5077 = vadd.f32 %v5076, 1.0
  %v5078 = vrcp.pop %v5077
  %v5079 = vmul.f32 1.0, %v5078
  %v5080 = vtanh.pop %v5073
  %v5081 = vmul.f32 %v4893, %v5079
  %5083 = vrot.lane.b32.xlu0 %v5080, 64
  %v5084 = vpop.permute.xlu0 %5083
  %v5086 = vmul.f32 %v5079, %v5084
  %5088 = vrot.lane.b32.xlu0 %v5086, 32
  %v5089 = vpop.permute.xlu0 %5088
  %v5091 = vadd.f32 %v5081, %v5089
  %v5092 = vtanh.pop %v5091
  %5094 = vrot.lane.b32.xlu0 %v5092, 64
  %v5095 = vpop.permute.xlu0 %5094
  %v5097 = vmul.f32 %v5079, %v5095
  %5099 = vrot.lane.b32.xlu0 %v5097, 32
  %v5100 = vpop.permute.xlu0 %5099
  %5102 = vst.msk [vmem:[%s8 + $0x2a] sm:$0x3] %vm988, %v5100
  %5103 = vmatprep.subr.bf16.mxu0 0
  %5104 = vmatpush1.bf16.msra.mxu0 %v770
  %5105 = vmatprep.subr.bf16.mxu0 0
  %5106 = vmatpush1.bf16.msra.mxu0 %v771
  %5107 = vmatprep.subr.bf16.mxu0 0
  %5108 = vmatpush1.bf16.msra.mxu0 0
  %5109 = vmatprep.subr.bf16.mxu0 0
  %5110 = vmatpush1.bf16.msra.mxu0 0
  %5111 = vmatprep.subr.bf16.mxu0 0
  %5112 = vmatpush1.bf16.msra.mxu0 0
  %5113 = vmatprep.subr.bf16.mxu0 0
  %5114 = vmatpush1.bf16.msra.mxu0 0
  %5115 = vmatprep.subr.bf16.mxu0 0
  %5116 = vmatpush1.bf16.msra.mxu0 0
  %5117 = vmatprep.subr.bf16.mxu0 0
  %5118 = vmatpush1.bf16.msra.mxu0 0
  %5119 = vmatprep.subr.bf16.mxu0 0
  %5120 = vmatpush1.bf16.msra.mxu0 0
  %5121 = vmatprep.subr.bf16.mxu0 0
  %5122 = vmatpush1.bf16.msra.mxu0 0
  %5123 = vmatprep.subr.bf16.mxu0 0
  %5124 = vmatpush1.bf16.msra.mxu0 0
  %5125 = vmatprep.subr.bf16.mxu0 0
  %5126 = vmatpush1.bf16.msra.mxu0 0
  %5127 = vmatprep.subr.bf16.mxu0 0
  %5128 = vmatpush1.bf16.msra.mxu0 0
  %5129 = vmatprep.subr.bf16.mxu0 0
  %5130 = vmatpush1.bf16.msra.mxu0 0
  %5131 = vmatprep.subr.bf16.mxu0 0
  %5132 = vmatpush1.bf16.msra.mxu0 0
  %5133 = vmatprep.subr.bf16.mxu0 0
  %5134 = vmatpush1.bf16.msra.mxu0 0
  %5135 = vmatprep.mubr.bf16.mxu0 0
  %5136 = vmatmul.mubr.bf16.gmra.mrb[0].mxu0 %v5031
  %v5137 = vpop.f32.mrb[0].mxu0
  %v5138 = vadd.f32 0.0, %v5137
  %v5139 = vpop.f32.mrb[0].mxu0
  %v5140 = vpop.f32.mrb[0].mxu0
  %v5141 = vpop.f32.mrb[0].mxu0
  %5142 = vdwg.mxu0
  %v5144 = vrot.slane %v5138, 4
  %v5146 = vadd.f32 %v735, %v5144
  %v5147 = vxor.u32 %v5146, 2147483648
  %v5148 = vmul.f32 %v5147, 1.442695
  %v5149 = vpow.pop %v5148
  %v5150 = vadd.f32 %v5149, 1.0
  %v5151 = vrcp.pop %v5150
  %v5152 = vmul.f32 1.0, %v5151
  %v5153 = vtanh.pop %v5146
  %v5155 = vrot.slane %v5152, 4
  %v5157 = vmul.f32 %v4970, %v5155
  %5159 = vrot.lane.b32.xlu0 %v5153, 64
  %v5160 = vpop.permute.xlu0 %5159
  %v5162 = vmul.f32 %v5152, %v5160
  %v5164 = vrot.slane %v5162, 4
  %5165 = vrot.lane.b32.xlu0 %v5164, 32
  %v5166 = vpop.permute.xlu0 %5165
  %v5168 = vadd.f32 %v5157, %v5166
  %v5169 = vtanh.pop %v5168
  %v5171 = vrot.slane %v5169, 4
  %5172 = vrot.lane.b32.xlu0 %v5171, 64
  %v5173 = vpop.permute.xlu0 %5172
  %v5175 = vmul.f32 %v5152, %v5173
  %v5176 = vpack.c.bf16 %v5175, %v5175
  %v5177 = vpack.c.bf16 %v5097, %v5097
  %5179 = vrot.lane.b32.xlu0 %v5177, 32
  %v5180 = vpop.permute.xlu0 %5179
  %v5182 = vsel %vm540, %v5180, 0
  %5184 = vmatprep.subr.bf16.mxu0 0
  %5185 = vmatpush1.bf16.msra.mxu0 %v851
  %5186 = vmatprep.subr.bf16.mxu0 0
  %5187 = vmatpush1.bf16.msra.mxu0 %v852
  %5188 = vmatprep.subr.bf16.mxu0 0
  %5189 = vmatpush1.bf16.msra.mxu0 0
  %5190 = vmatprep.subr.bf16.mxu0 0
  %5191 = vmatpush1.bf16.msra.mxu0 0
  %5192 = vmatprep.subr.bf16.mxu0 0
  %5193 = vmatpush1.bf16.msra.mxu0 0
  %5194 = vmatprep.subr.bf16.mxu0 0
  %5195 = vmatpush1.bf16.msra.mxu0 0
  %5196 = vmatprep.subr.bf16.mxu0 0
  %5197 = vmatpush1.bf16.msra.mxu0 0
  %5198 = vmatprep.subr.bf16.mxu0 0
  %5199 = vmatpush1.bf16.msra.mxu0 0
  %5200 = vmatprep.subr.bf16.mxu0 0
  %5201 = vmatpush1.bf16.msra.mxu0 0
  %5202 = vmatprep.subr.bf16.mxu0 0
  %5203 = vmatpush1.bf16.msra.mxu0 0
  %5204 = vmatprep.subr.bf16.mxu0 0
  %5205 = vmatpush1.bf16.msra.mxu0 0
  %5206 = vmatprep.subr.bf16.mxu0 0
  %5207 = vmatpush1.bf16.msra.mxu0 0
  %5208 = vmatprep.subr.bf16.mxu0 0
  %5209 = vmatpush1.bf16.msra.mxu0 0
  %5210 = vmatprep.subr.bf16.mxu0 0
  %5211 = vmatpush1.bf16.msra.mxu0 0
  %5212 = vmatprep.subr.bf16.mxu0 0
  %5213 = vmatpush1.bf16.msra.mxu0 0
  %5214 = vmatprep.subr.bf16.mxu0 0
  %5215 = vmatpush1.bf16.msra.mxu0 0
  %5216 = vmatprep.mubr.bf16.mxu0 0
  %5217 = vmatmul.mubr.bf16.gmra.mrb[0].mxu0 %v5182
  %v5218 = vpop.f32.mrb[0].mxu0
  %v5219 = vadd.f32 0.0, %v5218
  %v5220 = vpop.f32.mrb[0].mxu0
  %v5221 = vpop.f32.mrb[0].mxu0
  %v5222 = vpop.f32.mrb[0].mxu0
  %5223 = vdwg.mxu0
  %v5225 = vrot.slane %v5176, 2
  %5226 = vrot.lane.b32.xlu0 %v5225, 32
  %v5227 = vpop.permute.xlu0 %5226
  %v5229 = vsel %vm540, %v5227, 0
  %5231 = vmatprep.subr.bf16.mxu0 0
  %5232 = vmatpush1.bf16.msra.mxu0 %v906
  %5233 = vmatprep.subr.bf16.mxu0 0
  %5234 = vmatpush1.bf16.msra.mxu0 %v907
  %5235 = vmatprep.subr.bf16.mxu0 0
  %5236 = vmatpush1.bf16.msra.mxu0 0
  %5237 = vmatprep.subr.bf16.mxu0 0
  %5238 = vmatpush1.bf16.msra.mxu0 0
  %5239 = vmatprep.subr.bf16.mxu0 0
  %5240 = vmatpush1.bf16.msra.mxu0 0
  %5241 = vmatprep.subr.bf16.mxu0 0
  %5242 = vmatpush1.bf16.msra.mxu0 0
  %5243 = vmatprep.subr.bf16.mxu0 0
  %5244 = vmatpush1.bf16.msra.mxu0 0
  %5245 = vmatprep.subr.bf16.mxu0 0
  %5246 = vmatpush1.bf16.msra.mxu0 0
  %5247 = vmatprep.subr.bf16.mxu0 0
  %5248 = vmatpush1.bf16.msra.mxu0 0
  %5249 = vmatprep.subr.bf16.mxu0 0
  %5250 = vmatpush1.bf16.msra.mxu0 0
  %5251 = vmatprep.subr.bf16.mxu0 0
  %5252 = vmatpush1.bf16.msra.mxu0 0
  %5253 = vmatprep.subr.bf16.mxu0 0
  %5254 = vmatpush1.bf16.msra.mxu0 0
  %5255 = vmatprep.subr.bf16.mxu0 0
  %5256 = vmatpush1.bf16.msra.mxu0 0
  %5257 = vmatprep.subr.bf16.mxu0 0
  %5258 = vmatpush1.bf16.msra.mxu0 0
  %5259 = vmatprep.subr.bf16.mxu0 0
  %5260 = vmatpush1.bf16.msra.mxu0 0
  %5261 = vmatprep.subr.bf16.mxu0 0
  %5262 = vmatpush1.bf16.msra.mxu0 0
  %5263 = vmatprep.mubr.bf16.mxu0 0
  %5264 = vmatmul.mubr.bf16.gmra.mrb[0].mxu0 %v5229
  %v5265 = vpop.f32.mrb[0].mxu0
  %v5266 = vadd.f32 %v5219, %v5265
  %v5267 = vpop.f32.mrb[0].mxu0
  %v5268 = vpop.f32.mrb[0].mxu0
  %v5269 = vpop.f32.mrb[0].mxu0
  %5270 = vdwg.mxu0
  %v5271 = vadd.f32 %v5266, %v957
  %v5272 = vxor.u32 %v5271, 2147483648
  %v5273 = vmul.f32 %v5272, 1.442695
  %v5274 = vpow.pop %v5273
  %v5275 = vadd.f32 %v5274, 1.0
  %v5276 = vrcp.pop %v5275
  %v5277 = vmul.f32 1.0, %v5276
  %v5278 = vtanh.pop %v5271
  %v5279 = vmul.f32 %v5091, %v5277
  %5281 = vrot.lane.b32.xlu0 %v5278, 64
  %v5282 = vpop.permute.xlu0 %5281
  %v5284 = vmul.f32 %v5277, %v5282
  %5286 = vrot.lane.b32.xlu0 %v5284, 32
  %v5287 = vpop.permute.xlu0 %5286
  %v5289 = vadd.f32 %v5279, %v5287
  %v5290 = vtanh.pop %v5289
  %5292 = vrot.lane.b32.xlu0 %v5290, 64
  %v5293 = vpop.permute.xlu0 %5292
  %v5295 = vmul.f32 %v5277, %v5293
  %5297 = vrot.lane.b32.xlu0 %v5295, 32
  %v5298 = vpop.permute.xlu0 %5297
  %5300 = vst.msk [vmem:[%s8 + $0x2c] sm:$0x3] %vm988, %v5298
  %5301 = vmatprep.subr.bf16.mxu0 0
  %5302 = vmatpush1.bf16.msra.mxu0 %v770
  %5303 = vmatprep.subr.bf16.mxu0 0
  %5304 = vmatpush1.bf16.msra.mxu0 %v771
  %5305 = vmatprep.subr.bf16.mxu0 0
  %5306 = vmatpush1.bf16.msra.mxu0 0
  %5307 = vmatprep.subr.bf16.mxu0 0
  %5308 = vmatpush1.bf16.msra.mxu0 0
  %5309 = vmatprep.subr.bf16.mxu0 0
  %5310 = vmatpush1.bf16.msra.mxu0 0
  %5311 = vmatprep.subr.bf16.mxu0 0
  %5312 = vmatpush1.bf16.msra.mxu0 0
  %5313 = vmatprep.subr.bf16.mxu0 0
  %5314 = vmatpush1.bf16.msra.mxu0 0
  %5315 = vmatprep.subr.bf16.mxu0 0
  %5316 = vmatpush1.bf16.msra.mxu0 0
  %5317 = vmatprep.subr.bf16.mxu0 0
  %5318 = vmatpush1.bf16.msra.mxu0 0
  %5319 = vmatprep.subr.bf16.mxu0 0
  %5320 = vmatpush1.bf16.msra.mxu0 0
  %5321 = vmatprep.subr.bf16.mxu0 0
  %5322 = vmatpush1.bf16.msra.mxu0 0
  %5323 = vmatprep.subr.bf16.mxu0 0
  %5324 = vmatpush1.bf16.msra.mxu0 0
  %5325 = vmatprep.subr.bf16.mxu0 0
  %5326 = vmatpush1.bf16.msra.mxu0 0
  %5327 = vmatprep.subr.bf16.mxu0 0
  %5328 = vmatpush1.bf16.msra.mxu0 0
  %5329 = vmatprep.subr.bf16.mxu0 0
  %5330 = vmatpush1.bf16.msra.mxu0 0
  %5331 = vmatprep.subr.bf16.mxu0 0
  %5332 = vmatpush1.bf16.msra.mxu0 0
  %5333 = vmatprep.mubr.bf16.mxu0 0
  %5334 = vmatmul.mubr.bf16.gmra.mrb[0].mxu0 %v5229
  %v5335 = vpop.f32.mrb[0].mxu0
  %v5336 = vadd.f32 0.0, %v5335
  %v5337 = vpop.f32.mrb[0].mxu0
  %v5338 = vpop.f32.mrb[0].mxu0
  %v5339 = vpop.f32.mrb[0].mxu0
  %5340 = vdwg.mxu0
  %v5342 = vrot.slane %v5336, 2
  %v5344 = vadd.f32 %v735, %v5342
  %v5345 = vxor.u32 %v5344, 2147483648
  %v5346 = vmul.f32 %v5345, 1.442695
  %v5347 = vpow.pop %v5346
  %v5348 = vadd.f32 %v5347, 1.0
  %v5349 = vrcp.pop %v5348
  %v5350 = vmul.f32 1.0, %v5349
  %v5351 = vtanh.pop %v5344
  %v5353 = vrot.slane %v5350, 6
  %v5355 = vmul.f32 %v5168, %v5353
  %5357 = vrot.lane.b32.xlu0 %v5351, 64
  %v5358 = vpop.permute.xlu0 %5357
  %v5360 = vmul.f32 %v5350, %v5358
  %v5362 = vrot.slane %v5360, 6
  %5363 = vrot.lane.b32.xlu0 %v5362, 32
  %v5364 = vpop.permute.xlu0 %5363
  %v5366 = vadd.f32 %v5355, %v5364
  %v5367 = vtanh.pop %v5366
  %v5369 = vrot.slane %v5367, 2
  %5370 = vrot.lane.b32.xlu0 %v5369, 64
  %v5371 = vpop.permute.xlu0 %5370
  %v5373 = vmul.f32 %v5350, %v5371
  %v5374 = vpack.c.bf16 %v5373, %v5373
  %v5375 = vpack.c.bf16 %v5295, %v5295
  %5377 = vrot.lane.b32.xlu0 %v5375, 32
  %v5378 = vpop.permute.xlu0 %5377
  %v5380 = vsel %vm540, %v5378, 0
  %5382 = vmatprep.subr.bf16.mxu0 0
  %5383 = vmatpush1.bf16.msra.mxu0 %v851
  %5384 = vmatprep.subr.bf16.mxu0 0
  %5385 = vmatpush1.bf16.msra.mxu0 %v852
  %5386 = vmatprep.subr.bf16.mxu0 0
  %5387 = vmatpush1.bf16.msra.mxu0 0
  %5388 = vmatprep.subr.bf16.mxu0 0
  %5389 = vmatpush1.bf16.msra.mxu0 0
  %5390 = vmatprep.subr.bf16.mxu0 0
  %5391 = vmatpush1.bf16.msra.mxu0 0
  %5392 = vmatprep.subr.bf16.mxu0 0
  %5393 = vmatpush1.bf16.msra.mxu0 0
  %5394 = vmatprep.subr.bf16.mxu0 0
  %5395 = vmatpush1.bf16.msra.mxu0 0
  %5396 = vmatprep.subr.bf16.mxu0 0
  %5397 = vmatpush1.bf16.msra.mxu0 0
  %5398 = vmatprep.subr.bf16.mxu0 0
  %5399 = vmatpush1.bf16.msra.mxu0 0
  %5400 = vmatprep.subr.bf16.mxu0 0
  %5401 = vmatpush1.bf16.msra.mxu0 0
  %5402 = vmatprep.subr.bf16.mxu0 0
  %5403 = vmatpush1.bf16.msra.mxu0 0
  %5404 = vmatprep.subr.bf16.mxu0 0
  %5405 = vmatpush1.bf16.msra.mxu0 0
  %5406 = vmatprep.subr.bf16.mxu0 0
  %5407 = vmatpush1.bf16.msra.mxu0 0
  %5408 = vmatprep.subr.bf16.mxu0 0
  %5409 = vmatpush1.bf16.msra.mxu0 0
  %5410 = vmatprep.subr.bf16.mxu0 0
  %5411 = vmatpush1.bf16.msra.mxu0 0
  %5412 = vmatprep.subr.bf16.mxu0 0
  %5413 = vmatpush1.bf16.msra.mxu0 0
  %5414 = vmatprep.mubr.bf16.mxu0 0
  %5415 = vmatmul.mubr.bf16.gmra.mrb[0].mxu0 %v5380
  %v5416 = vpop.f32.mrb[0].mxu0
  %v5417 = vadd.f32 0.0, %v5416
  %v5418 = vpop.f32.mrb[0].mxu0
  %v5419 = vpop.f32.mrb[0].mxu0
  %v5420 = vpop.f32.mrb[0].mxu0
  %5421 = vdwg.mxu0
  %v5423 = vrot.slane %v5374, 3
  %5424 = vrot.lane.b32.xlu0 %v5423, 32
  %v5425 = vpop.permute.xlu0 %5424
  %v5427 = vsel %vm540, %v5425, 0
  %5429 = vmatprep.subr.bf16.mxu0 0
  %5430 = vmatpush1.bf16.msra.mxu0 %v906
  %5431 = vmatprep.subr.bf16.mxu0 0
  %5432 = vmatpush1.bf16.msra.mxu0 %v907
  %5433 = vmatprep.subr.bf16.mxu0 0
  %5434 = vmatpush1.bf16.msra.mxu0 0
  %5435 = vmatprep.subr.bf16.mxu0 0
  %5436 = vmatpush1.bf16.msra.mxu0 0
  %5437 = vmatprep.subr.bf16.mxu0 0
  %5438 = vmatpush1.bf16.msra.mxu0 0
  %5439 = vmatprep.subr.bf16.mxu0 0
  %5440 = vmatpush1.bf16.msra.mxu0 0
  %5441 = vmatprep.subr.bf16.mxu0 0
  %5442 = vmatpush1.bf16.msra.mxu0 0
  %5443 = vmatprep.subr.bf16.mxu0 0
  %5444 = vmatpush1.bf16.msra.mxu0 0
  %5445 = vmatprep.subr.bf16.mxu0 0
  %5446 = vmatpush1.bf16.msra.mxu0 0
  %5447 = vmatprep.subr.bf16.mxu0 0
  %5448 = vmatpush1.bf16.msra.mxu0 0
  %5449 = vmatprep.subr.bf16.mxu0 0
  %5450 = vmatpush1.bf16.msra.mxu0 0
  %5451 = vmatprep.subr.bf16.mxu0 0
  %5452 = vmatpush1.bf16.msra.mxu0 0
  %5453 = vmatprep.subr.bf16.mxu0 0
  %5454 = vmatpush1.bf16.msra.mxu0 0
  %5455 = vmatprep.subr.bf16.mxu0 0
  %5456 = vmatpush1.bf16.msra.mxu0 0
  %5457 = vmatprep.subr.bf16.mxu0 0
  %5458 = vmatpush1.bf16.msra.mxu0 0
  %5459 = vmatprep.subr.bf16.mxu0 0
  %5460 = vmatpush1.bf16.msra.mxu0 0
  %5461 = vmatprep.mubr.bf16.mxu0 0
  %5462 = vmatmul.mubr.bf16.gmra.mrb[0].mxu0 %v5427
  %v5463 = vpop.f32.mrb[0].mxu0
  %v5464 = vadd.f32 %v5417, %v5463
  %v5465 = vpop.f32.mrb[0].mxu0
  %v5466 = vpop.f32.mrb[0].mxu0
  %v5467 = vpop.f32.mrb[0].mxu0
  %5468 = vdwg.mxu0
  %v5469 = vadd.f32 %v5464, %v957
  %v5470 = vxor.u32 %v5469, 2147483648
  %v5471 = vmul.f32 %v5470, 1.442695
  %v5472 = vpow.pop %v5471
  %v5473 = vadd.f32 %v5472, 1.0
  %v5474 = vrcp.pop %v5473
  %v5475 = vmul.f32 1.0, %v5474
  %v5476 = vtanh.pop %v5469
  %v5477 = vmul.f32 %v5289, %v5475
  %5479 = vrot.lane.b32.xlu0 %v5476, 64
  %v5480 = vpop.permute.xlu0 %5479
  %v5482 = vmul.f32 %v5475, %v5480
  %5484 = vrot.lane.b32.xlu0 %v5482, 32
  %v5485 = vpop.permute.xlu0 %5484
  %v5487 = vadd.f32 %v5477, %v5485
  %v5488 = vtanh.pop %v5487
  %5490 = vrot.lane.b32.xlu0 %v5488, 64
  %v5491 = vpop.permute.xlu0 %5490
  %v5493 = vmul.f32 %v5475, %v5491
  %5495 = vrot.lane.b32.xlu0 %v5493, 32
  %v5496 = vpop.permute.xlu0 %5495
  %5498 = vst.msk [vmem:[%s8 + $0x2e] sm:$0x3] %vm988, %v5496
  %5499 = vmatprep.subr.bf16.mxu0 0
  %5500 = vmatpush1.bf16.msra.mxu0 %v770
  %5501 = vmatprep.subr.bf16.mxu0 0
  %5502 = vmatpush1.bf16.msra.mxu0 %v771
  %5503 = vmatprep.subr.bf16.mxu0 0
  %5504 = vmatpush1.bf16.msra.mxu0 0
  %5505 = vmatprep.subr.bf16.mxu0 0
  %5506 = vmatpush1.bf16.msra.mxu0 0
  %5507 = vmatprep.subr.bf16.mxu0 0
  %5508 = vmatpush1.bf16.msra.mxu0 0
  %5509 = vmatprep.subr.bf16.mxu0 0
  %5510 = vmatpush1.bf16.msra.mxu0 0
  %5511 = vmatprep.subr.bf16.mxu0 0
  %5512 = vmatpush1.bf16.msra.mxu0 0
  %5513 = vmatprep.subr.bf16.mxu0 0
  %5514 = vmatpush1.bf16.msra.mxu0 0
  %5515 = vmatprep.subr.bf16.mxu0 0
  %5516 = vmatpush1.bf16.msra.mxu0 0
  %5517 = vmatprep.subr.bf16.mxu0 0
  %5518 = vmatpush1.bf16.msra.mxu0 0
  %5519 = vmatprep.subr.bf16.mxu0 0
  %5520 = vmatpush1.bf16.msra.mxu0 0
  %5521 = vmatprep.subr.bf16.mxu0 0
  %5522 = vmatpush1.bf16.msra.mxu0 0
  %5523 = vmatprep.subr.bf16.mxu0 0
  %5524 = vmatpush1.bf16.msra.mxu0 0
  %5525 = vmatprep.subr.bf16.mxu0 0
  %5526 = vmatpush1.bf16.msra.mxu0 0
  %5527 = vmatprep.subr.bf16.mxu0 0
  %5528 = vmatpush1.bf16.msra.mxu0 0
  %5529 = vmatprep.subr.bf16.mxu0 0
  %5530 = vmatpush1.bf16.msra.mxu0 0
  %5531 = vmatprep.mubr.bf16.mxu0 0
  %5532 = vmatmul.mubr.bf16.gmra.mrb[0].mxu0 %v5427
  %v5533 = vpop.f32.mrb[0].mxu0
  %v5534 = vadd.f32 0.0, %v5533
  %v5535 = vpop.f32.mrb[0].mxu0
  %v5536 = vpop.f32.mrb[0].mxu0
  %v5537 = vpop.f32.mrb[0].mxu0
  %5538 = vdwg.mxu0
  %v5539 = vadd.f32 %v740, %v5534
  %v5540 = vxor.u32 %v5539, 2147483648
  %v5541 = vmul.f32 %v5540, 1.442695
  %v5542 = vpow.pop %v5541
  %v5543 = vadd.f32 %v5542, 1.0
  %v5544 = vrcp.pop %v5543
  %v5545 = vmul.f32 1.0, %v5544
  %v5546 = vtanh.pop %v5539
  %v5547 = vmul.f32 %v5366, %v5545
  %5549 = vrot.lane.b32.xlu0 %v5546, 64
  %v5550 = vpop.permute.xlu0 %5549
  %v5552 = vmul.f32 %v5545, %v5550
  %5554 = vrot.lane.b32.xlu0 %v5552, 32
  %v5555 = vpop.permute.xlu0 %5554
  %v5557 = vadd.f32 %v5547, %v5555
  %v5558 = vtanh.pop %v5557
  %5560 = vrot.lane.b32.xlu0 %v5558, 64
  %v5561 = vpop.permute.xlu0 %5560
  %v5563 = vmul.f32 %v5545, %v5561
  %v5564 = vpack.c.bf16 %v5563, %v5563
  %v5565 = vpack.c.bf16 %v5493, %v5493
  %5567 = vrot.lane.b32.xlu0 %v5565, 32
  %v5568 = vpop.permute.xlu0 %5567
  %v5570 = vsel %vm540, %v5568, 0
  %5572 = vmatprep.subr.bf16.mxu0 0
  %5573 = vmatpush1.bf16.msra.mxu0 %v851
  %5574 = vmatprep.subr.bf16.mxu0 0
  %5575 = vmatpush1.bf16.msra.mxu0 %v852
  %5576 = vmatprep.subr.bf16.mxu0 0
  %5577 = vmatpush1.bf16.msra.mxu0 0
  %5578 = vmatprep.subr.bf16.mxu0 0
  %5579 = vmatpush1.bf16.msra.mxu0 0
  %5580 = vmatprep.subr.bf16.mxu0 0
  %5581 = vmatpush1.bf16.msra.mxu0 0
  %5582 = vmatprep.subr.bf16.mxu0 0
  %5583 = vmatpush1.bf16.msra.mxu0 0
  %5584 = vmatprep.subr.bf16.mxu0 0
  %5585 = vmatpush1.bf16.msra.mxu0 0
  %5586 = vmatprep.subr.bf16.mxu0 0
  %5587 = vmatpush1.bf16.msra.mxu0 0
  %5588 = vmatprep.subr.bf16.mxu0 0
  %5589 = vmatpush1.bf16.msra.mxu0 0
  %5590 = vmatprep.subr.bf16.mxu0 0
  %5591 = vmatpush1.bf16.msra.mxu0 0
  %5592 = vmatprep.subr.bf16.mxu0 0
  %5593 = vmatpush1.bf16.msra.mxu0 0
  %5594 = vmatprep.subr.bf16.mxu0 0
  %5595 = vmatpush1.bf16.msra.mxu0 0
  %5596 = vmatprep.subr.bf16.mxu0 0
  %5597 = vmatpush1.bf16.msra.mxu0 0
  %5598 = vmatprep.subr.bf16.mxu0 0
  %5599 = vmatpush1.bf16.msra.mxu0 0
  %5600 = vmatprep.subr.bf16.mxu0 0
  %5601 = vmatpush1.bf16.msra.mxu0 0
  %5602 = vmatprep.subr.bf16.mxu0 0
  %5603 = vmatpush1.bf16.msra.mxu0 0
  %5604 = vmatprep.mubr.bf16.mxu0 0
  %5605 = vmatmul.mubr.bf16.gmra.mrb[0].mxu0 %v5570
  %v5606 = vpop.f32.mrb[0].mxu0
  %v5607 = vadd.f32 0.0, %v5606
  %v5608 = vpop.f32.mrb[0].mxu0
  %v5609 = vpop.f32.mrb[0].mxu0
  %v5610 = vpop.f32.mrb[0].mxu0
  %5611 = vdwg.mxu0
  %5613 = vrot.lane.b32.xlu0 %v5564, 32
  %v5614 = vpop.permute.xlu0 %5613
  %v5616 = vsel %vm540, %v5614, 0
  %5618 = vmatprep.subr.bf16.mxu0 0
  %5619 = vmatpush1.bf16.msra.mxu0 %v906
  %5620 = vmatprep.subr.bf16.mxu0 0
  %5621 = vmatpush1.bf16.msra.mxu0 %v907
  %5622 = vmatprep.subr.bf16.mxu0 0
  %5623 = vmatpush1.bf16.msra.mxu0 0
  %5624 = vmatprep.subr.bf16.mxu0 0
  %5625 = vmatpush1.bf16.msra.mxu0 0
  %5626 = vmatprep.subr.bf16.mxu0 0
  %5627 = vmatpush1.bf16.msra.mxu0 0
  %5628 = vmatprep.subr.bf16.mxu0 0
  %5629 = vmatpush1.bf16.msra.mxu0 0
  %5630 = vmatprep.subr.bf16.mxu0 0
  %5631 = vmatpush1.bf16.msra.mxu0 0
  %5632 = vmatprep.subr.bf16.mxu0 0
  %5633 = vmatpush1.bf16.msra.mxu0 0
  %5634 = vmatprep.subr.bf16.mxu0 0
  %5635 = vmatpush1.bf16.msra.mxu0 0
  %5636 = vmatprep.subr.bf16.mxu0 0
  %5637 = vmatpush1.bf16.msra.mxu0 0
  %5638 = vmatprep.subr.bf16.mxu0 0
  %5639 = vmatpush1.bf16.msra.mxu0 0
  %5640 = vmatprep.subr.bf16.mxu0 0
  %5641 = vmatpush1.bf16.msra.mxu0 0
  %5642 = vmatprep.subr.bf16.mxu0 0
  %5643 = vmatpush1.bf16.msra.mxu0 0
  %5644 = vmatprep.subr.bf16.mxu0 0
  %5645 = vmatpush1.bf16.msra.mxu0 0
  %5646 = vmatprep.subr.bf16.mxu0 0
  %5647 = vmatpush1.bf16.msra.mxu0 0
  %5648 = vmatprep.subr.bf16.mxu0 0
  %5649 = vmatpush1.bf16.msra.mxu0 0
  %5650 = vmatprep.mubr.bf16.mxu0 0
  %5651 = vmatmul.mubr.bf16.gmra.mrb[0].mxu0 %v5616
  %v5652 = vpop.f32.mrb[0].mxu0
  %v5653 = vadd.f32 %v5607, %v5652
  %v5654 = vpop.f32.mrb[0].mxu0
  %v5655 = vpop.f32.mrb[0].mxu0
  %v5656 = vpop.f32.mrb[0].mxu0
  %5657 = vdwg.mxu0
  %v5658 = vadd.f32 %v5653, %v957
  %v5659 = vxor.u32 %v5658, 2147483648
  %v5660 = vmul.f32 %v5659, 1.442695
  %v5661 = vpow.pop %v5660
  %v5662 = vadd.f32 %v5661, 1.0
  %v5663 = vrcp.pop %v5662
  %v5664 = vmul.f32 1.0, %v5663
  %v5665 = vtanh.pop %v5658
  %v5666 = vmul.f32 %v5487, %v5664
  %5668 = vrot.lane.b32.xlu0 %v5665, 64
  %v5669 = vpop.permute.xlu0 %5668
  %v5671 = vmul.f32 %v5664, %v5669
  %5673 = vrot.lane.b32.xlu0 %v5671, 32
  %v5674 = vpop.permute.xlu0 %5673
  %v5676 = vadd.f32 %v5666, %v5674
  %v5677 = vtanh.pop %v5676
  %5679 = vrot.lane.b32.xlu0 %v5677, 64
  %v5680 = vpop.permute.xlu0 %5679
  %v5682 = vmul.f32 %v5664, %v5680
  %5684 = vrot.lane.b32.xlu0 %v5682, 32
  %v5685 = vpop.permute.xlu0 %5684
  %5687 = vst.msk [vmem:[%s8 + $0x30] sm:$0x3] %vm988, %v5685
  %5688 = vmatprep.subr.bf16.mxu0 0
  %5689 = vmatpush1.bf16.msra.mxu0 %v770
  %5690 = vmatprep.subr.bf16.mxu0 0
  %5691 = vmatpush1.bf16.msra.mxu0 %v771
  %5692 = vmatprep.subr.bf16.mxu0 0
  %5693 = vmatpush1.bf16.msra.mxu0 0
  %5694 = vmatprep.subr.bf16.mxu0 0
  %5695 = vmatpush1.bf16.msra.mxu0 0
  %5696 = vmatprep.subr.bf16.mxu0 0
  %5697 = vmatpush1.bf16.msra.mxu0 0
  %5698 = vmatprep.subr.bf16.mxu0 0
  %5699 = vmatpush1.bf16.msra.mxu0 0
  %5700 = vmatprep.subr.bf16.mxu0 0
  %5701 = vmatpush1.bf16.msra.mxu0 0
  %5702 = vmatprep.subr.bf16.mxu0 0
  %5703 = vmatpush1.bf16.msra.mxu0 0
  %5704 = vmatprep.subr.bf16.mxu0 0
  %5705 = vmatpush1.bf16.msra.mxu0 0
  %5706 = vmatprep.subr.bf16.mxu0 0
  %5707 = vmatpush1.bf16.msra.mxu0 0
  %5708 = vmatprep.subr.bf16.mxu0 0
  %5709 = vmatpush1.bf16.msra.mxu0 0
  %5710 = vmatprep.subr.bf16.mxu0 0
  %5711 = vmatpush1.bf16.msra.mxu0 0
  %5712 = vmatprep.subr.bf16.mxu0 0
  %5713 = vmatpush1.bf16.msra.mxu0 0
  %5714 = vmatprep.subr.bf16.mxu0 0
  %5715 = vmatpush1.bf16.msra.mxu0 0
  %5716 = vmatprep.subr.bf16.mxu0 0
  %5717 = vmatpush1.bf16.msra.mxu0 0
  %5718 = vmatprep.subr.bf16.mxu0 0
  %5719 = vmatpush1.bf16.msra.mxu0 0
  %5720 = vmatprep.mubr.bf16.mxu0 0
  %5721 = vmatmul.mubr.bf16.gmra.mrb[0].mxu0 %v5616
  %v5722 = vpop.f32.mrb[0].mxu0
  %v5723 = vadd.f32 0.0, %v5722
  %v5724 = vpop.f32.mrb[0].mxu0
  %v5725 = vpop.f32.mrb[0].mxu0
  %v5726 = vpop.f32.mrb[0].mxu0
  %5727 = vdwg.mxu0
  %v5729 = vrot.slane %v5723, 6
  %v5731 = vadd.f32 %v740, %v5729
  %v5732 = vxor.u32 %v5731, 2147483648
  %v5733 = vmul.f32 %v5732, 1.442695
  %v5734 = vpow.pop %v5733
  %v5735 = vadd.f32 %v5734, 1.0
  %v5736 = vrcp.pop %v5735
  %v5737 = vmul.f32 1.0, %v5736
  %v5738 = vtanh.pop %v5731
  %v5740 = vrot.slane %v5737, 2
  %v5742 = vmul.f32 %v5557, %v5740
  %5744 = vrot.lane.b32.xlu0 %v5738, 64
  %v5745 = vpop.permute.xlu0 %5744
  %v5747 = vmul.f32 %v5737, %v5745
  %v5749 = vrot.slane %v5747, 2
  %5750 = vrot.lane.b32.xlu0 %v5749, 32
  %v5751 = vpop.permute.xlu0 %5750
  %v5753 = vadd.f32 %v5742, %v5751
  %v5754 = vtanh.pop %v5753
  %v5756 = vrot.slane %v5754, 6
  %5757 = vrot.lane.b32.xlu0 %v5756, 64
  %v5758 = vpop.permute.xlu0 %5757
  %v5760 = vmul.f32 %v5737, %v5758
  %v5761 = vpack.c.bf16 %v5760, %v5760
  %v5762 = vpack.c.bf16 %v5682, %v5682
  %5764 = vrot.lane.b32.xlu0 %v5762, 32
  %v5765 = vpop.permute.xlu0 %5764
  %v5767 = vsel %vm540, %v5765, 0
  %5769 = vmatprep.subr.bf16.mxu0 0
  %5770 = vmatpush1.bf16.msra.mxu0 %v851
  %5771 = vmatprep.subr.bf16.mxu0 0
  %5772 = vmatpush1.bf16.msra.mxu0 %v852
  %5773 = vmatprep.subr.bf16.mxu0 0
  %5774 = vmatpush1.bf16.msra.mxu0 0
  %5775 = vmatprep.subr.bf16.mxu0 0
  %5776 = vmatpush1.bf16.msra.mxu0 0
  %5777 = vmatprep.subr.bf16.mxu0 0
  %5778 = vmatpush1.bf16.msra.mxu0 0
  %5779 = vmatprep.subr.bf16.mxu0 0
  %5780 = vmatpush1.bf16.msra.mxu0 0
  %5781 = vmatprep.subr.bf16.mxu0 0
  %5782 = vmatpush1.bf16.msra.mxu0 0
  %5783 = vmatprep.subr.bf16.mxu0 0
  %5784 = vmatpush1.bf16.msra.mxu0 0
  %5785 = vmatprep.subr.bf16.mxu0 0
  %5786 = vmatpush1.bf16.msra.mxu0 0
  %5787 = vmatprep.subr.bf16.mxu0 0
  %5788 = vmatpush1.bf16.msra.mxu0 0
  %5789 = vmatprep.subr.bf16.mxu0 0
  %5790 = vmatpush1.bf16.msra.mxu0 0
  %5791 = vmatprep.subr.bf16.mxu0 0
  %5792 = vmatpush1.bf16.msra.mxu0 0
  %5793 = vmatprep.subr.bf16.mxu0 0
  %5794 = vmatpush1.bf16.msra.mxu0 0
  %5795 = vmatprep.subr.bf16.mxu0 0
  %5796 = vmatpush1.bf16.msra.mxu0 0
  %5797 = vmatprep.subr.bf16.mxu0 0
  %5798 = vmatpush1.bf16.msra.mxu0 0
  %5799 = vmatprep.subr.bf16.mxu0 0
  %5800 = vmatpush1.bf16.msra.mxu0 0
  %5801 = vmatprep.mubr.bf16.mxu0 0
  %5802 = vmatmul.mubr.bf16.gmra.mrb[0].mxu0 %v5767
  %v5803 = vpop.f32.mrb[0].mxu0
  %v5804 = vadd.f32 0.0, %v5803
  %v5805 = vpop.f32.mrb[0].mxu0
  %v5806 = vpop.f32.mrb[0].mxu0
  %v5807 = vpop.f32.mrb[0].mxu0
  %5808 = vdwg.mxu0
  %v5810 = vrot.slane %v5761, 1
  %5811 = vrot.lane.b32.xlu0 %v5810, 32
  %v5812 = vpop.permute.xlu0 %5811
  %v5814 = vsel %vm540, %v5812, 0
  %5816 = vmatprep.subr.bf16.mxu0 0
  %5817 = vmatpush1.bf16.msra.mxu0 %v906
  %5818 = vmatprep.subr.bf16.mxu0 0
  %5819 = vmatpush1.bf16.msra.mxu0 %v907
  %5820 = vmatprep.subr.bf16.mxu0 0
  %5821 = vmatpush1.bf16.msra.mxu0 0
  %5822 = vmatprep.subr.bf16.mxu0 0
  %5823 = vmatpush1.bf16.msra.mxu0 0
  %5824 = vmatprep.subr.bf16.mxu0 0
  %5825 = vmatpush1.bf16.msra.mxu0 0
  %5826 = vmatprep.subr.bf16.mxu0 0
  %5827 = vmatpush1.bf16.msra.mxu0 0
  %5828 = vmatprep.subr.bf16.mxu0 0
  %5829 = vmatpush1.bf16.msra.mxu0 0
  %5830 = vmatprep.subr.bf16.mxu0 0
  %5831 = vmatpush1.bf16.msra.mxu0 0
  %5832 = vmatprep.subr.bf16.mxu0 0
  %5833 = vmatpush1.bf16.msra.mxu0 0
  %5834 = vmatprep.subr.bf16.mxu0 0
  %5835 = vmatpush1.bf16.msra.mxu0 0
  %5836 = vmatprep.subr.bf16.mxu0 0
  %5837 = vmatpush1.bf16.msra.mxu0 0
  %5838 = vmatprep.subr.bf16.mxu0 0
  %5839 = vmatpush1.bf16.msra.mxu0 0
  %5840 = vmatprep.subr.bf16.mxu0 0
  %5841 = vmatpush1.bf16.msra.mxu0 0
  %5842 = vmatprep.subr.bf16.mxu0 0
  %5843 = vmatpush1.bf16.msra.mxu0 0
  %5844 = vmatprep.subr.bf16.mxu0 0
  %5845 = vmatpush1.bf16.msra.mxu0 0
  %5846 = vmatprep.subr.bf16.mxu0 0
  %5847 = vmatpush1.bf16.msra.mxu0 0
  %5848 = vmatprep.mubr.bf16.mxu0 0
  %5849 = vmatmul.mubr.bf16.gmra.mrb[0].mxu0 %v5814
  %v5850 = vpop.f32.mrb[0].mxu0
  %v5851 = vadd.f32 %v5804, %v5850
  %v5852 = vpop.f32.mrb[0].mxu0
  %v5853 = vpop.f32.mrb[0].mxu0
  %v5854 = vpop.f32.mrb[0].mxu0
  %5855 = vdwg.mxu0
  %v5856 = vadd.f32 %v5851, %v957
  %v5857 = vxor.u32 %v5856, 2147483648
  %v5858 = vmul.f32 %v5857, 1.442695
  %v5859 = vpow.pop %v5858
  %v5860 = vadd.f32 %v5859, 1.0
  %v5861 = vrcp.pop %v5860
  %v5862 = vmul.f32 1.0, %v5861
  %v5863 = vtanh.pop %v5856
  %v5864 = vmul.f32 %v5676, %v5862
  %5866 = vrot.lane.b32.xlu0 %v5863, 64
  %v5867 = vpop.permute.xlu0 %5866
  %v5869 = vmul.f32 %v5862, %v5867
  %5871 = vrot.lane.b32.xlu0 %v5869, 32
  %v5872 = vpop.permute.xlu0 %5871
  %v5874 = vadd.f32 %v5864, %v5872
  %v5875 = vtanh.pop %v5874
  %5877 = vrot.lane.b32.xlu0 %v5875, 64
  %v5878 = vpop.permute.xlu0 %5877
  %v5880 = vmul.f32 %v5862, %v5878
  %5882 = vrot.lane.b32.xlu0 %v5880, 32
  %v5883 = vpop.permute.xlu0 %5882
  %5885 = vst.msk [vmem:[%s8 + $0x32] sm:$0x3] %vm988, %v5883
  %5886 = vmatprep.subr.bf16.mxu0 0
  %5887 = vmatpush1.bf16.msra.mxu0 %v770
  %5888 = vmatprep.subr.bf16.mxu0 0
  %5889 = vmatpush1.bf16.msra.mxu0 %v771
  %5890 = vmatprep.subr.bf16.mxu0 0
  %5891 = vmatpush1.bf16.msra.mxu0 0
  %5892 = vmatprep.subr.bf16.mxu0 0
  %5893 = vmatpush1.bf16.msra.mxu0 0
  %5894 = vmatprep.subr.bf16.mxu0 0
  %5895 = vmatpush1.bf16.msra.mxu0 0
  %5896 = vmatprep.subr.bf16.mxu0 0
  %5897 = vmatpush1.bf16.msra.mxu0 0
  %5898 = vmatprep.subr.bf16.mxu0 0
  %5899 = vmatpush1.bf16.msra.mxu0 0
  %5900 = vmatprep.subr.bf16.mxu0 0
  %5901 = vmatpush1.bf16.msra.mxu0 0
  %5902 = vmatprep.subr.bf16.mxu0 0
  %5903 = vmatpush1.bf16.msra.mxu0 0
  %5904 = vmatprep.subr.bf16.mxu0 0
  %5905 = vmatpush1.bf16.msra.mxu0 0
  %5906 = vmatprep.subr.bf16.mxu0 0
  %5907 = vmatpush1.bf16.msra.mxu0 0
  %5908 = vmatprep.subr.bf16.mxu0 0
  %5909 = vmatpush1.bf16.msra.mxu0 0
  %5910 = vmatprep.subr.bf16.mxu0 0
  %5911 = vmatpush1.bf16.msra.mxu0 0
  %5912 = vmatprep.subr.bf16.mxu0 0
  %5913 = vmatpush1.bf16.msra.mxu0 0
  %5914 = vmatprep.subr.bf16.mxu0 0
  %5915 = vmatpush1.bf16.msra.mxu0 0
  %5916 = vmatprep.subr.bf16.mxu0 0
  %5917 = vmatpush1.bf16.msra.mxu0 0
  %5918 = vmatprep.mubr.bf16.mxu0 0
  %5919 = vmatmul.mubr.bf16.gmra.mrb[0].mxu0 %v5814
  %v5920 = vpop.f32.mrb[0].mxu0
  %v5921 = vadd.f32 0.0, %v5920
  %v5922 = vpop.f32.mrb[0].mxu0
  %v5923 = vpop.f32.mrb[0].mxu0
  %v5924 = vpop.f32.mrb[0].mxu0
  %5925 = vdwg.mxu0
  %v5927 = vrot.slane %v5921, 4
  %v5929 = vadd.f32 %v740, %v5927
  %v5930 = vxor.u32 %v5929, 2147483648
  %v5931 = vmul.f32 %v5930, 1.442695
  %v5932 = vpow.pop %v5931
  %v5933 = vadd.f32 %v5932, 1.0
  %v5934 = vrcp.pop %v5933
  %v5935 = vmul.f32 1.0, %v5934
  %v5936 = vtanh.pop %v5929
  %v5938 = vrot.slane %v5935, 4
  %v5940 = vmul.f32 %v5753, %v5938
  %5942 = vrot.lane.b32.xlu0 %v5936, 64
  %v5943 = vpop.permute.xlu0 %5942
  %v5945 = vmul.f32 %v5935, %v5943
  %v5947 = vrot.slane %v5945, 4
  %5948 = vrot.lane.b32.xlu0 %v5947, 32
  %v5949 = vpop.permute.xlu0 %5948
  %v5951 = vadd.f32 %v5940, %v5949
  %v5952 = vtanh.pop %v5951
  %v5954 = vrot.slane %v5952, 4
  %5955 = vrot.lane.b32.xlu0 %v5954, 64
  %v5956 = vpop.permute.xlu0 %5955
  %v5958 = vmul.f32 %v5935, %v5956
  %v5959 = vpack.c.bf16 %v5958, %v5958
  %v5960 = vpack.c.bf16 %v5880, %v5880
  %5962 = vrot.lane.b32.xlu0 %v5960, 32
  %v5963 = vpop.permute.xlu0 %5962
  %v5965 = vsel %vm540, %v5963, 0
  %5967 = vmatprep.subr.bf16.mxu0 0
  %5968 = vmatpush1.bf16.msra.mxu0 %v851
  %5969 = vmatprep.subr.bf16.mxu0 0
  %5970 = vmatpush1.bf16.msra.mxu0 %v852
  %5971 = vmatprep.subr.bf16.mxu0 0
  %5972 = vmatpush1.bf16.msra.mxu0 0
  %5973 = vmatprep.subr.bf16.mxu0 0
  %5974 = vmatpush1.bf16.msra.mxu0 0
  %5975 = vmatprep.subr.bf16.mxu0 0
  %5976 = vmatpush1.bf16.msra.mxu0 0
  %5977 = vmatprep.subr.bf16.mxu0 0
  %5978 = vmatpush1.bf16.msra.mxu0 0
  %5979 = vmatprep.subr.bf16.mxu0 0
  %5980 = vmatpush1.bf16.msra.mxu0 0
  %5981 = vmatprep.subr.bf16.mxu0 0
  %5982 = vmatpush1.bf16.msra.mxu0 0
  %5983 = vmatprep.subr.bf16.mxu0 0
  %5984 = vmatpush1.bf16.msra.mxu0 0
  %5985 = vmatprep.subr.bf16.mxu0 0
  %5986 = vmatpush1.bf16.msra.mxu0 0
  %5987 = vmatprep.subr.bf16.mxu0 0
  %5988 = vmatpush1.bf16.msra.mxu0 0
  %5989 = vmatprep.subr.bf16.mxu0 0
  %5990 = vmatpush1.bf16.msra.mxu0 0
  %5991 = vmatprep.subr.bf16.mxu0 0
  %5992 = vmatpush1.bf16.msra.mxu0 0
  %5993 = vmatprep.subr.bf16.mxu0 0
  %5994 = vmatpush1.bf16.msra.mxu0 0
  %5995 = vmatprep.subr.bf16.mxu0 0
  %5996 = vmatpush1.bf16.msra.mxu0 0
  %5997 = vmatprep.subr.bf16.mxu0 0
  %5998 = vmatpush1.bf16.msra.mxu0 0
  %5999 = vmatprep.mubr.bf16.mxu0 0
  %6000 = vmatmul.mubr.bf16.gmra.mrb[0].mxu0 %v5965
  %v6001 = vpop.f32.mrb[0].mxu0
  %v6002 = vadd.f32 0.0, %v6001
  %v6003 = vpop.f32.mrb[0].mxu0
  %v6004 = vpop.f32.mrb[0].mxu0
  %v6005 = vpop.f32.mrb[0].mxu0
  %6006 = vdwg.mxu0
  %v6008 = vrot.slane %v5959, 2
  %6009 = vrot.lane.b32.xlu0 %v6008, 32
  %v6010 = vpop.permute.xlu0 %6009
  %v6012 = vsel %vm540, %v6010, 0
  %6014 = vmatprep.subr.bf16.mxu0 0
  %6015 = vmatpush1.bf16.msra.mxu0 %v906
  %6016 = vmatprep.subr.bf16.mxu0 0
  %6017 = vmatpush1.bf16.msra.mxu0 %v907
  %6018 = vmatprep.subr.bf16.mxu0 0
  %6019 = vmatpush1.bf16.msra.mxu0 0
  %6020 = vmatprep.subr.bf16.mxu0 0
  %6021 = vmatpush1.bf16.msra.mxu0 0
  %6022 = vmatprep.subr.bf16.mxu0 0
  %6023 = vmatpush1.bf16.msra.mxu0 0
  %6024 = vmatprep.subr.bf16.mxu0 0
  %6025 = vmatpush1.bf16.msra.mxu0 0
  %6026 = vmatprep.subr.bf16.mxu0 0
  %6027 = vmatpush1.bf16.msra.mxu0 0
  %6028 = vmatprep.subr.bf16.mxu0 0
  %6029 = vmatpush1.bf16.msra.mxu0 0
  %6030 = vmatprep.subr.bf16.mxu0 0
  %6031 = vmatpush1.bf16.msra.mxu0 0
  %6032 = vmatprep.subr.bf16.mxu0 0
  %6033 = vmatpush1.bf16.msra.mxu0 0
  %6034 = vmatprep.subr.bf16.mxu0 0
  %6035 = vmatpush1.bf16.msra.mxu0 0
  %6036 = vmatprep.subr.bf16.mxu0 0
  %6037 = vmatpush1.bf16.msra.mxu0 0
  %6038 = vmatprep.subr.bf16.mxu0 0
  %6039 = vmatpush1.bf16.msra.mxu0 0
  %6040 = vmatprep.subr.bf16.mxu0 0
  %6041 = vmatpush1.bf16.msra.mxu0 0
  %6042 = vmatprep.subr.bf16.mxu0 0
  %6043 = vmatpush1.bf16.msra.mxu0 0
  %6044 = vmatprep.subr.bf16.mxu0 0
  %6045 = vmatpush1.bf16.msra.mxu0 0
  %6046 = vmatprep.mubr.bf16.mxu0 0
  %6047 = vmatmul.mubr.bf16.gmra.mrb[0].mxu0 %v6012
  %v6048 = vpop.f32.mrb[0].mxu0
  %v6049 = vadd.f32 %v6002, %v6048
  %v6050 = vpop.f32.mrb[0].mxu0
  %v6051 = vpop.f32.mrb[0].mxu0
  %v6052 = vpop.f32.mrb[0].mxu0
  %6053 = vdwg.mxu0
  %v6054 = vadd.f32 %v6049, %v957
  %v6055 = vxor.u32 %v6054, 2147483648
  %v6056 = vmul.f32 %v6055, 1.442695
  %v6057 = vpow.pop %v6056
  %v6058 = vadd.f32 %v6057, 1.0
  %v6059 = vrcp.pop %v6058
  %v6060 = vmul.f32 1.0, %v6059
  %v6061 = vtanh.pop %v6054
  %v6062 = vmul.f32 %v5874, %v6060
  %6064 = vrot.lane.b32.xlu0 %v6061, 64
  %v6065 = vpop.permute.xlu0 %6064
  %v6067 = vmul.f32 %v6060, %v6065
  %6069 = vrot.lane.b32.xlu0 %v6067, 32
  %v6070 = vpop.permute.xlu0 %6069
  %v6072 = vadd.f32 %v6062, %v6070
  %v6073 = vtanh.pop %v6072
  %6075 = vrot.lane.b32.xlu0 %v6073, 64
  %v6076 = vpop.permute.xlu0 %6075
  %v6078 = vmul.f32 %v6060, %v6076
  %6080 = vrot.lane.b32.xlu0 %v6078, 32
  %v6081 = vpop.permute.xlu0 %6080
  %6083 = vst.msk [vmem:[%s8 + $0x34] sm:$0x3] %vm988, %v6081
  %6084 = vmatprep.subr.bf16.mxu0 0
  %6085 = vmatpush1.bf16.msra.mxu0 %v770
  %6086 = vmatprep.subr.bf16.mxu0 0
  %6087 = vmatpush1.bf16.msra.mxu0 %v771
  %6088 = vmatprep.subr.bf16.mxu0 0
  %6089 = vmatpush1.bf16.msra.mxu0 0
  %6090 = vmatprep.subr.bf16.mxu0 0
  %6091 = vmatpush1.bf16.msra.mxu0 0
  %6092 = vmatprep.subr.bf16.mxu0 0
  %6093 = vmatpush1.bf16.msra.mxu0 0
  %6094 = vmatprep.subr.bf16.mxu0 0
  %6095 = vmatpush1.bf16.msra.mxu0 0
  %6096 = vmatprep.subr.bf16.mxu0 0
  %6097 = vmatpush1.bf16.msra.mxu0 0
  %6098 = vmatprep.subr.bf16.mxu0 0
  %6099 = vmatpush1.bf16.msra.mxu0 0
  %6100 = vmatprep.subr.bf16.mxu0 0
  %6101 = vmatpush1.bf16.msra.mxu0 0
  %6102 = vmatprep.subr.bf16.mxu0 0
  %6103 = vmatpush1.bf16.msra.mxu0 0
  %6104 = vmatprep.subr.bf16.mxu0 0
  %6105 = vmatpush1.bf16.msra.mxu0 0
  %6106 = vmatprep.subr.bf16.mxu0 0
  %6107 = vmatpush1.bf16.msra.mxu0 0
  %6108 = vmatprep.subr.bf16.mxu0 0
  %6109 = vmatpush1.bf16.msra.mxu0 0
  %6110 = vmatprep.subr.bf16.mxu0 0
  %6111 = vmatpush1.bf16.msra.mxu0 0
  %6112 = vmatprep.subr.bf16.mxu0 0
  %6113 = vmatpush1.bf16.msra.mxu0 0
  %6114 = vmatprep.subr.bf16.mxu0 0
  %6115 = vmatpush1.bf16.msra.mxu0 0
  %6116 = vmatprep.mubr.bf16.mxu0 0
  %6117 = vmatmul.mubr.bf16.gmra.mrb[0].mxu0 %v6012
  %v6118 = vpop.f32.mrb[0].mxu0
  %v6119 = vadd.f32 0.0, %v6118
  %v6120 = vpop.f32.mrb[0].mxu0
  %v6121 = vpop.f32.mrb[0].mxu0
  %v6122 = vpop.f32.mrb[0].mxu0
  %6123 = vdwg.mxu0
  %v6125 = vrot.slane %v6119, 2
  %v6127 = vadd.f32 %v740, %v6125
  %v6128 = vxor.u32 %v6127, 2147483648
  %v6129 = vmul.f32 %v6128, 1.442695
  %v6130 = vpow.pop %v6129
  %v6131 = vadd.f32 %v6130, 1.0
  %v6132 = vrcp.pop %v6131
  %v6133 = vmul.f32 1.0, %v6132
  %v6134 = vtanh.pop %v6127
  %v6136 = vrot.slane %v6133, 6
  %v6138 = vmul.f32 %v5951, %v6136
  %6140 = vrot.lane.b32.xlu0 %v6134, 64
  %v6141 = vpop.permute.xlu0 %6140
  %v6143 = vmul.f32 %v6133, %v6141
  %v6145 = vrot.slane %v6143, 6
  %6146 = vrot.lane.b32.xlu0 %v6145, 32
  %v6147 = vpop.permute.xlu0 %6146
  %v6149 = vadd.f32 %v6138, %v6147
  %v6150 = vtanh.pop %v6149
  %v6152 = vrot.slane %v6150, 2
  %6153 = vrot.lane.b32.xlu0 %v6152, 64
  %v6154 = vpop.permute.xlu0 %6153
  %v6156 = vmul.f32 %v6133, %v6154
  %v6157 = vpack.c.bf16 %v6156, %v6156
  %v6158 = vpack.c.bf16 %v6078, %v6078
  %6160 = vrot.lane.b32.xlu0 %v6158, 32
  %v6161 = vpop.permute.xlu0 %6160
  %v6163 = vsel %vm540, %v6161, 0
  %6165 = vmatprep.subr.bf16.mxu0 0
  %6166 = vmatpush1.bf16.msra.mxu0 %v851
  %6167 = vmatprep.subr.bf16.mxu0 0
  %6168 = vmatpush1.bf16.msra.mxu0 %v852
  %6169 = vmatprep.subr.bf16.mxu0 0
  %6170 = vmatpush1.bf16.msra.mxu0 0
  %6171 = vmatprep.subr.bf16.mxu0 0
  %6172 = vmatpush1.bf16.msra.mxu0 0
  %6173 = vmatprep.subr.bf16.mxu0 0
  %6174 = vmatpush1.bf16.msra.mxu0 0
  %6175 = vmatprep.subr.bf16.mxu0 0
  %6176 = vmatpush1.bf16.msra.mxu0 0
  %6177 = vmatprep.subr.bf16.mxu0 0
  %6178 = vmatpush1.bf16.msra.mxu0 0
  %6179 = vmatprep.subr.bf16.mxu0 0
  %6180 = vmatpush1.bf16.msra.mxu0 0
  %6181 = vmatprep.subr.bf16.mxu0 0
  %6182 = vmatpush1.bf16.msra.mxu0 0
  %6183 = vmatprep.subr.bf16.mxu0 0
  %6184 = vmatpush1.bf16.msra.mxu0 0
  %6185 = vmatprep.subr.bf16.mxu0 0
  %6186 = vmatpush1.bf16.msra.mxu0 0
  %6187 = vmatprep.subr.bf16.mxu0 0
  %6188 = vmatpush1.bf16.msra.mxu0 0
  %6189 = vmatprep.subr.bf16.mxu0 0
  %6190 = vmatpush1.bf16.msra.mxu0 0
  %6191 = vmatprep.subr.bf16.mxu0 0
  %6192 = vmatpush1.bf16.msra.mxu0 0
  %6193 = vmatprep.subr.bf16.mxu0 0
  %6194 = vmatpush1.bf16.msra.mxu0 0
  %6195 = vmatprep.subr.bf16.mxu0 0
  %6196 = vmatpush1.bf16.msra.mxu0 0
  %6197 = vmatprep.mubr.bf16.mxu0 0
  %6198 = vmatmul.mubr.bf16.gmra.mrb[0].mxu0 %v6163
  %v6199 = vpop.f32.mrb[0].mxu0
  %v6200 = vadd.f32 0.0, %v6199
  %v6201 = vpop.f32.mrb[0].mxu0
  %v6202 = vpop.f32.mrb[0].mxu0
  %v6203 = vpop.f32.mrb[0].mxu0
  %6204 = vdwg.mxu0
  %v6206 = vrot.slane %v6157, 3
  %6207 = vrot.lane.b32.xlu0 %v6206, 32
  %v6208 = vpop.permute.xlu0 %6207
  %v6210 = vsel %vm540, %v6208, 0
  %6212 = vmatprep.subr.bf16.mxu0 0
  %6213 = vmatpush1.bf16.msra.mxu0 %v906
  %6214 = vmatprep.subr.bf16.mxu0 0
  %6215 = vmatpush1.bf16.msra.mxu0 %v907
  %6216 = vmatprep.subr.bf16.mxu0 0
  %6217 = vmatpush1.bf16.msra.mxu0 0
  %6218 = vmatprep.subr.bf16.mxu0 0
  %6219 = vmatpush1.bf16.msra.mxu0 0
  %6220 = vmatprep.subr.bf16.mxu0 0
  %6221 = vmatpush1.bf16.msra.mxu0 0
  %6222 = vmatprep.subr.bf16.mxu0 0
  %6223 = vmatpush1.bf16.msra.mxu0 0
  %6224 = vmatprep.subr.bf16.mxu0 0
  %6225 = vmatpush1.bf16.msra.mxu0 0
  %6226 = vmatprep.subr.bf16.mxu0 0
  %6227 = vmatpush1.bf16.msra.mxu0 0
  %6228 = vmatprep.subr.bf16.mxu0 0
  %6229 = vmatpush1.bf16.msra.mxu0 0
  %6230 = vmatprep.subr.bf16.mxu0 0
  %6231 = vmatpush1.bf16.msra.mxu0 0
  %6232 = vmatprep.subr.bf16.mxu0 0
  %6233 = vmatpush1.bf16.msra.mxu0 0
  %6234 = vmatprep.subr.bf16.mxu0 0
  %6235 = vmatpush1.bf16.msra.mxu0 0
  %6236 = vmatprep.subr.bf16.mxu0 0
  %6237 = vmatpush1.bf16.msra.mxu0 0
  %6238 = vmatprep.subr.bf16.mxu0 0
  %6239 = vmatpush1.bf16.msra.mxu0 0
  %6240 = vmatprep.subr.bf16.mxu0 0
  %6241 = vmatpush1.bf16.msra.mxu0 0
  %6242 = vmatprep.subr.bf16.mxu0 0
  %6243 = vmatpush1.bf16.msra.mxu0 0
  %6244 = vmatprep.mubr.bf16.mxu0 0
  %6245 = vmatmul.mubr.bf16.gmra.mrb[0].mxu0 %v6210
  %v6246 = vpop.f32.mrb[0].mxu0
  %v6247 = vadd.f32 %v6200, %v6246
  %v6248 = vpop.f32.mrb[0].mxu0
  %v6249 = vpop.f32.mrb[0].mxu0
  %v6250 = vpop.f32.mrb[0].mxu0
  %6251 = vdwg.mxu0
  %v6252 = vadd.f32 %v6247, %v957
  %v6253 = vxor.u32 %v6252, 2147483648
  %v6254 = vmul.f32 %v6253, 1.442695
  %v6255 = vpow.pop %v6254
  %v6256 = vadd.f32 %v6255, 1.0
  %v6257 = vrcp.pop %v6256
  %v6258 = vmul.f32 1.0, %v6257
  %v6259 = vtanh.pop %v6252
  %v6260 = vmul.f32 %v6072, %v6258
  %6262 = vrot.lane.b32.xlu0 %v6259, 64
  %v6263 = vpop.permute.xlu0 %6262
  %v6265 = vmul.f32 %v6258, %v6263
  %6267 = vrot.lane.b32.xlu0 %v6265, 32
  %v6268 = vpop.permute.xlu0 %6267
  %v6270 = vadd.f32 %v6260, %v6268
  %v6271 = vtanh.pop %v6270
  %6273 = vrot.lane.b32.xlu0 %v6271, 64
  %v6274 = vpop.permute.xlu0 %6273
  %v6276 = vmul.f32 %v6258, %v6274
  %6278 = vrot.lane.b32.xlu0 %v6276, 32
  %v6279 = vpop.permute.xlu0 %6278
  %6281 = vst.msk [vmem:[%s8 + $0x36] sm:$0x3] %vm988, %v6279
  %6282 = vmatprep.subr.bf16.mxu0 0
  %6283 = vmatpush1.bf16.msra.mxu0 %v770
  %6284 = vmatprep.subr.bf16.mxu0 0
  %6285 = vmatpush1.bf16.msra.mxu0 %v771
  %6286 = vmatprep.subr.bf16.mxu0 0
  %6287 = vmatpush1.bf16.msra.mxu0 0
  %6288 = vmatprep.subr.bf16.mxu0 0
  %6289 = vmatpush1.bf16.msra.mxu0 0
  %6290 = vmatprep.subr.bf16.mxu0 0
  %6291 = vmatpush1.bf16.msra.mxu0 0
  %6292 = vmatprep.subr.bf16.mxu0 0
  %6293 = vmatpush1.bf16.msra.mxu0 0
  %6294 = vmatprep.subr.bf16.mxu0 0
  %6295 = vmatpush1.bf16.msra.mxu0 0
  %6296 = vmatprep.subr.bf16.mxu0 0
  %6297 = vmatpush1.bf16.msra.mxu0 0
  %6298 = vmatprep.subr.bf16.mxu0 0
  %6299 = vmatpush1.bf16.msra.mxu0 0
  %6300 = vmatprep.subr.bf16.mxu0 0
  %6301 = vmatpush1.bf16.msra.mxu0 0
  %6302 = vmatprep.subr.bf16.mxu0 0
  %6303 = vmatpush1.bf16.msra.mxu0 0
  %6304 = vmatprep.subr.bf16.mxu0 0
  %6305 = vmatpush1.bf16.msra.mxu0 0
  %6306 = vmatprep.subr.bf16.mxu0 0
  %6307 = vmatpush1.bf16.msra.mxu0 0
  %6308 = vmatprep.subr.bf16.mxu0 0
  %6309 = vmatpush1.bf16.msra.mxu0 0
  %6310 = vmatprep.subr.bf16.mxu0 0
  %6311 = vmatpush1.bf16.msra.mxu0 0
  %6312 = vmatprep.subr.bf16.mxu0 0
  %6313 = vmatpush1.bf16.msra.mxu0 0
  %6314 = vmatprep.mubr.bf16.mxu0 0
  %6315 = vmatmul.mubr.bf16.gmra.mrb[0].mxu0 %v6210
  %v6316 = vpop.f32.mrb[0].mxu0
  %v6317 = vadd.f32 0.0, %v6316
  %v6318 = vpop.f32.mrb[0].mxu0
  %v6319 = vpop.f32.mrb[0].mxu0
  %v6320 = vpop.f32.mrb[0].mxu0
  %6321 = vdwg.mxu0
  %v6322 = vadd.f32 %v743, %v6317
  %v6323 = vxor.u32 %v6322, 2147483648
  %v6324 = vmul.f32 %v6323, 1.442695
  %v6325 = vpow.pop %v6324
  %v6326 = vadd.f32 %v6325, 1.0
  %v6327 = vrcp.pop %v6326
  %v6328 = vmul.f32 1.0, %v6327
  %v6329 = vtanh.pop %v6322
  %v6330 = vmul.f32 %v6149, %v6328
  %6332 = vrot.lane.b32.xlu0 %v6329, 64
  %v6333 = vpop.permute.xlu0 %6332
  %v6335 = vmul.f32 %v6328, %v6333
  %6337 = vrot.lane.b32.xlu0 %v6335, 32
  %v6338 = vpop.permute.xlu0 %6337
  %v6340 = vadd.f32 %v6330, %v6338
  %v6341 = vtanh.pop %v6340
  %6343 = vrot.lane.b32.xlu0 %v6341, 64
  %v6344 = vpop.permute.xlu0 %6343
  %v6346 = vmul.f32 %v6328, %v6344
  %v6347 = vpack.c.bf16 %v6346, %v6346
  %v6348 = vpack.c.bf16 %v6276, %v6276
  %6350 = vrot.lane.b32.xlu0 %v6348, 32
  %v6351 = vpop.permute.xlu0 %6350
  %v6353 = vsel %vm540, %v6351, 0
  %6355 = vmatprep.subr.bf16.mxu0 0
  %6356 = vmatpush1.bf16.msra.mxu0 %v851
  %6357 = vmatprep.subr.bf16.mxu0 0
  %6358 = vmatpush1.bf16.msra.mxu0 %v852
  %6359 = vmatprep.subr.bf16.mxu0 0
  %6360 = vmatpush1.bf16.msra.mxu0 0
  %6361 = vmatprep.subr.bf16.mxu0 0
  %6362 = vmatpush1.bf16.msra.mxu0 0
  %6363 = vmatprep.subr.bf16.mxu0 0
  %6364 = vmatpush1.bf16.msra.mxu0 0
  %6365 = vmatprep.subr.bf16.mxu0 0
  %6366 = vmatpush1.bf16.msra.mxu0 0
  %6367 = vmatprep.subr.bf16.mxu0 0
  %6368 = vmatpush1.bf16.msra.mxu0 0
  %6369 = vmatprep.subr.bf16.mxu0 0
  %6370 = vmatpush1.bf16.msra.mxu0 0
  %6371 = vmatprep.subr.bf16.mxu0 0
  %6372 = vmatpush1.bf16.msra.mxu0 0
  %6373 = vmatprep.subr.bf16.mxu0 0
  %6374 = vmatpush1.bf16.msra.mxu0 0
  %6375 = vmatprep.subr.bf16.mxu0 0
  %6376 = vmatpush1.bf16.msra.mxu0 0
  %6377 = vmatprep.subr.bf16.mxu0 0
  %6378 = vmatpush1.bf16.msra.mxu0 0
  %6379 = vmatprep.subr.bf16.mxu0 0
  %6380 = vmatpush1.bf16.msra.mxu0 0
  %6381 = vmatprep.subr.bf16.mxu0 0
  %6382 = vmatpush1.bf16.msra.mxu0 0
  %6383 = vmatprep.subr.bf16.mxu0 0
  %6384 = vmatpush1.bf16.msra.mxu0 0
  %6385 = vmatprep.subr.bf16.mxu0 0
  %6386 = vmatpush1.bf16.msra.mxu0 0
  %6387 = vmatprep.mubr.bf16.mxu0 0
  %6388 = vmatmul.mubr.bf16.gmra.mrb[0].mxu0 %v6353
  %v6389 = vpop.f32.mrb[0].mxu0
  %v6390 = vadd.f32 0.0, %v6389
  %v6391 = vpop.f32.mrb[0].mxu0
  %v6392 = vpop.f32.mrb[0].mxu0
  %v6393 = vpop.f32.mrb[0].mxu0
  %6394 = vdwg.mxu0
  %6396 = vrot.lane.b32.xlu0 %v6347, 32
  %v6397 = vpop.permute.xlu0 %6396
  %v6399 = vsel %vm540, %v6397, 0
  %6401 = vmatprep.subr.bf16.mxu0 0
  %6402 = vmatpush1.bf16.msra.mxu0 %v906
  %6403 = vmatprep.subr.bf16.mxu0 0
  %6404 = vmatpush1.bf16.msra.mxu0 %v907
  %6405 = vmatprep.subr.bf16.mxu0 0
  %6406 = vmatpush1.bf16.msra.mxu0 0
  %6407 = vmatprep.subr.bf16.mxu0 0
  %6408 = vmatpush1.bf16.msra.mxu0 0
  %6409 = vmatprep.subr.bf16.mxu0 0
  %6410 = vmatpush1.bf16.msra.mxu0 0
  %6411 = vmatprep.subr.bf16.mxu0 0
  %6412 = vmatpush1.bf16.msra.mxu0 0
  %6413 = vmatprep.subr.bf16.mxu0 0
  %6414 = vmatpush1.bf16.msra.mxu0 0
  %6415 = vmatprep.subr.bf16.mxu0 0
  %6416 = vmatpush1.bf16.msra.mxu0 0
  %6417 = vmatprep.subr.bf16.mxu0 0
  %6418 = vmatpush1.bf16.msra.mxu0 0
  %6419 = vmatprep.subr.bf16.mxu0 0
  %6420 = vmatpush1.bf16.msra.mxu0 0
  %6421 = vmatprep.subr.bf16.mxu0 0
  %6422 = vmatpush1.bf16.msra.mxu0 0
  %6423 = vmatprep.subr.bf16.mxu0 0
  %6424 = vmatpush1.bf16.msra.mxu0 0
  %6425 = vmatprep.subr.bf16.mxu0 0
  %6426 = vmatpush1.bf16.msra.mxu0 0
  %6427 = vmatprep.subr.bf16.mxu0 0
  %6428 = vmatpush1.bf16.msra.mxu0 0
  %6429 = vmatprep.subr.bf16.mxu0 0
  %6430 = vmatpush1.bf16.msra.mxu0 0
  %6431 = vmatprep.subr.bf16.mxu0 0
  %6432 = vmatpush1.bf16.msra.mxu0 0
  %6433 = vmatprep.mubr.bf16.mxu0 0
  %6434 = vmatmul.mubr.bf16.gmra.mrb[0].mxu0 %v6399
  %v6435 = vpop.f32.mrb[0].mxu0
  %v6436 = vadd.f32 %v6390, %v6435
  %v6437 = vpop.f32.mrb[0].mxu0
  %v6438 = vpop.f32.mrb[0].mxu0
  %v6439 = vpop.f32.mrb[0].mxu0
  %6440 = vdwg.mxu0
  %v6441 = vadd.f32 %v6436, %v957
  %v6442 = vxor.u32 %v6441, 2147483648
  %v6443 = vmul.f32 %v6442, 1.442695
  %v6444 = vpow.pop %v6443
  %v6445 = vadd.f32 %v6444, 1.0
  %v6446 = vrcp.pop %v6445
  %v6447 = vmul.f32 1.0, %v6446
  %v6448 = vtanh.pop %v6441
  %v6449 = vmul.f32 %v6270, %v6447
  %6451 = vrot.lane.b32.xlu0 %v6448, 64
  %v6452 = vpop.permute.xlu0 %6451
  %v6454 = vmul.f32 %v6447, %v6452
  %6456 = vrot.lane.b32.xlu0 %v6454, 32
  %v6457 = vpop.permute.xlu0 %6456
  %v6459 = vadd.f32 %v6449, %v6457
  %v6460 = vtanh.pop %v6459
  %6462 = vrot.lane.b32.xlu0 %v6460, 64
  %v6463 = vpop.permute.xlu0 %6462
  %v6465 = vmul.f32 %v6447, %v6463
  %6467 = vrot.lane.b32.xlu0 %v6465, 32
  %v6468 = vpop.permute.xlu0 %6467
  %6470 = vst.msk [vmem:[%s8 + $0x38] sm:$0x3] %vm988, %v6468
  %6471 = vmatprep.subr.bf16.mxu0 0
  %6472 = vmatpush1.bf16.msra.mxu0 %v770
  %6473 = vmatprep.subr.bf16.mxu0 0
  %6474 = vmatpush1.bf16.msra.mxu0 %v771
  %6475 = vmatprep.subr.bf16.mxu0 0
  %6476 = vmatpush1.bf16.msra.mxu0 0
  %6477 = vmatprep.subr.bf16.mxu0 0
  %6478 = vmatpush1.bf16.msra.mxu0 0
  %6479 = vmatprep.subr.bf16.mxu0 0
  %6480 = vmatpush1.bf16.msra.mxu0 0
  %6481 = vmatprep.subr.bf16.mxu0 0
  %6482 = vmatpush1.bf16.msra.mxu0 0
  %6483 = vmatprep.subr.bf16.mxu0 0
  %6484 = vmatpush1.bf16.msra.mxu0 0
  %6485 = vmatprep.subr.bf16.mxu0 0
  %6486 = vmatpush1.bf16.msra.mxu0 0
  %6487 = vmatprep.subr.bf16.mxu0 0
  %6488 = vmatpush1.bf16.msra.mxu0 0
  %6489 = vmatprep.subr.bf16.mxu0 0
  %6490 = vmatpush1.bf16.msra.mxu0 0
  %6491 = vmatprep.subr.bf16.mxu0 0
  %6492 = vmatpush1.bf16.msra.mxu0 0
  %6493 = vmatprep.subr.bf16.mxu0 0
  %6494 = vmatpush1.bf16.msra.mxu0 0
  %6495 = vmatprep.subr.bf16.mxu0 0
  %6496 = vmatpush1.bf16.msra.mxu0 0
  %6497 = vmatprep.subr.bf16.mxu0 0
  %6498 = vmatpush1.bf16.msra.mxu0 0
  %6499 = vmatprep.subr.bf16.mxu0 0
  %6500 = vmatpush1.bf16.msra.mxu0 0
  %6501 = vmatprep.subr.bf16.mxu0 0
  %6502 = vmatpush1.bf16.msra.mxu0 0
  %6503 = vmatprep.mubr.bf16.mxu0 0
  %6504 = vmatmul.mubr.bf16.gmra.mrb[0].mxu0 %v6399
  %v6505 = vpop.f32.mrb[0].mxu0
  %v6506 = vadd.f32 0.0, %v6505
  %v6507 = vpop.f32.mrb[0].mxu0
  %v6508 = vpop.f32.mrb[0].mxu0
  %v6509 = vpop.f32.mrb[0].mxu0
  %6510 = vdwg.mxu0
  %v6512 = vrot.slane %v6506, 6
  %v6514 = vadd.f32 %v743, %v6512
  %v6515 = vxor.u32 %v6514, 2147483648
  %v6516 = vmul.f32 %v6515, 1.442695
  %v6517 = vpow.pop %v6516
  %v6518 = vadd.f32 %v6517, 1.0
  %v6519 = vrcp.pop %v6518
  %v6520 = vmul.f32 1.0, %v6519
  %v6521 = vtanh.pop %v6514
  %v6523 = vrot.slane %v6520, 2
  %v6525 = vmul.f32 %v6340, %v6523
  %6527 = vrot.lane.b32.xlu0 %v6521, 64
  %v6528 = vpop.permute.xlu0 %6527
  %v6530 = vmul.f32 %v6520, %v6528
  %v6532 = vrot.slane %v6530, 2
  %6533 = vrot.lane.b32.xlu0 %v6532, 32
  %v6534 = vpop.permute.xlu0 %6533
  %v6536 = vadd.f32 %v6525, %v6534
  %v6537 = vtanh.pop %v6536
  %v6539 = vrot.slane %v6537, 6
  %6540 = vrot.lane.b32.xlu0 %v6539, 64
  %v6541 = vpop.permute.xlu0 %6540
  %v6543 = vmul.f32 %v6520, %v6541
  %v6544 = vpack.c.bf16 %v6543, %v6543
  %v6545 = vpack.c.bf16 %v6465, %v6465
  %6547 = vrot.lane.b32.xlu0 %v6545, 32
  %v6548 = vpop.permute.xlu0 %6547
  %v6550 = vsel %vm540, %v6548, 0
  %6552 = vmatprep.subr.bf16.mxu0 0
  %6553 = vmatpush1.bf16.msra.mxu0 %v851
  %6554 = vmatprep.subr.bf16.mxu0 0
  %6555 = vmatpush1.bf16.msra.mxu0 %v852
  %6556 = vmatprep.subr.bf16.mxu0 0
  %6557 = vmatpush1.bf16.msra.mxu0 0
  %6558 = vmatprep.subr.bf16.mxu0 0
  %6559 = vmatpush1.bf16.msra.mxu0 0
  %6560 = vmatprep.subr.bf16.mxu0 0
  %6561 = vmatpush1.bf16.msra.mxu0 0
  %6562 = vmatprep.subr.bf16.mxu0 0
  %6563 = vmatpush1.bf16.msra.mxu0 0
  %6564 = vmatprep.subr.bf16.mxu0 0
  %6565 = vmatpush1.bf16.msra.mxu0 0
  %6566 = vmatprep.subr.bf16.mxu0 0
  %6567 = vmatpush1.bf16.msra.mxu0 0
  %6568 = vmatprep.subr.bf16.mxu0 0
  %6569 = vmatpush1.bf16.msra.mxu0 0
  %6570 = vmatprep.subr.bf16.mxu0 0
  %6571 = vmatpush1.bf16.msra.mxu0 0
  %6572 = vmatprep.subr.bf16.mxu0 0
  %6573 = vmatpush1.bf16.msra.mxu0 0
  %6574 = vmatprep.subr.bf16.mxu0 0
  %6575 = vmatpush1.bf16.msra.mxu0 0
  %6576 = vmatprep.subr.bf16.mxu0 0
  %6577 = vmatpush1.bf16.msra.mxu0 0
  %6578 = vmatprep.subr.bf16.mxu0 0
  %6579 = vmatpush1.bf16.msra.mxu0 0
  %6580 = vmatprep.subr.bf16.mxu0 0
  %6581 = vmatpush1.bf16.msra.mxu0 0
  %6582 = vmatprep.subr.bf16.mxu0 0
  %6583 = vmatpush1.bf16.msra.mxu0 0
  %6584 = vmatprep.mubr.bf16.mxu0 0
  %6585 = vmatmul.mubr.bf16.gmra.mrb[0].mxu0 %v6550
  %v6586 = vpop.f32.mrb[0].mxu0
  %v6587 = vadd.f32 0.0, %v6586
  %v6588 = vpop.f32.mrb[0].mxu0
  %v6589 = vpop.f32.mrb[0].mxu0
  %v6590 = vpop.f32.mrb[0].mxu0
  %6591 = vdwg.mxu0
  %v6593 = vrot.slane %v6544, 1
  %6594 = vrot.lane.b32.xlu0 %v6593, 32
  %v6595 = vpop.permute.xlu0 %6594
  %v6597 = vsel %vm540, %v6595, 0
  %6599 = vmatprep.subr.bf16.mxu0 0
  %6600 = vmatpush1.bf16.msra.mxu0 %v906
  %6601 = vmatprep.subr.bf16.mxu0 0
  %6602 = vmatpush1.bf16.msra.mxu0 %v907
  %6603 = vmatprep.subr.bf16.mxu0 0
  %6604 = vmatpush1.bf16.msra.mxu0 0
  %6605 = vmatprep.subr.bf16.mxu0 0
  %6606 = vmatpush1.bf16.msra.mxu0 0
  %6607 = vmatprep.subr.bf16.mxu0 0
  %6608 = vmatpush1.bf16.msra.mxu0 0
  %6609 = vmatprep.subr.bf16.mxu0 0
  %6610 = vmatpush1.bf16.msra.mxu0 0
  %6611 = vmatprep.subr.bf16.mxu0 0
  %6612 = vmatpush1.bf16.msra.mxu0 0
  %6613 = vmatprep.subr.bf16.mxu0 0
  %6614 = vmatpush1.bf16.msra.mxu0 0
  %6615 = vmatprep.subr.bf16.mxu0 0
  %6616 = vmatpush1.bf16.msra.mxu0 0
  %6617 = vmatprep.subr.bf16.mxu0 0
  %6618 = vmatpush1.bf16.msra.mxu0 0
  %6619 = vmatprep.subr.bf16.mxu0 0
  %6620 = vmatpush1.bf16.msra.mxu0 0
  %6621 = vmatprep.subr.bf16.mxu0 0
  %6622 = vmatpush1.bf16.msra.mxu0 0
  %6623 = vmatprep.subr.bf16.mxu0 0
  %6624 = vmatpush1.bf16.msra.mxu0 0
  %6625 = vmatprep.subr.bf16.mxu0 0
  %6626 = vmatpush1.bf16.msra.mxu0 0
  %6627 = vmatprep.subr.bf16.mxu0 0
  %6628 = vmatpush1.bf16.msra.mxu0 0
  %6629 = vmatprep.subr.bf16.mxu0 0
  %6630 = vmatpush1.bf16.msra.mxu0 0
  %6631 = vmatprep.mubr.bf16.mxu0 0
  %6632 = vmatmul.mubr.bf16.gmra.mrb[0].mxu0 %v6597
  %v6633 = vpop.f32.mrb[0].mxu0
  %v6634 = vadd.f32 %v6587, %v6633
  %v6635 = vpop.f32.mrb[0].mxu0
  %v6636 = vpop.f32.mrb[0].mxu0
  %v6637 = vpop.f32.mrb[0].mxu0
  %6638 = vdwg.mxu0
  %v6639 = vadd.f32 %v6634, %v957
  %v6640 = vxor.u32 %v6639, 2147483648
  %v6641 = vmul.f32 %v6640, 1.442695
  %v6642 = vpow.pop %v6641
  %v6643 = vadd.f32 %v6642, 1.0
  %v6644 = vrcp.pop %v6643
  %v6645 = vmul.f32 1.0, %v6644
  %v6646 = vtanh.pop %v6639
  %v6647 = vmul.f32 %v6459, %v6645
  %6649 = vrot.lane.b32.xlu0 %v6646, 64
  %v6650 = vpop.permute.xlu0 %6649
  %v6652 = vmul.f32 %v6645, %v6650
  %6654 = vrot.lane.b32.xlu0 %v6652, 32
  %v6655 = vpop.permute.xlu0 %6654
  %v6657 = vadd.f32 %v6647, %v6655
  %v6658 = vtanh.pop %v6657
  %6660 = vrot.lane.b32.xlu0 %v6658, 64
  %v6661 = vpop.permute.xlu0 %6660
  %v6663 = vmul.f32 %v6645, %v6661
  %6665 = vrot.lane.b32.xlu0 %v6663, 32
  %v6666 = vpop.permute.xlu0 %6665
  %6668 = vst.msk [vmem:[%s8 + $0x3a] sm:$0x3] %vm988, %v6666
  %6669 = vmatprep.subr.bf16.mxu0 0
  %6670 = vmatpush1.bf16.msra.mxu0 %v770
  %6671 = vmatprep.subr.bf16.mxu0 0
  %6672 = vmatpush1.bf16.msra.mxu0 %v771
  %6673 = vmatprep.subr.bf16.mxu0 0
  %6674 = vmatpush1.bf16.msra.mxu0 0
  %6675 = vmatprep.subr.bf16.mxu0 0
  %6676 = vmatpush1.bf16.msra.mxu0 0
  %6677 = vmatprep.subr.bf16.mxu0 0
  %6678 = vmatpush1.bf16.msra.mxu0 0
  %6679 = vmatprep.subr.bf16.mxu0 0
  %6680 = vmatpush1.bf16.msra.mxu0 0
  %6681 = vmatprep.subr.bf16.mxu0 0
  %6682 = vmatpush1.bf16.msra.mxu0 0
  %6683 = vmatprep.subr.bf16.mxu0 0
  %6684 = vmatpush1.bf16.msra.mxu0 0
  %6685 = vmatprep.subr.bf16.mxu0 0
  %6686 = vmatpush1.bf16.msra.mxu0 0
  %6687 = vmatprep.subr.bf16.mxu0 0
  %6688 = vmatpush1.bf16.msra.mxu0 0
  %6689 = vmatprep.subr.bf16.mxu0 0
  %6690 = vmatpush1.bf16.msra.mxu0 0
  %6691 = vmatprep.subr.bf16.mxu0 0
  %6692 = vmatpush1.bf16.msra.mxu0 0
  %6693 = vmatprep.subr.bf16.mxu0 0
  %6694 = vmatpush1.bf16.msra.mxu0 0
  %6695 = vmatprep.subr.bf16.mxu0 0
  %6696 = vmatpush1.bf16.msra.mxu0 0
  %6697 = vmatprep.subr.bf16.mxu0 0
  %6698 = vmatpush1.bf16.msra.mxu0 0
  %6699 = vmatprep.subr.bf16.mxu0 0
  %6700 = vmatpush1.bf16.msra.mxu0 0
  %6701 = vmatprep.mubr.bf16.mxu0 0
  %6702 = vmatmul.mubr.bf16.gmra.mrb[0].mxu0 %v6597
  %v6703 = vpop.f32.mrb[0].mxu0
  %v6704 = vadd.f32 0.0, %v6703
  %v6705 = vpop.f32.mrb[0].mxu0
  %v6706 = vpop.f32.mrb[0].mxu0
  %v6707 = vpop.f32.mrb[0].mxu0
  %6708 = vdwg.mxu0
  %v6710 = vrot.slane %v6704, 4
  %v6712 = vadd.f32 %v743, %v6710
  %v6713 = vxor.u32 %v6712, 2147483648
  %v6714 = vmul.f32 %v6713, 1.442695
  %v6715 = vpow.pop %v6714
  %v6716 = vadd.f32 %v6715, 1.0
  %v6717 = vrcp.pop %v6716
  %v6718 = vmul.f32 1.0, %v6717
  %v6719 = vtanh.pop %v6712
  %v6721 = vrot.slane %v6718, 4
  %v6723 = vmul.f32 %v6536, %v6721
  %6725 = vrot.lane.b32.xlu0 %v6719, 64
  %v6726 = vpop.permute.xlu0 %6725
  %v6728 = vmul.f32 %v6718, %v6726
  %v6730 = vrot.slane %v6728, 4
  %6731 = vrot.lane.b32.xlu0 %v6730, 32
  %v6732 = vpop.permute.xlu0 %6731
  %v6734 = vadd.f32 %v6723, %v6732
  %v6735 = vtanh.pop %v6734
  %v6737 = vrot.slane %v6735, 4
  %6738 = vrot.lane.b32.xlu0 %v6737, 64
  %v6739 = vpop.permute.xlu0 %6738
  %v6741 = vmul.f32 %v6718, %v6739
  %v6742 = vpack.c.bf16 %v6741, %v6741
  %v6743 = vpack.c.bf16 %v6663, %v6663
  %6745 = vrot.lane.b32.xlu0 %v6743, 32
  %v6746 = vpop.permute.xlu0 %6745
  %v6748 = vsel %vm540, %v6746, 0
  %6750 = vmatprep.subr.bf16.mxu0 0
  %6751 = vmatpush1.bf16.msra.mxu0 %v851
  %6752 = vmatprep.subr.bf16.mxu0 0
  %6753 = vmatpush1.bf16.msra.mxu0 %v852
  %6754 = vmatprep.subr.bf16.mxu0 0
  %6755 = vmatpush1.bf16.msra.mxu0 0
  %6756 = vmatprep.subr.bf16.mxu0 0
  %6757 = vmatpush1.bf16.msra.mxu0 0
  %6758 = vmatprep.subr.bf16.mxu0 0
  %6759 = vmatpush1.bf16.msra.mxu0 0
  %6760 = vmatprep.subr.bf16.mxu0 0
  %6761 = vmatpush1.bf16.msra.mxu0 0
  %6762 = vmatprep.subr.bf16.mxu0 0
  %6763 = vmatpush1.bf16.msra.mxu0 0
  %6764 = vmatprep.subr.bf16.mxu0 0
  %6765 = vmatpush1.bf16.msra.mxu0 0
  %6766 = vmatprep.subr.bf16.mxu0 0
  %6767 = vmatpush1.bf16.msra.mxu0 0
  %6768 = vmatprep.subr.bf16.mxu0 0
  %6769 = vmatpush1.bf16.msra.mxu0 0
  %6770 = vmatprep.subr.bf16.mxu0 0
  %6771 = vmatpush1.bf16.msra.mxu0 0
  %6772 = vmatprep.subr.bf16.mxu0 0
  %6773 = vmatpush1.bf16.msra.mxu0 0
  %6774 = vmatprep.subr.bf16.mxu0 0
  %6775 = vmatpush1.bf16.msra.mxu0 0
  %6776 = vmatprep.subr.bf16.mxu0 0
  %6777 = vmatpush1.bf16.msra.mxu0 0
  %6778 = vmatprep.subr.bf16.mxu0 0
  %6779 = vmatpush1.bf16.msra.mxu0 0
  %6780 = vmatprep.subr.bf16.mxu0 0
  %6781 = vmatpush1.bf16.msra.mxu0 0
  %6782 = vmatprep.mubr.bf16.mxu0 0
  %6783 = vmatmul.mubr.bf16.gmra.mrb[0].mxu0 %v6748
  %v6784 = vpop.f32.mrb[0].mxu0
  %v6785 = vadd.f32 0.0, %v6784
  %v6786 = vpop.f32.mrb[0].mxu0
  %v6787 = vpop.f32.mrb[0].mxu0
  %v6788 = vpop.f32.mrb[0].mxu0
  %6789 = vdwg.mxu0
  %v6791 = vrot.slane %v6742, 2
  %6792 = vrot.lane.b32.xlu0 %v6791, 32
  %v6793 = vpop.permute.xlu0 %6792
  %v6795 = vsel %vm540, %v6793, 0
  %6797 = vmatprep.subr.bf16.mxu0 0
  %6798 = vmatpush1.bf16.msra.mxu0 %v906
  %6799 = vmatprep.subr.bf16.mxu0 0
  %6800 = vmatpush1.bf16.msra.mxu0 %v907
  %6801 = vmatprep.subr.bf16.mxu0 0
  %6802 = vmatpush1.bf16.msra.mxu0 0
  %6803 = vmatprep.subr.bf16.mxu0 0
  %6804 = vmatpush1.bf16.msra.mxu0 0
  %6805 = vmatprep.subr.bf16.mxu0 0
  %6806 = vmatpush1.bf16.msra.mxu0 0
  %6807 = vmatprep.subr.bf16.mxu0 0
  %6808 = vmatpush1.bf16.msra.mxu0 0
  %6809 = vmatprep.subr.bf16.mxu0 0
  %6810 = vmatpush1.bf16.msra.mxu0 0
  %6811 = vmatprep.subr.bf16.mxu0 0
  %6812 = vmatpush1.bf16.msra.mxu0 0
  %6813 = vmatprep.subr.bf16.mxu0 0
  %6814 = vmatpush1.bf16.msra.mxu0 0
  %6815 = vmatprep.subr.bf16.mxu0 0
  %6816 = vmatpush1.bf16.msra.mxu0 0
  %6817 = vmatprep.subr.bf16.mxu0 0
  %6818 = vmatpush1.bf16.msra.mxu0 0
  %6819 = vmatprep.subr.bf16.mxu0 0
  %6820 = vmatpush1.bf16.msra.mxu0 0
  %6821 = vmatprep.subr.bf16.mxu0 0
  %6822 = vmatpush1.bf16.msra.mxu0 0
  %6823 = vmatprep.subr.bf16.mxu0 0
  %6824 = vmatpush1.bf16.msra.mxu0 0
  %6825 = vmatprep.subr.bf16.mxu0 0
  %6826 = vmatpush1.bf16.msra.mxu0 0
  %6827 = vmatprep.subr.bf16.mxu0 0
  %6828 = vmatpush1.bf16.msra.mxu0 0
  %6829 = vmatprep.mubr.bf16.mxu0 0
  %6830 = vmatmul.mubr.bf16.gmra.mrb[0].mxu0 %v6795
  %v6831 = vpop.f32.mrb[0].mxu0
  %v6832 = vadd.f32 %v6785, %v6831
  %v6833 = vpop.f32.mrb[0].mxu0
  %v6834 = vpop.f32.mrb[0].mxu0
  %v6835 = vpop.f32.mrb[0].mxu0
  %6836 = vdwg.mxu0
  %v6837 = vadd.f32 %v6832, %v957
  %v6838 = vxor.u32 %v6837, 2147483648
  %v6839 = vmul.f32 %v6838, 1.442695
  %v6840 = vpow.pop %v6839
  %v6841 = vadd.f32 %v6840, 1.0
  %v6842 = vrcp.pop %v6841
  %v6843 = vmul.f32 1.0, %v6842
  %v6844 = vtanh.pop %v6837
  %v6845 = vmul.f32 %v6657, %v6843
  %6847 = vrot.lane.b32.xlu0 %v6844, 64
  %v6848 = vpop.permute.xlu0 %6847
  %v6850 = vmul.f32 %v6843, %v6848
  %6852 = vrot.lane.b32.xlu0 %v6850, 32
  %v6853 = vpop.permute.xlu0 %6852
  %v6855 = vadd.f32 %v6845, %v6853
  %v6856 = vtanh.pop %v6855
  %6858 = vrot.lane.b32.xlu0 %v6856, 64
  %v6859 = vpop.permute.xlu0 %6858
  %v6861 = vmul.f32 %v6843, %v6859
  %6863 = vrot.lane.b32.xlu0 %v6861, 32
  %v6864 = vpop.permute.xlu0 %6863
  %6866 = vst.msk [vmem:[%s8 + $0x3c] sm:$0x3] %vm988, %v6864
  %6867 = vmatprep.subr.bf16.mxu0 0
  %6868 = vmatpush1.bf16.msra.mxu0 %v770
  %6869 = vmatprep.subr.bf16.mxu0 0
  %6870 = vmatpush1.bf16.msra.mxu0 %v771
  %6871 = vmatprep.subr.bf16.mxu0 0
  %6872 = vmatpush1.bf16.msra.mxu0 0
  %6873 = vmatprep.subr.bf16.mxu0 0
  %6874 = vmatpush1.bf16.msra.mxu0 0
  %6875 = vmatprep.subr.bf16.mxu0 0
  %6876 = vmatpush1.bf16.msra.mxu0 0
  %6877 = vmatprep.subr.bf16.mxu0 0
  %6878 = vmatpush1.bf16.msra.mxu0 0
  %6879 = vmatprep.subr.bf16.mxu0 0
  %6880 = vmatpush1.bf16.msra.mxu0 0
  %6881 = vmatprep.subr.bf16.mxu0 0
  %6882 = vmatpush1.bf16.msra.mxu0 0
  %6883 = vmatprep.subr.bf16.mxu0 0
  %6884 = vmatpush1.bf16.msra.mxu0 0
  %6885 = vmatprep.subr.bf16.mxu0 0
  %6886 = vmatpush1.bf16.msra.mxu0 0
  %6887 = vmatprep.subr.bf16.mxu0 0
  %6888 = vmatpush1.bf16.msra.mxu0 0
  %6889 = vmatprep.subr.bf16.mxu0 0
  %6890 = vmatpush1.bf16.msra.mxu0 0
  %6891 = vmatprep.subr.bf16.mxu0 0
  %6892 = vmatpush1.bf16.msra.mxu0 0
  %6893 = vmatprep.subr.bf16.mxu0 0
  %6894 = vmatpush1.bf16.msra.mxu0 0
  %6895 = vmatprep.subr.bf16.mxu0 0
  %6896 = vmatpush1.bf16.msra.mxu0 0
  %6897 = vmatprep.subr.bf16.mxu0 0
  %6898 = vmatpush1.bf16.msra.mxu0 0
  %6899 = vmatprep.mubr.bf16.mxu0 0
  %6900 = vmatmul.mubr.bf16.gmra.mrb[0].mxu0 %v6795
  %v6901 = vpop.f32.mrb[0].mxu0
  %v6902 = vadd.f32 0.0, %v6901
  %v6903 = vpop.f32.mrb[0].mxu0
  %v6904 = vpop.f32.mrb[0].mxu0
  %v6905 = vpop.f32.mrb[0].mxu0
  %6906 = vdwg.mxu0
  %v6908 = vrot.slane %v6902, 2
  %v6910 = vadd.f32 %v743, %v6908
  %v6911 = vxor.u32 %v6910, 2147483648
  %v6912 = vmul.f32 %v6911, 1.442695
  %v6913 = vpow.pop %v6912
  %v6914 = vadd.f32 %v6913, 1.0
  %v6915 = vrcp.pop %v6914
  %v6916 = vmul.f32 1.0, %v6915
  %v6917 = vtanh.pop %v6910
  %v6919 = vrot.slane %v6916, 6
  %v6921 = vmul.f32 %v6734, %v6919
  %6923 = vrot.lane.b32.xlu0 %v6917, 64
  %v6924 = vpop.permute.xlu0 %6923
  %v6926 = vmul.f32 %v6916, %v6924
  %v6928 = vrot.slane %v6926, 6
  %6929 = vrot.lane.b32.xlu0 %v6928, 32
  %v6930 = vpop.permute.xlu0 %6929
  %v6932 = vadd.f32 %v6921, %v6930
  %v6933 = vtanh.pop %v6932
  %v6935 = vrot.slane %v6933, 2
  %6936 = vrot.lane.b32.xlu0 %v6935, 64
  %v6937 = vpop.permute.xlu0 %6936
  %v6939 = vmul.f32 %v6916, %v6937
  %v6940 = vpack.c.bf16 %v6939, %v6939
  %v6941 = vpack.c.bf16 %v6861, %v6861
  %6943 = vrot.lane.b32.xlu0 %v6941, 32
  %v6944 = vpop.permute.xlu0 %6943
  %v6946 = vsel %vm540, %v6944, 0
  %6948 = vmatprep.subr.bf16.mxu0 0
  %6949 = vmatpush1.bf16.msra.mxu0 %v851
  %6950 = vmatprep.subr.bf16.mxu0 0
  %6951 = vmatpush1.bf16.msra.mxu0 %v852
  %6952 = vmatprep.subr.bf16.mxu0 0
  %6953 = vmatpush1.bf16.msra.mxu0 0
  %6954 = vmatprep.subr.bf16.mxu0 0
  %6955 = vmatpush1.bf16.msra.mxu0 0
  %6956 = vmatprep.subr.bf16.mxu0 0
  %6957 = vmatpush1.bf16.msra.mxu0 0
  %6958 = vmatprep.subr.bf16.mxu0 0
  %6959 = vmatpush1.bf16.msra.mxu0 0
  %6960 = vmatprep.subr.bf16.mxu0 0
  %6961 = vmatpush1.bf16.msra.mxu0 0
  %6962 = vmatprep.subr.bf16.mxu0 0
  %6963 = vmatpush1.bf16.msra.mxu0 0
  %6964 = vmatprep.subr.bf16.mxu0 0
  %6965 = vmatpush1.bf16.msra.mxu0 0
  %6966 = vmatprep.subr.bf16.mxu0 0
  %6967 = vmatpush1.bf16.msra.mxu0 0
  %6968 = vmatprep.subr.bf16.mxu0 0
  %6969 = vmatpush1.bf16.msra.mxu0 0
  %6970 = vmatprep.subr.bf16.mxu0 0
  %6971 = vmatpush1.bf16.msra.mxu0 0
  %6972 = vmatprep.subr.bf16.mxu0 0
  %6973 = vmatpush1.bf16.msra.mxu0 0
  %6974 = vmatprep.subr.bf16.mxu0 0
  %6975 = vmatpush1.bf16.msra.mxu0 0
  %6976 = vmatprep.subr.bf16.mxu0 0
  %6977 = vmatpush1.bf16.msra.mxu0 0
  %6978 = vmatprep.subr.bf16.mxu0 0
  %6979 = vmatpush1.bf16.msra.mxu0 0
  %6980 = vmatprep.mubr.bf16.mxu0 0
  %6981 = vmatmul.mubr.bf16.gmra.mrb[0].mxu0 %v6946
  %v6982 = vpop.f32.mrb[0].mxu0
  %v6983 = vadd.f32 0.0, %v6982
  %v6984 = vpop.f32.mrb[0].mxu0
  %v6985 = vpop.f32.mrb[0].mxu0
  %v6986 = vpop.f32.mrb[0].mxu0
  %6987 = vdwg.mxu0
  %v6989 = vrot.slane %v6940, 3
  %6990 = vrot.lane.b32.xlu0 %v6989, 32
  %v6991 = vpop.permute.xlu0 %6990
  %v6993 = vsel %vm540, %v6991, 0
  %6995 = vmatprep.subr.bf16.mxu0 0
  %6996 = vmatpush1.bf16.msra.mxu0 %v906
  %6997 = vmatprep.subr.bf16.mxu0 0
  %6998 = vmatpush1.bf16.msra.mxu0 %v907
  %6999 = vmatprep.subr.bf16.mxu0 0
  %7000 = vmatpush1.bf16.msra.mxu0 0
  %7001 = vmatprep.subr.bf16.mxu0 0
  %7002 = vmatpush1.bf16.msra.mxu0 0
  %7003 = vmatprep.subr.bf16.mxu0 0
  %7004 = vmatpush1.bf16.msra.mxu0 0
  %7005 = vmatprep.subr.bf16.mxu0 0
  %7006 = vmatpush1.bf16.msra.mxu0 0
  %7007 = vmatprep.subr.bf16.mxu0 0
  %7008 = vmatpush1.bf16.msra.mxu0 0
  %7009 = vmatprep.subr.bf16.mxu0 0
  %7010 = vmatpush1.bf16.msra.mxu0 0
  %7011 = vmatprep.subr.bf16.mxu0 0
  %7012 = vmatpush1.bf16.msra.mxu0 0
  %7013 = vmatprep.subr.bf16.mxu0 0
  %7014 = vmatpush1.bf16.msra.mxu0 0
  %7015 = vmatprep.subr.bf16.mxu0 0
  %7016 = vmatpush1.bf16.msra.mxu0 0
  %7017 = vmatprep.subr.bf16.mxu0 0
  %7018 = vmatpush1.bf16.msra.mxu0 0
  %7019 = vmatprep.subr.bf16.mxu0 0
  %7020 = vmatpush1.bf16.msra.mxu0 0
  %7021 = vmatprep.subr.bf16.mxu0 0
  %7022 = vmatpush1.bf16.msra.mxu0 0
  %7023 = vmatprep.subr.bf16.mxu0 0
  %7024 = vmatpush1.bf16.msra.mxu0 0
  %7025 = vmatprep.subr.bf16.mxu0 0
  %7026 = vmatpush1.bf16.msra.mxu0 0
  %7027 = vmatprep.mubr.bf16.mxu0 0
  %7028 = vmatmul.mubr.bf16.gmra.mrb[0].mxu0 %v6993
  %v7029 = vpop.f32.mrb[0].mxu0
  %v7030 = vadd.f32 %v6983, %v7029
  %v7031 = vpop.f32.mrb[0].mxu0
  %v7032 = vpop.f32.mrb[0].mxu0
  %v7033 = vpop.f32.mrb[0].mxu0
  %7034 = vdwg.mxu0
  %v7035 = vadd.f32 %v7030, %v957
  %v7036 = vxor.u32 %v7035, 2147483648
  %v7037 = vmul.f32 %v7036, 1.442695
  %v7038 = vpow.pop %v7037
  %v7039 = vadd.f32 %v7038, 1.0
  %v7040 = vrcp.pop %v7039
  %v7041 = vmul.f32 1.0, %v7040
  %v7042 = vtanh.pop %v7035
  %v7043 = vmul.f32 %v6855, %v7041
  %7045 = vrot.lane.b32.xlu0 %v7042, 64
  %v7046 = vpop.permute.xlu0 %7045
  %v7048 = vmul.f32 %v7041, %v7046
  %7050 = vrot.lane.b32.xlu0 %v7048, 32
  %v7051 = vpop.permute.xlu0 %7050
  %v7053 = vadd.f32 %v7043, %v7051
  %v7054 = vtanh.pop %v7053
  %7056 = vrot.lane.b32.xlu0 %v7054, 64
  %v7057 = vpop.permute.xlu0 %7056
  %v7059 = vmul.f32 %v7041, %v7057
  %7061 = vrot.lane.b32.xlu0 %v7059, 32
  %v7062 = vpop.permute.xlu0 %7061
  %7064 = vst.msk [vmem:[%s8 + $0x3e] sm:$0x3] %vm988, %v7062
  // Predicated region
  $region34: #{lstm_model_forward.1} parent=0 // pred_check
    _
  $region35: #{lstm_model_forward.1} parent=0 // pred_check_branch
    %7066 = sbr.rel (0) target = $region37
  $region36: #{lstm_model_forward.1} parent=0 // pred_region
    _
  $region37: #{lstm_model_forward.1} parent=0 // pred_fallthru
    _
  // Predicated region
  $region38: #{lstm_model_forward.1} parent=0 // pred_check
    _
  $region39: #{lstm_model_forward.1} parent=0 // pred_check_branch
    %7068 = sbr.rel (0) target = $region41
  $region40: #{lstm_model_forward.1} parent=0 // pred_region
    _
  $region41: #{lstm_model_forward.1} parent=0 // pred_fallthru
    _

</llo_original>
